<compile_context>
chip_gen: v7x
topology: tpu7x:2x2x1
jax: 0.10.0
libtpu: 0.0.40
codegen_flags: <defaults>
</compile_context>

<pallas_src>
import functools

import jax
import jax.numpy as jnp
from jax.experimental import pallas as pl
from jax.experimental.pallas import tpu as pltpu


_SQRT_HALF = 0.7071067811865476


def _gelu_exact(x):
    """Exact (erf-based) GELU with an f32-accurate erf rational approximation."""
    z = x * _SQRT_HALF
    a = jnp.abs(z)
    t = 1.0 / (1.0 + 0.3275911 * a)
    poly = t * (0.254829592 + t * (-0.284496736 +
            t * (1.421413741 + t * (-1.453152027 + t * 1.061405429))))
    erf_abs = 1.0 - poly * jnp.exp(-a * a)
    erf = jnp.where(z < 0.0, -erf_abs, erf_abs)
    return 0.5 * x * (1.0 + erf)


def _scale_block_kernel(x_ref, wct_ref, bct_ref, wdw_ref, g_ref, b_ref, o_ref,
                        p00, p01, p10, p11, *, H, W, C, eps):
    """Fused ConvTranspose2d(2,2) -> GELU -> depthwise 3x3 -> LayerNorm2d.

    x_ref   : (1, H, W, C)      NHWC input tile (one batch element)
    wct_ref : (C, 4*C)          conv-transpose weight, cols = (di, dj, c_out)
    bct_ref : (1, 4*C)          conv-transpose bias tiled over the 4 phases
    wdw_ref : (9, C)            depthwise 3x3 taps, row = 3*ka + kb
    g_ref/b_ref : (1, C)        LayerNorm2d gamma / beta
    o_ref   : (1, 2, 2, H, W, C) phase-separated output (di, dj phases)
    p??     : (H+2, W+2, C)     zero-padded per-phase VMEM scratch
    """
    pads = ((p00, p01), (p10, p11))

    # Zero the padded per-phase buffers every step (the 1-px ring supplies the
    # depthwise conv's zero padding; interiors are fully overwritten below).
    for row in pads:
        for p in row:
            p[...] = jnp.zeros_like(p)

    # ---- ConvTranspose2d(k=2, s=2) as one lane-dense matmul, GELU fused ----
    x2 = x_ref[...].reshape(H * W, C)                              # (H*W, C)
    y4 = jnp.dot(x2, wct_ref[...], preferred_element_type=jnp.float32)
    y4 = _gelu_exact(y4 + bct_ref[...])                            # (H*W, 4*C)

    # Scatter the four upsample phases into their padded VMEM buffers.
    for ph in range(4):
        di, dj = ph // 2, ph % 2
        yp = y4[:, ph * C:(ph + 1) * C].reshape(H, W, C)
        pads[di][dj][pl.ds(1, H), pl.ds(1, W), :] = yp

    # ---- depthwise 3x3 (9 shifted MACs on resident tiles) + LayerNorm2d ----
    gamma = g_ref[...].reshape(1, 1, C)
    beta = b_ref[...].reshape(1, 1, C)
    for di in range(2):
        for dj in range(2):
            acc = jnp.zeros((H, W, C), jnp.float32)
            for a in (-1, 0, 1):
                sdi = (di + a) % 2                 # source phase (rows)
                ri = 1 + (di + a) // 2             # row offset into padded buf
                for bb in (-1, 0, 1):
                    sdj = (dj + bb) % 2            # source phase (cols)
                    cj = 1 + (dj + bb) // 2        # col offset into padded buf
                    t = (a + 1) * 3 + (bb + 1)
                    tap = wdw_ref[pl.ds(t, 1), :].reshape(1, 1, C)
                    nb = pads[sdi][sdj][pl.ds(ri, H), pl.ds(cj, W), :]
                    acc = acc + nb * tap
            # LayerNorm over the channel (lane) dim, per spatial location.
            mu = jnp.mean(acc, axis=-1, keepdims=True)
            var = jnp.mean(jnp.square(acc - mu), axis=-1, keepdims=True)
            zn = (acc - mu) * jax.lax.rsqrt(var + eps)
            o_ref[0, di, dj, :, :, :] = (zn * gamma + beta).astype(o_ref.dtype)


def scale_block(x, params, *, eps=1e-6):
    """ScaleBlock forward. x: (B, C, H, W) NCHW (PyTorch layout) -> (B, C, 2H, 2W)."""
    Bb, C, H, W = x.shape
    H2, W2 = 2 * H, 2 * W

    x_nhwc = jnp.transpose(x, (0, 2, 3, 1)).astype(jnp.float32)    # (B, H, W, C)
    # ConvTranspose2d weight (C_in, C_out, 2, 2) -> (C_in, (di, dj, C_out))
    wct4 = jnp.transpose(params['ct_w'], (0, 2, 3, 1)).reshape(C, 4 * C)
    bct4 = jnp.tile(params['ct_b'], 4).reshape(1, 4 * C)
    # depthwise weight (C, 3, 3) -> (9, C), row index = 3*ka + kb
    wdw9 = params['dw_w'].reshape(C, 9).T
    g2 = params['ln_g'].reshape(1, C)
    b2 = params['ln_b'].reshape(1, C)

    kern = functools.partial(_scale_block_kernel, H=H, W=W, C=C, eps=eps)
    out = pl.pallas_call(
        kern,
        out_shape=jax.ShapeDtypeStruct((Bb, 2, 2, H, W, C), jnp.float32),
        grid=(Bb,),
        in_specs=[
            pl.BlockSpec((1, H, W, C), lambda b: (b, 0, 0, 0)),
            pl.BlockSpec((C, 4 * C), lambda b: (0, 0)),
            pl.BlockSpec((1, 4 * C), lambda b: (0, 0)),
            pl.BlockSpec((9, C), lambda b: (0, 0)),
            pl.BlockSpec((1, C), lambda b: (0, 0)),
            pl.BlockSpec((1, C), lambda b: (0, 0)),
        ],
        out_specs=pl.BlockSpec((1, 2, 2, H, W, C),
                               lambda b: (b, 0, 0, 0, 0, 0)),
        scratch_shapes=[pltpu.VMEM((H + 2, W + 2, C), jnp.float32)
                        for _ in range(4)],
        compiler_params=pltpu.CompilerParams(
            dimension_semantics=("parallel",)),
    )(x_nhwc, wct4, bct4, wdw9, g2, b2)

    # (b, di, dj, i, j, c) -> (b, c, i, di, j, dj) -> (B, C, 2H, 2W); the reshape
    # of (i, di)/(j, dj) into 2H/2W is layout-exact (row-major), so this is one
    # XLA transpose on the way to HBM.
    return jnp.transpose(out, (0, 5, 3, 1, 4, 2)).reshape(Bb, C, H2, W2)


def ref_forward(x, params, *, eps=1e-6):
    """Pure-JAX reference (same math as the PyTorch ScaleBlock)."""
    Bb, C, H, W = x.shape
    y = jnp.einsum('bchw,cokl->bohwkl', x, params['ct_w'])         # (B,C,H,W,2,2)
    y = y.transpose(0, 1, 2, 4, 3, 5).reshape(Bb, C, 2 * H, 2 * W)
    y = y + params['ct_b'][None, :, None, None]
    y = jax.nn.gelu(y, approximate=False)
    yp = jnp.pad(y, ((0, 0), (0, 0), (1, 1), (1, 1)))
    z = jnp.zeros_like(y)
    for ka in range(3):
        for kb in range(3):
            z = z + yp[:, :, ka:ka + 2 * H, kb:kb + 2 * W] \
                * params['dw_w'][None, :, ka, kb, None, None]
    mu = z.mean(axis=1, keepdims=True)
    var = ((z - mu) ** 2).mean(axis=1, keepdims=True)
    zn = (z - mu) / jnp.sqrt(var + eps)
    return params['ln_g'][None, :, None, None] * zn + params['ln_b'][None, :, None, None]


if __name__ == "__main__":
    key = jax.random.PRNGKey(0)
    ks = jax.random.split(key, 6)
    B, C, H, W = 2, 32, 16, 16

    x = jax.random.uniform(ks[0], (B, C, H, W), jnp.float32)
    params = dict(
        ct_w=0.2 * jax.random.normal(ks[1], (C, C, 2, 2), jnp.float32),
        ct_b=0.1 * jax.random.normal(ks[2], (C,), jnp.float32),
        dw_w=0.2 * jax.random.normal(ks[3], (C, 3, 3), jnp.float32),
        ln_g=1.0 + 0.1 * jax.random.normal(ks[4], (C,), jnp.float32),
        ln_b=0.1 * jax.random.normal(ks[5], (C,), jnp.float32),
    )

    fwd = jax.jit(scale_block)
    out = fwd(x, params)
    jax.block_until_ready(out)
    assert out.shape == (B, C, 2 * H, 2 * W), out.shape

    ref = ref_forward(x, params)
    err = float(jnp.max(jnp.abs(out - ref)))
    assert err < 2e-4, f"max abs err {err}"
    print("KERNEL_OK")
</pallas_src>

<mosaic_0001>
module attributes {stable_mosaic.version = 11 : i64} {
  func.func @_scale_block_kernel(%arg0: i32, %arg1: memref<1x16x16x32xf32, #tpu.memory_space<vmem>>, %arg2: memref<32x128xf32, #tpu.memory_space<vmem>>, %arg3: memref<1x128xf32, #tpu.memory_space<vmem>>, %arg4: memref<9x32xf32, #tpu.memory_space<vmem>>, %arg5: memref<1x32xf32, #tpu.memory_space<vmem>>, %arg6: memref<1x32xf32, #tpu.memory_space<vmem>>, %arg7: memref<1x2x2x16x16x32xf32, #tpu.memory_space<vmem>>, %arg8: memref<18x18x32xf32, #tpu.memory_space<vmem>>, %arg9: memref<18x18x32xf32, #tpu.memory_space<vmem>>, %arg10: memref<18x18x32xf32, #tpu.memory_space<vmem>>, %arg11: memref<18x18x32xf32, #tpu.memory_space<vmem>>) attributes {dimension_semantics = [#tpu.dimension_semantics<parallel>], iteration_bounds = array<i64: 2>, scalar_prefetch = 0 : i64, scratch_operands = 4 : i64, tpu.core_type = #tpu.core_type<tc>, window_params = [{transform_indices = @transform_0, window_bounds = array<i64: 1, 16, 16, 32>}, {pipeline_mode = #tpu.pipeline_mode<synchronous>, transform_indices = @transform_1, window_bounds = array<i64: 32, 128>}, {pipeline_mode = #tpu.pipeline_mode<synchronous>, transform_indices = @transform_2, window_bounds = array<i64: 1, 128>}, {pipeline_mode = #tpu.pipeline_mode<synchronous>, transform_indices = @transform_3, window_bounds = array<i64: 9, 32>}, {pipeline_mode = #tpu.pipeline_mode<synchronous>, transform_indices = @transform_4, window_bounds = array<i64: 1, 32>}, {pipeline_mode = #tpu.pipeline_mode<synchronous>, transform_indices = @transform_5, window_bounds = array<i64: 1, 32>}, {transform_indices = @transform_6, window_bounds = array<i64: 1, 2, 2, 16, 16, 32>}]} {
    %cst = arith.constant 0.000000e+00 : f32
    %0 = vector.broadcast %cst : f32 to vector<18x18x32xf32>
    %c0 = arith.constant 0 : index
    %c0_0 = arith.constant 0 : index
    %c0_1 = arith.constant 0 : index
    %1 = vector.load %arg8[%c0, %c0_0, %c0_1] : memref<18x18x32xf32, #tpu.memory_space<vmem>>, vector<18x18x32xf32>
    tpu.vector_store %arg8[%c0, %c0_0, %c0_1], %0 {strides = array<i32>} : memref<18x18x32xf32, #tpu.memory_space<vmem>>, vector<18x18x32xf32>,
    %cst_2 = arith.constant 0.000000e+00 : f32
    %2 = vector.broadcast %cst_2 : f32 to vector<18x18x32xf32>
    %c0_3 = arith.constant 0 : index
    %c0_4 = arith.constant 0 : index
    %c0_5 = arith.constant 0 : index
    %3 = vector.load %arg9[%c0_3, %c0_4, %c0_5] : memref<18x18x32xf32, #tpu.memory_space<vmem>>, vector<18x18x32xf32>
    tpu.vector_store %arg9[%c0_3, %c0_4, %c0_5], %2 {strides = array<i32>} : memref<18x18x32xf32, #tpu.memory_space<vmem>>, vector<18x18x32xf32>,
    %cst_6 = arith.constant 0.000000e+00 : f32
    %4 = vector.broadcast %cst_6 : f32 to vector<18x18x32xf32>
    %c0_7 = arith.constant 0 : index
    %c0_8 = arith.constant 0 : index
    %c0_9 = arith.constant 0 : index
    %5 = vector.load %arg10[%c0_7, %c0_8, %c0_9] : memref<18x18x32xf32, #tpu.memory_space<vmem>>, vector<18x18x32xf32>
    tpu.vector_store %arg10[%c0_7, %c0_8, %c0_9], %4 {strides = array<i32>} : memref<18x18x32xf32, #tpu.memory_space<vmem>>, vector<18x18x32xf32>,
    %cst_10 = arith.constant 0.000000e+00 : f32
    %6 = vector.broadcast %cst_10 : f32 to vector<18x18x32xf32>
    %c0_11 = arith.constant 0 : index
    %c0_12 = arith.constant 0 : index
    %c0_13 = arith.constant 0 : index
    %7 = vector.load %arg11[%c0_11, %c0_12, %c0_13] : memref<18x18x32xf32, #tpu.memory_space<vmem>>, vector<18x18x32xf32>
    tpu.vector_store %arg11[%c0_11, %c0_12, %c0_13], %6 {strides = array<i32>} : memref<18x18x32xf32, #tpu.memory_space<vmem>>, vector<18x18x32xf32>,
    %c0_14 = arith.constant 0 : index
    %c0_15 = arith.constant 0 : index
    %c0_16 = arith.constant 0 : index
    %c0_17 = arith.constant 0 : index
    %8 = vector.load %arg1[%c0_14, %c0_15, %c0_16, %c0_17] : memref<1x16x16x32xf32, #tpu.memory_space<vmem>>, vector<1x16x16x32xf32>
    %9 = vector.shape_cast %8 : vector<1x16x16x32xf32> to vector<256x32xf32>
    %c0_18 = arith.constant 0 : index
    %c0_19 = arith.constant 0 : index
    %10 = vector.load %arg2[%c0_18, %c0_19] : memref<32x128xf32, #tpu.memory_space<vmem>>, vector<32x128xf32>
    %cst_20 = arith.constant dense<0.000000e+00> : vector<256x128xf32>
    %11 = tpu.matmul %9, %10, %cst_20 {dimension_numbers = #tpu.dot_dimension_numbers<[1], [0], [0], [1], [0, 0, 1, 1], [], []>} : vector<256x32xf32>, vector<32x128xf32>, vector<256x128xf32> -> vector<256x128xf32>
    %c0_21 = arith.constant 0 : index
    %c0_22 = arith.constant 0 : index
    %12 = vector.load %arg3[%c0_21, %c0_22] : memref<1x128xf32, #tpu.memory_space<vmem>>, vector<1x128xf32>
    %13 = vector.broadcast %12 : vector<1x128xf32> to vector<256x128xf32>
    %14 = arith.addf %11, %13 : vector<256x128xf32>
    %cst_23 = arith.constant 0.707106769 : f32
    %15 = vector.broadcast %cst_23 : f32 to vector<256x128xf32>
    %16 = arith.mulf %14, %15 : vector<256x128xf32>
    %17 = math.absf %16 : vector<256x128xf32>
    %cst_24 = arith.constant 0.327591091 : f32
    %18 = vector.broadcast %cst_24 : f32 to vector<256x128xf32>
    %19 = arith.mulf %18, %17 : vector<256x128xf32>
    %cst_25 = arith.constant 1.000000e+00 : f32
    %20 = vector.broadcast %cst_25 : f32 to vector<256x128xf32>
    %21 = arith.addf %20, %19 : vector<256x128xf32>
    %cst_26 = arith.constant 1.000000e+00 : f32
    %22 = vector.broadcast %cst_26 : f32 to vector<256x128xf32>
    %23 = arith.divf %22, %21 : vector<256x128xf32>
    %cst_27 = arith.constant 1.06140542 : f32
    %24 = vector.broadcast %cst_27 : f32 to vector<256x128xf32>
    %25 = arith.mulf %23, %24 : vector<256x128xf32>
    %cst_28 = arith.constant -1.45315206 : f32
    %26 = vector.broadcast %cst_28 : f32 to vector<256x128xf32>
    %27 = arith.addf %26, %25 : vector<256x128xf32>
    %28 = arith.mulf %23, %27 : vector<256x128xf32>
    %cst_29 = arith.constant 1.42141378 : f32
    %29 = vector.broadcast %cst_29 : f32 to vector<256x128xf32>
    %30 = arith.addf %29, %28 : vector<256x128xf32>
    %31 = arith.mulf %23, %30 : vector<256x128xf32>
    %cst_30 = arith.constant -0.284496725 : f32
    %32 = vector.broadcast %cst_30 : f32 to vector<256x128xf32>
    %33 = arith.addf %32, %31 : vector<256x128xf32>
    %34 = arith.mulf %23, %33 : vector<256x128xf32>
    %cst_31 = arith.constant 0.254829586 : f32
    %35 = vector.broadcast %cst_31 : f32 to vector<256x128xf32>
    %36 = arith.addf %35, %34 : vector<256x128xf32>
    %37 = arith.mulf %23, %36 : vector<256x128xf32>
    %cst_32 = arith.constant 0.000000e+00 : f32
    %38 = vector.broadcast %cst_32 : f32 to vector<256x128xf32>
    %39 = arith.subf %38, %17 : vector<256x128xf32>
    %40 = arith.mulf %39, %17 : vector<256x128xf32>
    %41 = math.exp %40 : vector<256x128xf32>
    %42 = arith.mulf %37, %41 : vector<256x128xf32>
    %cst_33 = arith.constant 1.000000e+00 : f32
    %43 = vector.broadcast %cst_33 : f32 to vector<256x128xf32>
    %44 = arith.subf %43, %42 : vector<256x128xf32>
    %cst_34 = arith.constant 0.000000e+00 : f32
    %45 = vector.broadcast %cst_34 : f32 to vector<256x128xf32>
    %46 = arith.cmpf olt, %16, %45 : vector<256x128xf32>
    %cst_35 = arith.constant 0.000000e+00 : f32
    %47 = vector.broadcast %cst_35 : f32 to vector<256x128xf32>
    %48 = arith.subf %47, %44 : vector<256x128xf32>
    %49 = arith.select %46, %48, %44 : vector<256x128xi1>, vector<256x128xf32>
    %cst_36 = arith.constant 5.000000e-01 : f32
    %50 = vector.broadcast %cst_36 : f32 to vector<256x128xf32>
    %51 = arith.mulf %50, %14 : vector<256x128xf32>
    %cst_37 = arith.constant 1.000000e+00 : f32
    %52 = vector.broadcast %cst_37 : f32 to vector<256x128xf32>
    %53 = arith.addf %52, %49 : vector<256x128xf32>
    %54 = arith.mulf %51, %53 : vector<256x128xf32>
    %55 = vector.extract_strided_slice %54 {offsets = [0, 0], sizes = [256, 32], strides = [1, 1]} : vector<256x128xf32> to vector<256x32xf32>
    %56 = vector.shape_cast %55 : vector<256x32xf32> to vector<16x16x32xf32>
    %c1 = arith.constant 1 : index
    %c1_38 = arith.constant 1 : index
    %c0_39 = arith.constant 0 : index
    %57 = vector.load %arg8[%c1, %c1_38, %c0_39] : memref<18x18x32xf32, #tpu.memory_space<vmem>>, vector<16x16x32xf32>
    tpu.vector_store %arg8[%c1, %c1_38, %c0_39], %56 {strides = array<i32>} : memref<18x18x32xf32, #tpu.memory_space<vmem>>, vector<16x16x32xf32>,
    %58 = vector.extract_strided_slice %54 {offsets = [0, 32], sizes = [256, 32], strides = [1, 1]} : vector<256x128xf32> to vector<256x32xf32>
    %59 = vector.shape_cast %58 : vector<256x32xf32> to vector<16x16x32xf32>
    %c1_40 = arith.constant 1 : index
    %c1_41 = arith.constant 1 : index
    %c0_42 = arith.constant 0 : index
    %60 = vector.load %arg9[%c1_40, %c1_41, %c0_42] : memref<18x18x32xf32, #tpu.memory_space<vmem>>, vector<16x16x32xf32>
    tpu.vector_store %arg9[%c1_40, %c1_41, %c0_42], %59 {strides = array<i32>} : memref<18x18x32xf32, #tpu.memory_space<vmem>>, vector<16x16x32xf32>,
    %61 = vector.extract_strided_slice %54 {offsets = [0, 64], sizes = [256, 32], strides = [1, 1]} : vector<256x128xf32> to vector<256x32xf32>
    %62 = vector.shape_cast %61 : vector<256x32xf32> to vector<16x16x32xf32>
    %c1_43 = arith.constant 1 : index
    %c1_44 = arith.constant 1 : index
    %c0_45 = arith.constant 0 : index
    %63 = vector.load %arg10[%c1_43, %c1_44, %c0_45] : memref<18x18x32xf32, #tpu.memory_space<vmem>>, vector<16x16x32xf32>
    tpu.vector_store %arg10[%c1_43, %c1_44, %c0_45], %62 {strides = array<i32>} : memref<18x18x32xf32, #tpu.memory_space<vmem>>, vector<16x16x32xf32>,
    %64 = vector.extract_strided_slice %54 {offsets = [0, 96], sizes = [256, 32], strides = [1, 1]} : vector<256x128xf32> to vector<256x32xf32>
    %65 = vector.shape_cast %64 : vector<256x32xf32> to vector<16x16x32xf32>
    %c1_46 = arith.constant 1 : index
    %c1_47 = arith.constant 1 : index
    %c0_48 = arith.constant 0 : index
    %66 = vector.load %arg11[%c1_46, %c1_47, %c0_48] : memref<18x18x32xf32, #tpu.memory_space<vmem>>, vector<16x16x32xf32>
    tpu.vector_store %arg11[%c1_46, %c1_47, %c0_48], %65 {strides = array<i32>} : memref<18x18x32xf32, #tpu.memory_space<vmem>>, vector<16x16x32xf32>,
    %c0_49 = arith.constant 0 : index
    %c0_50 = arith.constant 0 : index
    %67 = vector.load %arg5[%c0_49, %c0_50] : memref<1x32xf32, #tpu.memory_space<vmem>>, vector<1x32xf32>
    %68 = vector.shape_cast %67 : vector<1x32xf32> to vector<1x1x32xf32>
    %c0_51 = arith.constant 0 : index
    %c0_52 = arith.constant 0 : index
    %69 = vector.load %arg6[%c0_51, %c0_52] : memref<1x32xf32, #tpu.memory_space<vmem>>, vector<1x32xf32>
    %70 = vector.shape_cast %69 : vector<1x32xf32> to vector<1x1x32xf32>
    %cst_53 = arith.constant 0.000000e+00 : f32
    %71 = vector.broadcast %cst_53 : f32 to vector<16x16x32xf32>
    %c0_54 = arith.constant 0 : index
    %c0_55 = arith.constant 0 : index
    %72 = vector.load %arg4[%c0_54, %c0_55] : memref<9x32xf32, #tpu.memory_space<vmem>>, vector<1x32xf32>
    %73 = vector.shape_cast %72 : vector<1x32xf32> to vector<1x1x32xf32>
    %c0_56 = arith.constant 0 : index
    %c0_57 = arith.constant 0 : index
    %c0_58 = arith.constant 0 : index
    %74 = vector.load %arg11[%c0_56, %c0_57, %c0_58] : memref<18x18x32xf32, #tpu.memory_space<vmem>>, vector<16x16x32xf32>
    %75 = vector.broadcast %73 : vector<1x1x32xf32> to vector<16x16x32xf32>
    %76 = arith.mulf %74, %75 : vector<16x16x32xf32>
    %77 = arith.addf %71, %76 : vector<16x16x32xf32>
    %c1_59 = arith.constant 1 : index
    %c0_60 = arith.constant 0 : index
    %78 = vector.load %arg4[%c1_59, %c0_60] : memref<9x32xf32, #tpu.memory_space<vmem>>, vector<1x32xf32>
    %79 = vector.shape_cast %78 : vector<1x32xf32> to vector<1x1x32xf32>
    %c0_61 = arith.constant 0 : index
    %c1_62 = arith.constant 1 : index
    %c0_63 = arith.constant 0 : index
    %80 = vector.load %arg10[%c0_61, %c1_62, %c0_63] : memref<18x18x32xf32, #tpu.memory_space<vmem>>, vector<16x16x32xf32>
    %81 = vector.broadcast %79 : vector<1x1x32xf32> to vector<16x16x32xf32>
    %82 = arith.mulf %80, %81 : vector<16x16x32xf32>
    %83 = arith.addf %77, %82 : vector<16x16x32xf32>
    %c2 = arith.constant 2 : index
    %c0_64 = arith.constant 0 : index
    %84 = vector.load %arg4[%c2, %c0_64] : memref<9x32xf32, #tpu.memory_space<vmem>>, vector<1x32xf32>
    %85 = vector.shape_cast %84 : vector<1x32xf32> to vector<1x1x32xf32>
    %c0_65 = arith.constant 0 : index
    %c1_66 = arith.constant 1 : index
    %c0_67 = arith.constant 0 : index
    %86 = vector.load %arg11[%c0_65, %c1_66, %c0_67] : memref<18x18x32xf32, #tpu.memory_space<vmem>>, vector<16x16x32xf32>
    %87 = vector.broadcast %85 : vector<1x1x32xf32> to vector<16x16x32xf32>
    %88 = arith.mulf %86, %87 : vector<16x16x32xf32>
    %89 = arith.addf %83, %88 : vector<16x16x32xf32>
    %c3 = arith.constant 3 : index
    %c0_68 = arith.constant 0 : index
    %90 = vector.load %arg4[%c3, %c0_68] : memref<9x32xf32, #tpu.memory_space<vmem>>, vector<1x32xf32>
    %91 = vector.shape_cast %90 : vector<1x32xf32> to vector<1x1x32xf32>
    %c1_69 = arith.constant 1 : index
    %c0_70 = arith.constant 0 : index
    %c0_71 = arith.constant 0 : index
    %92 = vector.load %arg9[%c1_69, %c0_70, %c0_71] : memref<18x18x32xf32, #tpu.memory_space<vmem>>, vector<16x16x32xf32>
    %93 = vector.broadcast %91 : vector<1x1x32xf32> to vector<16x16x32xf32>
    %94 = arith.mulf %92, %93 : vector<16x16x32xf32>
    %95 = arith.addf %89, %94 : vector<16x16x32xf32>
    %c4 = arith.constant 4 : index
    %c0_72 = arith.constant 0 : index
    %96 = vector.load %arg4[%c4, %c0_72] : memref<9x32xf32, #tpu.memory_space<vmem>>, vector<1x32xf32>
    %97 = vector.shape_cast %96 : vector<1x32xf32> to vector<1x1x32xf32>
    %c1_73 = arith.constant 1 : index
    %c1_74 = arith.constant 1 : index
    %c0_75 = arith.constant 0 : index
    %98 = vector.load %arg8[%c1_73, %c1_74, %c0_75] : memref<18x18x32xf32, #tpu.memory_space<vmem>>, vector<16x16x32xf32>
    %99 = vector.broadcast %97 : vector<1x1x32xf32> to vector<16x16x32xf32>
    %100 = arith.mulf %98, %99 : vector<16x16x32xf32>
    %101 = arith.addf %95, %100 : vector<16x16x32xf32>
    %c5 = arith.constant 5 : index
    %c0_76 = arith.constant 0 : index
    %102 = vector.load %arg4[%c5, %c0_76] : memref<9x32xf32, #tpu.memory_space<vmem>>, vector<1x32xf32>
    %103 = vector.shape_cast %102 : vector<1x32xf32> to vector<1x1x32xf32>
    %c1_77 = arith.constant 1 : index
    %c1_78 = arith.constant 1 : index
    %c0_79 = arith.constant 0 : index
    %104 = vector.load %arg9[%c1_77, %c1_78, %c0_79] : memref<18x18x32xf32, #tpu.memory_space<vmem>>, vector<16x16x32xf32>
    %105 = vector.broadcast %103 : vector<1x1x32xf32> to vector<16x16x32xf32>
    %106 = arith.mulf %104, %105 : vector<16x16x32xf32>
    %107 = arith.addf %101, %106 : vector<16x16x32xf32>
    %c6 = arith.constant 6 : index
    %c0_80 = arith.constant 0 : index
    %108 = vector.load %arg4[%c6, %c0_80] : memref<9x32xf32, #tpu.memory_space<vmem>>, vector<1x32xf32>
    %109 = vector.shape_cast %108 : vector<1x32xf32> to vector<1x1x32xf32>
    %c1_81 = arith.constant 1 : index
    %c0_82 = arith.constant 0 : index
    %c0_83 = arith.constant 0 : index
    %110 = vector.load %arg11[%c1_81, %c0_82, %c0_83] : memref<18x18x32xf32, #tpu.memory_space<vmem>>, vector<16x16x32xf32>
    %111 = vector.broadcast %109 : vector<1x1x32xf32> to vector<16x16x32xf32>
    %112 = arith.mulf %110, %111 : vector<16x16x32xf32>
    %113 = arith.addf %107, %112 : vector<16x16x32xf32>
    %c7 = arith.constant 7 : index
    %c0_84 = arith.constant 0 : index
    %114 = vector.load %arg4[%c7, %c0_84] : memref<9x32xf32, #tpu.memory_space<vmem>>, vector<1x32xf32>
    %115 = vector.shape_cast %114 : vector<1x32xf32> to vector<1x1x32xf32>
    %c1_85 = arith.constant 1 : index
    %c1_86 = arith.constant 1 : index
    %c0_87 = arith.constant 0 : index
    %116 = vector.load %arg10[%c1_85, %c1_86, %c0_87] : memref<18x18x32xf32, #tpu.memory_space<vmem>>, vector<16x16x32xf32>
    %117 = vector.broadcast %115 : vector<1x1x32xf32> to vector<16x16x32xf32>
    %118 = arith.mulf %116, %117 : vector<16x16x32xf32>
    %119 = arith.addf %113, %118 : vector<16x16x32xf32>
    %c8 = arith.constant 8 : index
    %c0_88 = arith.constant 0 : index
    %120 = vector.load %arg4[%c8, %c0_88] : memref<9x32xf32, #tpu.memory_space<vmem>>, vector<1x32xf32>
    %121 = vector.shape_cast %120 : vector<1x32xf32> to vector<1x1x32xf32>
    %c1_89 = arith.constant 1 : index
    %c1_90 = arith.constant 1 : index
    %c0_91 = arith.constant 0 : index
    %122 = vector.load %arg11[%c1_89, %c1_90, %c0_91] : memref<18x18x32xf32, #tpu.memory_space<vmem>>, vector<16x16x32xf32>
    %123 = vector.broadcast %121 : vector<1x1x32xf32> to vector<16x16x32xf32>
    %124 = arith.mulf %122, %123 : vector<16x16x32xf32>
    %125 = arith.addf %119, %124 : vector<16x16x32xf32>
    %cst_92 = arith.constant dense<0.000000e+00> : vector<16x16xf32>
    %126 = vector.multi_reduction <add>, %125, %cst_92 [2] : vector<16x16x32xf32> to vector<16x16xf32>
    %127 = vector.shape_cast %126 : vector<16x16xf32> to vector<16x16x1xf32>
    %cst_93 = arith.constant 3.200000e+01 : f32
    %128 = vector.broadcast %cst_93 : f32 to vector<16x16x1xf32>
    %129 = arith.divf %127, %128 : vector<16x16x1xf32>
    %130 = vector.broadcast %129 : vector<16x16x1xf32> to vector<16x16x32xf32>
    %131 = arith.subf %125, %130 : vector<16x16x32xf32>
    %132 = arith.mulf %131, %131 : vector<16x16x32xf32>
    %cst_94 = arith.constant dense<0.000000e+00> : vector<16x16xf32>
    %133 = vector.multi_reduction <add>, %132, %cst_94 [2] : vector<16x16x32xf32> to vector<16x16xf32>
    %134 = vector.shape_cast %133 : vector<16x16xf32> to vector<16x16x1xf32>
    %cst_95 = arith.constant 3.200000e+01 : f32
    %135 = vector.broadcast %cst_95 : f32 to vector<16x16x1xf32>
    %136 = arith.divf %134, %135 : vector<16x16x1xf32>
    %137 = vector.broadcast %129 : vector<16x16x1xf32> to vector<16x16x32xf32>
    %138 = arith.subf %125, %137 : vector<16x16x32xf32>
    %cst_96 = arith.constant 9.99999997E-7 : f32
    %139 = vector.broadcast %cst_96 : f32 to vector<16x16x1xf32>
    %140 = arith.addf %136, %139 : vector<16x16x1xf32>
    %141 = math.rsqrt %140 : vector<16x16x1xf32>
    %142 = vector.broadcast %141 : vector<16x16x1xf32> to vector<16x16x32xf32>
    %143 = arith.mulf %138, %142 : vector<16x16x32xf32>
    %144 = vector.broadcast %68 : vector<1x1x32xf32> to vector<16x16x32xf32>
    %145 = arith.mulf %143, %144 : vector<16x16x32xf32>
    %146 = vector.broadcast %70 : vector<1x1x32xf32> to vector<16x16x32xf32>
    %147 = arith.addf %145, %146 : vector<16x16x32xf32>
    %c0_97 = arith.constant 0 : index
    %c0_98 = arith.constant 0 : index
    %c0_99 = arith.constant 0 : index
    %c0_100 = arith.constant 0 : index
    %c0_101 = arith.constant 0 : index
    %c0_102 = arith.constant 0 : index
    %148 = vector.load %arg7[%c0_97, %c0_98, %c0_99, %c0_100, %c0_101, %c0_102] : memref<1x2x2x16x16x32xf32, #tpu.memory_space<vmem>>, vector<1x1x1x16x16x32xf32>
    %149 = vector.shape_cast %148 : vector<1x1x1x16x16x32xf32> to vector<16x16x32xf32>
    %150 = vector.shape_cast %147 : vector<16x16x32xf32> to vector<1x1x1x16x16x32xf32>
    tpu.vector_store %arg7[%c0_97, %c0_98, %c0_99, %c0_100, %c0_101, %c0_102], %150 {strides = array<i32>} : memref<1x2x2x16x16x32xf32, #tpu.memory_space<vmem>>, vector<1x1x1x16x16x32xf32>,
    %cst_103 = arith.constant 0.000000e+00 : f32
    %151 = vector.broadcast %cst_103 : f32 to vector<16x16x32xf32>
    %c0_104 = arith.constant 0 : index
    %c0_105 = arith.constant 0 : index
    %152 = vector.load %arg4[%c0_104, %c0_105] : memref<9x32xf32, #tpu.memory_space<vmem>>, vector<1x32xf32>
    %153 = vector.shape_cast %152 : vector<1x32xf32> to vector<1x1x32xf32>
    %c0_106 = arith.constant 0 : index
    %c1_107 = arith.constant 1 : index
    %c0_108 = arith.constant 0 : index
    %154 = vector.load %arg10[%c0_106, %c1_107, %c0_108] : memref<18x18x32xf32, #tpu.memory_space<vmem>>, vector<16x16x32xf32>
    %155 = vector.broadcast %153 : vector<1x1x32xf32> to vector<16x16x32xf32>
    %156 = arith.mulf %154, %155 : vector<16x16x32xf32>
    %157 = arith.addf %151, %156 : vector<16x16x32xf32>
    %c1_109 = arith.constant 1 : index
    %c0_110 = arith.constant 0 : index
    %158 = vector.load %arg4[%c1_109, %c0_110] : memref<9x32xf32, #tpu.memory_space<vmem>>, vector<1x32xf32>
    %159 = vector.shape_cast %158 : vector<1x32xf32> to vector<1x1x32xf32>
    %c0_111 = arith.constant 0 : index
    %c1_112 = arith.constant 1 : index
    %c0_113 = arith.constant 0 : index
    %160 = vector.load %arg11[%c0_111, %c1_112, %c0_113] : memref<18x18x32xf32, #tpu.memory_space<vmem>>, vector<16x16x32xf32>
    %161 = vector.broadcast %159 : vector<1x1x32xf32> to vector<16x16x32xf32>
    %162 = arith.mulf %160, %161 : vector<16x16x32xf32>
    %163 = arith.addf %157, %162 : vector<16x16x32xf32>
    %c2_114 = arith.constant 2 : index
    %c0_115 = arith.constant 0 : index
    %164 = vector.load %arg4[%c2_114, %c0_115] : memref<9x32xf32, #tpu.memory_space<vmem>>, vector<1x32xf32>
    %165 = vector.shape_cast %164 : vector<1x32xf32> to vector<1x1x32xf32>
    %c0_116 = arith.constant 0 : index
    %c2_117 = arith.constant 2 : index
    %c0_118 = arith.constant 0 : index
    %166 = vector.load %arg10[%c0_116, %c2_117, %c0_118] : memref<18x18x32xf32, #tpu.memory_space<vmem>>, vector<16x16x32xf32>
    %167 = vector.broadcast %165 : vector<1x1x32xf32> to vector<16x16x32xf32>
    %168 = arith.mulf %166, %167 : vector<16x16x32xf32>
    %169 = arith.addf %163, %168 : vector<16x16x32xf32>
    %c3_119 = arith.constant 3 : index
    %c0_120 = arith.constant 0 : index
    %170 = vector.load %arg4[%c3_119, %c0_120] : memref<9x32xf32, #tpu.memory_space<vmem>>, vector<1x32xf32>
    %171 = vector.shape_cast %170 : vector<1x32xf32> to vector<1x1x32xf32>
    %c1_121 = arith.constant 1 : index
    %c1_122 = arith.constant 1 : index
    %c0_123 = arith.constant 0 : index
    %172 = vector.load %arg8[%c1_121, %c1_122, %c0_123] : memref<18x18x32xf32, #tpu.memory_space<vmem>>, vector<16x16x32xf32>
    %173 = vector.broadcast %171 : vector<1x1x32xf32> to vector<16x16x32xf32>
    %174 = arith.mulf %172, %173 : vector<16x16x32xf32>
    %175 = arith.addf %169, %174 : vector<16x16x32xf32>
    %c4_124 = arith.constant 4 : index
    %c0_125 = arith.constant 0 : index
    %176 = vector.load %arg4[%c4_124, %c0_125] : memref<9x32xf32, #tpu.memory_space<vmem>>, vector<1x32xf32>
    %177 = vector.shape_cast %176 : vector<1x32xf32> to vector<1x1x32xf32>
    %c1_126 = arith.constant 1 : index
    %c1_127 = arith.constant 1 : index
    %c0_128 = arith.constant 0 : index
    %178 = vector.load %arg9[%c1_126, %c1_127, %c0_128] : memref<18x18x32xf32, #tpu.memory_space<vmem>>, vector<16x16x32xf32>
    %179 = vector.broadcast %177 : vector<1x1x32xf32> to vector<16x16x32xf32>
    %180 = arith.mulf %178, %179 : vector<16x16x32xf32>
    %181 = arith.addf %175, %180 : vector<16x16x32xf32>
    %c5_129 = arith.constant 5 : index
    %c0_130 = arith.constant 0 : index
    %182 = vector.load %arg4[%c5_129, %c0_130] : memref<9x32xf32, #tpu.memory_space<vmem>>, vector<1x32xf32>
    %183 = vector.shape_cast %182 : vector<1x32xf32> to vector<1x1x32xf32>
    %c1_131 = arith.constant 1 : index
    %c2_132 = arith.constant 2 : index
    %c0_133 = arith.constant 0 : index
    %184 = vector.load %arg8[%c1_131, %c2_132, %c0_133] : memref<18x18x32xf32, #tpu.memory_space<vmem>>, vector<16x16x32xf32>
    %185 = vector.broadcast %183 : vector<1x1x32xf32> to vector<16x16x32xf32>
    %186 = arith.mulf %184, %185 : vector<16x16x32xf32>
    %187 = arith.addf %181, %186 : vector<16x16x32xf32>
    %c6_134 = arith.constant 6 : index
    %c0_135 = arith.constant 0 : index
    %188 = vector.load %arg4[%c6_134, %c0_135] : memref<9x32xf32, #tpu.memory_space<vmem>>, vector<1x32xf32>
    %189 = vector.shape_cast %188 : vector<1x32xf32> to vector<1x1x32xf32>
    %c1_136 = arith.constant 1 : index
    %c1_137 = arith.constant 1 : index
    %c0_138 = arith.constant 0 : index
    %190 = vector.load %arg10[%c1_136, %c1_137, %c0_138] : memref<18x18x32xf32, #tpu.memory_space<vmem>>, vector<16x16x32xf32>
    %191 = vector.broadcast %189 : vector<1x1x32xf32> to vector<16x16x32xf32>
    %192 = arith.mulf %190, %191 : vector<16x16x32xf32>
    %193 = arith.addf %187, %192 : vector<16x16x32xf32>
    %c7_139 = arith.constant 7 : index
    %c0_140 = arith.constant 0 : index
    %194 = vector.load %arg4[%c7_139, %c0_140] : memref<9x32xf32, #tpu.memory_space<vmem>>, vector<1x32xf32>
    %195 = vector.shape_cast %194 : vector<1x32xf32> to vector<1x1x32xf32>
    %c1_141 = arith.constant 1 : index
    %c1_142 = arith.constant 1 : index
    %c0_143 = arith.constant 0 : index
    %196 = vector.load %arg11[%c1_141, %c1_142, %c0_143] : memref<18x18x32xf32, #tpu.memory_space<vmem>>, vector<16x16x32xf32>
    %197 = vector.broadcast %195 : vector<1x1x32xf32> to vector<16x16x32xf32>
    %198 = arith.mulf %196, %197 : vector<16x16x32xf32>
    %199 = arith.addf %193, %198 : vector<16x16x32xf32>
    %c8_144 = arith.constant 8 : index
    %c0_145 = arith.constant 0 : index
    %200 = vector.load %arg4[%c8_144, %c0_145] : memref<9x32xf32, #tpu.memory_space<vmem>>, vector<1x32xf32>
    %201 = vector.shape_cast %200 : vector<1x32xf32> to vector<1x1x32xf32>
    %c1_146 = arith.constant 1 : index
    %c2_147 = arith.constant 2 : index
    %c0_148 = arith.constant 0 : index
    %202 = vector.load %arg10[%c1_146, %c2_147, %c0_148] : memref<18x18x32xf32, #tpu.memory_space<vmem>>, vector<16x16x32xf32>
    %203 = vector.broadcast %201 : vector<1x1x32xf32> to vector<16x16x32xf32>
    %204 = arith.mulf %202, %203 : vector<16x16x32xf32>
    %205 = arith.addf %199, %204 : vector<16x16x32xf32>
    %cst_149 = arith.constant dense<0.000000e+00> : vector<16x16xf32>
    %206 = vector.multi_reduction <add>, %205, %cst_149 [2] : vector<16x16x32xf32> to vector<16x16xf32>
    %207 = vector.shape_cast %206 : vector<16x16xf32> to vector<16x16x1xf32>
    %cst_150 = arith.constant 3.200000e+01 : f32
    %208 = vector.broadcast %cst_150 : f32 to vector<16x16x1xf32>
    %209 = arith.divf %207, %208 : vector<16x16x1xf32>
    %210 = vector.broadcast %209 : vector<16x16x1xf32> to vector<16x16x32xf32>
    %211 = arith.subf %205, %210 : vector<16x16x32xf32>
    %212 = arith.mulf %211, %211 : vector<16x16x32xf32>
    %cst_151 = arith.constant dense<0.000000e+00> : vector<16x16xf32>
    %213 = vector.multi_reduction <add>, %212, %cst_151 [2] : vector<16x16x32xf32> to vector<16x16xf32>
    %214 = vector.shape_cast %213 : vector<16x16xf32> to vector<16x16x1xf32>
    %cst_152 = arith.constant 3.200000e+01 : f32
    %215 = vector.broadcast %cst_152 : f32 to vector<16x16x1xf32>
    %216 = arith.divf %214, %215 : vector<16x16x1xf32>
    %217 = vector.broadcast %209 : vector<16x16x1xf32> to vector<16x16x32xf32>
    %218 = arith.subf %205, %217 : vector<16x16x32xf32>
    %cst_153 = arith.constant 9.99999997E-7 : f32
    %219 = vector.broadcast %cst_153 : f32 to vector<16x16x1xf32>
    %220 = arith.addf %216, %219 : vector<16x16x1xf32>
    %221 = math.rsqrt %220 : vector<16x16x1xf32>
    %222 = vector.broadcast %221 : vector<16x16x1xf32> to vector<16x16x32xf32>
    %223 = arith.mulf %218, %222 : vector<16x16x32xf32>
    %224 = vector.broadcast %68 : vector<1x1x32xf32> to vector<16x16x32xf32>
    %225 = arith.mulf %223, %224 : vector<16x16x32xf32>
    %226 = vector.broadcast %70 : vector<1x1x32xf32> to vector<16x16x32xf32>
    %227 = arith.addf %225, %226 : vector<16x16x32xf32>
    %c0_154 = arith.constant 0 : index
    %c0_155 = arith.constant 0 : index
    %c1_156 = arith.constant 1 : index
    %c0_157 = arith.constant 0 : index
    %c0_158 = arith.constant 0 : index
    %c0_159 = arith.constant 0 : index
    %228 = vector.load %arg7[%c0_154, %c0_155, %c1_156, %c0_157, %c0_158, %c0_159] : memref<1x2x2x16x16x32xf32, #tpu.memory_space<vmem>>, vector<1x1x1x16x16x32xf32>
    %229 = vector.shape_cast %228 : vector<1x1x1x16x16x32xf32> to vector<16x16x32xf32>
    %230 = vector.shape_cast %227 : vector<16x16x32xf32> to vector<1x1x1x16x16x32xf32>
    tpu.vector_store %arg7[%c0_154, %c0_155, %c1_156, %c0_157, %c0_158, %c0_159], %230 {strides = array<i32>} : memref<1x2x2x16x16x32xf32, #tpu.memory_space<vmem>>, vector<1x1x1x16x16x32xf32>,
    %cst_160 = arith.constant 0.000000e+00 : f32
    %231 = vector.broadcast %cst_160 : f32 to vector<16x16x32xf32>
    %c0_161 = arith.constant 0 : index
    %c0_162 = arith.constant 0 : index
    %232 = vector.load %arg4[%c0_161, %c0_162] : memref<9x32xf32, #tpu.memory_space<vmem>>, vector<1x32xf32>
    %233 = vector.shape_cast %232 : vector<1x32xf32> to vector<1x1x32xf32>
    %c1_163 = arith.constant 1 : index
    %c0_164 = arith.constant 0 : index
    %c0_165 = arith.constant 0 : index
    %234 = vector.load %arg9[%c1_163, %c0_164, %c0_165] : memref<18x18x32xf32, #tpu.memory_space<vmem>>, vector<16x16x32xf32>
    %235 = vector.broadcast %233 : vector<1x1x32xf32> to vector<16x16x32xf32>
    %236 = arith.mulf %234, %235 : vector<16x16x32xf32>
    %237 = arith.addf %231, %236 : vector<16x16x32xf32>
    %c1_166 = arith.constant 1 : index
    %c0_167 = arith.constant 0 : index
    %238 = vector.load %arg4[%c1_166, %c0_167] : memref<9x32xf32, #tpu.memory_space<vmem>>, vector<1x32xf32>
    %239 = vector.shape_cast %238 : vector<1x32xf32> to vector<1x1x32xf32>
    %c1_168 = arith.constant 1 : index
    %c1_169 = arith.constant 1 : index
    %c0_170 = arith.constant 0 : index
    %240 = vector.load %arg8[%c1_168, %c1_169, %c0_170] : memref<18x18x32xf32, #tpu.memory_space<vmem>>, vector<16x16x32xf32>
    %241 = vector.broadcast %239 : vector<1x1x32xf32> to vector<16x16x32xf32>
    %242 = arith.mulf %240, %241 : vector<16x16x32xf32>
    %243 = arith.addf %237, %242 : vector<16x16x32xf32>
    %c2_171 = arith.constant 2 : index
    %c0_172 = arith.constant 0 : index
    %244 = vector.load %arg4[%c2_171, %c0_172] : memref<9x32xf32, #tpu.memory_space<vmem>>, vector<1x32xf32>
    %245 = vector.shape_cast %244 : vector<1x32xf32> to vector<1x1x32xf32>
    %c1_173 = arith.constant 1 : index
    %c1_174 = arith.constant 1 : index
    %c0_175 = arith.constant 0 : index
    %246 = vector.load %arg9[%c1_173, %c1_174, %c0_175] : memref<18x18x32xf32, #tpu.memory_space<vmem>>, vector<16x16x32xf32>
    %247 = vector.broadcast %245 : vector<1x1x32xf32> to vector<16x16x32xf32>
    %248 = arith.mulf %246, %247 : vector<16x16x32xf32>
    %249 = arith.addf %243, %248 : vector<16x16x32xf32>
    %c3_176 = arith.constant 3 : index
    %c0_177 = arith.constant 0 : index
    %250 = vector.load %arg4[%c3_176, %c0_177] : memref<9x32xf32, #tpu.memory_space<vmem>>, vector<1x32xf32>
    %251 = vector.shape_cast %250 : vector<1x32xf32> to vector<1x1x32xf32>
    %c1_178 = arith.constant 1 : index
    %c0_179 = arith.constant 0 : index
    %c0_180 = arith.constant 0 : index
    %252 = vector.load %arg11[%c1_178, %c0_179, %c0_180] : memref<18x18x32xf32, #tpu.memory_space<vmem>>, vector<16x16x32xf32>
    %253 = vector.broadcast %251 : vector<1x1x32xf32> to vector<16x16x32xf32>
    %254 = arith.mulf %252, %253 : vector<16x16x32xf32>
    %255 = arith.addf %249, %254 : vector<16x16x32xf32>
    %c4_181 = arith.constant 4 : index
    %c0_182 = arith.constant 0 : index
    %256 = vector.load %arg4[%c4_181, %c0_182] : memref<9x32xf32, #tpu.memory_space<vmem>>, vector<1x32xf32>
    %257 = vector.shape_cast %256 : vector<1x32xf32> to vector<1x1x32xf32>
    %c1_183 = arith.constant 1 : index
    %c1_184 = arith.constant 1 : index
    %c0_185 = arith.constant 0 : index
    %258 = vector.load %arg10[%c1_183, %c1_184, %c0_185] : memref<18x18x32xf32, #tpu.memory_space<vmem>>, vector<16x16x32xf32>
    %259 = vector.broadcast %257 : vector<1x1x32xf32> to vector<16x16x32xf32>
    %260 = arith.mulf %258, %259 : vector<16x16x32xf32>
    %261 = arith.addf %255, %260 : vector<16x16x32xf32>
    %c5_186 = arith.constant 5 : index
    %c0_187 = arith.constant 0 : index
    %262 = vector.load %arg4[%c5_186, %c0_187] : memref<9x32xf32, #tpu.memory_space<vmem>>, vector<1x32xf32>
    %263 = vector.shape_cast %262 : vector<1x32xf32> to vector<1x1x32xf32>
    %c1_188 = arith.constant 1 : index
    %c1_189 = arith.constant 1 : index
    %c0_190 = arith.constant 0 : index
    %264 = vector.load %arg11[%c1_188, %c1_189, %c0_190] : memref<18x18x32xf32, #tpu.memory_space<vmem>>, vector<16x16x32xf32>
    %265 = vector.broadcast %263 : vector<1x1x32xf32> to vector<16x16x32xf32>
    %266 = arith.mulf %264, %265 : vector<16x16x32xf32>
    %267 = arith.addf %261, %266 : vector<16x16x32xf32>
    %c6_191 = arith.constant 6 : index
    %c0_192 = arith.constant 0 : index
    %268 = vector.load %arg4[%c6_191, %c0_192] : memref<9x32xf32, #tpu.memory_space<vmem>>, vector<1x32xf32>
    %269 = vector.shape_cast %268 : vector<1x32xf32> to vector<1x1x32xf32>
    %c2_193 = arith.constant 2 : index
    %c0_194 = arith.constant 0 : index
    %c0_195 = arith.constant 0 : index
    %270 = vector.load %arg9[%c2_193, %c0_194, %c0_195] : memref<18x18x32xf32, #tpu.memory_space<vmem>>, vector<16x16x32xf32>
    %271 = vector.broadcast %269 : vector<1x1x32xf32> to vector<16x16x32xf32>
    %272 = arith.mulf %270, %271 : vector<16x16x32xf32>
    %273 = arith.addf %267, %272 : vector<16x16x32xf32>
    %c7_196 = arith.constant 7 : index
    %c0_197 = arith.constant 0 : index
    %274 = vector.load %arg4[%c7_196, %c0_197] : memref<9x32xf32, #tpu.memory_space<vmem>>, vector<1x32xf32>
    %275 = vector.shape_cast %274 : vector<1x32xf32> to vector<1x1x32xf32>
    %c2_198 = arith.constant 2 : index
    %c1_199 = arith.constant 1 : index
    %c0_200 = arith.constant 0 : index
    %276 = vector.load %arg8[%c2_198, %c1_199, %c0_200] : memref<18x18x32xf32, #tpu.memory_space<vmem>>, vector<16x16x32xf32>
    %277 = vector.broadcast %275 : vector<1x1x32xf32> to vector<16x16x32xf32>
    %278 = arith.mulf %276, %277 : vector<16x16x32xf32>
    %279 = arith.addf %273, %278 : vector<16x16x32xf32>
    %c8_201 = arith.constant 8 : index
    %c0_202 = arith.constant 0 : index
    %280 = vector.load %arg4[%c8_201, %c0_202] : memref<9x32xf32, #tpu.memory_space<vmem>>, vector<1x32xf32>
    %281 = vector.shape_cast %280 : vector<1x32xf32> to vector<1x1x32xf32>
    %c2_203 = arith.constant 2 : index
    %c1_204 = arith.constant 1 : index
    %c0_205 = arith.constant 0 : index
    %282 = vector.load %arg9[%c2_203, %c1_204, %c0_205] : memref<18x18x32xf32, #tpu.memory_space<vmem>>, vector<16x16x32xf32>
    %283 = vector.broadcast %281 : vector<1x1x32xf32> to vector<16x16x32xf32>
    %284 = arith.mulf %282, %283 : vector<16x16x32xf32>
    %285 = arith.addf %279, %284 : vector<16x16x32xf32>
    %cst_206 = arith.constant dense<0.000000e+00> : vector<16x16xf32>
    %286 = vector.multi_reduction <add>, %285, %cst_206 [2] : vector<16x16x32xf32> to vector<16x16xf32>
    %287 = vector.shape_cast %286 : vector<16x16xf32> to vector<16x16x1xf32>
    %cst_207 = arith.constant 3.200000e+01 : f32
    %288 = vector.broadcast %cst_207 : f32 to vector<16x16x1xf32>
    %289 = arith.divf %287, %288 : vector<16x16x1xf32>
    %290 = vector.broadcast %289 : vector<16x16x1xf32> to vector<16x16x32xf32>
    %291 = arith.subf %285, %290 : vector<16x16x32xf32>
    %292 = arith.mulf %291, %291 : vector<16x16x32xf32>
    %cst_208 = arith.constant dense<0.000000e+00> : vector<16x16xf32>
    %293 = vector.multi_reduction <add>, %292, %cst_208 [2] : vector<16x16x32xf32> to vector<16x16xf32>
    %294 = vector.shape_cast %293 : vector<16x16xf32> to vector<16x16x1xf32>
    %cst_209 = arith.constant 3.200000e+01 : f32
    %295 = vector.broadcast %cst_209 : f32 to vector<16x16x1xf32>
    %296 = arith.divf %294, %295 : vector<16x16x1xf32>
    %297 = vector.broadcast %289 : vector<16x16x1xf32> to vector<16x16x32xf32>
    %298 = arith.subf %285, %297 : vector<16x16x32xf32>
    %cst_210 = arith.constant 9.99999997E-7 : f32
    %299 = vector.broadcast %cst_210 : f32 to vector<16x16x1xf32>
    %300 = arith.addf %296, %299 : vector<16x16x1xf32>
    %301 = math.rsqrt %300 : vector<16x16x1xf32>
    %302 = vector.broadcast %301 : vector<16x16x1xf32> to vector<16x16x32xf32>
    %303 = arith.mulf %298, %302 : vector<16x16x32xf32>
    %304 = vector.broadcast %68 : vector<1x1x32xf32> to vector<16x16x32xf32>
    %305 = arith.mulf %303, %304 : vector<16x16x32xf32>
    %306 = vector.broadcast %70 : vector<1x1x32xf32> to vector<16x16x32xf32>
    %307 = arith.addf %305, %306 : vector<16x16x32xf32>
    %c0_211 = arith.constant 0 : index
    %c1_212 = arith.constant 1 : index
    %c0_213 = arith.constant 0 : index
    %c0_214 = arith.constant 0 : index
    %c0_215 = arith.constant 0 : index
    %c0_216 = arith.constant 0 : index
    %308 = vector.load %arg7[%c0_211, %c1_212, %c0_213, %c0_214, %c0_215, %c0_216] : memref<1x2x2x16x16x32xf32, #tpu.memory_space<vmem>>, vector<1x1x1x16x16x32xf32>
    %309 = vector.shape_cast %308 : vector<1x1x1x16x16x32xf32> to vector<16x16x32xf32>
    %310 = vector.shape_cast %307 : vector<16x16x32xf32> to vector<1x1x1x16x16x32xf32>
    tpu.vector_store %arg7[%c0_211, %c1_212, %c0_213, %c0_214, %c0_215, %c0_216], %310 {strides = array<i32>} : memref<1x2x2x16x16x32xf32, #tpu.memory_space<vmem>>, vector<1x1x1x16x16x32xf32>,
    %cst_217 = arith.constant 0.000000e+00 : f32
    %311 = vector.broadcast %cst_217 : f32 to vector<16x16x32xf32>
    %c0_218 = arith.constant 0 : index
    %c0_219 = arith.constant 0 : index
    %312 = vector.load %arg4[%c0_218, %c0_219] : memref<9x32xf32, #tpu.memory_space<vmem>>, vector<1x32xf32>
    %313 = vector.shape_cast %312 : vector<1x32xf32> to vector<1x1x32xf32>
    %c1_220 = arith.constant 1 : index
    %c1_221 = arith.constant 1 : index
    %c0_222 = arith.constant 0 : index
    %314 = vector.load %arg8[%c1_220, %c1_221, %c0_222] : memref<18x18x32xf32, #tpu.memory_space<vmem>>, vector<16x16x32xf32>
    %315 = vector.broadcast %313 : vector<1x1x32xf32> to vector<16x16x32xf32>
    %316 = arith.mulf %314, %315 : vector<16x16x32xf32>
    %317 = arith.addf %311, %316 : vector<16x16x32xf32>
    %c1_223 = arith.constant 1 : index
    %c0_224 = arith.constant 0 : index
    %318 = vector.load %arg4[%c1_223, %c0_224] : memref<9x32xf32, #tpu.memory_space<vmem>>, vector<1x32xf32>
    %319 = vector.shape_cast %318 : vector<1x32xf32> to vector<1x1x32xf32>
    %c1_225 = arith.constant 1 : index
    %c1_226 = arith.constant 1 : index
    %c0_227 = arith.constant 0 : index
    %320 = vector.load %arg9[%c1_225, %c1_226, %c0_227] : memref<18x18x32xf32, #tpu.memory_space<vmem>>, vector<16x16x32xf32>
    %321 = vector.broadcast %319 : vector<1x1x32xf32> to vector<16x16x32xf32>
    %322 = arith.mulf %320, %321 : vector<16x16x32xf32>
    %323 = arith.addf %317, %322 : vector<16x16x32xf32>
    %c2_228 = arith.constant 2 : index
    %c0_229 = arith.constant 0 : index
    %324 = vector.load %arg4[%c2_228, %c0_229] : memref<9x32xf32, #tpu.memory_space<vmem>>, vector<1x32xf32>
    %325 = vector.shape_cast %324 : vector<1x32xf32> to vector<1x1x32xf32>
    %c1_230 = arith.constant 1 : index
    %c2_231 = arith.constant 2 : index
    %c0_232 = arith.constant 0 : index
    %326 = vector.load %arg8[%c1_230, %c2_231, %c0_232] : memref<18x18x32xf32, #tpu.memory_space<vmem>>, vector<16x16x32xf32>
    %327 = vector.broadcast %325 : vector<1x1x32xf32> to vector<16x16x32xf32>
    %328 = arith.mulf %326, %327 : vector<16x16x32xf32>
    %329 = arith.addf %323, %328 : vector<16x16x32xf32>
    %c3_233 = arith.constant 3 : index
    %c0_234 = arith.constant 0 : index
    %330 = vector.load %arg4[%c3_233, %c0_234] : memref<9x32xf32, #tpu.memory_space<vmem>>, vector<1x32xf32>
    %331 = vector.shape_cast %330 : vector<1x32xf32> to vector<1x1x32xf32>
    %c1_235 = arith.constant 1 : index
    %c1_236 = arith.constant 1 : index
    %c0_237 = arith.constant 0 : index
    %332 = vector.load %arg10[%c1_235, %c1_236, %c0_237] : memref<18x18x32xf32, #tpu.memory_space<vmem>>, vector<16x16x32xf32>
    %333 = vector.broadcast %331 : vector<1x1x32xf32> to vector<16x16x32xf32>
    %334 = arith.mulf %332, %333 : vector<16x16x32xf32>
    %335 = arith.addf %329, %334 : vector<16x16x32xf32>
    %c4_238 = arith.constant 4 : index
    %c0_239 = arith.constant 0 : index
    %336 = vector.load %arg4[%c4_238, %c0_239] : memref<9x32xf32, #tpu.memory_space<vmem>>, vector<1x32xf32>
    %337 = vector.shape_cast %336 : vector<1x32xf32> to vector<1x1x32xf32>
    %c1_240 = arith.constant 1 : index
    %c1_241 = arith.constant 1 : index
    %c0_242 = arith.constant 0 : index
    %338 = vector.load %arg11[%c1_240, %c1_241, %c0_242] : memref<18x18x32xf32, #tpu.memory_space<vmem>>, vector<16x16x32xf32>
    %339 = vector.broadcast %337 : vector<1x1x32xf32> to vector<16x16x32xf32>
    %340 = arith.mulf %338, %339 : vector<16x16x32xf32>
    %341 = arith.addf %335, %340 : vector<16x16x32xf32>
    %c5_243 = arith.constant 5 : index
    %c0_244 = arith.constant 0 : index
    %342 = vector.load %arg4[%c5_243, %c0_244] : memref<9x32xf32, #tpu.memory_space<vmem>>, vector<1x32xf32>
    %343 = vector.shape_cast %342 : vector<1x32xf32> to vector<1x1x32xf32>
    %c1_245 = arith.constant 1 : index
    %c2_246 = arith.constant 2 : index
    %c0_247 = arith.constant 0 : index
    %344 = vector.load %arg10[%c1_245, %c2_246, %c0_247] : memref<18x18x32xf32, #tpu.memory_space<vmem>>, vector<16x16x32xf32>
    %345 = vector.broadcast %343 : vector<1x1x32xf32> to vector<16x16x32xf32>
    %346 = arith.mulf %344, %345 : vector<16x16x32xf32>
    %347 = arith.addf %341, %346 : vector<16x16x32xf32>
    %c6_248 = arith.constant 6 : index
    %c0_249 = arith.constant 0 : index
    %348 = vector.load %arg4[%c6_248, %c0_249] : memref<9x32xf32, #tpu.memory_space<vmem>>, vector<1x32xf32>
    %349 = vector.shape_cast %348 : vector<1x32xf32> to vector<1x1x32xf32>
    %c2_250 = arith.constant 2 : index
    %c1_251 = arith.constant 1 : index
    %c0_252 = arith.constant 0 : index
    %350 = vector.load %arg8[%c2_250, %c1_251, %c0_252] : memref<18x18x32xf32, #tpu.memory_space<vmem>>, vector<16x16x32xf32>
    %351 = vector.broadcast %349 : vector<1x1x32xf32> to vector<16x16x32xf32>
    %352 = arith.mulf %350, %351 : vector<16x16x32xf32>
    %353 = arith.addf %347, %352 : vector<16x16x32xf32>
    %c7_253 = arith.constant 7 : index
    %c0_254 = arith.constant 0 : index
    %354 = vector.load %arg4[%c7_253, %c0_254] : memref<9x32xf32, #tpu.memory_space<vmem>>, vector<1x32xf32>
    %355 = vector.shape_cast %354 : vector<1x32xf32> to vector<1x1x32xf32>
    %c2_255 = arith.constant 2 : index
    %c1_256 = arith.constant 1 : index
    %c0_257 = arith.constant 0 : index
    %356 = vector.load %arg9[%c2_255, %c1_256, %c0_257] : memref<18x18x32xf32, #tpu.memory_space<vmem>>, vector<16x16x32xf32>
    %357 = vector.broadcast %355 : vector<1x1x32xf32> to vector<16x16x32xf32>
    %358 = arith.mulf %356, %357 : vector<16x16x32xf32>
    %359 = arith.addf %353, %358 : vector<16x16x32xf32>
    %c8_258 = arith.constant 8 : index
    %c0_259 = arith.constant 0 : index
    %360 = vector.load %arg4[%c8_258, %c0_259] : memref<9x32xf32, #tpu.memory_space<vmem>>, vector<1x32xf32>
    %361 = vector.shape_cast %360 : vector<1x32xf32> to vector<1x1x32xf32>
    %c2_260 = arith.constant 2 : index
    %c2_261 = arith.constant 2 : index
    %c0_262 = arith.constant 0 : index
    %362 = vector.load %arg8[%c2_260, %c2_261, %c0_262] : memref<18x18x32xf32, #tpu.memory_space<vmem>>, vector<16x16x32xf32>
    %363 = vector.broadcast %361 : vector<1x1x32xf32> to vector<16x16x32xf32>
    %364 = arith.mulf %362, %363 : vector<16x16x32xf32>
    %365 = arith.addf %359, %364 : vector<16x16x32xf32>
    %cst_263 = arith.constant dense<0.000000e+00> : vector<16x16xf32>
    %366 = vector.multi_reduction <add>, %365, %cst_263 [2] : vector<16x16x32xf32> to vector<16x16xf32>
    %367 = vector.shape_cast %366 : vector<16x16xf32> to vector<16x16x1xf32>
    %cst_264 = arith.constant 3.200000e+01 : f32
    %368 = vector.broadcast %cst_264 : f32 to vector<16x16x1xf32>
    %369 = arith.divf %367, %368 : vector<16x16x1xf32>
    %370 = vector.broadcast %369 : vector<16x16x1xf32> to vector<16x16x32xf32>
    %371 = arith.subf %365, %370 : vector<16x16x32xf32>
    %372 = arith.mulf %371, %371 : vector<16x16x32xf32>
    %cst_265 = arith.constant dense<0.000000e+00> : vector<16x16xf32>
    %373 = vector.multi_reduction <add>, %372, %cst_265 [2] : vector<16x16x32xf32> to vector<16x16xf32>
    %374 = vector.shape_cast %373 : vector<16x16xf32> to vector<16x16x1xf32>
    %cst_266 = arith.constant 3.200000e+01 : f32
    %375 = vector.broadcast %cst_266 : f32 to vector<16x16x1xf32>
    %376 = arith.divf %374, %375 : vector<16x16x1xf32>
    %377 = vector.broadcast %369 : vector<16x16x1xf32> to vector<16x16x32xf32>
    %378 = arith.subf %365, %377 : vector<16x16x32xf32>
    %cst_267 = arith.constant 9.99999997E-7 : f32
    %379 = vector.broadcast %cst_267 : f32 to vector<16x16x1xf32>
    %380 = arith.addf %376, %379 : vector<16x16x1xf32>
    %381 = math.rsqrt %380 : vector<16x16x1xf32>
    %382 = vector.broadcast %381 : vector<16x16x1xf32> to vector<16x16x32xf32>
    %383 = arith.mulf %378, %382 : vector<16x16x32xf32>
    %384 = vector.broadcast %68 : vector<1x1x32xf32> to vector<16x16x32xf32>
    %385 = arith.mulf %383, %384 : vector<16x16x32xf32>
    %386 = vector.broadcast %70 : vector<1x1x32xf32> to vector<16x16x32xf32>
    %387 = arith.addf %385, %386 : vector<16x16x32xf32>
    %c0_268 = arith.constant 0 : index
    %c1_269 = arith.constant 1 : index
    %c1_270 = arith.constant 1 : index
    %c0_271 = arith.constant 0 : index
    %c0_272 = arith.constant 0 : index
    %c0_273 = arith.constant 0 : index
    %388 = vector.load %arg7[%c0_268, %c1_269, %c1_270, %c0_271, %c0_272, %c0_273] : memref<1x2x2x16x16x32xf32, #tpu.memory_space<vmem>>, vector<1x1x1x16x16x32xf32>
    %389 = vector.shape_cast %388 : vector<1x1x1x16x16x32xf32> to vector<16x16x32xf32>
    %390 = vector.shape_cast %387 : vector<16x16x32xf32> to vector<1x1x1x16x16x32xf32>
    tpu.vector_store %arg7[%c0_268, %c1_269, %c1_270, %c0_271, %c0_272, %c0_273], %390 {strides = array<i32>} : memref<1x2x2x16x16x32xf32, #tpu.memory_space<vmem>>, vector<1x1x1x16x16x32xf32>,
    return
  }
  func.func @transform_0(%arg0: i32) -> (i32, i32, i32, i32) {
    %c0_i32 = arith.constant 0 : i32
    %c0_i32_0 = arith.constant 0 : i32
    %c0_i32_1 = arith.constant 0 : i32
    %c0_i32_2 = arith.constant 0 : i32
    return %arg0, %c0_i32, %c0_i32_0, %c0_i32_1 : i32, i32, i32, i32
  }
  func.func @transform_1(%arg0: i32) -> (i32, i32) {
    %c0_i32 = arith.constant 0 : i32
    %c0_i32_0 = arith.constant 0 : i32
    %c0_i32_1 = arith.constant 0 : i32
    return %c0_i32, %c0_i32_0 : i32, i32
  }
  func.func @transform_2(%arg0: i32) -> (i32, i32) {
    %c0_i32 = arith.constant 0 : i32
    %c0_i32_0 = arith.constant 0 : i32
    %c0_i32_1 = arith.constant 0 : i32
    return %c0_i32, %c0_i32_0 : i32, i32
  }
  func.func @transform_3(%arg0: i32) -> (i32, i32) {
    %c0_i32 = arith.constant 0 : i32
    %c0_i32_0 = arith.constant 0 : i32
    %c0_i32_1 = arith.constant 0 : i32
    return %c0_i32, %c0_i32_0 : i32, i32
  }
  func.func @transform_4(%arg0: i32) -> (i32, i32) {
    %c0_i32 = arith.constant 0 : i32
    %c0_i32_0 = arith.constant 0 : i32
    %c0_i32_1 = arith.constant 0 : i32
    return %c0_i32, %c0_i32_0 : i32, i32
  }
  func.func @transform_5(%arg0: i32) -> (i32, i32) {
    %c0_i32 = arith.constant 0 : i32
    %c0_i32_0 = arith.constant 0 : i32
    %c0_i32_1 = arith.constant 0 : i32
    return %c0_i32, %c0_i32_0 : i32, i32
  }
  func.func @transform_6(%arg0: i32) -> (i32, i32, i32, i32, i32, i32) {
    %c0_i32 = arith.constant 0 : i32
    %c0_i32_0 = arith.constant 0 : i32
    %c0_i32_1 = arith.constant 0 : i32
    %c0_i32_2 = arith.constant 0 : i32
    %c0_i32_3 = arith.constant 0 : i32
    %c0_i32_4 = arith.constant 0 : i32
    return %arg0, %c0_i32, %c0_i32_0, %c0_i32_1, %c0_i32_2, %c0_i32_3 : i32, i32, i32, i32, i32, i32
  }
}

</mosaic_0001>

<llo_original>
// kernel: tile.9
$region0: #{tile.9}
  %s0 = inlined_call_operand.vmem [shape: f32[4,32], index: 0, kind: input, shape index: {}]
  %s1 = inlined_call_operand.vmem [shape: f32[1,128], index: 1, kind: output, shape index: {}]
  $region1: #{tile.9} parent=0
    #allocation0 [shape = 'u8[4096]{0}', space=vmem, size = 0x1000, scoped, tag = 'scoped mem for output reshape']
    #allocation1 [shape = 'u8[4096]{0}', space=vmem, size = 0x1000, scoped, tag = 'scoped mem for input reshape']
    %s3 = sshllo.u32 0, 4
    %v4 = vld [vmem:[%s0] sm:%s3]
    %5 = vst [vmem:[#allocation1] sm:%s3] %v4
    %v6 = vld [vmem:[#allocation1] sm:$0x1]
    %vm7 = vcmask 261120
    %8 = vst.msk [vmem:[#allocation0] sm:$0x1] %vm7, %v6
    %s9 = scalar_lea.vmem [#allocation1], 3
    %v10 = vld [vmem:[%s9] sm:$0x1]
    %11 = vrot.lane.b32.xlu0 %v10, 96
    %v12 = vpop.permute.xlu0 %11
    %vm13 = vcmask 1048320
    %14 = vst.msk [vmem:[#allocation0] sm:$0x1] %vm13, %v12
    %s15 = scalar_lea.vmem [#allocation1], 2
    %v16 = vld [vmem:[%s15] sm:$0x1]
    %17 = vrot.lane.b32.xlu0 %v16, 64
    %v18 = vpop.permute.xlu0 %17
    %vm19 = vcmask 785920
    %20 = vst.msk [vmem:[#allocation0] sm:$0x1] %vm19, %v18
    %s21 = scalar_lea.vmem [#allocation1], 1
    %v22 = vld [vmem:[%s21] sm:$0x1]
    %23 = vrot.lane.b32.xlu0 %v22, 32
    %v24 = vpop.permute.xlu0 %23
    %vm25 = vcmask 523520
    %26 = vst.msk [vmem:[#allocation0] sm:$0x1] %vm25, %v24
    %s28 = sshllo.u32 0, 1
    %v30 = vld [vmem:[#allocation0] sm:%s28]
    %s31 = sshllo.u32 0, 1
    %32 = vst [vmem:[%s1] sm:%s31] %v30

// kernel: tile.8
$region0: #{tile.8}
  #allocation0 [shape = 's32[1]{0}', space=sflag, size = 0x4, scoped, tag = 'scoped memory for tile.8']
  %s0 = inlined_call_operand.vmem [shape: f32[32], index: 0, kind: input, shape index: {}]
  %s1 = inlined_call_operand.vmem [shape: f32[4,32], index: 1, kind: output, shape index: {}]
  // Predicated region
  $region2: #{tile.8} parent=0 // pred_check
    _
  $region3: #{tile.8} parent=0 // pred_check_branch
    %3 = sbr.rel (0) target = $region5
  $region4: #{tile.8} parent=0 // pred_region
    _
  $region5: #{tile.8} parent=0 // pred_fallthru
    _
  %v4 = vld [vmem:[%s0] ss:$0 sm:$0xff]
  %5 = vst [vmem:[%s1] sm:$0xf] %v4

// kernel: scale_block.1
$region0: #{scale_block.1}
  #allocation0 [shape = 'u32[]', space=smem, size = 0x4, offset = 0x4, fixed_abs, tag = 'smem constant byte address 0x4 - core index']
  #allocation1 [shape = 'u32[144,128]{1,0:T(1,128)}', space=vmem, size = 0x12000, scoped, tag = 'internal scratch']
  #allocation2 [shape = 'f32[18,18,32]{2,1,0:T(8,128)}', space=vmem, size = 0x36000, scoped, tag = 'scratch operand']
  #allocation3 [shape = 'f32[18,18,32]{2,1,0:T(8,128)}', space=vmem, size = 0x36000, scoped, tag = 'scratch operand']
  #allocation4 [shape = 'f32[18,18,32]{2,1,0:T(8,128)}', space=vmem, size = 0x36000, scoped, tag = 'scratch operand']
  #allocation5 [shape = 'f32[18,18,32]{2,1,0:T(8,128)}', space=vmem, size = 0x36000, scoped, tag = 'scratch operand']
  %s0 = inlined_call_operand.hbm [shape: f32[2,16,16,32], index: 0, kind: input, shape index: {}]
  %s1 = inlined_call_operand.vmem [shape: f32[32,128], index: 1, kind: input, shape index: {}]
  %s2 = inlined_call_operand.vmem [shape: f32[1,128], index: 2, kind: input, shape index: {}]
  %s3 = inlined_call_operand.vmem [shape: f32[9,32], index: 3, kind: input, shape index: {}]
  %s4 = inlined_call_operand.vmem [shape: f32[1,32], index: 4, kind: input, shape index: {}]
  %s5 = inlined_call_operand.vmem [shape: f32[1,32], index: 5, kind: input, shape index: {}]
  %s6 = inlined_call_operand.vmem [shape: f32[2,2,2,16,16,32], index: 6, kind: output, shape index: {}]
  %s7 = sld [smem:[#allocation0]]
  $region61: #{scale_block.1} parent=0
    _
  %s9 = ssub.s32 1, %s7
  %s10 = scalar_select 0, %s9, %s7
  $region1: #{scale_block.1} parent=0
    #allocation6 [shape = 'u8[262144]{0}', space=vmem, size = 0x40000, scoped, tag = 'input window, operand 0']
    #allocation7 [shape = 's32[2]{0}', space=sflag, size = 0x8, scoped, tag = 'scoped memory for scale_block.1']
    %11 = vsyncpa [#allocation7], 0
    %s12 = scalar_lea.sflag [#allocation7], 1
    %13 = vsyncpa %s12, 0
    loop: start=0, step=1, limit=4
    $region2: #{scale_block.1} parent=1 // loop_pre_header
      _
    $region3: #{scale_block.1} parent=1 // loop_header
      %s15 = sphi 0, %s19
      %p16 = scmp.ge.s32.totalorder %s15, 4
      %s25 = sphi 0, %s27
      %s28 = sphi 0, %s25
      %s29 = sphi 0, %s28
      %s45 = sphi 0, %s29
      %s49 = sphi 0, %s49
      %s51 = sphi 0, %s49
      %s52 = sphi 0, %s51
      %s66 = sphi 0, %s52
      %s70 = sphi 0, %s70
      %s72 = sphi 0, %s70
      %s73 = sphi 0, %s72
      %s87 = sphi 0, %s73
      %s91 = sphi 0, %s91
      %s93 = sphi 0, %s91
      %s94 = sphi 0, %s93
      %s108 = sphi 0, %s94
      %s112 = sphi 0, %s112
      %s114 = sphi 0, %s112
      %s115 = sphi 0, %s114
      %s129 = sphi 0, %s115
      %s133 = sphi 0, %s133
      %s135 = sphi 0, %s133
      %s136 = sphi 0, %s135
      %s150 = sphi 0, %s136
      %s156 = sphi 0, %s158
      %s159 = sphi 0, %s156
      %s160 = sphi 0, %s159
      %s176 = sphi 0, %s160
    $region4: #{scale_block.1} parent=1 // loop_header_branch
      %18 = sbr.rel (%p16) target = $region8
    $region5: #{scale_block.1} parent=1 // loop_body
      %s20 = ssub.s32 %s15, 1
      %s21 = ssub.s32 %s15, 2
      %s22 = sadd.s32 %s15, 1
      %s23 = ssub.s32 %s15, %s22
      %p24 = scmp.eq.s32.totalorder %s23, 0
      %s26 = sadd.s32 %s25, 1
      %s27 = scalar_select %p24, %s25, %s26
      %p30 = pneg %p24
      %p31 = scmp.eq.s32.totalorder %s15, 1
      %p32 = por %p30, %p31
      %p33 = scmp.ne.s32.totalorder %s25, %s28
      %p34 = scmp.eq.s32.totalorder %s15, 0
      %p35 = por %p33, %p34
      %p36 = scmp.ne.s32.totalorder %s25, %s28
      %p37 = scmp.eq.s32.totalorder %s20, 1
      %p38 = por %p36, %p37
      %p39 = scmp.ne.s32.totalorder %s28, %s29
      %p40 = scmp.eq.s32.totalorder %s20, 0
      %p41 = por %p39, %p40
      %p42 = scmp.ne.s32.totalorder %s28, %s29
      %p43 = scmp.eq.s32.totalorder %s21, 1
      %p44 = por %p42, %p43
      %p46 = scmp.ne.s32.totalorder %s29, %s45
      %p47 = scmp.eq.s32.totalorder %s21, 0
      %p48 = por %p46, %p47
      %s50 = sadd.s32 %s49, 1
      %p53 = scmp.eq.s32.totalorder %s15, 1
      %p54 = scmp.ne.s32.totalorder %s49, %s51
      %p55 = scmp.eq.s32.totalorder %s15, 0
      %p56 = por %p54, %p55
      %p57 = scmp.ne.s32.totalorder %s49, %s51
      %p58 = scmp.eq.s32.totalorder %s20, 1
      %p59 = por %p57, %p58
      %p60 = scmp.ne.s32.totalorder %s51, %s52
      %p61 = scmp.eq.s32.totalorder %s20, 0
      %p62 = por %p60, %p61
      %p63 = scmp.ne.s32.totalorder %s51, %s52
      %p64 = scmp.eq.s32.totalorder %s21, 1
      %p65 = por %p63, %p64
      %p67 = scmp.ne.s32.totalorder %s52, %s66
      %p68 = scmp.eq.s32.totalorder %s21, 0
      %p69 = por %p67, %p68
      %s71 = sadd.s32 %s70, 1
      %p74 = scmp.eq.s32.totalorder %s15, 1
      %p75 = scmp.ne.s32.totalorder %s70, %s72
      %p76 = scmp.eq.s32.totalorder %s15, 0
      %p77 = por %p75, %p76
      %p78 = scmp.ne.s32.totalorder %s70, %s72
      %p79 = scmp.eq.s32.totalorder %s20, 1
      %p80 = por %p78, %p79
      %p81 = scmp.ne.s32.totalorder %s72, %s73
      %p82 = scmp.eq.s32.totalorder %s20, 0
      %p83 = por %p81, %p82
      %p84 = scmp.ne.s32.totalorder %s72, %s73
      %p85 = scmp.eq.s32.totalorder %s21, 1
      %p86 = por %p84, %p85
      %p88 = scmp.ne.s32.totalorder %s73, %s87
      %p89 = scmp.eq.s32.totalorder %s21, 0
      %p90 = por %p88, %p89
      %s92 = sadd.s32 %s91, 1
      %p95 = scmp.eq.s32.totalorder %s15, 1
      %p96 = scmp.ne.s32.totalorder %s91, %s93
      %p97 = scmp.eq.s32.totalorder %s15, 0
      %p98 = por %p96, %p97
      %p99 = scmp.ne.s32.totalorder %s91, %s93
      %p100 = scmp.eq.s32.totalorder %s20, 1
      %p101 = por %p99, %p100
      %p102 = scmp.ne.s32.totalorder %s93, %s94
      %p103 = scmp.eq.s32.totalorder %s20, 0
      %p104 = por %p102, %p103
      %p105 = scmp.ne.s32.totalorder %s93, %s94
      %p106 = scmp.eq.s32.totalorder %s21, 1
      %p107 = por %p105, %p106
      %p109 = scmp.ne.s32.totalorder %s94, %s108
      %p110 = scmp.eq.s32.totalorder %s21, 0
      %p111 = por %p109, %p110
      %s113 = sadd.s32 %s112, 1
      %p116 = scmp.eq.s32.totalorder %s15, 1
      %p117 = scmp.ne.s32.totalorder %s112, %s114
      %p118 = scmp.eq.s32.totalorder %s15, 0
      %p119 = por %p117, %p118
      %p120 = scmp.ne.s32.totalorder %s112, %s114
      %p121 = scmp.eq.s32.totalorder %s20, 1
      %p122 = por %p120, %p121
      %p123 = scmp.ne.s32.totalorder %s114, %s115
      %p124 = scmp.eq.s32.totalorder %s20, 0
      %p125 = por %p123, %p124
      %p126 = scmp.ne.s32.totalorder %s114, %s115
      %p127 = scmp.eq.s32.totalorder %s21, 1
      %p128 = por %p126, %p127
      %p130 = scmp.ne.s32.totalorder %s115, %s129
      %p131 = scmp.eq.s32.totalorder %s21, 0
      %p132 = por %p130, %p131
      %s134 = sadd.s32 %s133, 1
      %p137 = scmp.eq.s32.totalorder %s15, 1
      %p138 = scmp.ne.s32.totalorder %s133, %s135
      %p139 = scmp.eq.s32.totalorder %s15, 0
      %p140 = por %p138, %p139
      %p141 = scmp.ne.s32.totalorder %s133, %s135
      %p142 = scmp.eq.s32.totalorder %s20, 1
      %p143 = por %p141, %p142
      %p144 = scmp.ne.s32.totalorder %s135, %s136
      %p145 = scmp.eq.s32.totalorder %s20, 0
      %p146 = por %p144, %p145
      %p147 = scmp.ne.s32.totalorder %s135, %s136
      %p148 = scmp.eq.s32.totalorder %s21, 1
      %p149 = por %p147, %p148
      %p151 = scmp.ne.s32.totalorder %s136, %s150
      %p152 = scmp.eq.s32.totalorder %s21, 0
      %p153 = por %p151, %p152
      %s154 = ssub.s32 %s15, %s22
      %p155 = scmp.eq.s32.totalorder %s154, 0
      %s157 = sadd.s32 %s156, 1
      %s158 = scalar_select %p155, %s156, %s157
      %p161 = pneg %p155
      %p162 = scmp.eq.s32.totalorder %s15, 1
      %p163 = por %p161, %p162
      %p164 = scmp.ne.s32.totalorder %s156, %s159
      %p165 = scmp.eq.s32.totalorder %s15, 0
      %p166 = por %p164, %p165
      %p167 = scmp.ne.s32.totalorder %s156, %s159
      %p168 = scmp.eq.s32.totalorder %s20, 1
      %p169 = por %p167, %p168
      %p170 = scmp.ne.s32.totalorder %s159, %s160
      %p171 = scmp.eq.s32.totalorder %s20, 0
      %p172 = por %p170, %p171
      %p173 = scmp.ne.s32.totalorder %s159, %s160
      %p174 = scmp.eq.s32.totalorder %s21, 1
      %p175 = por %p173, %p174
      %p177 = scmp.ne.s32.totalorder %s160, %s176
      %p178 = scmp.eq.s32.totalorder %s21, 0
      %p179 = por %p177, %p178
      %p180 = scmp.le.s32.totalorder 1, %s15
      %p181 = scmp.lt.s32.totalorder %s15, 3
      %p182 = pnand %p180, %p181
      %p183 = pneg %p182
      // Predicated region
      $region9: #{scale_block.1} parent=5 // pred_check
        _
      $region10: #{scale_block.1} parent=5 // pred_check_branch
        %185 = sbr.rel (%p182) target = $region12
      $region11: #{scale_block.1} parent=5 // pred_region
        %s186 = ssub.s32 %s15, 1
        // Predicated region
        $region13: #{scale_block.1} parent=11 // pred_check
          %p187 = pneg %p62
        $region14: #{scale_block.1} parent=11 // pred_check_branch
          %189 = sbr.rel (%p187) target = $region16
        $region15: #{scale_block.1} parent=11 // pred_region
          _
        $region16: #{scale_block.1} parent=11 // pred_fallthru
          _
        // Predicated region
        $region17: #{scale_block.1} parent=11 // pred_check
          %p190 = pneg %p83
        $region18: #{scale_block.1} parent=11 // pred_check_branch
          %192 = sbr.rel (%p190) target = $region20
        $region19: #{scale_block.1} parent=11 // pred_region
          _
        $region20: #{scale_block.1} parent=11 // pred_fallthru
          _
        // Predicated region
        $region21: #{scale_block.1} parent=11 // pred_check
          %p193 = pneg %p104
        $region22: #{scale_block.1} parent=11 // pred_check_branch
          %195 = sbr.rel (%p193) target = $region24
        $region23: #{scale_block.1} parent=11 // pred_region
          _
        $region24: #{scale_block.1} parent=11 // pred_fallthru
          _
        // Predicated region
        $region25: #{scale_block.1} parent=11 // pred_check
          %p196 = pneg %p125
        $region26: #{scale_block.1} parent=11 // pred_check_branch
          %198 = sbr.rel (%p196) target = $region28
        $region27: #{scale_block.1} parent=11 // pred_region
          _
        $region28: #{scale_block.1} parent=11 // pred_fallthru
          _
        // Predicated region
        $region29: #{scale_block.1} parent=11 // pred_check
          %p199 = pneg %p146
        $region30: #{scale_block.1} parent=11 // pred_check_branch
          %201 = sbr.rel (%p199) target = $region32
        $region31: #{scale_block.1} parent=11 // pred_region
          _
        $region32: #{scale_block.1} parent=11 // pred_fallthru
          _
      $region12: #{scale_block.1} parent=5 // pred_fallthru
        _
      %p202 = scmp.lt.s32.totalorder %s15, 2
      // Predicated region
      $region33: #{scale_block.1} parent=5 // pred_check
        %p203 = pneg %p202
      $region34: #{scale_block.1} parent=5 // pred_check_branch
        %205 = sbr.rel (%p203) target = $region36
      $region35: #{scale_block.1} parent=5 // pred_region
        // Predicated region
        $region37: #{scale_block.1} parent=35 // pred_check
          %p206 = pneg %p35
        $region38: #{scale_block.1} parent=35 // pred_check_branch
          %208 = sbr.rel (%p206) target = $region40
        $region39: #{scale_block.1} parent=35 // pred_region
          %s209 = sand.u32 %s25, 1
          %s210 = scalar_lea.sflag [#allocation7], %s209
          %s211 = sand.u32 %s25, 1
          %s212 = smul.addr %s211, 256
          %s213 = scalar_lea.vmem [#allocation6], %s212
          %s215 = ssub.s32 4096, 4096
          %216 = vsyncadd %s210, %s215
          %s217 = smul.addr %s15, 32
          %s218 = smul.addr %s217, 128
          %s219 = scalar_lea.hbm %s0, %s218
          %s220 = sshll.u32 %s213, 4
          %s221 = int_to_ptr.vmem [resolvable:$true] %s220
          %226 = dma.hbm_to_vmem [thread:$0]  %s219, 4096, %s221, %s210, 128, 128, 8
        $region40: #{scale_block.1} parent=35 // pred_fallthru
          _
      $region36: #{scale_block.1} parent=5 // pred_fallthru
        _
      %p227 = scmp.le.s32.totalorder 1, %s15
      %p228 = scmp.lt.s32.totalorder %s15, 3
      %p229 = pnand %p227, %p228
      %p230 = pneg %p229
      // Predicated region
      $region41: #{scale_block.1} parent=5 // pred_check
        _
      $region42: #{scale_block.1} parent=5 // pred_check_branch
        %232 = sbr.rel (%p229) target = $region44
      $region43: #{scale_block.1} parent=5 // pred_region
        %s233 = ssub.s32 %s15, 1
        %s234 = sand.u32 %s28, 1
        %s235 = scalar_lea.sflag [#allocation7], %s234
        %s236 = sand.u32 %s28, 1
        %s237 = smul.addr %s236, 256
        %s238 = scalar_lea.vmem [#allocation6], %s237
        // Predicated region
        $region45: #{scale_block.1} parent=43 // pred_check
          %p239 = pneg %p41
        $region46: #{scale_block.1} parent=43 // pred_check_branch
          %241 = sbr.rel (%p239) target = $region48
        $region47: #{scale_block.1} parent=43 // pred_region
          %242 = dma.done %s235, 4096
        $region48: #{scale_block.1} parent=43 // pred_fallthru
          _
        %s243 = sand.u32 %s28, 1
        %s244 = scalar_lea.sflag [#allocation7], %s243
        %s245 = sand.u32 %s28, 1
        %s246 = smul.addr %s245, 256
        %s247 = scalar_lea.vmem [#allocation6], %s246
        %p248 = pneg %p41
        %p249 = pneg %p38
        %p250 = pneg %p62
        %p251 = pneg %p59
        %p252 = pneg %p83
        %p253 = pneg %p80
        %p254 = pneg %p104
        %p255 = pneg %p101
        %p256 = pneg %p125
        %p257 = pneg %p122
        %p258 = pneg %p146
        %p259 = pneg %p143
        %p260 = pneg %p172
        %p261 = pneg %p169
        %p262 = scmp.lt.s32.totalorder %s20, 1
        %s263 = scalar_select %p262, %s20, 1
        %s264 = smul.addr %s263, 128
        %s265 = smul.addr %s264, 8
        %s266 = scalar_lea.vmem %s6, %s265
        %p267 = scmp.lt.s32.totalorder %s20, 1
        %s268 = scalar_select %p267, %s20, 1
        %s269 = smul.addr %s268, 128
        %s270 = smul.addr %s269, 8
        %s271 = scalar_lea.vmem %s6, %s270
        %vm272 = vcmask 261120
        %273 = vst.msk [vmem:[#allocation2] sm:$0xff] %vm272, 0.0
        %274 = vst.msk [vmem:[#allocation2 + $0x8] sm:$0xff] %vm272, 0.0
        %vm275 = vcmask 254976
        %276 = vst.msk [vmem:[#allocation2 + $0x10] sm:$0x3] %vm275, 0.0
        %277 = vst.msk [vmem:[#allocation2 + $0x18] sm:$0xff] %vm272, 0.0
        %278 = vst.msk [vmem:[#allocation2 + $0x20] sm:$0xff] %vm272, 0.0
        %279 = vst.msk [vmem:[#allocation2 + $0x28] sm:$0x3] %vm275, 0.0
        %280 = vst.msk [vmem:[#allocation2 + $0x30] sm:$0xff] %vm272, 0.0
        %281 = vst.msk [vmem:[#allocation2 + $0x38] sm:$0xff] %vm272, 0.0
        %282 = vst.msk [vmem:[#allocation2 + $0x40] sm:$0x3] %vm275, 0.0
        %283 = vst.msk [vmem:[#allocation2 + $0x48] sm:$0xff] %vm272, 0.0
        %284 = vst.msk [vmem:[#allocation2 + $0x50] sm:$0xff] %vm272, 0.0
        %285 = vst.msk [vmem:[#allocation2 + $0x58] sm:$0x3] %vm275, 0.0
        %286 = vst.msk [vmem:[#allocation2 + $0x60] sm:$0xff] %vm272, 0.0
        %287 = vst.msk [vmem:[#allocation2 + $0x68] sm:$0xff] %vm272, 0.0
        %288 = vst.msk [vmem:[#allocation2 + $0x70] sm:$0x3] %vm275, 0.0
        %289 = vst.msk [vmem:[#allocation2 + $0x78] sm:$0xff] %vm272, 0.0
        %290 = vst.msk [vmem:[#allocation2 + $0x80] sm:$0xff] %vm272, 0.0
        %291 = vst.msk [vmem:[#allocation2 + $0x88] sm:$0x3] %vm275, 0.0
        %292 = vst.msk [vmem:[#allocation2 + $0x90] sm:$0xff] %vm272, 0.0
        %293 = vst.msk [vmem:[#allocation2 + $0x98] sm:$0xff] %vm272, 0.0
        %294 = vst.msk [vmem:[#allocation2 + $0xa0] sm:$0x3] %vm275, 0.0
        %295 = vst.msk [vmem:[#allocation2 + $0xa8] sm:$0xff] %vm272, 0.0
        %296 = vst.msk [vmem:[#allocation2 + $0xb0] sm:$0xff] %vm272, 0.0
        %297 = vst.msk [vmem:[#allocation2 + $0xb8] sm:$0x3] %vm275, 0.0
        %298 = vst.msk [vmem:[#allocation2 + $0xc0] sm:$0xff] %vm272, 0.0
        %299 = vst.msk [vmem:[#allocation2 + $0xc8] sm:$0xff] %vm272, 0.0
        %300 = vst.msk [vmem:[#allocation2 + $0xd0] sm:$0x3] %vm275, 0.0
        %301 = vst.msk [vmem:[#allocation2 + $0xd8] sm:$0xff] %vm272, 0.0
        %302 = vst.msk [vmem:[#allocation2 + $0xe0] sm:$0xff] %vm272, 0.0
        %303 = vst.msk [vmem:[#allocation2 + $0xe8] sm:$0x3] %vm275, 0.0
        %304 = vst.msk [vmem:[#allocation2 + $0xf0] sm:$0xff] %vm272, 0.0
        %305 = vst.msk [vmem:[#allocation2 + $0xf8] sm:$0xff] %vm272, 0.0
        %306 = vst.msk [vmem:[#allocation2 + $0x100] sm:$0x3] %vm275, 0.0
        %307 = vst.msk [vmem:[#allocation2 + $0x108] sm:$0xff] %vm272, 0.0
        %308 = vst.msk [vmem:[#allocation2 + $0x110] sm:$0xff] %vm272, 0.0
        %309 = vst.msk [vmem:[#allocation2 + $0x118] sm:$0x3] %vm275, 0.0
        %310 = vst.msk [vmem:[#allocation2 + $0x120] sm:$0xff] %vm272, 0.0
        %311 = vst.msk [vmem:[#allocation2 + $0x128] sm:$0xff] %vm272, 0.0
        %312 = vst.msk [vmem:[#allocation2 + $0x130] sm:$0x3] %vm275, 0.0
        %313 = vst.msk [vmem:[#allocation2 + $0x138] sm:$0xff] %vm272, 0.0
        %314 = vst.msk [vmem:[#allocation2 + $0x140] sm:$0xff] %vm272, 0.0
        %315 = vst.msk [vmem:[#allocation2 + $0x148] sm:$0x3] %vm275, 0.0
        %316 = vst.msk [vmem:[#allocation2 + $0x150] sm:$0xff] %vm272, 0.0
        %317 = vst.msk [vmem:[#allocation2 + $0x158] sm:$0xff] %vm272, 0.0
        %318 = vst.msk [vmem:[#allocation2 + $0x160] sm:$0x3] %vm275, 0.0
        %319 = vst.msk [vmem:[#allocation2 + $0x168] sm:$0xff] %vm272, 0.0
        %320 = vst.msk [vmem:[#allocation2 + $0x170] sm:$0xff] %vm272, 0.0
        %321 = vst.msk [vmem:[#allocation2 + $0x178] sm:$0x3] %vm275, 0.0
        %322 = vst.msk [vmem:[#allocation2 + $0x180] sm:$0xff] %vm272, 0.0
        %323 = vst.msk [vmem:[#allocation2 + $0x188] sm:$0xff] %vm272, 0.0
        %324 = vst.msk [vmem:[#allocation2 + $0x190] sm:$0x3] %vm275, 0.0
        %325 = vst.msk [vmem:[#allocation2 + $0x198] sm:$0xff] %vm272, 0.0
        %326 = vst.msk [vmem:[#allocation2 + $0x1a0] sm:$0xff] %vm272, 0.0
        %327 = vst.msk [vmem:[#allocation2 + $0x1a8] sm:$0x3] %vm275, 0.0
        %328 = vst.msk [vmem:[#allocation3] sm:$0xff] %vm272, 0.0
        %329 = vst.msk [vmem:[#allocation3 + $0x8] sm:$0xff] %vm272, 0.0
        %330 = vst.msk [vmem:[#allocation3 + $0x10] sm:$0x3] %vm275, 0.0
        %331 = vst.msk [vmem:[#allocation3 + $0x18] sm:$0xff] %vm272, 0.0
        %332 = vst.msk [vmem:[#allocation3 + $0x20] sm:$0xff] %vm272, 0.0
        %333 = vst.msk [vmem:[#allocation3 + $0x28] sm:$0x3] %vm275, 0.0
        %334 = vst.msk [vmem:[#allocation3 + $0x30] sm:$0xff] %vm272, 0.0
        %335 = vst.msk [vmem:[#allocation3 + $0x38] sm:$0xff] %vm272, 0.0
        %336 = vst.msk [vmem:[#allocation3 + $0x40] sm:$0x3] %vm275, 0.0
        %337 = vst.msk [vmem:[#allocation3 + $0x48] sm:$0xff] %vm272, 0.0
        %338 = vst.msk [vmem:[#allocation3 + $0x50] sm:$0xff] %vm272, 0.0
        %339 = vst.msk [vmem:[#allocation3 + $0x58] sm:$0x3] %vm275, 0.0
        %340 = vst.msk [vmem:[#allocation3 + $0x60] sm:$0xff] %vm272, 0.0
        %341 = vst.msk [vmem:[#allocation3 + $0x68] sm:$0xff] %vm272, 0.0
        %342 = vst.msk [vmem:[#allocation3 + $0x70] sm:$0x3] %vm275, 0.0
        %343 = vst.msk [vmem:[#allocation3 + $0x78] sm:$0xff] %vm272, 0.0
        %344 = vst.msk [vmem:[#allocation3 + $0x80] sm:$0xff] %vm272, 0.0
        %345 = vst.msk [vmem:[#allocation3 + $0x88] sm:$0x3] %vm275, 0.0
        %346 = vst.msk [vmem:[#allocation3 + $0x90] sm:$0xff] %vm272, 0.0
        %347 = vst.msk [vmem:[#allocation3 + $0x98] sm:$0xff] %vm272, 0.0
        %348 = vst.msk [vmem:[#allocation3 + $0xa0] sm:$0x3] %vm275, 0.0
        %349 = vst.msk [vmem:[#allocation3 + $0xa8] sm:$0xff] %vm272, 0.0
        %350 = vst.msk [vmem:[#allocation3 + $0xb0] sm:$0xff] %vm272, 0.0
        %351 = vst.msk [vmem:[#allocation3 + $0xb8] sm:$0x3] %vm275, 0.0
        %352 = vst.msk [vmem:[#allocation3 + $0xc0] sm:$0xff] %vm272, 0.0
        %353 = vst.msk [vmem:[#allocation3 + $0xc8] sm:$0xff] %vm272, 0.0
        %354 = vst.msk [vmem:[#allocation3 + $0xd0] sm:$0x3] %vm275, 0.0
        %355 = vst.msk [vmem:[#allocation3 + $0xd8] sm:$0xff] %vm272, 0.0
        %356 = vst.msk [vmem:[#allocation3 + $0xe0] sm:$0xff] %vm272, 0.0
        %357 = vst.msk [vmem:[#allocation3 + $0xe8] sm:$0x3] %vm275, 0.0
        %358 = vst.msk [vmem:[#allocation3 + $0xf0] sm:$0xff] %vm272, 0.0
        %359 = vst.msk [vmem:[#allocation3 + $0xf8] sm:$0xff] %vm272, 0.0
        %360 = vst.msk [vmem:[#allocation3 + $0x100] sm:$0x3] %vm275, 0.0
        %361 = vst.msk [vmem:[#allocation3 + $0x108] sm:$0xff] %vm272, 0.0
        %362 = vst.msk [vmem:[#allocation3 + $0x110] sm:$0xff] %vm272, 0.0
        %363 = vst.msk [vmem:[#allocation3 + $0x118] sm:$0x3] %vm275, 0.0
        %364 = vst.msk [vmem:[#allocation3 + $0x120] sm:$0xff] %vm272, 0.0
        %365 = vst.msk [vmem:[#allocation3 + $0x128] sm:$0xff] %vm272, 0.0
        %366 = vst.msk [vmem:[#allocation3 + $0x130] sm:$0x3] %vm275, 0.0
        %367 = vst.msk [vmem:[#allocation3 + $0x138] sm:$0xff] %vm272, 0.0
        %368 = vst.msk [vmem:[#allocation3 + $0x140] sm:$0xff] %vm272, 0.0
        %369 = vst.msk [vmem:[#allocation3 + $0x148] sm:$0x3] %vm275, 0.0
        %370 = vst.msk [vmem:[#allocation3 + $0x150] sm:$0xff] %vm272, 0.0
        %371 = vst.msk [vmem:[#allocation3 + $0x158] sm:$0xff] %vm272, 0.0
        %372 = vst.msk [vmem:[#allocation3 + $0x160] sm:$0x3] %vm275, 0.0
        %373 = vst.msk [vmem:[#allocation3 + $0x168] sm:$0xff] %vm272, 0.0
        %374 = vst.msk [vmem:[#allocation3 + $0x170] sm:$0xff] %vm272, 0.0
        %375 = vst.msk [vmem:[#allocation3 + $0x178] sm:$0x3] %vm275, 0.0
        %376 = vst.msk [vmem:[#allocation3 + $0x180] sm:$0xff] %vm272, 0.0
        %377 = vst.msk [vmem:[#allocation3 + $0x188] sm:$0xff] %vm272, 0.0
        %378 = vst.msk [vmem:[#allocation3 + $0x190] sm:$0x3] %vm275, 0.0
        %379 = vst.msk [vmem:[#allocation3 + $0x198] sm:$0xff] %vm272, 0.0
        %380 = vst.msk [vmem:[#allocation3 + $0x1a0] sm:$0xff] %vm272, 0.0
        %381 = vst.msk [vmem:[#allocation3 + $0x1a8] sm:$0x3] %vm275, 0.0
        %382 = vst.msk [vmem:[#allocation4] sm:$0xff] %vm272, 0.0
        %383 = vst.msk [vmem:[#allocation4 + $0x8] sm:$0xff] %vm272, 0.0
        %384 = vst.msk [vmem:[#allocation4 + $0x10] sm:$0x3] %vm275, 0.0
        %385 = vst.msk [vmem:[#allocation4 + $0x18] sm:$0xff] %vm272, 0.0
        %386 = vst.msk [vmem:[#allocation4 + $0x20] sm:$0xff] %vm272, 0.0
        %387 = vst.msk [vmem:[#allocation4 + $0x28] sm:$0x3] %vm275, 0.0
        %388 = vst.msk [vmem:[#allocation4 + $0x30] sm:$0xff] %vm272, 0.0
        %389 = vst.msk [vmem:[#allocation4 + $0x38] sm:$0xff] %vm272, 0.0
        %390 = vst.msk [vmem:[#allocation4 + $0x40] sm:$0x3] %vm275, 0.0
        %391 = vst.msk [vmem:[#allocation4 + $0x48] sm:$0xff] %vm272, 0.0
        %392 = vst.msk [vmem:[#allocation4 + $0x50] sm:$0xff] %vm272, 0.0
        %393 = vst.msk [vmem:[#allocation4 + $0x58] sm:$0x3] %vm275, 0.0
        %394 = vst.msk [vmem:[#allocation4 + $0x60] sm:$0xff] %vm272, 0.0
        %395 = vst.msk [vmem:[#allocation4 + $0x68] sm:$0xff] %vm272, 0.0
        %396 = vst.msk [vmem:[#allocation4 + $0x70] sm:$0x3] %vm275, 0.0
        %397 = vst.msk [vmem:[#allocation4 + $0x78] sm:$0xff] %vm272, 0.0
        %398 = vst.msk [vmem:[#allocation4 + $0x80] sm:$0xff] %vm272, 0.0
        %399 = vst.msk [vmem:[#allocation4 + $0x88] sm:$0x3] %vm275, 0.0
        %400 = vst.msk [vmem:[#allocation4 + $0x90] sm:$0xff] %vm272, 0.0
        %401 = vst.msk [vmem:[#allocation4 + $0x98] sm:$0xff] %vm272, 0.0
        %402 = vst.msk [vmem:[#allocation4 + $0xa0] sm:$0x3] %vm275, 0.0
        %403 = vst.msk [vmem:[#allocation4 + $0xa8] sm:$0xff] %vm272, 0.0
        %404 = vst.msk [vmem:[#allocation4 + $0xb0] sm:$0xff] %vm272, 0.0
        %405 = vst.msk [vmem:[#allocation4 + $0xb8] sm:$0x3] %vm275, 0.0
        %406 = vst.msk [vmem:[#allocation4 + $0xc0] sm:$0xff] %vm272, 0.0
        %407 = vst.msk [vmem:[#allocation4 + $0xc8] sm:$0xff] %vm272, 0.0
        %408 = vst.msk [vmem:[#allocation4 + $0xd0] sm:$0x3] %vm275, 0.0
        %409 = vst.msk [vmem:[#allocation4 + $0xd8] sm:$0xff] %vm272, 0.0
        %410 = vst.msk [vmem:[#allocation4 + $0xe0] sm:$0xff] %vm272, 0.0
        %411 = vst.msk [vmem:[#allocation4 + $0xe8] sm:$0x3] %vm275, 0.0
        %412 = vst.msk [vmem:[#allocation4 + $0xf0] sm:$0xff] %vm272, 0.0
        %413 = vst.msk [vmem:[#allocation4 + $0xf8] sm:$0xff] %vm272, 0.0
        %414 = vst.msk [vmem:[#allocation4 + $0x100] sm:$0x3] %vm275, 0.0
        %415 = vst.msk [vmem:[#allocation4 + $0x108] sm:$0xff] %vm272, 0.0
        %416 = vst.msk [vmem:[#allocation4 + $0x110] sm:$0xff] %vm272, 0.0
        %417 = vst.msk [vmem:[#allocation4 + $0x118] sm:$0x3] %vm275, 0.0
        %418 = vst.msk [vmem:[#allocation4 + $0x120] sm:$0xff] %vm272, 0.0
        %419 = vst.msk [vmem:[#allocation4 + $0x128] sm:$0xff] %vm272, 0.0
        %420 = vst.msk [vmem:[#allocation4 + $0x130] sm:$0x3] %vm275, 0.0
        %421 = vst.msk [vmem:[#allocation4 + $0x138] sm:$0xff] %vm272, 0.0
        %422 = vst.msk [vmem:[#allocation4 + $0x140] sm:$0xff] %vm272, 0.0
        %423 = vst.msk [vmem:[#allocation4 + $0x148] sm:$0x3] %vm275, 0.0
        %424 = vst.msk [vmem:[#allocation4 + $0x150] sm:$0xff] %vm272, 0.0
        %425 = vst.msk [vmem:[#allocation4 + $0x158] sm:$0xff] %vm272, 0.0
        %426 = vst.msk [vmem:[#allocation4 + $0x160] sm:$0x3] %vm275, 0.0
        %427 = vst.msk [vmem:[#allocation4 + $0x168] sm:$0xff] %vm272, 0.0
        %428 = vst.msk [vmem:[#allocation4 + $0x170] sm:$0xff] %vm272, 0.0
        %429 = vst.msk [vmem:[#allocation4 + $0x178] sm:$0x3] %vm275, 0.0
        %430 = vst.msk [vmem:[#allocation4 + $0x180] sm:$0xff] %vm272, 0.0
        %431 = vst.msk [vmem:[#allocation4 + $0x188] sm:$0xff] %vm272, 0.0
        %432 = vst.msk [vmem:[#allocation4 + $0x190] sm:$0x3] %vm275, 0.0
        %433 = vst.msk [vmem:[#allocation4 + $0x198] sm:$0xff] %vm272, 0.0
        %434 = vst.msk [vmem:[#allocation4 + $0x1a0] sm:$0xff] %vm272, 0.0
        %435 = vst.msk [vmem:[#allocation4 + $0x1a8] sm:$0x3] %vm275, 0.0
        %436 = vst.msk [vmem:[#allocation5] sm:$0xff] %vm272, 0.0
        %437 = vst.msk [vmem:[#allocation5 + $0x8] sm:$0xff] %vm272, 0.0
        %438 = vst.msk [vmem:[#allocation5 + $0x10] sm:$0x3] %vm275, 0.0
        %439 = vst.msk [vmem:[#allocation5 + $0x18] sm:$0xff] %vm272, 0.0
        %440 = vst.msk [vmem:[#allocation5 + $0x20] sm:$0xff] %vm272, 0.0
        %441 = vst.msk [vmem:[#allocation5 + $0x28] sm:$0x3] %vm275, 0.0
        %442 = vst.msk [vmem:[#allocation5 + $0x30] sm:$0xff] %vm272, 0.0
        %443 = vst.msk [vmem:[#allocation5 + $0x38] sm:$0xff] %vm272, 0.0
        %444 = vst.msk [vmem:[#allocation5 + $0x40] sm:$0x3] %vm275, 0.0
        %445 = vst.msk [vmem:[#allocation5 + $0x48] sm:$0xff] %vm272, 0.0
        %446 = vst.msk [vmem:[#allocation5 + $0x50] sm:$0xff] %vm272, 0.0
        %447 = vst.msk [vmem:[#allocation5 + $0x58] sm:$0x3] %vm275, 0.0
        %448 = vst.msk [vmem:[#allocation5 + $0x60] sm:$0xff] %vm272, 0.0
        %449 = vst.msk [vmem:[#allocation5 + $0x68] sm:$0xff] %vm272, 0.0
        %450 = vst.msk [vmem:[#allocation5 + $0x70] sm:$0x3] %vm275, 0.0
        %451 = vst.msk [vmem:[#allocation5 + $0x78] sm:$0xff] %vm272, 0.0
        %452 = vst.msk [vmem:[#allocation5 + $0x80] sm:$0xff] %vm272, 0.0
        %453 = vst.msk [vmem:[#allocation5 + $0x88] sm:$0x3] %vm275, 0.0
        %454 = vst.msk [vmem:[#allocation5 + $0x90] sm:$0xff] %vm272, 0.0
        %455 = vst.msk [vmem:[#allocation5 + $0x98] sm:$0xff] %vm272, 0.0
        %456 = vst.msk [vmem:[#allocation5 + $0xa0] sm:$0x3] %vm275, 0.0
        %457 = vst.msk [vmem:[#allocation5 + $0xa8] sm:$0xff] %vm272, 0.0
        %458 = vst.msk [vmem:[#allocation5 + $0xb0] sm:$0xff] %vm272, 0.0
        %459 = vst.msk [vmem:[#allocation5 + $0xb8] sm:$0x3] %vm275, 0.0
        %460 = vst.msk [vmem:[#allocation5 + $0xc0] sm:$0xff] %vm272, 0.0
        %461 = vst.msk [vmem:[#allocation5 + $0xc8] sm:$0xff] %vm272, 0.0
        %462 = vst.msk [vmem:[#allocation5 + $0xd0] sm:$0x3] %vm275, 0.0
        %463 = vst.msk [vmem:[#allocation5 + $0xd8] sm:$0xff] %vm272, 0.0
        %464 = vst.msk [vmem:[#allocation5 + $0xe0] sm:$0xff] %vm272, 0.0
        %465 = vst.msk [vmem:[#allocation5 + $0xe8] sm:$0x3] %vm275, 0.0
        %466 = vst.msk [vmem:[#allocation5 + $0xf0] sm:$0xff] %vm272, 0.0
        %467 = vst.msk [vmem:[#allocation5 + $0xf8] sm:$0xff] %vm272, 0.0
        %468 = vst.msk [vmem:[#allocation5 + $0x100] sm:$0x3] %vm275, 0.0
        %469 = vst.msk [vmem:[#allocation5 + $0x108] sm:$0xff] %vm272, 0.0
        %470 = vst.msk [vmem:[#allocation5 + $0x110] sm:$0xff] %vm272, 0.0
        %471 = vst.msk [vmem:[#allocation5 + $0x118] sm:$0x3] %vm275, 0.0
        %472 = vst.msk [vmem:[#allocation5 + $0x120] sm:$0xff] %vm272, 0.0
        %473 = vst.msk [vmem:[#allocation5 + $0x128] sm:$0xff] %vm272, 0.0
        %474 = vst.msk [vmem:[#allocation5 + $0x130] sm:$0x3] %vm275, 0.0
        %475 = vst.msk [vmem:[#allocation5 + $0x138] sm:$0xff] %vm272, 0.0
        %476 = vst.msk [vmem:[#allocation5 + $0x140] sm:$0xff] %vm272, 0.0
        %477 = vst.msk [vmem:[#allocation5 + $0x148] sm:$0x3] %vm275, 0.0
        %478 = vst.msk [vmem:[#allocation5 + $0x150] sm:$0xff] %vm272, 0.0
        %479 = vst.msk [vmem:[#allocation5 + $0x158] sm:$0xff] %vm272, 0.0
        %480 = vst.msk [vmem:[#allocation5 + $0x160] sm:$0x3] %vm275, 0.0
        %481 = vst.msk [vmem:[#allocation5 + $0x168] sm:$0xff] %vm272, 0.0
        %482 = vst.msk [vmem:[#allocation5 + $0x170] sm:$0xff] %vm272, 0.0
        %483 = vst.msk [vmem:[#allocation5 + $0x178] sm:$0x3] %vm275, 0.0
        %484 = vst.msk [vmem:[#allocation5 + $0x180] sm:$0xff] %vm272, 0.0
        %485 = vst.msk [vmem:[#allocation5 + $0x188] sm:$0xff] %vm272, 0.0
        %486 = vst.msk [vmem:[#allocation5 + $0x190] sm:$0x3] %vm275, 0.0
        %487 = vst.msk [vmem:[#allocation5 + $0x198] sm:$0xff] %vm272, 0.0
        %488 = vst.msk [vmem:[#allocation5 + $0x1a0] sm:$0xff] %vm272, 0.0
        %489 = vst.msk [vmem:[#allocation5 + $0x1a8] sm:$0x3] %vm275, 0.0
        %v490 = vld [vmem:[%s238] sm:$0xff]
        %v491 = vld [vmem:[%s238 + $0x8] sm:$0xff]
        %v492 = vld [vmem:[%s238 + $0x10] sm:$0xff]
        %v493 = vld [vmem:[%s238 + $0x18] sm:$0xff]
        %v494 = vld [vmem:[%s238 + $0x20] sm:$0xff]
        %v495 = vld [vmem:[%s238 + $0x28] sm:$0xff]
        %v496 = vld [vmem:[%s238 + $0x30] sm:$0xff]
        %v497 = vld [vmem:[%s238 + $0x38] sm:$0xff]
        %v498 = vld [vmem:[%s238 + $0x40] sm:$0xff]
        %v499 = vld [vmem:[%s238 + $0x48] sm:$0xff]
        %v500 = vld [vmem:[%s238 + $0x50] sm:$0xff]
        %v501 = vld [vmem:[%s238 + $0x58] sm:$0xff]
        %v502 = vld [vmem:[%s238 + $0x60] sm:$0xff]
        %v503 = vld [vmem:[%s238 + $0x68] sm:$0xff]
        %v504 = vld [vmem:[%s238 + $0x70] sm:$0xff]
        %v505 = vld [vmem:[%s238 + $0x78] sm:$0xff]
        %v506 = vld [vmem:[%s238 + $0x80] sm:$0xff]
        %v507 = vld [vmem:[%s238 + $0x88] sm:$0xff]
        %v508 = vld [vmem:[%s238 + $0x90] sm:$0xff]
        %v509 = vld [vmem:[%s238 + $0x98] sm:$0xff]
        %v510 = vld [vmem:[%s238 + $0xa0] sm:$0xff]
        %v511 = vld [vmem:[%s238 + $0xa8] sm:$0xff]
        %v512 = vld [vmem:[%s238 + $0xb0] sm:$0xff]
        %v513 = vld [vmem:[%s238 + $0xb8] sm:$0xff]
        %v514 = vld [vmem:[%s238 + $0xc0] sm:$0xff]
        %v515 = vld [vmem:[%s238 + $0xc8] sm:$0xff]
        %v516 = vld [vmem:[%s238 + $0xd0] sm:$0xff]
        %v517 = vld [vmem:[%s238 + $0xd8] sm:$0xff]
        %v518 = vld [vmem:[%s238 + $0xe0] sm:$0xff]
        %v519 = vld [vmem:[%s238 + $0xe8] sm:$0xff]
        %v520 = vld [vmem:[%s238 + $0xf0] sm:$0xff]
        %v521 = vld [vmem:[%s238 + $0xf8] sm:$0xff]
        %v522 = vld [vmem:[%s1] sm:$0xff]
        %v523 = vld [vmem:[%s1 + $0x8] sm:$0xff]
        %v524 = vld [vmem:[%s1 + $0x10] sm:$0xff]
        %v525 = vld [vmem:[%s1 + $0x18] sm:$0xff]
        %v526 = vld [vmem:[%s2] sm:$0x1]
        %v528 = vlaneseq
        %v529 = vshrl.u32 %v528, 7
        %v530 = vsub.s32 0, %v529
        %v531 = vrot.slane %v526, %v530
        %v534 = vsel %vm272, %v490, 0
        %v537 = vsel %vm272, %v491, 0
        %v540 = vsel %vm272, %v492, 0
        %v543 = vsel %vm272, %v493, 0
        %v546 = vsel %vm272, %v494, 0
        %v549 = vsel %vm272, %v495, 0
        %v552 = vsel %vm272, %v496, 0
        %v555 = vsel %vm272, %v497, 0
        %v558 = vsel %vm272, %v498, 0
        %v561 = vsel %vm272, %v499, 0
        %v564 = vsel %vm272, %v500, 0
        %v567 = vsel %vm272, %v501, 0
        %v570 = vsel %vm272, %v502, 0
        %v573 = vsel %vm272, %v503, 0
        %v576 = vsel %vm272, %v504, 0
        %v579 = vsel %vm272, %v505, 0
        %v582 = vsel %vm272, %v506, 0
        %v585 = vsel %vm272, %v507, 0
        %v588 = vsel %vm272, %v508, 0
        %v591 = vsel %vm272, %v509, 0
        %v594 = vsel %vm272, %v510, 0
        %v597 = vsel %vm272, %v511, 0
        %v600 = vsel %vm272, %v512, 0
        %v603 = vsel %vm272, %v513, 0
        %v606 = vsel %vm272, %v514, 0
        %v609 = vsel %vm272, %v515, 0
        %v612 = vsel %vm272, %v516, 0
        %v615 = vsel %vm272, %v517, 0
        %v618 = vsel %vm272, %v518, 0
        %v621 = vsel %vm272, %v519, 0
        %v624 = vsel %vm272, %v520, 0
        %v627 = vsel %vm272, %v521, 0
        %629 = vmatprep.subr.mxu0 0.0
        %630 = vmatpush1.msra.mxu0 %v522
        %631 = vmatprep.subr.mxu0 0.0
        %632 = vmatpush1.msra.mxu0 %v523
        %633 = vmatprep.subr.mxu0 0.0
        %634 = vmatpush1.msra.mxu0 %v524
        %635 = vmatprep.subr.mxu0 0.0
        %636 = vmatpush1.msra.mxu0 %v525
        %637 = vmatprep.subr.mxu0 0.0
        %638 = vmatpush1.msra.mxu0 0.0
        %639 = vmatprep.subr.mxu0 0.0
        %640 = vmatpush1.msra.mxu0 0.0
        %641 = vmatprep.subr.mxu0 0.0
        %642 = vmatpush1.msra.mxu0 0.0
        %643 = vmatprep.subr.mxu0 0.0
        %644 = vmatpush1.msra.mxu0 0.0
        %645 = vmatprep.subr.mxu0 0.0
        %646 = vmatpush1.msra.mxu0 0.0
        %647 = vmatprep.subr.mxu0 0.0
        %648 = vmatpush1.msra.mxu0 0.0
        %649 = vmatprep.subr.mxu0 0.0
        %650 = vmatpush1.msra.mxu0 0.0
        %651 = vmatprep.subr.mxu0 0.0
        %652 = vmatpush1.msra.mxu0 0.0
        %653 = vmatprep.subr.mxu0 0.0
        %654 = vmatpush1.msra.mxu0 0.0
        %655 = vmatprep.subr.mxu0 0.0
        %656 = vmatpush1.msra.mxu0 0.0
        %657 = vmatprep.subr.mxu0 0.0
        %658 = vmatpush1.msra.mxu0 0.0
        %659 = vmatprep.subr.mxu0 0.0
        %660 = vmatpush1.msra.mxu0 0.0
        %661 = vmatprep.subr.mxu0 0.0
        %662 = vmatpush1.msra.mxu0 0.0
        %663 = vmatprep.subr.mxu0 0.0
        %664 = vmatpush1.msra.mxu0 0.0
        %665 = vmatprep.subr.mxu0 0.0
        %666 = vmatpush1.msra.mxu0 0.0
        %667 = vmatprep.subr.mxu0 0.0
        %668 = vmatpush1.msra.mxu0 0.0
        %669 = vmatprep.subr.mxu0 0.0
        %670 = vmatpush1.msra.mxu0 0.0
        %671 = vmatprep.subr.mxu0 0.0
        %672 = vmatpush1.msra.mxu0 0.0
        %673 = vmatprep.subr.mxu0 0.0
        %674 = vmatpush1.msra.mxu0 0.0
        %675 = vmatprep.subr.mxu0 0.0
        %676 = vmatpush1.msra.mxu0 0.0
        %677 = vmatprep.subr.mxu0 0.0
        %678 = vmatpush1.msra.mxu0 0.0
        %679 = vmatprep.subr.mxu0 0.0
        %680 = vmatpush1.msra.mxu0 0.0
        %681 = vmatprep.subr.mxu0 0.0
        %682 = vmatpush1.msra.mxu0 0.0
        %683 = vmatprep.subr.mxu0 0.0
        %684 = vmatpush1.msra.mxu0 0.0
        %685 = vmatprep.subr.mxu0 0.0
        %686 = vmatpush1.msra.mxu0 0.0
        %687 = vmatprep.subr.mxu0 0.0
        %688 = vmatpush1.msra.mxu0 0.0
        %689 = vmatprep.subr.mxu0 0.0
        %690 = vmatpush1.msra.mxu0 0.0
        %691 = vmatprep.subr.mxu0 0.0
        %692 = vmatpush1.msra.mxu0 0.0
        %693 = vmatprep.mubr.f32.mxu0 0.0
        %694 = vmatmul.mubr.f32.gmra.mrb[0].mxu0 %v534
        %v695 = vpop.f32.mrb[0].mxu0
        %v696 = vadd.f32 %v531, %v695
        %v697 = vpop.f32.mrb[0].mxu0
        %698 = vmatprep.mubr.f32.mxu0 0.0
        %699 = vmatmul.mubr.f32.gmra.mrb[0].mxu0 %v537
        %v700 = vpop.f32.mrb[0].mxu0
        %v701 = vadd.f32 %v531, %v700
        %v702 = vpop.f32.mrb[0].mxu0
        %703 = vmatprep.mubr.f32.mxu0 0.0
        %704 = vmatmul.mubr.f32.gmra.mrb[0].mxu0 %v540
        %v705 = vpop.f32.mrb[0].mxu0
        %v706 = vadd.f32 %v531, %v705
        %v707 = vpop.f32.mrb[0].mxu0
        %708 = vmatprep.mubr.f32.mxu0 0.0
        %709 = vmatmul.mubr.f32.gmra.mrb[0].mxu0 %v543
        %v710 = vpop.f32.mrb[0].mxu0
        %v711 = vadd.f32 %v531, %v710
        %v712 = vpop.f32.mrb[0].mxu0
        %713 = vmatprep.mubr.f32.mxu0 0.0
        %714 = vmatmul.mubr.f32.gmra.mrb[0].mxu0 %v546
        %v715 = vpop.f32.mrb[0].mxu0
        %v716 = vadd.f32 %v531, %v715
        %v717 = vpop.f32.mrb[0].mxu0
        %718 = vmatprep.mubr.f32.mxu0 0.0
        %719 = vmatmul.mubr.f32.gmra.mrb[0].mxu0 %v549
        %v720 = vpop.f32.mrb[0].mxu0
        %v721 = vadd.f32 %v531, %v720
        %v722 = vpop.f32.mrb[0].mxu0
        %723 = vmatprep.mubr.f32.mxu0 0.0
        %724 = vmatmul.mubr.f32.gmra.mrb[0].mxu0 %v552
        %v725 = vpop.f32.mrb[0].mxu0
        %v726 = vadd.f32 %v531, %v725
        %v727 = vpop.f32.mrb[0].mxu0
        %728 = vmatprep.mubr.f32.mxu0 0.0
        %729 = vmatmul.mubr.f32.gmra.mrb[0].mxu0 %v555
        %v730 = vpop.f32.mrb[0].mxu0
        %v731 = vadd.f32 %v531, %v730
        %v732 = vpop.f32.mrb[0].mxu0
        %733 = vmatprep.mubr.f32.mxu0 0.0
        %734 = vmatmul.mubr.f32.gmra.mrb[0].mxu0 %v558
        %v735 = vpop.f32.mrb[0].mxu0
        %v736 = vadd.f32 %v531, %v735
        %v737 = vpop.f32.mrb[0].mxu0
        %738 = vmatprep.mubr.f32.mxu0 0.0
        %739 = vmatmul.mubr.f32.gmra.mrb[0].mxu0 %v561
        %v740 = vpop.f32.mrb[0].mxu0
        %v741 = vadd.f32 %v531, %v740
        %v742 = vpop.f32.mrb[0].mxu0
        %743 = vmatprep.mubr.f32.mxu0 0.0
        %744 = vmatmul.mubr.f32.gmra.mrb[0].mxu0 %v564
        %v745 = vpop.f32.mrb[0].mxu0
        %v746 = vadd.f32 %v531, %v745
        %v747 = vpop.f32.mrb[0].mxu0
        %748 = vmatprep.mubr.f32.mxu0 0.0
        %749 = vmatmul.mubr.f32.gmra.mrb[0].mxu0 %v567
        %v750 = vpop.f32.mrb[0].mxu0
        %v751 = vadd.f32 %v531, %v750
        %v752 = vpop.f32.mrb[0].mxu0
        %753 = vmatprep.mubr.f32.mxu0 0.0
        %754 = vmatmul.mubr.f32.gmra.mrb[0].mxu0 %v570
        %v755 = vpop.f32.mrb[0].mxu0
        %v756 = vadd.f32 %v531, %v755
        %v757 = vpop.f32.mrb[0].mxu0
        %758 = vmatprep.mubr.f32.mxu0 0.0
        %759 = vmatmul.mubr.f32.gmra.mrb[0].mxu0 %v573
        %v760 = vpop.f32.mrb[0].mxu0
        %v761 = vadd.f32 %v531, %v760
        %v762 = vpop.f32.mrb[0].mxu0
        %763 = vmatprep.mubr.f32.mxu0 0.0
        %764 = vmatmul.mubr.f32.gmra.mrb[0].mxu0 %v576
        %v765 = vpop.f32.mrb[0].mxu0
        %v766 = vadd.f32 %v531, %v765
        %v767 = vpop.f32.mrb[0].mxu0
        %768 = vmatprep.mubr.f32.mxu0 0.0
        %769 = vmatmul.mubr.f32.gmra.mrb[0].mxu0 %v579
        %v770 = vpop.f32.mrb[0].mxu0
        %v771 = vadd.f32 %v531, %v770
        %v772 = vpop.f32.mrb[0].mxu0
        %773 = vmatprep.mubr.f32.mxu0 0.0
        %774 = vmatmul.mubr.f32.gmra.mrb[0].mxu0 %v582
        %v775 = vpop.f32.mrb[0].mxu0
        %v776 = vadd.f32 %v531, %v775
        %v777 = vpop.f32.mrb[0].mxu0
        %778 = vmatprep.mubr.f32.mxu0 0.0
        %779 = vmatmul.mubr.f32.gmra.mrb[0].mxu0 %v585
        %v780 = vpop.f32.mrb[0].mxu0
        %v781 = vadd.f32 %v531, %v780
        %v782 = vpop.f32.mrb[0].mxu0
        %783 = vmatprep.mubr.f32.mxu0 0.0
        %784 = vmatmul.mubr.f32.gmra.mrb[0].mxu0 %v588
        %v785 = vpop.f32.mrb[0].mxu0
        %v786 = vadd.f32 %v531, %v785
        %v787 = vpop.f32.mrb[0].mxu0
        %788 = vmatprep.mubr.f32.mxu0 0.0
        %789 = vmatmul.mubr.f32.gmra.mrb[0].mxu0 %v591
        %v790 = vpop.f32.mrb[0].mxu0
        %v791 = vadd.f32 %v531, %v790
        %v792 = vpop.f32.mrb[0].mxu0
        %793 = vmatprep.mubr.f32.mxu0 0.0
        %794 = vmatmul.mubr.f32.gmra.mrb[0].mxu0 %v594
        %v795 = vpop.f32.mrb[0].mxu0
        %v796 = vadd.f32 %v531, %v795
        %v797 = vpop.f32.mrb[0].mxu0
        %798 = vmatprep.mubr.f32.mxu0 0.0
        %799 = vmatmul.mubr.f32.gmra.mrb[0].mxu0 %v597
        %v800 = vpop.f32.mrb[0].mxu0
        %v801 = vadd.f32 %v531, %v800
        %v802 = vpop.f32.mrb[0].mxu0
        %803 = vmatprep.mubr.f32.mxu0 0.0
        %804 = vmatmul.mubr.f32.gmra.mrb[0].mxu0 %v600
        %v805 = vpop.f32.mrb[0].mxu0
        %v806 = vadd.f32 %v531, %v805
        %v807 = vpop.f32.mrb[0].mxu0
        %808 = vmatprep.mubr.f32.mxu0 0.0
        %809 = vmatmul.mubr.f32.gmra.mrb[0].mxu0 %v603
        %v810 = vpop.f32.mrb[0].mxu0
        %v811 = vadd.f32 %v531, %v810
        %v812 = vpop.f32.mrb[0].mxu0
        %813 = vmatprep.mubr.f32.mxu0 0.0
        %814 = vmatmul.mubr.f32.gmra.mrb[0].mxu0 %v606
        %v815 = vpop.f32.mrb[0].mxu0
        %v816 = vadd.f32 %v531, %v815
        %v817 = vpop.f32.mrb[0].mxu0
        %818 = vmatprep.mubr.f32.mxu0 0.0
        %819 = vmatmul.mubr.f32.gmra.mrb[0].mxu0 %v609
        %v820 = vpop.f32.mrb[0].mxu0
        %v821 = vadd.f32 %v531, %v820
        %v822 = vpop.f32.mrb[0].mxu0
        %823 = vmatprep.mubr.f32.mxu0 0.0
        %824 = vmatmul.mubr.f32.gmra.mrb[0].mxu0 %v612
        %v825 = vpop.f32.mrb[0].mxu0
        %v826 = vadd.f32 %v531, %v825
        %v827 = vpop.f32.mrb[0].mxu0
        %828 = vmatprep.mubr.f32.mxu0 0.0
        %829 = vmatmul.mubr.f32.gmra.mrb[0].mxu0 %v615
        %v830 = vpop.f32.mrb[0].mxu0
        %v831 = vadd.f32 %v531, %v830
        %v832 = vpop.f32.mrb[0].mxu0
        %833 = vmatprep.mubr.f32.mxu0 0.0
        %834 = vmatmul.mubr.f32.gmra.mrb[0].mxu0 %v618
        %v835 = vpop.f32.mrb[0].mxu0
        %v836 = vadd.f32 %v531, %v835
        %v837 = vpop.f32.mrb[0].mxu0
        %838 = vmatprep.mubr.f32.mxu0 0.0
        %839 = vmatmul.mubr.f32.gmra.mrb[0].mxu0 %v621
        %v840 = vpop.f32.mrb[0].mxu0
        %v841 = vadd.f32 %v531, %v840
        %v842 = vpop.f32.mrb[0].mxu0
        %843 = vmatprep.mubr.f32.mxu0 0.0
        %844 = vmatmul.mubr.f32.gmra.mrb[0].mxu0 %v624
        %v845 = vpop.f32.mrb[0].mxu0
        %v846 = vadd.f32 %v531, %v845
        %v847 = vpop.f32.mrb[0].mxu0
        %848 = vmatprep.mubr.f32.mxu0 0.0
        %849 = vmatmul.mubr.f32.gmra.mrb[0].mxu0 %v627
        %v850 = vpop.f32.mrb[0].mxu0
        %v851 = vadd.f32 %v531, %v850
        %v852 = vpop.f32.mrb[0].mxu0
        %853 = vdwg.mxu0
        %v854 = vmul.f32 %v696, 0.70710677
        %v855 = vmul.f32 %v701, 0.70710677
        %v856 = vmul.f32 %v706, 0.70710677
        %v857 = vmul.f32 %v711, 0.70710677
        %v858 = vmul.f32 %v716, 0.70710677
        %v859 = vmul.f32 %v721, 0.70710677
        %v860 = vmul.f32 %v726, 0.70710677
        %v861 = vmul.f32 %v731, 0.70710677
        %v862 = vmul.f32 %v736, 0.70710677
        %v863 = vmul.f32 %v741, 0.70710677
        %v864 = vmul.f32 %v746, 0.70710677
        %v865 = vmul.f32 %v751, 0.70710677
        %v866 = vmul.f32 %v756, 0.70710677
        %v867 = vmul.f32 %v761, 0.70710677
        %v868 = vmul.f32 %v766, 0.70710677
        %v869 = vmul.f32 %v771, 0.70710677
        %v870 = vmul.f32 %v776, 0.70710677
        %v871 = vmul.f32 %v781, 0.70710677
        %v872 = vmul.f32 %v786, 0.70710677
        %v873 = vmul.f32 %v791, 0.70710677
        %v874 = vmul.f32 %v796, 0.70710677
        %v875 = vmul.f32 %v801, 0.70710677
        %v876 = vmul.f32 %v806, 0.70710677
        %v877 = vmul.f32 %v811, 0.70710677
        %v878 = vmul.f32 %v816, 0.70710677
        %v879 = vmul.f32 %v821, 0.70710677
        %v880 = vmul.f32 %v826, 0.70710677
        %v881 = vmul.f32 %v831, 0.70710677
        %v882 = vmul.f32 %v836, 0.70710677
        %v883 = vmul.f32 %v841, 0.70710677
        %v884 = vmul.f32 %v846, 0.70710677
        %v885 = vmul.f32 %v851, 0.70710677
        %v886 = vand.u32 2147483647, %v854
        %v887 = vand.u32 2147483647, %v855
        %v888 = vand.u32 2147483647, %v856
        %v889 = vand.u32 2147483647, %v857
        %v890 = vand.u32 2147483647, %v858
        %v891 = vand.u32 2147483647, %v859
        %v892 = vand.u32 2147483647, %v860
        %v893 = vand.u32 2147483647, %v861
        %v894 = vand.u32 2147483647, %v862
        %v895 = vand.u32 2147483647, %v863
        %v896 = vand.u32 2147483647, %v864
        %v897 = vand.u32 2147483647, %v865
        %v898 = vand.u32 2147483647, %v866
        %v899 = vand.u32 2147483647, %v867
        %v900 = vand.u32 2147483647, %v868
        %v901 = vand.u32 2147483647, %v869
        %v902 = vand.u32 2147483647, %v870
        %v903 = vand.u32 2147483647, %v871
        %v904 = vand.u32 2147483647, %v872
        %v905 = vand.u32 2147483647, %v873
        %v906 = vand.u32 2147483647, %v874
        %v907 = vand.u32 2147483647, %v875
        %v908 = vand.u32 2147483647, %v876
        %v909 = vand.u32 2147483647, %v877
        %v910 = vand.u32 2147483647, %v878
        %v911 = vand.u32 2147483647, %v879
        %v912 = vand.u32 2147483647, %v880
        %v913 = vand.u32 2147483647, %v881
        %v914 = vand.u32 2147483647, %v882
        %v915 = vand.u32 2147483647, %v883
        %v916 = vand.u32 2147483647, %v884
        %v917 = vand.u32 2147483647, %v885
        %v918 = vmul.f32 %v886, 0.3275911
        %v919 = vmul.f32 %v887, 0.3275911
        %v920 = vmul.f32 %v888, 0.3275911
        %v921 = vmul.f32 %v889, 0.3275911
        %v922 = vmul.f32 %v890, 0.3275911
        %v923 = vmul.f32 %v891, 0.3275911
        %v924 = vmul.f32 %v892, 0.3275911
        %v925 = vmul.f32 %v893, 0.3275911
        %v926 = vmul.f32 %v894, 0.3275911
        %v927 = vmul.f32 %v895, 0.3275911
        %v928 = vmul.f32 %v896, 0.3275911
        %v929 = vmul.f32 %v897, 0.3275911
        %v930 = vmul.f32 %v898, 0.3275911
        %v931 = vmul.f32 %v899, 0.3275911
        %v932 = vmul.f32 %v900, 0.3275911
        %v933 = vmul.f32 %v901, 0.3275911
        %v934 = vmul.f32 %v902, 0.3275911
        %v935 = vmul.f32 %v903, 0.3275911
        %v936 = vmul.f32 %v904, 0.3275911
        %v937 = vmul.f32 %v905, 0.3275911
        %v938 = vmul.f32 %v906, 0.3275911
        %v939 = vmul.f32 %v907, 0.3275911
        %v940 = vmul.f32 %v908, 0.3275911
        %v941 = vmul.f32 %v909, 0.3275911
        %v942 = vmul.f32 %v910, 0.3275911
        %v943 = vmul.f32 %v911, 0.3275911
        %v944 = vmul.f32 %v912, 0.3275911
        %v945 = vmul.f32 %v913, 0.3275911
        %v946 = vmul.f32 %v914, 0.3275911
        %v947 = vmul.f32 %v915, 0.3275911
        %v948 = vmul.f32 %v916, 0.3275911
        %v949 = vmul.f32 %v917, 0.3275911
        %v950 = vadd.f32 %v918, 1.0
        %v951 = vadd.f32 %v919, 1.0
        %v952 = vadd.f32 %v920, 1.0
        %v953 = vadd.f32 %v921, 1.0
        %v954 = vadd.f32 %v922, 1.0
        %v955 = vadd.f32 %v923, 1.0
        %v956 = vadd.f32 %v924, 1.0
        %v957 = vadd.f32 %v925, 1.0
        %v958 = vadd.f32 %v926, 1.0
        %v959 = vadd.f32 %v927, 1.0
        %v960 = vadd.f32 %v928, 1.0
        %v961 = vadd.f32 %v929, 1.0
        %v962 = vadd.f32 %v930, 1.0
        %v963 = vadd.f32 %v931, 1.0
        %v964 = vadd.f32 %v932, 1.0
        %v965 = vadd.f32 %v933, 1.0
        %v966 = vadd.f32 %v934, 1.0
        %v967 = vadd.f32 %v935, 1.0
        %v968 = vadd.f32 %v936, 1.0
        %v969 = vadd.f32 %v937, 1.0
        %v970 = vadd.f32 %v938, 1.0
        %v971 = vadd.f32 %v939, 1.0
        %v972 = vadd.f32 %v940, 1.0
        %v973 = vadd.f32 %v941, 1.0
        %v974 = vadd.f32 %v942, 1.0
        %v975 = vadd.f32 %v943, 1.0
        %v976 = vadd.f32 %v944, 1.0
        %v977 = vadd.f32 %v945, 1.0
        %v978 = vadd.f32 %v946, 1.0
        %v979 = vadd.f32 %v947, 1.0
        %v980 = vadd.f32 %v948, 1.0
        %v981 = vadd.f32 %v949, 1.0
        %v982 = vrcp.pop %v950
        %v983 = vmul.f32 1.0, %v982
        %v984 = vrcp.pop %v951
        %v985 = vmul.f32 1.0, %v984
        %v986 = vrcp.pop %v952
        %v987 = vmul.f32 1.0, %v986
        %v988 = vrcp.pop %v953
        %v989 = vmul.f32 1.0, %v988
        %v990 = vrcp.pop %v954
        %v991 = vmul.f32 1.0, %v990
        %v992 = vrcp.pop %v955
        %v993 = vmul.f32 1.0, %v992
        %v994 = vrcp.pop %v956
        %v995 = vmul.f32 1.0, %v994
        %v996 = vrcp.pop %v957
        %v997 = vmul.f32 1.0, %v996
        %v998 = vrcp.pop %v958
        %v999 = vmul.f32 1.0, %v998
        %v1000 = vrcp.pop %v959
        %v1001 = vmul.f32 1.0, %v1000
        %v1002 = vrcp.pop %v960
        %v1003 = vmul.f32 1.0, %v1002
        %v1004 = vrcp.pop %v961
        %v1005 = vmul.f32 1.0, %v1004
        %v1006 = vrcp.pop %v962
        %v1007 = vmul.f32 1.0, %v1006
        %v1008 = vrcp.pop %v963
        %v1009 = vmul.f32 1.0, %v1008
        %v1010 = vrcp.pop %v964
        %v1011 = vmul.f32 1.0, %v1010
        %v1012 = vrcp.pop %v965
        %v1013 = vmul.f32 1.0, %v1012
        %v1014 = vrcp.pop %v966
        %v1015 = vmul.f32 1.0, %v1014
        %v1016 = vrcp.pop %v967
        %v1017 = vmul.f32 1.0, %v1016
        %v1018 = vrcp.pop %v968
        %v1019 = vmul.f32 1.0, %v1018
        %v1020 = vrcp.pop %v969
        %v1021 = vmul.f32 1.0, %v1020
        %v1022 = vrcp.pop %v970
        %v1023 = vmul.f32 1.0, %v1022
        %v1024 = vrcp.pop %v971
        %v1025 = vmul.f32 1.0, %v1024
        %v1026 = vrcp.pop %v972
        %v1027 = vmul.f32 1.0, %v1026
        %v1028 = vrcp.pop %v973
        %v1029 = vmul.f32 1.0, %v1028
        %v1030 = vrcp.pop %v974
        %v1031 = vmul.f32 1.0, %v1030
        %v1032 = vrcp.pop %v975
        %v1033 = vmul.f32 1.0, %v1032
        %v1034 = vrcp.pop %v976
        %v1035 = vmul.f32 1.0, %v1034
        %v1036 = vrcp.pop %v977
        %v1037 = vmul.f32 1.0, %v1036
        %v1038 = vrcp.pop %v978
        %v1039 = vmul.f32 1.0, %v1038
        %v1040 = vrcp.pop %v979
        %v1041 = vmul.f32 1.0, %v1040
        %v1042 = vrcp.pop %v980
        %v1043 = vmul.f32 1.0, %v1042
        %v1044 = vrcp.pop %v981
        %v1045 = vmul.f32 1.0, %v1044
        %v1046 = vmul.f32 %v983, 1.0614054
        %v1047 = vmul.f32 %v985, 1.0614054
        %v1048 = vmul.f32 %v987, 1.0614054
        %v1049 = vmul.f32 %v989, 1.0614054
        %v1050 = vmul.f32 %v991, 1.0614054
        %v1051 = vmul.f32 %v993, 1.0614054
        %v1052 = vmul.f32 %v995, 1.0614054
        %v1053 = vmul.f32 %v997, 1.0614054
        %v1054 = vmul.f32 %v999, 1.0614054
        %v1055 = vmul.f32 %v1001, 1.0614054
        %v1056 = vmul.f32 %v1003, 1.0614054
        %v1057 = vmul.f32 %v1005, 1.0614054
        %v1058 = vmul.f32 %v1007, 1.0614054
        %v1059 = vmul.f32 %v1009, 1.0614054
        %v1060 = vmul.f32 %v1011, 1.0614054
        %v1061 = vmul.f32 %v1013, 1.0614054
        %v1062 = vmul.f32 %v1015, 1.0614054
        %v1063 = vmul.f32 %v1017, 1.0614054
        %v1064 = vmul.f32 %v1019, 1.0614054
        %v1065 = vmul.f32 %v1021, 1.0614054
        %v1066 = vmul.f32 %v1023, 1.0614054
        %v1067 = vmul.f32 %v1025, 1.0614054
        %v1068 = vmul.f32 %v1027, 1.0614054
        %v1069 = vmul.f32 %v1029, 1.0614054
        %v1070 = vmul.f32 %v1031, 1.0614054
        %v1071 = vmul.f32 %v1033, 1.0614054
        %v1072 = vmul.f32 %v1035, 1.0614054
        %v1073 = vmul.f32 %v1037, 1.0614054
        %v1074 = vmul.f32 %v1039, 1.0614054
        %v1075 = vmul.f32 %v1041, 1.0614054
        %v1076 = vmul.f32 %v1043, 1.0614054
        %v1077 = vmul.f32 %v1045, 1.0614054
        %v1078 = vadd.f32 %v1046, -1.4531521
        %v1079 = vadd.f32 %v1047, -1.4531521
        %v1080 = vadd.f32 %v1048, -1.4531521
        %v1081 = vadd.f32 %v1049, -1.4531521
        %v1082 = vadd.f32 %v1050, -1.4531521
        %v1083 = vadd.f32 %v1051, -1.4531521
        %v1084 = vadd.f32 %v1052, -1.4531521
        %v1085 = vadd.f32 %v1053, -1.4531521
        %v1086 = vadd.f32 %v1054, -1.4531521
        %v1087 = vadd.f32 %v1055, -1.4531521
        %v1088 = vadd.f32 %v1056, -1.4531521
        %v1089 = vadd.f32 %v1057, -1.4531521
        %v1090 = vadd.f32 %v1058, -1.4531521
        %v1091 = vadd.f32 %v1059, -1.4531521
        %v1092 = vadd.f32 %v1060, -1.4531521
        %v1093 = vadd.f32 %v1061, -1.4531521
        %v1094 = vadd.f32 %v1062, -1.4531521
        %v1095 = vadd.f32 %v1063, -1.4531521
        %v1096 = vadd.f32 %v1064, -1.4531521
        %v1097 = vadd.f32 %v1065, -1.4531521
        %v1098 = vadd.f32 %v1066, -1.4531521
        %v1099 = vadd.f32 %v1067, -1.4531521
        %v1100 = vadd.f32 %v1068, -1.4531521
        %v1101 = vadd.f32 %v1069, -1.4531521
        %v1102 = vadd.f32 %v1070, -1.4531521
        %v1103 = vadd.f32 %v1071, -1.4531521
        %v1104 = vadd.f32 %v1072, -1.4531521
        %v1105 = vadd.f32 %v1073, -1.4531521
        %v1106 = vadd.f32 %v1074, -1.4531521
        %v1107 = vadd.f32 %v1075, -1.4531521
        %v1108 = vadd.f32 %v1076, -1.4531521
        %v1109 = vadd.f32 %v1077, -1.4531521
        %v1110 = vmul.f32 %v983, %v1078
        %v1111 = vmul.f32 %v985, %v1079
        %v1112 = vmul.f32 %v987, %v1080
        %v1113 = vmul.f32 %v989, %v1081
        %v1114 = vmul.f32 %v991, %v1082
        %v1115 = vmul.f32 %v993, %v1083
        %v1116 = vmul.f32 %v995, %v1084
        %v1117 = vmul.f32 %v997, %v1085
        %v1118 = vmul.f32 %v999, %v1086
        %v1119 = vmul.f32 %v1001, %v1087
        %v1120 = vmul.f32 %v1003, %v1088
        %v1121 = vmul.f32 %v1005, %v1089
        %v1122 = vmul.f32 %v1007, %v1090
        %v1123 = vmul.f32 %v1009, %v1091
        %v1124 = vmul.f32 %v1011, %v1092
        %v1125 = vmul.f32 %v1013, %v1093
        %v1126 = vmul.f32 %v1015, %v1094
        %v1127 = vmul.f32 %v1017, %v1095
        %v1128 = vmul.f32 %v1019, %v1096
        %v1129 = vmul.f32 %v1021, %v1097
        %v1130 = vmul.f32 %v1023, %v1098
        %v1131 = vmul.f32 %v1025, %v1099
        %v1132 = vmul.f32 %v1027, %v1100
        %v1133 = vmul.f32 %v1029, %v1101
        %v1134 = vmul.f32 %v1031, %v1102
        %v1135 = vmul.f32 %v1033, %v1103
        %v1136 = vmul.f32 %v1035, %v1104
        %v1137 = vmul.f32 %v1037, %v1105
        %v1138 = vmul.f32 %v1039, %v1106
        %v1139 = vmul.f32 %v1041, %v1107
        %v1140 = vmul.f32 %v1043, %v1108
        %v1141 = vmul.f32 %v1045, %v1109
        %v1142 = vadd.f32 %v1110, 1.4214138
        %v1143 = vadd.f32 %v1111, 1.4214138
        %v1144 = vadd.f32 %v1112, 1.4214138
        %v1145 = vadd.f32 %v1113, 1.4214138
        %v1146 = vadd.f32 %v1114, 1.4214138
        %v1147 = vadd.f32 %v1115, 1.4214138
        %v1148 = vadd.f32 %v1116, 1.4214138
        %v1149 = vadd.f32 %v1117, 1.4214138
        %v1150 = vadd.f32 %v1118, 1.4214138
        %v1151 = vadd.f32 %v1119, 1.4214138
        %v1152 = vadd.f32 %v1120, 1.4214138
        %v1153 = vadd.f32 %v1121, 1.4214138
        %v1154 = vadd.f32 %v1122, 1.4214138
        %v1155 = vadd.f32 %v1123, 1.4214138
        %v1156 = vadd.f32 %v1124, 1.4214138
        %v1157 = vadd.f32 %v1125, 1.4214138
        %v1158 = vadd.f32 %v1126, 1.4214138
        %v1159 = vadd.f32 %v1127, 1.4214138
        %v1160 = vadd.f32 %v1128, 1.4214138
        %v1161 = vadd.f32 %v1129, 1.4214138
        %v1162 = vadd.f32 %v1130, 1.4214138
        %v1163 = vadd.f32 %v1131, 1.4214138
        %v1164 = vadd.f32 %v1132, 1.4214138
        %v1165 = vadd.f32 %v1133, 1.4214138
        %v1166 = vadd.f32 %v1134, 1.4214138
        %v1167 = vadd.f32 %v1135, 1.4214138
        %v1168 = vadd.f32 %v1136, 1.4214138
        %v1169 = vadd.f32 %v1137, 1.4214138
        %v1170 = vadd.f32 %v1138, 1.4214138
        %v1171 = vadd.f32 %v1139, 1.4214138
        %v1172 = vadd.f32 %v1140, 1.4214138
        %v1173 = vadd.f32 %v1141, 1.4214138
        %v1174 = vmul.f32 %v983, %v1142
        %v1175 = vmul.f32 %v985, %v1143
        %v1176 = vmul.f32 %v987, %v1144
        %v1177 = vmul.f32 %v989, %v1145
        %v1178 = vmul.f32 %v991, %v1146
        %v1179 = vmul.f32 %v993, %v1147
        %v1180 = vmul.f32 %v995, %v1148
        %v1181 = vmul.f32 %v997, %v1149
        %v1182 = vmul.f32 %v999, %v1150
        %v1183 = vmul.f32 %v1001, %v1151
        %v1184 = vmul.f32 %v1003, %v1152
        %v1185 = vmul.f32 %v1005, %v1153
        %v1186 = vmul.f32 %v1007, %v1154
        %v1187 = vmul.f32 %v1009, %v1155
        %v1188 = vmul.f32 %v1011, %v1156
        %v1189 = vmul.f32 %v1013, %v1157
        %v1190 = vmul.f32 %v1015, %v1158
        %v1191 = vmul.f32 %v1017, %v1159
        %v1192 = vmul.f32 %v1019, %v1160
        %v1193 = vmul.f32 %v1021, %v1161
        %v1194 = vmul.f32 %v1023, %v1162
        %v1195 = vmul.f32 %v1025, %v1163
        %v1196 = vmul.f32 %v1027, %v1164
        %v1197 = vmul.f32 %v1029, %v1165
        %v1198 = vmul.f32 %v1031, %v1166
        %v1199 = vmul.f32 %v1033, %v1167
        %v1200 = vmul.f32 %v1035, %v1168
        %v1201 = vmul.f32 %v1037, %v1169
        %v1202 = vmul.f32 %v1039, %v1170
        %v1203 = vmul.f32 %v1041, %v1171
        %v1204 = vmul.f32 %v1043, %v1172
        %v1205 = vmul.f32 %v1045, %v1173
        %v1206 = vadd.f32 %v1174, -0.28449672
        %v1207 = vadd.f32 %v1175, -0.28449672
        %v1208 = vadd.f32 %v1176, -0.28449672
        %v1209 = vadd.f32 %v1177, -0.28449672
        %v1210 = vadd.f32 %v1178, -0.28449672
        %v1211 = vadd.f32 %v1179, -0.28449672
        %v1212 = vadd.f32 %v1180, -0.28449672
        %v1213 = vadd.f32 %v1181, -0.28449672
        %v1214 = vadd.f32 %v1182, -0.28449672
        %v1215 = vadd.f32 %v1183, -0.28449672
        %v1216 = vadd.f32 %v1184, -0.28449672
        %v1217 = vadd.f32 %v1185, -0.28449672
        %v1218 = vadd.f32 %v1186, -0.28449672
        %v1219 = vadd.f32 %v1187, -0.28449672
        %v1220 = vadd.f32 %v1188, -0.28449672
        %v1221 = vadd.f32 %v1189, -0.28449672
        %v1222 = vadd.f32 %v1190, -0.28449672
        %v1223 = vadd.f32 %v1191, -0.28449672
        %v1224 = vadd.f32 %v1192, -0.28449672
        %v1225 = vadd.f32 %v1193, -0.28449672
        %v1226 = vadd.f32 %v1194, -0.28449672
        %v1227 = vadd.f32 %v1195, -0.28449672
        %v1228 = vadd.f32 %v1196, -0.28449672
        %v1229 = vadd.f32 %v1197, -0.28449672
        %v1230 = vadd.f32 %v1198, -0.28449672
        %v1231 = vadd.f32 %v1199, -0.28449672
        %v1232 = vadd.f32 %v1200, -0.28449672
        %v1233 = vadd.f32 %v1201, -0.28449672
        %v1234 = vadd.f32 %v1202, -0.28449672
        %v1235 = vadd.f32 %v1203, -0.28449672
        %v1236 = vadd.f32 %v1204, -0.28449672
        %v1237 = vadd.f32 %v1205, -0.28449672
        %v1238 = vmul.f32 %v983, %v1206
        %v1239 = vmul.f32 %v985, %v1207
        %v1240 = vmul.f32 %v987, %v1208
        %v1241 = vmul.f32 %v989, %v1209
        %v1242 = vmul.f32 %v991, %v1210
        %v1243 = vmul.f32 %v993, %v1211
        %v1244 = vmul.f32 %v995, %v1212
        %v1245 = vmul.f32 %v997, %v1213
        %v1246 = vmul.f32 %v999, %v1214
        %v1247 = vmul.f32 %v1001, %v1215
        %v1248 = vmul.f32 %v1003, %v1216
        %v1249 = vmul.f32 %v1005, %v1217
        %v1250 = vmul.f32 %v1007, %v1218
        %v1251 = vmul.f32 %v1009, %v1219
        %v1252 = vmul.f32 %v1011, %v1220
        %v1253 = vmul.f32 %v1013, %v1221
        %v1254 = vmul.f32 %v1015, %v1222
        %v1255 = vmul.f32 %v1017, %v1223
        %v1256 = vmul.f32 %v1019, %v1224
        %v1257 = vmul.f32 %v1021, %v1225
        %v1258 = vmul.f32 %v1023, %v1226
        %v1259 = vmul.f32 %v1025, %v1227
        %v1260 = vmul.f32 %v1027, %v1228
        %v1261 = vmul.f32 %v1029, %v1229
        %v1262 = vmul.f32 %v1031, %v1230
        %v1263 = vmul.f32 %v1033, %v1231
        %v1264 = vmul.f32 %v1035, %v1232
        %v1265 = vmul.f32 %v1037, %v1233
        %v1266 = vmul.f32 %v1039, %v1234
        %v1267 = vmul.f32 %v1041, %v1235
        %v1268 = vmul.f32 %v1043, %v1236
        %v1269 = vmul.f32 %v1045, %v1237
        %v1270 = vadd.f32 %v1238, 0.2548296
        %v1271 = vadd.f32 %v1239, 0.2548296
        %v1272 = vadd.f32 %v1240, 0.2548296
        %v1273 = vadd.f32 %v1241, 0.2548296
        %v1274 = vadd.f32 %v1242, 0.2548296
        %v1275 = vadd.f32 %v1243, 0.2548296
        %v1276 = vadd.f32 %v1244, 0.2548296
        %v1277 = vadd.f32 %v1245, 0.2548296
        %v1278 = vadd.f32 %v1246, 0.2548296
        %v1279 = vadd.f32 %v1247, 0.2548296
        %v1280 = vadd.f32 %v1248, 0.2548296
        %v1281 = vadd.f32 %v1249, 0.2548296
        %v1282 = vadd.f32 %v1250, 0.2548296
        %v1283 = vadd.f32 %v1251, 0.2548296
        %v1284 = vadd.f32 %v1252, 0.2548296
        %v1285 = vadd.f32 %v1253, 0.2548296
        %v1286 = vadd.f32 %v1254, 0.2548296
        %v1287 = vadd.f32 %v1255, 0.2548296
        %v1288 = vadd.f32 %v1256, 0.2548296
        %v1289 = vadd.f32 %v1257, 0.2548296
        %v1290 = vadd.f32 %v1258, 0.2548296
        %v1291 = vadd.f32 %v1259, 0.2548296
        %v1292 = vadd.f32 %v1260, 0.2548296
        %v1293 = vadd.f32 %v1261, 0.2548296
        %v1294 = vadd.f32 %v1262, 0.2548296
        %v1295 = vadd.f32 %v1263, 0.2548296
        %v1296 = vadd.f32 %v1264, 0.2548296
        %v1297 = vadd.f32 %v1265, 0.2548296
        %v1298 = vadd.f32 %v1266, 0.2548296
        %v1299 = vadd.f32 %v1267, 0.2548296
        %v1300 = vadd.f32 %v1268, 0.2548296
        %v1301 = vadd.f32 %v1269, 0.2548296
        %v1302 = vmul.f32 %v983, %v1270
        %v1303 = vmul.f32 %v985, %v1271
        %v1304 = vmul.f32 %v987, %v1272
        %v1305 = vmul.f32 %v989, %v1273
        %v1306 = vmul.f32 %v991, %v1274
        %v1307 = vmul.f32 %v993, %v1275
        %v1308 = vmul.f32 %v995, %v1276
        %v1309 = vmul.f32 %v997, %v1277
        %v1310 = vmul.f32 %v999, %v1278
        %v1311 = vmul.f32 %v1001, %v1279
        %v1312 = vmul.f32 %v1003, %v1280
        %v1313 = vmul.f32 %v1005, %v1281
        %v1314 = vmul.f32 %v1007, %v1282
        %v1315 = vmul.f32 %v1009, %v1283
        %v1316 = vmul.f32 %v1011, %v1284
        %v1317 = vmul.f32 %v1013, %v1285
        %v1318 = vmul.f32 %v1015, %v1286
        %v1319 = vmul.f32 %v1017, %v1287
        %v1320 = vmul.f32 %v1019, %v1288
        %v1321 = vmul.f32 %v1021, %v1289
        %v1322 = vmul.f32 %v1023, %v1290
        %v1323 = vmul.f32 %v1025, %v1291
        %v1324 = vmul.f32 %v1027, %v1292
        %v1325 = vmul.f32 %v1029, %v1293
        %v1326 = vmul.f32 %v1031, %v1294
        %v1327 = vmul.f32 %v1033, %v1295
        %v1328 = vmul.f32 %v1035, %v1296
        %v1329 = vmul.f32 %v1037, %v1297
        %v1330 = vmul.f32 %v1039, %v1298
        %v1331 = vmul.f32 %v1041, %v1299
        %v1332 = vmul.f32 %v1043, %v1300
        %v1333 = vmul.f32 %v1045, %v1301
        %v1334 = vsub.f32 0.0, %v886
        %v1335 = vsub.f32 0.0, %v887
        %v1336 = vsub.f32 0.0, %v888
        %v1337 = vsub.f32 0.0, %v889
        %v1338 = vsub.f32 0.0, %v890
        %v1339 = vsub.f32 0.0, %v891
        %v1340 = vsub.f32 0.0, %v892
        %v1341 = vsub.f32 0.0, %v893
        %v1342 = vsub.f32 0.0, %v894
        %v1343 = vsub.f32 0.0, %v895
        %v1344 = vsub.f32 0.0, %v896
        %v1345 = vsub.f32 0.0, %v897
        %v1346 = vsub.f32 0.0, %v898
        %v1347 = vsub.f32 0.0, %v899
        %v1348 = vsub.f32 0.0, %v900
        %v1349 = vsub.f32 0.0, %v901
        %v1350 = vsub.f32 0.0, %v902
        %v1351 = vsub.f32 0.0, %v903
        %v1352 = vsub.f32 0.0, %v904
        %v1353 = vsub.f32 0.0, %v905
        %v1354 = vsub.f32 0.0, %v906
        %v1355 = vsub.f32 0.0, %v907
        %v1356 = vsub.f32 0.0, %v908
        %v1357 = vsub.f32 0.0, %v909
        %v1358 = vsub.f32 0.0, %v910
        %v1359 = vsub.f32 0.0, %v911
        %v1360 = vsub.f32 0.0, %v912
        %v1361 = vsub.f32 0.0, %v913
        %v1362 = vsub.f32 0.0, %v914
        %v1363 = vsub.f32 0.0, %v915
        %v1364 = vsub.f32 0.0, %v916
        %v1365 = vsub.f32 0.0, %v917
        %v1366 = vmul.f32 %v1334, %v886
        %v1367 = vmul.f32 %v1335, %v887
        %v1368 = vmul.f32 %v1336, %v888
        %v1369 = vmul.f32 %v1337, %v889
        %v1370 = vmul.f32 %v1338, %v890
        %v1371 = vmul.f32 %v1339, %v891
        %v1372 = vmul.f32 %v1340, %v892
        %v1373 = vmul.f32 %v1341, %v893
        %v1374 = vmul.f32 %v1342, %v894
        %v1375 = vmul.f32 %v1343, %v895
        %v1376 = vmul.f32 %v1344, %v896
        %v1377 = vmul.f32 %v1345, %v897
        %v1378 = vmul.f32 %v1346, %v898
        %v1379 = vmul.f32 %v1347, %v899
        %v1380 = vmul.f32 %v1348, %v900
        %v1381 = vmul.f32 %v1349, %v901
        %v1382 = vmul.f32 %v1350, %v902
        %v1383 = vmul.f32 %v1351, %v903
        %v1384 = vmul.f32 %v1352, %v904
        %v1385 = vmul.f32 %v1353, %v905
        %v1386 = vmul.f32 %v1354, %v906
        %v1387 = vmul.f32 %v1355, %v907
        %v1388 = vmul.f32 %v1356, %v908
        %v1389 = vmul.f32 %v1357, %v909
        %v1390 = vmul.f32 %v1358, %v910
        %v1391 = vmul.f32 %v1359, %v911
        %v1392 = vmul.f32 %v1360, %v912
        %v1393 = vmul.f32 %v1361, %v913
        %v1394 = vmul.f32 %v1362, %v914
        %v1395 = vmul.f32 %v1363, %v915
        %v1396 = vmul.f32 %v1364, %v916
        %v1397 = vmul.f32 %v1365, %v917
        %v1398 = vmul.f32 %v1366, 1.442695
        %v1399 = vpow.pop %v1398
        %v1400 = vmul.f32 %v1367, 1.442695
        %v1401 = vpow.pop %v1400
        %v1402 = vmul.f32 %v1368, 1.442695
        %v1403 = vpow.pop %v1402
        %v1404 = vmul.f32 %v1369, 1.442695
        %v1405 = vpow.pop %v1404
        %v1406 = vmul.f32 %v1370, 1.442695
        %v1407 = vpow.pop %v1406
        %v1408 = vmul.f32 %v1371, 1.442695
        %v1409 = vpow.pop %v1408
        %v1410 = vmul.f32 %v1372, 1.442695
        %v1411 = vpow.pop %v1410
        %v1412 = vmul.f32 %v1373, 1.442695
        %v1413 = vpow.pop %v1412
        %v1414 = vmul.f32 %v1374, 1.442695
        %v1415 = vpow.pop %v1414
        %v1416 = vmul.f32 %v1375, 1.442695
        %v1417 = vpow.pop %v1416
        %v1418 = vmul.f32 %v1376, 1.442695
        %v1419 = vpow.pop %v1418
        %v1420 = vmul.f32 %v1377, 1.442695
        %v1421 = vpow.pop %v1420
        %v1422 = vmul.f32 %v1378, 1.442695
        %v1423 = vpow.pop %v1422
        %v1424 = vmul.f32 %v1379, 1.442695
        %v1425 = vpow.pop %v1424
        %v1426 = vmul.f32 %v1380, 1.442695
        %v1427 = vpow.pop %v1426
        %v1428 = vmul.f32 %v1381, 1.442695
        %v1429 = vpow.pop %v1428
        %v1430 = vmul.f32 %v1382, 1.442695
        %v1431 = vpow.pop %v1430
        %v1432 = vmul.f32 %v1383, 1.442695
        %v1433 = vpow.pop %v1432
        %v1434 = vmul.f32 %v1384, 1.442695
        %v1435 = vpow.pop %v1434
        %v1436 = vmul.f32 %v1385, 1.442695
        %v1437 = vpow.pop %v1436
        %v1438 = vmul.f32 %v1386, 1.442695
        %v1439 = vpow.pop %v1438
        %v1440 = vmul.f32 %v1387, 1.442695
        %v1441 = vpow.pop %v1440
        %v1442 = vmul.f32 %v1388, 1.442695
        %v1443 = vpow.pop %v1442
        %v1444 = vmul.f32 %v1389, 1.442695
        %v1445 = vpow.pop %v1444
        %v1446 = vmul.f32 %v1390, 1.442695
        %v1447 = vpow.pop %v1446
        %v1448 = vmul.f32 %v1391, 1.442695
        %v1449 = vpow.pop %v1448
        %v1450 = vmul.f32 %v1392, 1.442695
        %v1451 = vpow.pop %v1450
        %v1452 = vmul.f32 %v1393, 1.442695
        %v1453 = vpow.pop %v1452
        %v1454 = vmul.f32 %v1394, 1.442695
        %v1455 = vpow.pop %v1454
        %v1456 = vmul.f32 %v1395, 1.442695
        %v1457 = vpow.pop %v1456
        %v1458 = vmul.f32 %v1396, 1.442695
        %v1459 = vpow.pop %v1458
        %v1460 = vmul.f32 %v1397, 1.442695
        %v1461 = vpow.pop %v1460
        %v1462 = vmul.f32 %v1302, %v1399
        %v1463 = vmul.f32 %v1303, %v1401
        %v1464 = vmul.f32 %v1304, %v1403
        %v1465 = vmul.f32 %v1305, %v1405
        %v1466 = vmul.f32 %v1306, %v1407
        %v1467 = vmul.f32 %v1307, %v1409
        %v1468 = vmul.f32 %v1308, %v1411
        %v1469 = vmul.f32 %v1309, %v1413
        %v1470 = vmul.f32 %v1310, %v1415
        %v1471 = vmul.f32 %v1311, %v1417
        %v1472 = vmul.f32 %v1312, %v1419
        %v1473 = vmul.f32 %v1313, %v1421
        %v1474 = vmul.f32 %v1314, %v1423
        %v1475 = vmul.f32 %v1315, %v1425
        %v1476 = vmul.f32 %v1316, %v1427
        %v1477 = vmul.f32 %v1317, %v1429
        %v1478 = vmul.f32 %v1318, %v1431
        %v1479 = vmul.f32 %v1319, %v1433
        %v1480 = vmul.f32 %v1320, %v1435
        %v1481 = vmul.f32 %v1321, %v1437
        %v1482 = vmul.f32 %v1322, %v1439
        %v1483 = vmul.f32 %v1323, %v1441
        %v1484 = vmul.f32 %v1324, %v1443
        %v1485 = vmul.f32 %v1325, %v1445
        %v1486 = vmul.f32 %v1326, %v1447
        %v1487 = vmul.f32 %v1327, %v1449
        %v1488 = vmul.f32 %v1328, %v1451
        %v1489 = vmul.f32 %v1329, %v1453
        %v1490 = vmul.f32 %v1330, %v1455
        %v1491 = vmul.f32 %v1331, %v1457
        %v1492 = vmul.f32 %v1332, %v1459
        %v1493 = vmul.f32 %v1333, %v1461
        %v1494 = vsub.f32 1.0, %v1462
        %v1495 = vsub.f32 1.0, %v1463
        %v1496 = vsub.f32 1.0, %v1464
        %v1497 = vsub.f32 1.0, %v1465
        %v1498 = vsub.f32 1.0, %v1466
        %v1499 = vsub.f32 1.0, %v1467
        %v1500 = vsub.f32 1.0, %v1468
        %v1501 = vsub.f32 1.0, %v1469
        %v1502 = vsub.f32 1.0, %v1470
        %v1503 = vsub.f32 1.0, %v1471
        %v1504 = vsub.f32 1.0, %v1472
        %v1505 = vsub.f32 1.0, %v1473
        %v1506 = vsub.f32 1.0, %v1474
        %v1507 = vsub.f32 1.0, %v1475
        %v1508 = vsub.f32 1.0, %v1476
        %v1509 = vsub.f32 1.0, %v1477
        %v1510 = vsub.f32 1.0, %v1478
        %v1511 = vsub.f32 1.0, %v1479
        %v1512 = vsub.f32 1.0, %v1480
        %v1513 = vsub.f32 1.0, %v1481
        %v1514 = vsub.f32 1.0, %v1482
        %v1515 = vsub.f32 1.0, %v1483
        %v1516 = vsub.f32 1.0, %v1484
        %v1517 = vsub.f32 1.0, %v1485
        %v1518 = vsub.f32 1.0, %v1486
        %v1519 = vsub.f32 1.0, %v1487
        %v1520 = vsub.f32 1.0, %v1488
        %v1521 = vsub.f32 1.0, %v1489
        %v1522 = vsub.f32 1.0, %v1490
        %v1523 = vsub.f32 1.0, %v1491
        %v1524 = vsub.f32 1.0, %v1492
        %v1525 = vsub.f32 1.0, %v1493
        %vm1526 = vcmp.lt.f32.partialorder %v854, 0.0
        %vm1527 = vcmp.lt.f32.partialorder %v855, 0.0
        %vm1528 = vcmp.lt.f32.partialorder %v856, 0.0
        %vm1529 = vcmp.lt.f32.partialorder %v857, 0.0
        %vm1530 = vcmp.lt.f32.partialorder %v858, 0.0
        %vm1531 = vcmp.lt.f32.partialorder %v859, 0.0
        %vm1532 = vcmp.lt.f32.partialorder %v860, 0.0
        %vm1533 = vcmp.lt.f32.partialorder %v861, 0.0
        %vm1534 = vcmp.lt.f32.partialorder %v862, 0.0
        %vm1535 = vcmp.lt.f32.partialorder %v863, 0.0
        %vm1536 = vcmp.lt.f32.partialorder %v864, 0.0
        %vm1537 = vcmp.lt.f32.partialorder %v865, 0.0
        %vm1538 = vcmp.lt.f32.partialorder %v866, 0.0
        %vm1539 = vcmp.lt.f32.partialorder %v867, 0.0
        %vm1540 = vcmp.lt.f32.partialorder %v868, 0.0
        %vm1541 = vcmp.lt.f32.partialorder %v869, 0.0
        %vm1542 = vcmp.lt.f32.partialorder %v870, 0.0
        %vm1543 = vcmp.lt.f32.partialorder %v871, 0.0
        %vm1544 = vcmp.lt.f32.partialorder %v872, 0.0
        %vm1545 = vcmp.lt.f32.partialorder %v873, 0.0
        %vm1546 = vcmp.lt.f32.partialorder %v874, 0.0
        %vm1547 = vcmp.lt.f32.partialorder %v875, 0.0
        %vm1548 = vcmp.lt.f32.partialorder %v876, 0.0
        %vm1549 = vcmp.lt.f32.partialorder %v877, 0.0
        %vm1550 = vcmp.lt.f32.partialorder %v878, 0.0
        %vm1551 = vcmp.lt.f32.partialorder %v879, 0.0
        %vm1552 = vcmp.lt.f32.partialorder %v880, 0.0
        %vm1553 = vcmp.lt.f32.partialorder %v881, 0.0
        %vm1554 = vcmp.lt.f32.partialorder %v882, 0.0
        %vm1555 = vcmp.lt.f32.partialorder %v883, 0.0
        %vm1556 = vcmp.lt.f32.partialorder %v884, 0.0
        %vm1557 = vcmp.lt.f32.partialorder %v885, 0.0
        %v1558 = vsub.f32 0.0, %v1494
        %v1559 = vsub.f32 0.0, %v1495
        %v1560 = vsub.f32 0.0, %v1496
        %v1561 = vsub.f32 0.0, %v1497
        %v1562 = vsub.f32 0.0, %v1498
        %v1563 = vsub.f32 0.0, %v1499
        %v1564 = vsub.f32 0.0, %v1500
        %v1565 = vsub.f32 0.0, %v1501
        %v1566 = vsub.f32 0.0, %v1502
        %v1567 = vsub.f32 0.0, %v1503
        %v1568 = vsub.f32 0.0, %v1504
        %v1569 = vsub.f32 0.0, %v1505
        %v1570 = vsub.f32 0.0, %v1506
        %v1571 = vsub.f32 0.0, %v1507
        %v1572 = vsub.f32 0.0, %v1508
        %v1573 = vsub.f32 0.0, %v1509
        %v1574 = vsub.f32 0.0, %v1510
        %v1575 = vsub.f32 0.0, %v1511
        %v1576 = vsub.f32 0.0, %v1512
        %v1577 = vsub.f32 0.0, %v1513
        %v1578 = vsub.f32 0.0, %v1514
        %v1579 = vsub.f32 0.0, %v1515
        %v1580 = vsub.f32 0.0, %v1516
        %v1581 = vsub.f32 0.0, %v1517
        %v1582 = vsub.f32 0.0, %v1518
        %v1583 = vsub.f32 0.0, %v1519
        %v1584 = vsub.f32 0.0, %v1520
        %v1585 = vsub.f32 0.0, %v1521
        %v1586 = vsub.f32 0.0, %v1522
        %v1587 = vsub.f32 0.0, %v1523
        %v1588 = vsub.f32 0.0, %v1524
        %v1589 = vsub.f32 0.0, %v1525
        %v1590 = vsel %vm1526, %v1558, %v1494
        %v1591 = vsel %vm1527, %v1559, %v1495
        %v1592 = vsel %vm1528, %v1560, %v1496
        %v1593 = vsel %vm1529, %v1561, %v1497
        %v1594 = vsel %vm1530, %v1562, %v1498
        %v1595 = vsel %vm1531, %v1563, %v1499
        %v1596 = vsel %vm1532, %v1564, %v1500
        %v1597 = vsel %vm1533, %v1565, %v1501
        %v1598 = vsel %vm1534, %v1566, %v1502
        %v1599 = vsel %vm1535, %v1567, %v1503
        %v1600 = vsel %vm1536, %v1568, %v1504
        %v1601 = vsel %vm1537, %v1569, %v1505
        %v1602 = vsel %vm1538, %v1570, %v1506
        %v1603 = vsel %vm1539, %v1571, %v1507
        %v1604 = vsel %vm1540, %v1572, %v1508
        %v1605 = vsel %vm1541, %v1573, %v1509
        %v1606 = vsel %vm1542, %v1574, %v1510
        %v1607 = vsel %vm1543, %v1575, %v1511
        %v1608 = vsel %vm1544, %v1576, %v1512
        %v1609 = vsel %vm1545, %v1577, %v1513
        %v1610 = vsel %vm1546, %v1578, %v1514
        %v1611 = vsel %vm1547, %v1579, %v1515
        %v1612 = vsel %vm1548, %v1580, %v1516
        %v1613 = vsel %vm1549, %v1581, %v1517
        %v1614 = vsel %vm1550, %v1582, %v1518
        %v1615 = vsel %vm1551, %v1583, %v1519
        %v1616 = vsel %vm1552, %v1584, %v1520
        %v1617 = vsel %vm1553, %v1585, %v1521
        %v1618 = vsel %vm1554, %v1586, %v1522
        %v1619 = vsel %vm1555, %v1587, %v1523
        %v1620 = vsel %vm1556, %v1588, %v1524
        %v1621 = vsel %vm1557, %v1589, %v1525
        %v1622 = vmul.f32 %v696, 0.5
        %v1623 = vmul.f32 %v701, 0.5
        %v1624 = vmul.f32 %v706, 0.5
        %v1625 = vmul.f32 %v711, 0.5
        %v1626 = vmul.f32 %v716, 0.5
        %v1627 = vmul.f32 %v721, 0.5
        %v1628 = vmul.f32 %v726, 0.5
        %v1629 = vmul.f32 %v731, 0.5
        %v1630 = vmul.f32 %v736, 0.5
        %v1631 = vmul.f32 %v741, 0.5
        %v1632 = vmul.f32 %v746, 0.5
        %v1633 = vmul.f32 %v751, 0.5
        %v1634 = vmul.f32 %v756, 0.5
        %v1635 = vmul.f32 %v761, 0.5
        %v1636 = vmul.f32 %v766, 0.5
        %v1637 = vmul.f32 %v771, 0.5
        %v1638 = vmul.f32 %v776, 0.5
        %v1639 = vmul.f32 %v781, 0.5
        %v1640 = vmul.f32 %v786, 0.5
        %v1641 = vmul.f32 %v791, 0.5
        %v1642 = vmul.f32 %v796, 0.5
        %v1643 = vmul.f32 %v801, 0.5
        %v1644 = vmul.f32 %v806, 0.5
        %v1645 = vmul.f32 %v811, 0.5
        %v1646 = vmul.f32 %v816, 0.5
        %v1647 = vmul.f32 %v821, 0.5
        %v1648 = vmul.f32 %v826, 0.5
        %v1649 = vmul.f32 %v831, 0.5
        %v1650 = vmul.f32 %v836, 0.5
        %v1651 = vmul.f32 %v841, 0.5
        %v1652 = vmul.f32 %v846, 0.5
        %v1653 = vmul.f32 %v851, 0.5
        %v1654 = vadd.f32 %v1590, 1.0
        %v1655 = vadd.f32 %v1591, 1.0
        %v1656 = vadd.f32 %v1592, 1.0
        %v1657 = vadd.f32 %v1593, 1.0
        %v1658 = vadd.f32 %v1594, 1.0
        %v1659 = vadd.f32 %v1595, 1.0
        %v1660 = vadd.f32 %v1596, 1.0
        %v1661 = vadd.f32 %v1597, 1.0
        %v1662 = vadd.f32 %v1598, 1.0
        %v1663 = vadd.f32 %v1599, 1.0
        %v1664 = vadd.f32 %v1600, 1.0
        %v1665 = vadd.f32 %v1601, 1.0
        %v1666 = vadd.f32 %v1602, 1.0
        %v1667 = vadd.f32 %v1603, 1.0
        %v1668 = vadd.f32 %v1604, 1.0
        %v1669 = vadd.f32 %v1605, 1.0
        %v1670 = vadd.f32 %v1606, 1.0
        %v1671 = vadd.f32 %v1607, 1.0
        %v1672 = vadd.f32 %v1608, 1.0
        %v1673 = vadd.f32 %v1609, 1.0
        %v1674 = vadd.f32 %v1610, 1.0
        %v1675 = vadd.f32 %v1611, 1.0
        %v1676 = vadd.f32 %v1612, 1.0
        %v1677 = vadd.f32 %v1613, 1.0
        %v1678 = vadd.f32 %v1614, 1.0
        %v1679 = vadd.f32 %v1615, 1.0
        %v1680 = vadd.f32 %v1616, 1.0
        %v1681 = vadd.f32 %v1617, 1.0
        %v1682 = vadd.f32 %v1618, 1.0
        %v1683 = vadd.f32 %v1619, 1.0
        %v1684 = vadd.f32 %v1620, 1.0
        %v1685 = vadd.f32 %v1621, 1.0
        %v1686 = vmul.f32 %v1622, %v1654
        %v1687 = vmul.f32 %v1623, %v1655
        %v1688 = vmul.f32 %v1624, %v1656
        %v1689 = vmul.f32 %v1625, %v1657
        %v1690 = vmul.f32 %v1626, %v1658
        %v1691 = vmul.f32 %v1627, %v1659
        %v1692 = vmul.f32 %v1628, %v1660
        %v1693 = vmul.f32 %v1629, %v1661
        %v1694 = vmul.f32 %v1630, %v1662
        %v1695 = vmul.f32 %v1631, %v1663
        %v1696 = vmul.f32 %v1632, %v1664
        %v1697 = vmul.f32 %v1633, %v1665
        %v1698 = vmul.f32 %v1634, %v1666
        %v1699 = vmul.f32 %v1635, %v1667
        %v1700 = vmul.f32 %v1636, %v1668
        %v1701 = vmul.f32 %v1637, %v1669
        %v1702 = vmul.f32 %v1638, %v1670
        %v1703 = vmul.f32 %v1639, %v1671
        %v1704 = vmul.f32 %v1640, %v1672
        %v1705 = vmul.f32 %v1641, %v1673
        %v1706 = vmul.f32 %v1642, %v1674
        %v1707 = vmul.f32 %v1643, %v1675
        %v1708 = vmul.f32 %v1644, %v1676
        %v1709 = vmul.f32 %v1645, %v1677
        %v1710 = vmul.f32 %v1646, %v1678
        %v1711 = vmul.f32 %v1647, %v1679
        %v1712 = vmul.f32 %v1648, %v1680
        %v1713 = vmul.f32 %v1649, %v1681
        %v1714 = vmul.f32 %v1650, %v1682
        %v1715 = vmul.f32 %v1651, %v1683
        %v1716 = vmul.f32 %v1652, %v1684
        %v1717 = vmul.f32 %v1653, %v1685
        %s1718 = scalar_lea.vmem [#allocation2], 24
        %1719 = vst.msk [vmem:[%s1718 + $0x1] sm:$0xff] %vm272, %v1686
        %1720 = vst.msk [vmem:[%s1718 + $0x9] sm:$0xff] %vm272, %v1687
        %1721 = vst.msk [vmem:[%s1718 + $0x19] sm:$0xff] %vm272, %v1688
        %1722 = vst.msk [vmem:[%s1718 + $0x21] sm:$0xff] %vm272, %v1689
        %1723 = vst.msk [vmem:[%s1718 + $0x31] sm:$0xff] %vm272, %v1690
        %1724 = vst.msk [vmem:[%s1718 + $0x39] sm:$0xff] %vm272, %v1691
        %1725 = vst.msk [vmem:[%s1718 + $0x49] sm:$0xff] %vm272, %v1692
        %1726 = vst.msk [vmem:[%s1718 + $0x51] sm:$0xff] %vm272, %v1693
        %1727 = vst.msk [vmem:[%s1718 + $0x61] sm:$0xff] %vm272, %v1694
        %1728 = vst.msk [vmem:[%s1718 + $0x69] sm:$0xff] %vm272, %v1695
        %1729 = vst.msk [vmem:[%s1718 + $0x79] sm:$0xff] %vm272, %v1696
        %1730 = vst.msk [vmem:[%s1718 + $0x81] sm:$0xff] %vm272, %v1697
        %1731 = vst.msk [vmem:[%s1718 + $0x91] sm:$0xff] %vm272, %v1698
        %1732 = vst.msk [vmem:[%s1718 + $0x99] sm:$0xff] %vm272, %v1699
        %1733 = vst.msk [vmem:[%s1718 + $0xa9] sm:$0xff] %vm272, %v1700
        %1734 = vst.msk [vmem:[%s1718 + $0xb1] sm:$0xff] %vm272, %v1701
        %1735 = vst.msk [vmem:[%s1718 + $0xc1] sm:$0xff] %vm272, %v1702
        %1736 = vst.msk [vmem:[%s1718 + $0xc9] sm:$0xff] %vm272, %v1703
        %1737 = vst.msk [vmem:[%s1718 + $0xd9] sm:$0xff] %vm272, %v1704
        %1738 = vst.msk [vmem:[%s1718 + $0xe1] sm:$0xff] %vm272, %v1705
        %1739 = vst.msk [vmem:[%s1718 + $0xf1] sm:$0xff] %vm272, %v1706
        %1740 = vst.msk [vmem:[%s1718 + $0xf9] sm:$0xff] %vm272, %v1707
        %1741 = vst.msk [vmem:[%s1718 + $0x109] sm:$0xff] %vm272, %v1708
        %1742 = vst.msk [vmem:[%s1718 + $0x111] sm:$0xff] %vm272, %v1709
        %1743 = vst.msk [vmem:[%s1718 + $0x121] sm:$0xff] %vm272, %v1710
        %1744 = vst.msk [vmem:[%s1718 + $0x129] sm:$0xff] %vm272, %v1711
        %1745 = vst.msk [vmem:[%s1718 + $0x139] sm:$0xff] %vm272, %v1712
        %1746 = vst.msk [vmem:[%s1718 + $0x141] sm:$0xff] %vm272, %v1713
        %1747 = vst.msk [vmem:[%s1718 + $0x151] sm:$0xff] %vm272, %v1714
        %1748 = vst.msk [vmem:[%s1718 + $0x159] sm:$0xff] %vm272, %v1715
        %1749 = vst.msk [vmem:[%s1718 + $0x169] sm:$0xff] %vm272, %v1716
        %1750 = vst.msk [vmem:[%s1718 + $0x171] sm:$0xff] %vm272, %v1717
        %1783 = vrot.lane.b32.xlu0 %v1686, 96
        %v1784 = vpop.permute.xlu0 %1783
        %1785 = vrot.lane.b32.xlu0 %v1687, 96
        %v1786 = vpop.permute.xlu0 %1785
        %1787 = vrot.lane.b32.xlu0 %v1688, 96
        %v1788 = vpop.permute.xlu0 %1787
        %1789 = vrot.lane.b32.xlu0 %v1689, 96
        %v1790 = vpop.permute.xlu0 %1789
        %1791 = vrot.lane.b32.xlu0 %v1690, 96
        %v1792 = vpop.permute.xlu0 %1791
        %1793 = vrot.lane.b32.xlu0 %v1691, 96
        %v1794 = vpop.permute.xlu0 %1793
        %1795 = vrot.lane.b32.xlu0 %v1692, 96
        %v1796 = vpop.permute.xlu0 %1795
        %1797 = vrot.lane.b32.xlu0 %v1693, 96
        %v1798 = vpop.permute.xlu0 %1797
        %1799 = vrot.lane.b32.xlu0 %v1694, 96
        %v1800 = vpop.permute.xlu0 %1799
        %1801 = vrot.lane.b32.xlu0 %v1695, 96
        %v1802 = vpop.permute.xlu0 %1801
        %1803 = vrot.lane.b32.xlu0 %v1696, 96
        %v1804 = vpop.permute.xlu0 %1803
        %1805 = vrot.lane.b32.xlu0 %v1697, 96
        %v1806 = vpop.permute.xlu0 %1805
        %1807 = vrot.lane.b32.xlu0 %v1698, 96
        %v1808 = vpop.permute.xlu0 %1807
        %1809 = vrot.lane.b32.xlu0 %v1699, 96
        %v1810 = vpop.permute.xlu0 %1809
        %1811 = vrot.lane.b32.xlu0 %v1700, 96
        %v1812 = vpop.permute.xlu0 %1811
        %1813 = vrot.lane.b32.xlu0 %v1701, 96
        %v1814 = vpop.permute.xlu0 %1813
        %1815 = vrot.lane.b32.xlu0 %v1702, 96
        %v1816 = vpop.permute.xlu0 %1815
        %1817 = vrot.lane.b32.xlu0 %v1703, 96
        %v1818 = vpop.permute.xlu0 %1817
        %1819 = vrot.lane.b32.xlu0 %v1704, 96
        %v1820 = vpop.permute.xlu0 %1819
        %1821 = vrot.lane.b32.xlu0 %v1705, 96
        %v1822 = vpop.permute.xlu0 %1821
        %1823 = vrot.lane.b32.xlu0 %v1706, 96
        %v1824 = vpop.permute.xlu0 %1823
        %1825 = vrot.lane.b32.xlu0 %v1707, 96
        %v1826 = vpop.permute.xlu0 %1825
        %1827 = vrot.lane.b32.xlu0 %v1708, 96
        %v1828 = vpop.permute.xlu0 %1827
        %1829 = vrot.lane.b32.xlu0 %v1709, 96
        %v1830 = vpop.permute.xlu0 %1829
        %1831 = vrot.lane.b32.xlu0 %v1710, 96
        %v1832 = vpop.permute.xlu0 %1831
        %1833 = vrot.lane.b32.xlu0 %v1711, 96
        %v1834 = vpop.permute.xlu0 %1833
        %1835 = vrot.lane.b32.xlu0 %v1712, 96
        %v1836 = vpop.permute.xlu0 %1835
        %1837 = vrot.lane.b32.xlu0 %v1713, 96
        %v1838 = vpop.permute.xlu0 %1837
        %1839 = vrot.lane.b32.xlu0 %v1714, 96
        %v1840 = vpop.permute.xlu0 %1839
        %1841 = vrot.lane.b32.xlu0 %v1715, 96
        %v1842 = vpop.permute.xlu0 %1841
        %1843 = vrot.lane.b32.xlu0 %v1716, 96
        %v1844 = vpop.permute.xlu0 %1843
        %1845 = vrot.lane.b32.xlu0 %v1717, 96
        %v1846 = vpop.permute.xlu0 %1845
        %s1879 = scalar_lea.vmem [#allocation3], 24
        %1880 = vst.msk [vmem:[%s1879 + $0x1] sm:$0xff] %vm272, %v1784
        %1881 = vst.msk [vmem:[%s1879 + $0x9] sm:$0xff] %vm272, %v1786
        %1882 = vst.msk [vmem:[%s1879 + $0x19] sm:$0xff] %vm272, %v1788
        %1883 = vst.msk [vmem:[%s1879 + $0x21] sm:$0xff] %vm272, %v1790
        %1884 = vst.msk [vmem:[%s1879 + $0x31] sm:$0xff] %vm272, %v1792
        %1885 = vst.msk [vmem:[%s1879 + $0x39] sm:$0xff] %vm272, %v1794
        %1886 = vst.msk [vmem:[%s1879 + $0x49] sm:$0xff] %vm272, %v1796
        %1887 = vst.msk [vmem:[%s1879 + $0x51] sm:$0xff] %vm272, %v1798
        %1888 = vst.msk [vmem:[%s1879 + $0x61] sm:$0xff] %vm272, %v1800
        %1889 = vst.msk [vmem:[%s1879 + $0x69] sm:$0xff] %vm272, %v1802
        %1890 = vst.msk [vmem:[%s1879 + $0x79] sm:$0xff] %vm272, %v1804
        %1891 = vst.msk [vmem:[%s1879 + $0x81] sm:$0xff] %vm272, %v1806
        %1892 = vst.msk [vmem:[%s1879 + $0x91] sm:$0xff] %vm272, %v1808
        %1893 = vst.msk [vmem:[%s1879 + $0x99] sm:$0xff] %vm272, %v1810
        %1894 = vst.msk [vmem:[%s1879 + $0xa9] sm:$0xff] %vm272, %v1812
        %1895 = vst.msk [vmem:[%s1879 + $0xb1] sm:$0xff] %vm272, %v1814
        %1896 = vst.msk [vmem:[%s1879 + $0xc1] sm:$0xff] %vm272, %v1816
        %1897 = vst.msk [vmem:[%s1879 + $0xc9] sm:$0xff] %vm272, %v1818
        %1898 = vst.msk [vmem:[%s1879 + $0xd9] sm:$0xff] %vm272, %v1820
        %1899 = vst.msk [vmem:[%s1879 + $0xe1] sm:$0xff] %vm272, %v1822
        %1900 = vst.msk [vmem:[%s1879 + $0xf1] sm:$0xff] %vm272, %v1824
        %1901 = vst.msk [vmem:[%s1879 + $0xf9] sm:$0xff] %vm272, %v1826
        %1902 = vst.msk [vmem:[%s1879 + $0x109] sm:$0xff] %vm272, %v1828
        %1903 = vst.msk [vmem:[%s1879 + $0x111] sm:$0xff] %vm272, %v1830
        %1904 = vst.msk [vmem:[%s1879 + $0x121] sm:$0xff] %vm272, %v1832
        %1905 = vst.msk [vmem:[%s1879 + $0x129] sm:$0xff] %vm272, %v1834
        %1906 = vst.msk [vmem:[%s1879 + $0x139] sm:$0xff] %vm272, %v1836
        %1907 = vst.msk [vmem:[%s1879 + $0x141] sm:$0xff] %vm272, %v1838
        %1908 = vst.msk [vmem:[%s1879 + $0x151] sm:$0xff] %vm272, %v1840
        %1909 = vst.msk [vmem:[%s1879 + $0x159] sm:$0xff] %vm272, %v1842
        %1910 = vst.msk [vmem:[%s1879 + $0x169] sm:$0xff] %vm272, %v1844
        %1911 = vst.msk [vmem:[%s1879 + $0x171] sm:$0xff] %vm272, %v1846
        %1912 = vrot.lane.b32.xlu0 %v1686, 64
        %v1913 = vpop.permute.xlu0 %1912
        %1914 = vrot.lane.b32.xlu0 %v1687, 64
        %v1915 = vpop.permute.xlu0 %1914
        %1916 = vrot.lane.b32.xlu0 %v1688, 64
        %v1917 = vpop.permute.xlu0 %1916
        %1918 = vrot.lane.b32.xlu0 %v1689, 64
        %v1919 = vpop.permute.xlu0 %1918
        %1920 = vrot.lane.b32.xlu0 %v1690, 64
        %v1921 = vpop.permute.xlu0 %1920
        %1922 = vrot.lane.b32.xlu0 %v1691, 64
        %v1923 = vpop.permute.xlu0 %1922
        %1924 = vrot.lane.b32.xlu0 %v1692, 64
        %v1925 = vpop.permute.xlu0 %1924
        %1926 = vrot.lane.b32.xlu0 %v1693, 64
        %v1927 = vpop.permute.xlu0 %1926
        %1928 = vrot.lane.b32.xlu0 %v1694, 64
        %v1929 = vpop.permute.xlu0 %1928
        %1930 = vrot.lane.b32.xlu0 %v1695, 64
        %v1931 = vpop.permute.xlu0 %1930
        %1932 = vrot.lane.b32.xlu0 %v1696, 64
        %v1933 = vpop.permute.xlu0 %1932
        %1934 = vrot.lane.b32.xlu0 %v1697, 64
        %v1935 = vpop.permute.xlu0 %1934
        %1936 = vrot.lane.b32.xlu0 %v1698, 64
        %v1937 = vpop.permute.xlu0 %1936
        %1938 = vrot.lane.b32.xlu0 %v1699, 64
        %v1939 = vpop.permute.xlu0 %1938
        %1940 = vrot.lane.b32.xlu0 %v1700, 64
        %v1941 = vpop.permute.xlu0 %1940
        %1942 = vrot.lane.b32.xlu0 %v1701, 64
        %v1943 = vpop.permute.xlu0 %1942
        %1944 = vrot.lane.b32.xlu0 %v1702, 64
        %v1945 = vpop.permute.xlu0 %1944
        %1946 = vrot.lane.b32.xlu0 %v1703, 64
        %v1947 = vpop.permute.xlu0 %1946
        %1948 = vrot.lane.b32.xlu0 %v1704, 64
        %v1949 = vpop.permute.xlu0 %1948
        %1950 = vrot.lane.b32.xlu0 %v1705, 64
        %v1951 = vpop.permute.xlu0 %1950
        %1952 = vrot.lane.b32.xlu0 %v1706, 64
        %v1953 = vpop.permute.xlu0 %1952
        %1954 = vrot.lane.b32.xlu0 %v1707, 64
        %v1955 = vpop.permute.xlu0 %1954
        %1956 = vrot.lane.b32.xlu0 %v1708, 64
        %v1957 = vpop.permute.xlu0 %1956
        %1958 = vrot.lane.b32.xlu0 %v1709, 64
        %v1959 = vpop.permute.xlu0 %1958
        %1960 = vrot.lane.b32.xlu0 %v1710, 64
        %v1961 = vpop.permute.xlu0 %1960
        %1962 = vrot.lane.b32.xlu0 %v1711, 64
        %v1963 = vpop.permute.xlu0 %1962
        %1964 = vrot.lane.b32.xlu0 %v1712, 64
        %v1965 = vpop.permute.xlu0 %1964
        %1966 = vrot.lane.b32.xlu0 %v1713, 64
        %v1967 = vpop.permute.xlu0 %1966
        %1968 = vrot.lane.b32.xlu0 %v1714, 64
        %v1969 = vpop.permute.xlu0 %1968
        %1970 = vrot.lane.b32.xlu0 %v1715, 64
        %v1971 = vpop.permute.xlu0 %1970
        %1972 = vrot.lane.b32.xlu0 %v1716, 64
        %v1973 = vpop.permute.xlu0 %1972
        %1974 = vrot.lane.b32.xlu0 %v1717, 64
        %v1975 = vpop.permute.xlu0 %1974
        %s2008 = scalar_lea.vmem [#allocation4], 24
        %2009 = vst.msk [vmem:[%s2008 + $0x1] sm:$0xff] %vm272, %v1913
        %2010 = vst.msk [vmem:[%s2008 + $0x9] sm:$0xff] %vm272, %v1915
        %2011 = vst.msk [vmem:[%s2008 + $0x19] sm:$0xff] %vm272, %v1917
        %2012 = vst.msk [vmem:[%s2008 + $0x21] sm:$0xff] %vm272, %v1919
        %2013 = vst.msk [vmem:[%s2008 + $0x31] sm:$0xff] %vm272, %v1921
        %2014 = vst.msk [vmem:[%s2008 + $0x39] sm:$0xff] %vm272, %v1923
        %2015 = vst.msk [vmem:[%s2008 + $0x49] sm:$0xff] %vm272, %v1925
        %2016 = vst.msk [vmem:[%s2008 + $0x51] sm:$0xff] %vm272, %v1927
        %2017 = vst.msk [vmem:[%s2008 + $0x61] sm:$0xff] %vm272, %v1929
        %2018 = vst.msk [vmem:[%s2008 + $0x69] sm:$0xff] %vm272, %v1931
        %2019 = vst.msk [vmem:[%s2008 + $0x79] sm:$0xff] %vm272, %v1933
        %2020 = vst.msk [vmem:[%s2008 + $0x81] sm:$0xff] %vm272, %v1935
        %2021 = vst.msk [vmem:[%s2008 + $0x91] sm:$0xff] %vm272, %v1937
        %2022 = vst.msk [vmem:[%s2008 + $0x99] sm:$0xff] %vm272, %v1939
        %2023 = vst.msk [vmem:[%s2008 + $0xa9] sm:$0xff] %vm272, %v1941
        %2024 = vst.msk [vmem:[%s2008 + $0xb1] sm:$0xff] %vm272, %v1943
        %2025 = vst.msk [vmem:[%s2008 + $0xc1] sm:$0xff] %vm272, %v1945
        %2026 = vst.msk [vmem:[%s2008 + $0xc9] sm:$0xff] %vm272, %v1947
        %2027 = vst.msk [vmem:[%s2008 + $0xd9] sm:$0xff] %vm272, %v1949
        %2028 = vst.msk [vmem:[%s2008 + $0xe1] sm:$0xff] %vm272, %v1951
        %2029 = vst.msk [vmem:[%s2008 + $0xf1] sm:$0xff] %vm272, %v1953
        %2030 = vst.msk [vmem:[%s2008 + $0xf9] sm:$0xff] %vm272, %v1955
        %2031 = vst.msk [vmem:[%s2008 + $0x109] sm:$0xff] %vm272, %v1957
        %2032 = vst.msk [vmem:[%s2008 + $0x111] sm:$0xff] %vm272, %v1959
        %2033 = vst.msk [vmem:[%s2008 + $0x121] sm:$0xff] %vm272, %v1961
        %2034 = vst.msk [vmem:[%s2008 + $0x129] sm:$0xff] %vm272, %v1963
        %2035 = vst.msk [vmem:[%s2008 + $0x139] sm:$0xff] %vm272, %v1965
        %2036 = vst.msk [vmem:[%s2008 + $0x141] sm:$0xff] %vm272, %v1967
        %2037 = vst.msk [vmem:[%s2008 + $0x151] sm:$0xff] %vm272, %v1969
        %2038 = vst.msk [vmem:[%s2008 + $0x159] sm:$0xff] %vm272, %v1971
        %2039 = vst.msk [vmem:[%s2008 + $0x169] sm:$0xff] %vm272, %v1973
        %2040 = vst.msk [vmem:[%s2008 + $0x171] sm:$0xff] %vm272, %v1975
        %2041 = vrot.lane.b32.xlu0 %v1686, 32
        %v2042 = vpop.permute.xlu0 %2041
        %2043 = vrot.lane.b32.xlu0 %v1687, 32
        %v2044 = vpop.permute.xlu0 %2043
        %2045 = vrot.lane.b32.xlu0 %v1688, 32
        %v2046 = vpop.permute.xlu0 %2045
        %2047 = vrot.lane.b32.xlu0 %v1689, 32
        %v2048 = vpop.permute.xlu0 %2047
        %2049 = vrot.lane.b32.xlu0 %v1690, 32
        %v2050 = vpop.permute.xlu0 %2049
        %2051 = vrot.lane.b32.xlu0 %v1691, 32
        %v2052 = vpop.permute.xlu0 %2051
        %2053 = vrot.lane.b32.xlu0 %v1692, 32
        %v2054 = vpop.permute.xlu0 %2053
        %2055 = vrot.lane.b32.xlu0 %v1693, 32
        %v2056 = vpop.permute.xlu0 %2055
        %2057 = vrot.lane.b32.xlu0 %v1694, 32
        %v2058 = vpop.permute.xlu0 %2057
        %2059 = vrot.lane.b32.xlu0 %v1695, 32
        %v2060 = vpop.permute.xlu0 %2059
        %2061 = vrot.lane.b32.xlu0 %v1696, 32
        %v2062 = vpop.permute.xlu0 %2061
        %2063 = vrot.lane.b32.xlu0 %v1697, 32
        %v2064 = vpop.permute.xlu0 %2063
        %2065 = vrot.lane.b32.xlu0 %v1698, 32
        %v2066 = vpop.permute.xlu0 %2065
        %2067 = vrot.lane.b32.xlu0 %v1699, 32
        %v2068 = vpop.permute.xlu0 %2067
        %2069 = vrot.lane.b32.xlu0 %v1700, 32
        %v2070 = vpop.permute.xlu0 %2069
        %2071 = vrot.lane.b32.xlu0 %v1701, 32
        %v2072 = vpop.permute.xlu0 %2071
        %2073 = vrot.lane.b32.xlu0 %v1702, 32
        %v2074 = vpop.permute.xlu0 %2073
        %2075 = vrot.lane.b32.xlu0 %v1703, 32
        %v2076 = vpop.permute.xlu0 %2075
        %2077 = vrot.lane.b32.xlu0 %v1704, 32
        %v2078 = vpop.permute.xlu0 %2077
        %2079 = vrot.lane.b32.xlu0 %v1705, 32
        %v2080 = vpop.permute.xlu0 %2079
        %2081 = vrot.lane.b32.xlu0 %v1706, 32
        %v2082 = vpop.permute.xlu0 %2081
        %2083 = vrot.lane.b32.xlu0 %v1707, 32
        %v2084 = vpop.permute.xlu0 %2083
        %2085 = vrot.lane.b32.xlu0 %v1708, 32
        %v2086 = vpop.permute.xlu0 %2085
        %2087 = vrot.lane.b32.xlu0 %v1709, 32
        %v2088 = vpop.permute.xlu0 %2087
        %2089 = vrot.lane.b32.xlu0 %v1710, 32
        %v2090 = vpop.permute.xlu0 %2089
        %2091 = vrot.lane.b32.xlu0 %v1711, 32
        %v2092 = vpop.permute.xlu0 %2091
        %2093 = vrot.lane.b32.xlu0 %v1712, 32
        %v2094 = vpop.permute.xlu0 %2093
        %2095 = vrot.lane.b32.xlu0 %v1713, 32
        %v2096 = vpop.permute.xlu0 %2095
        %2097 = vrot.lane.b32.xlu0 %v1714, 32
        %v2098 = vpop.permute.xlu0 %2097
        %2099 = vrot.lane.b32.xlu0 %v1715, 32
        %v2100 = vpop.permute.xlu0 %2099
        %2101 = vrot.lane.b32.xlu0 %v1716, 32
        %v2102 = vpop.permute.xlu0 %2101
        %2103 = vrot.lane.b32.xlu0 %v1717, 32
        %v2104 = vpop.permute.xlu0 %2103
        %s2137 = scalar_lea.vmem [#allocation5], 24
        %2138 = vst.msk [vmem:[%s2137 + $0x1] sm:$0xff] %vm272, %v2042
        %2139 = vst.msk [vmem:[%s2137 + $0x9] sm:$0xff] %vm272, %v2044
        %2140 = vst.msk [vmem:[%s2137 + $0x19] sm:$0xff] %vm272, %v2046
        %2141 = vst.msk [vmem:[%s2137 + $0x21] sm:$0xff] %vm272, %v2048
        %2142 = vst.msk [vmem:[%s2137 + $0x31] sm:$0xff] %vm272, %v2050
        %2143 = vst.msk [vmem:[%s2137 + $0x39] sm:$0xff] %vm272, %v2052
        %2144 = vst.msk [vmem:[%s2137 + $0x49] sm:$0xff] %vm272, %v2054
        %2145 = vst.msk [vmem:[%s2137 + $0x51] sm:$0xff] %vm272, %v2056
        %2146 = vst.msk [vmem:[%s2137 + $0x61] sm:$0xff] %vm272, %v2058
        %2147 = vst.msk [vmem:[%s2137 + $0x69] sm:$0xff] %vm272, %v2060
        %2148 = vst.msk [vmem:[%s2137 + $0x79] sm:$0xff] %vm272, %v2062
        %2149 = vst.msk [vmem:[%s2137 + $0x81] sm:$0xff] %vm272, %v2064
        %2150 = vst.msk [vmem:[%s2137 + $0x91] sm:$0xff] %vm272, %v2066
        %2151 = vst.msk [vmem:[%s2137 + $0x99] sm:$0xff] %vm272, %v2068
        %2152 = vst.msk [vmem:[%s2137 + $0xa9] sm:$0xff] %vm272, %v2070
        %2153 = vst.msk [vmem:[%s2137 + $0xb1] sm:$0xff] %vm272, %v2072
        %2154 = vst.msk [vmem:[%s2137 + $0xc1] sm:$0xff] %vm272, %v2074
        %2155 = vst.msk [vmem:[%s2137 + $0xc9] sm:$0xff] %vm272, %v2076
        %2156 = vst.msk [vmem:[%s2137 + $0xd9] sm:$0xff] %vm272, %v2078
        %2157 = vst.msk [vmem:[%s2137 + $0xe1] sm:$0xff] %vm272, %v2080
        %2158 = vst.msk [vmem:[%s2137 + $0xf1] sm:$0xff] %vm272, %v2082
        %2159 = vst.msk [vmem:[%s2137 + $0xf9] sm:$0xff] %vm272, %v2084
        %2160 = vst.msk [vmem:[%s2137 + $0x109] sm:$0xff] %vm272, %v2086
        %2161 = vst.msk [vmem:[%s2137 + $0x111] sm:$0xff] %vm272, %v2088
        %2162 = vst.msk [vmem:[%s2137 + $0x121] sm:$0xff] %vm272, %v2090
        %2163 = vst.msk [vmem:[%s2137 + $0x129] sm:$0xff] %vm272, %v2092
        %2164 = vst.msk [vmem:[%s2137 + $0x139] sm:$0xff] %vm272, %v2094
        %2165 = vst.msk [vmem:[%s2137 + $0x141] sm:$0xff] %vm272, %v2096
        %2166 = vst.msk [vmem:[%s2137 + $0x151] sm:$0xff] %vm272, %v2098
        %2167 = vst.msk [vmem:[%s2137 + $0x159] sm:$0xff] %vm272, %v2100
        %2168 = vst.msk [vmem:[%s2137 + $0x169] sm:$0xff] %vm272, %v2102
        %2169 = vst.msk [vmem:[%s2137 + $0x171] sm:$0xff] %vm272, %v2104
        %v2170 = vld [vmem:[%s4] sm:$0x1]
        %v2171 = vld [vmem:[%s5] sm:$0x1]
        %v2172 = vld [vmem:[%s3] sm:$0x1]
        %v2173 = vld [vmem:[#allocation5] sm:$0xff]
        %v2174 = vld [vmem:[#allocation5 + $0x8] sm:$0xff]
        %v2175 = vld [vmem:[#allocation5 + $0x18] sm:$0xff]
        %v2176 = vld [vmem:[#allocation5 + $0x20] sm:$0xff]
        %v2177 = vld [vmem:[#allocation5 + $0x30] sm:$0xff]
        %v2178 = vld [vmem:[#allocation5 + $0x38] sm:$0xff]
        %v2179 = vld [vmem:[#allocation5 + $0x48] sm:$0xff]
        %v2180 = vld [vmem:[#allocation5 + $0x50] sm:$0xff]
        %v2181 = vld [vmem:[#allocation5 + $0x60] sm:$0xff]
        %v2182 = vld [vmem:[#allocation5 + $0x68] sm:$0xff]
        %v2183 = vld [vmem:[#allocation5 + $0x78] sm:$0xff]
        %v2184 = vld [vmem:[#allocation5 + $0x80] sm:$0xff]
        %v2185 = vld [vmem:[#allocation5 + $0x90] sm:$0xff]
        %v2186 = vld [vmem:[#allocation5 + $0x98] sm:$0xff]
        %v2187 = vld [vmem:[#allocation5 + $0xa8] sm:$0xff]
        %v2188 = vld [vmem:[#allocation5 + $0xb0] sm:$0xff]
        %v2189 = vld [vmem:[#allocation5 + $0xc0] sm:$0xff]
        %v2190 = vld [vmem:[#allocation5 + $0xc8] sm:$0xff]
        %v2191 = vld [vmem:[#allocation5 + $0xd8] sm:$0xff]
        %v2192 = vld [vmem:[#allocation5 + $0xe0] sm:$0xff]
        %v2193 = vld [vmem:[#allocation5 + $0xf0] sm:$0xff]
        %v2194 = vld [vmem:[#allocation5 + $0xf8] sm:$0xff]
        %v2195 = vld [vmem:[#allocation5 + $0x108] sm:$0xff]
        %v2196 = vld [vmem:[#allocation5 + $0x110] sm:$0xff]
        %v2197 = vld [vmem:[#allocation5 + $0x120] sm:$0xff]
        %v2198 = vld [vmem:[#allocation5 + $0x128] sm:$0xff]
        %v2199 = vld [vmem:[#allocation5 + $0x138] sm:$0xff]
        %v2200 = vld [vmem:[#allocation5 + $0x140] sm:$0xff]
        %v2201 = vld [vmem:[#allocation5 + $0x150] sm:$0xff]
        %v2202 = vld [vmem:[#allocation5 + $0x158] sm:$0xff]
        %v2203 = vld [vmem:[#allocation5 + $0x168] sm:$0xff]
        %v2204 = vld [vmem:[#allocation5 + $0x170] sm:$0xff]
        %v2205 = vlaneseq
        %v2206 = vshrl.u32 %v2205, 7
        %v2207 = vsub.s32 0, %v2206
        %v2208 = vrot.slane %v2172, %v2207
        %v2209 = vmul.f32 %v2173, %v2208
        %v2210 = vmul.f32 %v2174, %v2208
        %v2211 = vmul.f32 %v2175, %v2208
        %v2212 = vmul.f32 %v2176, %v2208
        %v2213 = vmul.f32 %v2177, %v2208
        %v2214 = vmul.f32 %v2178, %v2208
        %v2215 = vmul.f32 %v2179, %v2208
        %v2216 = vmul.f32 %v2180, %v2208
        %v2217 = vmul.f32 %v2181, %v2208
        %v2218 = vmul.f32 %v2182, %v2208
        %v2219 = vmul.f32 %v2183, %v2208
        %v2220 = vmul.f32 %v2184, %v2208
        %v2221 = vmul.f32 %v2185, %v2208
        %v2222 = vmul.f32 %v2186, %v2208
        %v2223 = vmul.f32 %v2187, %v2208
        %v2224 = vmul.f32 %v2188, %v2208
        %v2225 = vmul.f32 %v2189, %v2208
        %v2226 = vmul.f32 %v2190, %v2208
        %v2227 = vmul.f32 %v2191, %v2208
        %v2228 = vmul.f32 %v2192, %v2208
        %v2229 = vmul.f32 %v2193, %v2208
        %v2230 = vmul.f32 %v2194, %v2208
        %v2231 = vmul.f32 %v2195, %v2208
        %v2232 = vmul.f32 %v2196, %v2208
        %v2233 = vmul.f32 %v2197, %v2208
        %v2234 = vmul.f32 %v2198, %v2208
        %v2235 = vmul.f32 %v2199, %v2208
        %v2236 = vmul.f32 %v2200, %v2208
        %v2237 = vmul.f32 %v2201, %v2208
        %v2238 = vmul.f32 %v2202, %v2208
        %v2239 = vmul.f32 %v2203, %v2208
        %v2240 = vmul.f32 %v2204, %v2208
        %v2241 = vadd.f32 %v2209, 0.0
        %v2242 = vadd.f32 %v2210, 0.0
        %v2243 = vadd.f32 %v2211, 0.0
        %v2244 = vadd.f32 %v2212, 0.0
        %v2245 = vadd.f32 %v2213, 0.0
        %v2246 = vadd.f32 %v2214, 0.0
        %v2247 = vadd.f32 %v2215, 0.0
        %v2248 = vadd.f32 %v2216, 0.0
        %v2249 = vadd.f32 %v2217, 0.0
        %v2250 = vadd.f32 %v2218, 0.0
        %v2251 = vadd.f32 %v2219, 0.0
        %v2252 = vadd.f32 %v2220, 0.0
        %v2253 = vadd.f32 %v2221, 0.0
        %v2254 = vadd.f32 %v2222, 0.0
        %v2255 = vadd.f32 %v2223, 0.0
        %v2256 = vadd.f32 %v2224, 0.0
        %v2257 = vadd.f32 %v2225, 0.0
        %v2258 = vadd.f32 %v2226, 0.0
        %v2259 = vadd.f32 %v2227, 0.0
        %v2260 = vadd.f32 %v2228, 0.0
        %v2261 = vadd.f32 %v2229, 0.0
        %v2262 = vadd.f32 %v2230, 0.0
        %v2263 = vadd.f32 %v2231, 0.0
        %v2264 = vadd.f32 %v2232, 0.0
        %v2265 = vadd.f32 %v2233, 0.0
        %v2266 = vadd.f32 %v2234, 0.0
        %v2267 = vadd.f32 %v2235, 0.0
        %v2268 = vadd.f32 %v2236, 0.0
        %v2269 = vadd.f32 %v2237, 0.0
        %v2270 = vadd.f32 %v2238, 0.0
        %v2271 = vadd.f32 %v2239, 0.0
        %v2272 = vadd.f32 %v2240, 0.0
        %v2273 = vld [vmem:[%s3 + $0x1] sm:$0x1]
        %v2274 = vld [vmem:[#allocation4 + $0x1] sm:$0xff]
        %v2275 = vld [vmem:[#allocation4 + $0x9] sm:$0xff]
        %v2276 = vld [vmem:[#allocation4 + $0x19] sm:$0xff]
        %v2277 = vld [vmem:[#allocation4 + $0x21] sm:$0xff]
        %v2278 = vld [vmem:[#allocation4 + $0x31] sm:$0xff]
        %v2279 = vld [vmem:[#allocation4 + $0x39] sm:$0xff]
        %v2280 = vld [vmem:[#allocation4 + $0x49] sm:$0xff]
        %v2281 = vld [vmem:[#allocation4 + $0x51] sm:$0xff]
        %v2282 = vld [vmem:[#allocation4 + $0x61] sm:$0xff]
        %v2283 = vld [vmem:[#allocation4 + $0x69] sm:$0xff]
        %v2284 = vld [vmem:[#allocation4 + $0x79] sm:$0xff]
        %v2285 = vld [vmem:[#allocation4 + $0x81] sm:$0xff]
        %v2286 = vld [vmem:[#allocation4 + $0x91] sm:$0xff]
        %v2287 = vld [vmem:[#allocation4 + $0x99] sm:$0xff]
        %v2288 = vld [vmem:[#allocation4 + $0xa9] sm:$0xff]
        %v2289 = vld [vmem:[#allocation4 + $0xb1] sm:$0xff]
        %v2290 = vld [vmem:[#allocation4 + $0xc1] sm:$0xff]
        %v2291 = vld [vmem:[#allocation4 + $0xc9] sm:$0xff]
        %v2292 = vld [vmem:[#allocation4 + $0xd9] sm:$0xff]
        %v2293 = vld [vmem:[#allocation4 + $0xe1] sm:$0xff]
        %v2294 = vld [vmem:[#allocation4 + $0xf1] sm:$0xff]
        %v2295 = vld [vmem:[#allocation4 + $0xf9] sm:$0xff]
        %v2296 = vld [vmem:[#allocation4 + $0x109] sm:$0xff]
        %v2297 = vld [vmem:[#allocation4 + $0x111] sm:$0xff]
        %v2298 = vld [vmem:[#allocation4 + $0x121] sm:$0xff]
        %v2299 = vld [vmem:[#allocation4 + $0x129] sm:$0xff]
        %v2300 = vld [vmem:[#allocation4 + $0x139] sm:$0xff]
        %v2301 = vld [vmem:[#allocation4 + $0x141] sm:$0xff]
        %v2302 = vld [vmem:[#allocation4 + $0x151] sm:$0xff]
        %v2303 = vld [vmem:[#allocation4 + $0x159] sm:$0xff]
        %v2304 = vld [vmem:[#allocation4 + $0x169] sm:$0xff]
        %v2305 = vld [vmem:[#allocation4 + $0x171] sm:$0xff]
        %v2306 = vlaneseq
        %v2307 = vshrl.u32 %v2306, 7
        %v2308 = vsub.s32 0, %v2307
        %v2309 = vrot.slane %v2273, %v2308
        %v2310 = vmul.f32 %v2274, %v2309
        %v2311 = vmul.f32 %v2275, %v2309
        %v2312 = vmul.f32 %v2276, %v2309
        %v2313 = vmul.f32 %v2277, %v2309
        %v2314 = vmul.f32 %v2278, %v2309
        %v2315 = vmul.f32 %v2279, %v2309
        %v2316 = vmul.f32 %v2280, %v2309
        %v2317 = vmul.f32 %v2281, %v2309
        %v2318 = vmul.f32 %v2282, %v2309
        %v2319 = vmul.f32 %v2283, %v2309
        %v2320 = vmul.f32 %v2284, %v2309
        %v2321 = vmul.f32 %v2285, %v2309
        %v2322 = vmul.f32 %v2286, %v2309
        %v2323 = vmul.f32 %v2287, %v2309
        %v2324 = vmul.f32 %v2288, %v2309
        %v2325 = vmul.f32 %v2289, %v2309
        %v2326 = vmul.f32 %v2290, %v2309
        %v2327 = vmul.f32 %v2291, %v2309
        %v2328 = vmul.f32 %v2292, %v2309
        %v2329 = vmul.f32 %v2293, %v2309
        %v2330 = vmul.f32 %v2294, %v2309
        %v2331 = vmul.f32 %v2295, %v2309
        %v2332 = vmul.f32 %v2296, %v2309
        %v2333 = vmul.f32 %v2297, %v2309
        %v2334 = vmul.f32 %v2298, %v2309
        %v2335 = vmul.f32 %v2299, %v2309
        %v2336 = vmul.f32 %v2300, %v2309
        %v2337 = vmul.f32 %v2301, %v2309
        %v2338 = vmul.f32 %v2302, %v2309
        %v2339 = vmul.f32 %v2303, %v2309
        %v2340 = vmul.f32 %v2304, %v2309
        %v2341 = vmul.f32 %v2305, %v2309
        %v2342 = vadd.f32 %v2241, %v2310
        %v2343 = vadd.f32 %v2242, %v2311
        %v2344 = vadd.f32 %v2243, %v2312
        %v2345 = vadd.f32 %v2244, %v2313
        %v2346 = vadd.f32 %v2245, %v2314
        %v2347 = vadd.f32 %v2246, %v2315
        %v2348 = vadd.f32 %v2247, %v2316
        %v2349 = vadd.f32 %v2248, %v2317
        %v2350 = vadd.f32 %v2249, %v2318
        %v2351 = vadd.f32 %v2250, %v2319
        %v2352 = vadd.f32 %v2251, %v2320
        %v2353 = vadd.f32 %v2252, %v2321
        %v2354 = vadd.f32 %v2253, %v2322
        %v2355 = vadd.f32 %v2254, %v2323
        %v2356 = vadd.f32 %v2255, %v2324
        %v2357 = vadd.f32 %v2256, %v2325
        %v2358 = vadd.f32 %v2257, %v2326
        %v2359 = vadd.f32 %v2258, %v2327
        %v2360 = vadd.f32 %v2259, %v2328
        %v2361 = vadd.f32 %v2260, %v2329
        %v2362 = vadd.f32 %v2261, %v2330
        %v2363 = vadd.f32 %v2262, %v2331
        %v2364 = vadd.f32 %v2263, %v2332
        %v2365 = vadd.f32 %v2264, %v2333
        %v2366 = vadd.f32 %v2265, %v2334
        %v2367 = vadd.f32 %v2266, %v2335
        %v2368 = vadd.f32 %v2267, %v2336
        %v2369 = vadd.f32 %v2268, %v2337
        %v2370 = vadd.f32 %v2269, %v2338
        %v2371 = vadd.f32 %v2270, %v2339
        %v2372 = vadd.f32 %v2271, %v2340
        %v2373 = vadd.f32 %v2272, %v2341
        %v2374 = vld [vmem:[%s3 + $0x2] sm:$0x1]
        %v2375 = vld [vmem:[#allocation5 + $0x1] sm:$0xff]
        %v2376 = vld [vmem:[#allocation5 + $0x9] sm:$0xff]
        %v2377 = vld [vmem:[#allocation5 + $0x19] sm:$0xff]
        %v2378 = vld [vmem:[#allocation5 + $0x21] sm:$0xff]
        %v2379 = vld [vmem:[#allocation5 + $0x31] sm:$0xff]
        %v2380 = vld [vmem:[#allocation5 + $0x39] sm:$0xff]
        %v2381 = vld [vmem:[#allocation5 + $0x49] sm:$0xff]
        %v2382 = vld [vmem:[#allocation5 + $0x51] sm:$0xff]
        %v2383 = vld [vmem:[#allocation5 + $0x61] sm:$0xff]
        %v2384 = vld [vmem:[#allocation5 + $0x69] sm:$0xff]
        %v2385 = vld [vmem:[#allocation5 + $0x79] sm:$0xff]
        %v2386 = vld [vmem:[#allocation5 + $0x81] sm:$0xff]
        %v2387 = vld [vmem:[#allocation5 + $0x91] sm:$0xff]
        %v2388 = vld [vmem:[#allocation5 + $0x99] sm:$0xff]
        %v2389 = vld [vmem:[#allocation5 + $0xa9] sm:$0xff]
        %v2390 = vld [vmem:[#allocation5 + $0xb1] sm:$0xff]
        %v2391 = vld [vmem:[#allocation5 + $0xc1] sm:$0xff]
        %v2392 = vld [vmem:[#allocation5 + $0xc9] sm:$0xff]
        %v2393 = vld [vmem:[#allocation5 + $0xd9] sm:$0xff]
        %v2394 = vld [vmem:[#allocation5 + $0xe1] sm:$0xff]
        %v2395 = vld [vmem:[#allocation5 + $0xf1] sm:$0xff]
        %v2396 = vld [vmem:[#allocation5 + $0xf9] sm:$0xff]
        %v2397 = vld [vmem:[#allocation5 + $0x109] sm:$0xff]
        %v2398 = vld [vmem:[#allocation5 + $0x111] sm:$0xff]
        %v2399 = vld [vmem:[#allocation5 + $0x121] sm:$0xff]
        %v2400 = vld [vmem:[#allocation5 + $0x129] sm:$0xff]
        %v2401 = vld [vmem:[#allocation5 + $0x139] sm:$0xff]
        %v2402 = vld [vmem:[#allocation5 + $0x141] sm:$0xff]
        %v2403 = vld [vmem:[#allocation5 + $0x151] sm:$0xff]
        %v2404 = vld [vmem:[#allocation5 + $0x159] sm:$0xff]
        %v2405 = vld [vmem:[#allocation5 + $0x169] sm:$0xff]
        %v2406 = vld [vmem:[#allocation5 + $0x171] sm:$0xff]
        %v2407 = vlaneseq
        %v2408 = vshrl.u32 %v2407, 7
        %v2409 = vsub.s32 0, %v2408
        %v2410 = vrot.slane %v2374, %v2409
        %v2411 = vmul.f32 %v2375, %v2410
        %v2412 = vmul.f32 %v2376, %v2410
        %v2413 = vmul.f32 %v2377, %v2410
        %v2414 = vmul.f32 %v2378, %v2410
        %v2415 = vmul.f32 %v2379, %v2410
        %v2416 = vmul.f32 %v2380, %v2410
        %v2417 = vmul.f32 %v2381, %v2410
        %v2418 = vmul.f32 %v2382, %v2410
        %v2419 = vmul.f32 %v2383, %v2410
        %v2420 = vmul.f32 %v2384, %v2410
        %v2421 = vmul.f32 %v2385, %v2410
        %v2422 = vmul.f32 %v2386, %v2410
        %v2423 = vmul.f32 %v2387, %v2410
        %v2424 = vmul.f32 %v2388, %v2410
        %v2425 = vmul.f32 %v2389, %v2410
        %v2426 = vmul.f32 %v2390, %v2410
        %v2427 = vmul.f32 %v2391, %v2410
        %v2428 = vmul.f32 %v2392, %v2410
        %v2429 = vmul.f32 %v2393, %v2410
        %v2430 = vmul.f32 %v2394, %v2410
        %v2431 = vmul.f32 %v2395, %v2410
        %v2432 = vmul.f32 %v2396, %v2410
        %v2433 = vmul.f32 %v2397, %v2410
        %v2434 = vmul.f32 %v2398, %v2410
        %v2435 = vmul.f32 %v2399, %v2410
        %v2436 = vmul.f32 %v2400, %v2410
        %v2437 = vmul.f32 %v2401, %v2410
        %v2438 = vmul.f32 %v2402, %v2410
        %v2439 = vmul.f32 %v2403, %v2410
        %v2440 = vmul.f32 %v2404, %v2410
        %v2441 = vmul.f32 %v2405, %v2410
        %v2442 = vmul.f32 %v2406, %v2410
        %v2443 = vadd.f32 %v2342, %v2411
        %v2444 = vadd.f32 %v2343, %v2412
        %v2445 = vadd.f32 %v2344, %v2413
        %v2446 = vadd.f32 %v2345, %v2414
        %v2447 = vadd.f32 %v2346, %v2415
        %v2448 = vadd.f32 %v2347, %v2416
        %v2449 = vadd.f32 %v2348, %v2417
        %v2450 = vadd.f32 %v2349, %v2418
        %v2451 = vadd.f32 %v2350, %v2419
        %v2452 = vadd.f32 %v2351, %v2420
        %v2453 = vadd.f32 %v2352, %v2421
        %v2454 = vadd.f32 %v2353, %v2422
        %v2455 = vadd.f32 %v2354, %v2423
        %v2456 = vadd.f32 %v2355, %v2424
        %v2457 = vadd.f32 %v2356, %v2425
        %v2458 = vadd.f32 %v2357, %v2426
        %v2459 = vadd.f32 %v2358, %v2427
        %v2460 = vadd.f32 %v2359, %v2428
        %v2461 = vadd.f32 %v2360, %v2429
        %v2462 = vadd.f32 %v2361, %v2430
        %v2463 = vadd.f32 %v2362, %v2431
        %v2464 = vadd.f32 %v2363, %v2432
        %v2465 = vadd.f32 %v2364, %v2433
        %v2466 = vadd.f32 %v2365, %v2434
        %v2467 = vadd.f32 %v2366, %v2435
        %v2468 = vadd.f32 %v2367, %v2436
        %v2469 = vadd.f32 %v2368, %v2437
        %v2470 = vadd.f32 %v2369, %v2438
        %v2471 = vadd.f32 %v2370, %v2439
        %v2472 = vadd.f32 %v2371, %v2440
        %v2473 = vadd.f32 %v2372, %v2441
        %v2474 = vadd.f32 %v2373, %v2442
        %v2475 = vld [vmem:[%s3 + $0x3] sm:$0x1]
        %v2476 = vld [vmem:[%s1879] sm:$0xff]
        %v2477 = vld [vmem:[%s1879 + $0x8] sm:$0xff]
        %v2478 = vld [vmem:[%s1879 + $0x18] sm:$0xff]
        %v2479 = vld [vmem:[%s1879 + $0x20] sm:$0xff]
        %v2480 = vld [vmem:[%s1879 + $0x30] sm:$0xff]
        %v2481 = vld [vmem:[%s1879 + $0x38] sm:$0xff]
        %v2482 = vld [vmem:[%s1879 + $0x48] sm:$0xff]
        %v2483 = vld [vmem:[%s1879 + $0x50] sm:$0xff]
        %v2484 = vld [vmem:[%s1879 + $0x60] sm:$0xff]
        %v2485 = vld [vmem:[%s1879 + $0x68] sm:$0xff]
        %v2486 = vld [vmem:[%s1879 + $0x78] sm:$0xff]
        %v2487 = vld [vmem:[%s1879 + $0x80] sm:$0xff]
        %v2488 = vld [vmem:[%s1879 + $0x90] sm:$0xff]
        %v2489 = vld [vmem:[%s1879 + $0x98] sm:$0xff]
        %v2490 = vld [vmem:[%s1879 + $0xa8] sm:$0xff]
        %v2491 = vld [vmem:[%s1879 + $0xb0] sm:$0xff]
        %v2492 = vld [vmem:[%s1879 + $0xc0] sm:$0xff]
        %v2493 = vld [vmem:[%s1879 + $0xc8] sm:$0xff]
        %v2494 = vld [vmem:[%s1879 + $0xd8] sm:$0xff]
        %v2495 = vld [vmem:[%s1879 + $0xe0] sm:$0xff]
        %v2496 = vld [vmem:[%s1879 + $0xf0] sm:$0xff]
        %v2497 = vld [vmem:[%s1879 + $0xf8] sm:$0xff]
        %v2498 = vld [vmem:[%s1879 + $0x108] sm:$0xff]
        %v2499 = vld [vmem:[%s1879 + $0x110] sm:$0xff]
        %v2500 = vld [vmem:[%s1879 + $0x120] sm:$0xff]
        %v2501 = vld [vmem:[%s1879 + $0x128] sm:$0xff]
        %v2502 = vld [vmem:[%s1879 + $0x138] sm:$0xff]
        %v2503 = vld [vmem:[%s1879 + $0x140] sm:$0xff]
        %v2504 = vld [vmem:[%s1879 + $0x150] sm:$0xff]
        %v2505 = vld [vmem:[%s1879 + $0x158] sm:$0xff]
        %v2506 = vld [vmem:[%s1879 + $0x168] sm:$0xff]
        %v2507 = vld [vmem:[%s1879 + $0x170] sm:$0xff]
        %v2508 = vlaneseq
        %v2509 = vshrl.u32 %v2508, 7
        %v2510 = vsub.s32 0, %v2509
        %v2511 = vrot.slane %v2475, %v2510
        %v2512 = vmul.f32 %v2476, %v2511
        %v2513 = vmul.f32 %v2477, %v2511
        %v2514 = vmul.f32 %v2478, %v2511
        %v2515 = vmul.f32 %v2479, %v2511
        %v2516 = vmul.f32 %v2480, %v2511
        %v2517 = vmul.f32 %v2481, %v2511
        %v2518 = vmul.f32 %v2482, %v2511
        %v2519 = vmul.f32 %v2483, %v2511
        %v2520 = vmul.f32 %v2484, %v2511
        %v2521 = vmul.f32 %v2485, %v2511
        %v2522 = vmul.f32 %v2486, %v2511
        %v2523 = vmul.f32 %v2487, %v2511
        %v2524 = vmul.f32 %v2488, %v2511
        %v2525 = vmul.f32 %v2489, %v2511
        %v2526 = vmul.f32 %v2490, %v2511
        %v2527 = vmul.f32 %v2491, %v2511
        %v2528 = vmul.f32 %v2492, %v2511
        %v2529 = vmul.f32 %v2493, %v2511
        %v2530 = vmul.f32 %v2494, %v2511
        %v2531 = vmul.f32 %v2495, %v2511
        %v2532 = vmul.f32 %v2496, %v2511
        %v2533 = vmul.f32 %v2497, %v2511
        %v2534 = vmul.f32 %v2498, %v2511
        %v2535 = vmul.f32 %v2499, %v2511
        %v2536 = vmul.f32 %v2500, %v2511
        %v2537 = vmul.f32 %v2501, %v2511
        %v2538 = vmul.f32 %v2502, %v2511
        %v2539 = vmul.f32 %v2503, %v2511
        %v2540 = vmul.f32 %v2504, %v2511
        %v2541 = vmul.f32 %v2505, %v2511
        %v2542 = vmul.f32 %v2506, %v2511
        %v2543 = vmul.f32 %v2507, %v2511
        %v2544 = vadd.f32 %v2443, %v2512
        %v2545 = vadd.f32 %v2444, %v2513
        %v2546 = vadd.f32 %v2445, %v2514
        %v2547 = vadd.f32 %v2446, %v2515
        %v2548 = vadd.f32 %v2447, %v2516
        %v2549 = vadd.f32 %v2448, %v2517
        %v2550 = vadd.f32 %v2449, %v2518
        %v2551 = vadd.f32 %v2450, %v2519
        %v2552 = vadd.f32 %v2451, %v2520
        %v2553 = vadd.f32 %v2452, %v2521
        %v2554 = vadd.f32 %v2453, %v2522
        %v2555 = vadd.f32 %v2454, %v2523
        %v2556 = vadd.f32 %v2455, %v2524
        %v2557 = vadd.f32 %v2456, %v2525
        %v2558 = vadd.f32 %v2457, %v2526
        %v2559 = vadd.f32 %v2458, %v2527
        %v2560 = vadd.f32 %v2459, %v2528
        %v2561 = vadd.f32 %v2460, %v2529
        %v2562 = vadd.f32 %v2461, %v2530
        %v2563 = vadd.f32 %v2462, %v2531
        %v2564 = vadd.f32 %v2463, %v2532
        %v2565 = vadd.f32 %v2464, %v2533
        %v2566 = vadd.f32 %v2465, %v2534
        %v2567 = vadd.f32 %v2466, %v2535
        %v2568 = vadd.f32 %v2467, %v2536
        %v2569 = vadd.f32 %v2468, %v2537
        %v2570 = vadd.f32 %v2469, %v2538
        %v2571 = vadd.f32 %v2470, %v2539
        %v2572 = vadd.f32 %v2471, %v2540
        %v2573 = vadd.f32 %v2472, %v2541
        %v2574 = vadd.f32 %v2473, %v2542
        %v2575 = vadd.f32 %v2474, %v2543
        %v2576 = vld [vmem:[%s3 + $0x4] sm:$0x1]
        %v2577 = vld [vmem:[%s1718 + $0x1] sm:$0xff]
        %v2578 = vld [vmem:[%s1718 + $0x9] sm:$0xff]
        %v2579 = vld [vmem:[%s1718 + $0x19] sm:$0xff]
        %v2580 = vld [vmem:[%s1718 + $0x21] sm:$0xff]
        %v2581 = vld [vmem:[%s1718 + $0x31] sm:$0xff]
        %v2582 = vld [vmem:[%s1718 + $0x39] sm:$0xff]
        %v2583 = vld [vmem:[%s1718 + $0x49] sm:$0xff]
        %v2584 = vld [vmem:[%s1718 + $0x51] sm:$0xff]
        %v2585 = vld [vmem:[%s1718 + $0x61] sm:$0xff]
        %v2586 = vld [vmem:[%s1718 + $0x69] sm:$0xff]
        %v2587 = vld [vmem:[%s1718 + $0x79] sm:$0xff]
        %v2588 = vld [vmem:[%s1718 + $0x81] sm:$0xff]
        %v2589 = vld [vmem:[%s1718 + $0x91] sm:$0xff]
        %v2590 = vld [vmem:[%s1718 + $0x99] sm:$0xff]
        %v2591 = vld [vmem:[%s1718 + $0xa9] sm:$0xff]
        %v2592 = vld [vmem:[%s1718 + $0xb1] sm:$0xff]
        %v2593 = vld [vmem:[%s1718 + $0xc1] sm:$0xff]
        %v2594 = vld [vmem:[%s1718 + $0xc9] sm:$0xff]
        %v2595 = vld [vmem:[%s1718 + $0xd9] sm:$0xff]
        %v2596 = vld [vmem:[%s1718 + $0xe1] sm:$0xff]
        %v2597 = vld [vmem:[%s1718 + $0xf1] sm:$0xff]
        %v2598 = vld [vmem:[%s1718 + $0xf9] sm:$0xff]
        %v2599 = vld [vmem:[%s1718 + $0x109] sm:$0xff]
        %v2600 = vld [vmem:[%s1718 + $0x111] sm:$0xff]
        %v2601 = vld [vmem:[%s1718 + $0x121] sm:$0xff]
        %v2602 = vld [vmem:[%s1718 + $0x129] sm:$0xff]
        %v2603 = vld [vmem:[%s1718 + $0x139] sm:$0xff]
        %v2604 = vld [vmem:[%s1718 + $0x141] sm:$0xff]
        %v2605 = vld [vmem:[%s1718 + $0x151] sm:$0xff]
        %v2606 = vld [vmem:[%s1718 + $0x159] sm:$0xff]
        %v2607 = vld [vmem:[%s1718 + $0x169] sm:$0xff]
        %v2608 = vld [vmem:[%s1718 + $0x171] sm:$0xff]
        %v2609 = vlaneseq
        %v2610 = vshrl.u32 %v2609, 7
        %v2611 = vsub.s32 0, %v2610
        %v2612 = vrot.slane %v2576, %v2611
        %v2613 = vmul.f32 %v2577, %v2612
        %v2614 = vmul.f32 %v2578, %v2612
        %v2615 = vmul.f32 %v2579, %v2612
        %v2616 = vmul.f32 %v2580, %v2612
        %v2617 = vmul.f32 %v2581, %v2612
        %v2618 = vmul.f32 %v2582, %v2612
        %v2619 = vmul.f32 %v2583, %v2612
        %v2620 = vmul.f32 %v2584, %v2612
        %v2621 = vmul.f32 %v2585, %v2612
        %v2622 = vmul.f32 %v2586, %v2612
        %v2623 = vmul.f32 %v2587, %v2612
        %v2624 = vmul.f32 %v2588, %v2612
        %v2625 = vmul.f32 %v2589, %v2612
        %v2626 = vmul.f32 %v2590, %v2612
        %v2627 = vmul.f32 %v2591, %v2612
        %v2628 = vmul.f32 %v2592, %v2612
        %v2629 = vmul.f32 %v2593, %v2612
        %v2630 = vmul.f32 %v2594, %v2612
        %v2631 = vmul.f32 %v2595, %v2612
        %v2632 = vmul.f32 %v2596, %v2612
        %v2633 = vmul.f32 %v2597, %v2612
        %v2634 = vmul.f32 %v2598, %v2612
        %v2635 = vmul.f32 %v2599, %v2612
        %v2636 = vmul.f32 %v2600, %v2612
        %v2637 = vmul.f32 %v2601, %v2612
        %v2638 = vmul.f32 %v2602, %v2612
        %v2639 = vmul.f32 %v2603, %v2612
        %v2640 = vmul.f32 %v2604, %v2612
        %v2641 = vmul.f32 %v2605, %v2612
        %v2642 = vmul.f32 %v2606, %v2612
        %v2643 = vmul.f32 %v2607, %v2612
        %v2644 = vmul.f32 %v2608, %v2612
        %v2645 = vadd.f32 %v2544, %v2613
        %v2646 = vadd.f32 %v2545, %v2614
        %v2647 = vadd.f32 %v2546, %v2615
        %v2648 = vadd.f32 %v2547, %v2616
        %v2649 = vadd.f32 %v2548, %v2617
        %v2650 = vadd.f32 %v2549, %v2618
        %v2651 = vadd.f32 %v2550, %v2619
        %v2652 = vadd.f32 %v2551, %v2620
        %v2653 = vadd.f32 %v2552, %v2621
        %v2654 = vadd.f32 %v2553, %v2622
        %v2655 = vadd.f32 %v2554, %v2623
        %v2656 = vadd.f32 %v2555, %v2624
        %v2657 = vadd.f32 %v2556, %v2625
        %v2658 = vadd.f32 %v2557, %v2626
        %v2659 = vadd.f32 %v2558, %v2627
        %v2660 = vadd.f32 %v2559, %v2628
        %v2661 = vadd.f32 %v2560, %v2629
        %v2662 = vadd.f32 %v2561, %v2630
        %v2663 = vadd.f32 %v2562, %v2631
        %v2664 = vadd.f32 %v2563, %v2632
        %v2665 = vadd.f32 %v2564, %v2633
        %v2666 = vadd.f32 %v2565, %v2634
        %v2667 = vadd.f32 %v2566, %v2635
        %v2668 = vadd.f32 %v2567, %v2636
        %v2669 = vadd.f32 %v2568, %v2637
        %v2670 = vadd.f32 %v2569, %v2638
        %v2671 = vadd.f32 %v2570, %v2639
        %v2672 = vadd.f32 %v2571, %v2640
        %v2673 = vadd.f32 %v2572, %v2641
        %v2674 = vadd.f32 %v2573, %v2642
        %v2675 = vadd.f32 %v2574, %v2643
        %v2676 = vadd.f32 %v2575, %v2644
        %v2677 = vld [vmem:[%s3 + $0x5] sm:$0x1]
        %v2678 = vld [vmem:[%s1879 + $0x1] sm:$0xff]
        %v2679 = vld [vmem:[%s1879 + $0x9] sm:$0xff]
        %v2680 = vld [vmem:[%s1879 + $0x19] sm:$0xff]
        %v2681 = vld [vmem:[%s1879 + $0x21] sm:$0xff]
        %v2682 = vld [vmem:[%s1879 + $0x31] sm:$0xff]
        %v2683 = vld [vmem:[%s1879 + $0x39] sm:$0xff]
        %v2684 = vld [vmem:[%s1879 + $0x49] sm:$0xff]
        %v2685 = vld [vmem:[%s1879 + $0x51] sm:$0xff]
        %v2686 = vld [vmem:[%s1879 + $0x61] sm:$0xff]
        %v2687 = vld [vmem:[%s1879 + $0x69] sm:$0xff]
        %v2688 = vld [vmem:[%s1879 + $0x79] sm:$0xff]
        %v2689 = vld [vmem:[%s1879 + $0x81] sm:$0xff]
        %v2690 = vld [vmem:[%s1879 + $0x91] sm:$0xff]
        %v2691 = vld [vmem:[%s1879 + $0x99] sm:$0xff]
        %v2692 = vld [vmem:[%s1879 + $0xa9] sm:$0xff]
        %v2693 = vld [vmem:[%s1879 + $0xb1] sm:$0xff]
        %v2694 = vld [vmem:[%s1879 + $0xc1] sm:$0xff]
        %v2695 = vld [vmem:[%s1879 + $0xc9] sm:$0xff]
        %v2696 = vld [vmem:[%s1879 + $0xd9] sm:$0xff]
        %v2697 = vld [vmem:[%s1879 + $0xe1] sm:$0xff]
        %v2698 = vld [vmem:[%s1879 + $0xf1] sm:$0xff]
        %v2699 = vld [vmem:[%s1879 + $0xf9] sm:$0xff]
        %v2700 = vld [vmem:[%s1879 + $0x109] sm:$0xff]
        %v2701 = vld [vmem:[%s1879 + $0x111] sm:$0xff]
        %v2702 = vld [vmem:[%s1879 + $0x121] sm:$0xff]
        %v2703 = vld [vmem:[%s1879 + $0x129] sm:$0xff]
        %v2704 = vld [vmem:[%s1879 + $0x139] sm:$0xff]
        %v2705 = vld [vmem:[%s1879 + $0x141] sm:$0xff]
        %v2706 = vld [vmem:[%s1879 + $0x151] sm:$0xff]
        %v2707 = vld [vmem:[%s1879 + $0x159] sm:$0xff]
        %v2708 = vld [vmem:[%s1879 + $0x169] sm:$0xff]
        %v2709 = vld [vmem:[%s1879 + $0x171] sm:$0xff]
        %v2710 = vlaneseq
        %v2711 = vshrl.u32 %v2710, 7
        %v2712 = vsub.s32 0, %v2711
        %v2713 = vrot.slane %v2677, %v2712
        %v2714 = vmul.f32 %v2678, %v2713
        %v2715 = vmul.f32 %v2679, %v2713
        %v2716 = vmul.f32 %v2680, %v2713
        %v2717 = vmul.f32 %v2681, %v2713
        %v2718 = vmul.f32 %v2682, %v2713
        %v2719 = vmul.f32 %v2683, %v2713
        %v2720 = vmul.f32 %v2684, %v2713
        %v2721 = vmul.f32 %v2685, %v2713
        %v2722 = vmul.f32 %v2686, %v2713
        %v2723 = vmul.f32 %v2687, %v2713
        %v2724 = vmul.f32 %v2688, %v2713
        %v2725 = vmul.f32 %v2689, %v2713
        %v2726 = vmul.f32 %v2690, %v2713
        %v2727 = vmul.f32 %v2691, %v2713
        %v2728 = vmul.f32 %v2692, %v2713
        %v2729 = vmul.f32 %v2693, %v2713
        %v2730 = vmul.f32 %v2694, %v2713
        %v2731 = vmul.f32 %v2695, %v2713
        %v2732 = vmul.f32 %v2696, %v2713
        %v2733 = vmul.f32 %v2697, %v2713
        %v2734 = vmul.f32 %v2698, %v2713
        %v2735 = vmul.f32 %v2699, %v2713
        %v2736 = vmul.f32 %v2700, %v2713
        %v2737 = vmul.f32 %v2701, %v2713
        %v2738 = vmul.f32 %v2702, %v2713
        %v2739 = vmul.f32 %v2703, %v2713
        %v2740 = vmul.f32 %v2704, %v2713
        %v2741 = vmul.f32 %v2705, %v2713
        %v2742 = vmul.f32 %v2706, %v2713
        %v2743 = vmul.f32 %v2707, %v2713
        %v2744 = vmul.f32 %v2708, %v2713
        %v2745 = vmul.f32 %v2709, %v2713
        %v2746 = vadd.f32 %v2645, %v2714
        %v2747 = vadd.f32 %v2646, %v2715
        %v2748 = vadd.f32 %v2647, %v2716
        %v2749 = vadd.f32 %v2648, %v2717
        %v2750 = vadd.f32 %v2649, %v2718
        %v2751 = vadd.f32 %v2650, %v2719
        %v2752 = vadd.f32 %v2651, %v2720
        %v2753 = vadd.f32 %v2652, %v2721
        %v2754 = vadd.f32 %v2653, %v2722
        %v2755 = vadd.f32 %v2654, %v2723
        %v2756 = vadd.f32 %v2655, %v2724
        %v2757 = vadd.f32 %v2656, %v2725
        %v2758 = vadd.f32 %v2657, %v2726
        %v2759 = vadd.f32 %v2658, %v2727
        %v2760 = vadd.f32 %v2659, %v2728
        %v2761 = vadd.f32 %v2660, %v2729
        %v2762 = vadd.f32 %v2661, %v2730
        %v2763 = vadd.f32 %v2662, %v2731
        %v2764 = vadd.f32 %v2663, %v2732
        %v2765 = vadd.f32 %v2664, %v2733
        %v2766 = vadd.f32 %v2665, %v2734
        %v2767 = vadd.f32 %v2666, %v2735
        %v2768 = vadd.f32 %v2667, %v2736
        %v2769 = vadd.f32 %v2668, %v2737
        %v2770 = vadd.f32 %v2669, %v2738
        %v2771 = vadd.f32 %v2670, %v2739
        %v2772 = vadd.f32 %v2671, %v2740
        %v2773 = vadd.f32 %v2672, %v2741
        %v2774 = vadd.f32 %v2673, %v2742
        %v2775 = vadd.f32 %v2674, %v2743
        %v2776 = vadd.f32 %v2675, %v2744
        %v2777 = vadd.f32 %v2676, %v2745
        %v2778 = vld [vmem:[%s3 + $0x6] sm:$0x1]
        %v2779 = vld [vmem:[%s2137] sm:$0xff]
        %v2780 = vld [vmem:[%s2137 + $0x8] sm:$0xff]
        %v2781 = vld [vmem:[%s2137 + $0x18] sm:$0xff]
        %v2782 = vld [vmem:[%s2137 + $0x20] sm:$0xff]
        %v2783 = vld [vmem:[%s2137 + $0x30] sm:$0xff]
        %v2784 = vld [vmem:[%s2137 + $0x38] sm:$0xff]
        %v2785 = vld [vmem:[%s2137 + $0x48] sm:$0xff]
        %v2786 = vld [vmem:[%s2137 + $0x50] sm:$0xff]
        %v2787 = vld [vmem:[%s2137 + $0x60] sm:$0xff]
        %v2788 = vld [vmem:[%s2137 + $0x68] sm:$0xff]
        %v2789 = vld [vmem:[%s2137 + $0x78] sm:$0xff]
        %v2790 = vld [vmem:[%s2137 + $0x80] sm:$0xff]
        %v2791 = vld [vmem:[%s2137 + $0x90] sm:$0xff]
        %v2792 = vld [vmem:[%s2137 + $0x98] sm:$0xff]
        %v2793 = vld [vmem:[%s2137 + $0xa8] sm:$0xff]
        %v2794 = vld [vmem:[%s2137 + $0xb0] sm:$0xff]
        %v2795 = vld [vmem:[%s2137 + $0xc0] sm:$0xff]
        %v2796 = vld [vmem:[%s2137 + $0xc8] sm:$0xff]
        %v2797 = vld [vmem:[%s2137 + $0xd8] sm:$0xff]
        %v2798 = vld [vmem:[%s2137 + $0xe0] sm:$0xff]
        %v2799 = vld [vmem:[%s2137 + $0xf0] sm:$0xff]
        %v2800 = vld [vmem:[%s2137 + $0xf8] sm:$0xff]
        %v2801 = vld [vmem:[%s2137 + $0x108] sm:$0xff]
        %v2802 = vld [vmem:[%s2137 + $0x110] sm:$0xff]
        %v2803 = vld [vmem:[%s2137 + $0x120] sm:$0xff]
        %v2804 = vld [vmem:[%s2137 + $0x128] sm:$0xff]
        %v2805 = vld [vmem:[%s2137 + $0x138] sm:$0xff]
        %v2806 = vld [vmem:[%s2137 + $0x140] sm:$0xff]
        %v2807 = vld [vmem:[%s2137 + $0x150] sm:$0xff]
        %v2808 = vld [vmem:[%s2137 + $0x158] sm:$0xff]
        %v2809 = vld [vmem:[%s2137 + $0x168] sm:$0xff]
        %v2810 = vld [vmem:[%s2137 + $0x170] sm:$0xff]
        %v2811 = vlaneseq
        %v2812 = vshrl.u32 %v2811, 7
        %v2813 = vsub.s32 0, %v2812
        %v2814 = vrot.slane %v2778, %v2813
        %v2815 = vmul.f32 %v2779, %v2814
        %v2816 = vmul.f32 %v2780, %v2814
        %v2817 = vmul.f32 %v2781, %v2814
        %v2818 = vmul.f32 %v2782, %v2814
        %v2819 = vmul.f32 %v2783, %v2814
        %v2820 = vmul.f32 %v2784, %v2814
        %v2821 = vmul.f32 %v2785, %v2814
        %v2822 = vmul.f32 %v2786, %v2814
        %v2823 = vmul.f32 %v2787, %v2814
        %v2824 = vmul.f32 %v2788, %v2814
        %v2825 = vmul.f32 %v2789, %v2814
        %v2826 = vmul.f32 %v2790, %v2814
        %v2827 = vmul.f32 %v2791, %v2814
        %v2828 = vmul.f32 %v2792, %v2814
        %v2829 = vmul.f32 %v2793, %v2814
        %v2830 = vmul.f32 %v2794, %v2814
        %v2831 = vmul.f32 %v2795, %v2814
        %v2832 = vmul.f32 %v2796, %v2814
        %v2833 = vmul.f32 %v2797, %v2814
        %v2834 = vmul.f32 %v2798, %v2814
        %v2835 = vmul.f32 %v2799, %v2814
        %v2836 = vmul.f32 %v2800, %v2814
        %v2837 = vmul.f32 %v2801, %v2814
        %v2838 = vmul.f32 %v2802, %v2814
        %v2839 = vmul.f32 %v2803, %v2814
        %v2840 = vmul.f32 %v2804, %v2814
        %v2841 = vmul.f32 %v2805, %v2814
        %v2842 = vmul.f32 %v2806, %v2814
        %v2843 = vmul.f32 %v2807, %v2814
        %v2844 = vmul.f32 %v2808, %v2814
        %v2845 = vmul.f32 %v2809, %v2814
        %v2846 = vmul.f32 %v2810, %v2814
        %v2847 = vadd.f32 %v2746, %v2815
        %v2848 = vadd.f32 %v2747, %v2816
        %v2849 = vadd.f32 %v2748, %v2817
        %v2850 = vadd.f32 %v2749, %v2818
        %v2851 = vadd.f32 %v2750, %v2819
        %v2852 = vadd.f32 %v2751, %v2820
        %v2853 = vadd.f32 %v2752, %v2821
        %v2854 = vadd.f32 %v2753, %v2822
        %v2855 = vadd.f32 %v2754, %v2823
        %v2856 = vadd.f32 %v2755, %v2824
        %v2857 = vadd.f32 %v2756, %v2825
        %v2858 = vadd.f32 %v2757, %v2826
        %v2859 = vadd.f32 %v2758, %v2827
        %v2860 = vadd.f32 %v2759, %v2828
        %v2861 = vadd.f32 %v2760, %v2829
        %v2862 = vadd.f32 %v2761, %v2830
        %v2863 = vadd.f32 %v2762, %v2831
        %v2864 = vadd.f32 %v2763, %v2832
        %v2865 = vadd.f32 %v2764, %v2833
        %v2866 = vadd.f32 %v2765, %v2834
        %v2867 = vadd.f32 %v2766, %v2835
        %v2868 = vadd.f32 %v2767, %v2836
        %v2869 = vadd.f32 %v2768, %v2837
        %v2870 = vadd.f32 %v2769, %v2838
        %v2871 = vadd.f32 %v2770, %v2839
        %v2872 = vadd.f32 %v2771, %v2840
        %v2873 = vadd.f32 %v2772, %v2841
        %v2874 = vadd.f32 %v2773, %v2842
        %v2875 = vadd.f32 %v2774, %v2843
        %v2876 = vadd.f32 %v2775, %v2844
        %v2877 = vadd.f32 %v2776, %v2845
        %v2878 = vadd.f32 %v2777, %v2846
        %v2879 = vld [vmem:[%s3 + $0x7] sm:$0x1]
        %v2880 = vld [vmem:[%s2008 + $0x1] sm:$0xff]
        %v2881 = vld [vmem:[%s2008 + $0x9] sm:$0xff]
        %v2882 = vld [vmem:[%s2008 + $0x19] sm:$0xff]
        %v2883 = vld [vmem:[%s2008 + $0x21] sm:$0xff]
        %v2884 = vld [vmem:[%s2008 + $0x31] sm:$0xff]
        %v2885 = vld [vmem:[%s2008 + $0x39] sm:$0xff]
        %v2886 = vld [vmem:[%s2008 + $0x49] sm:$0xff]
        %v2887 = vld [vmem:[%s2008 + $0x51] sm:$0xff]
        %v2888 = vld [vmem:[%s2008 + $0x61] sm:$0xff]
        %v2889 = vld [vmem:[%s2008 + $0x69] sm:$0xff]
        %v2890 = vld [vmem:[%s2008 + $0x79] sm:$0xff]
        %v2891 = vld [vmem:[%s2008 + $0x81] sm:$0xff]
        %v2892 = vld [vmem:[%s2008 + $0x91] sm:$0xff]
        %v2893 = vld [vmem:[%s2008 + $0x99] sm:$0xff]
        %v2894 = vld [vmem:[%s2008 + $0xa9] sm:$0xff]
        %v2895 = vld [vmem:[%s2008 + $0xb1] sm:$0xff]
        %v2896 = vld [vmem:[%s2008 + $0xc1] sm:$0xff]
        %v2897 = vld [vmem:[%s2008 + $0xc9] sm:$0xff]
        %v2898 = vld [vmem:[%s2008 + $0xd9] sm:$0xff]
        %v2899 = vld [vmem:[%s2008 + $0xe1] sm:$0xff]
        %v2900 = vld [vmem:[%s2008 + $0xf1] sm:$0xff]
        %v2901 = vld [vmem:[%s2008 + $0xf9] sm:$0xff]
        %v2902 = vld [vmem:[%s2008 + $0x109] sm:$0xff]
        %v2903 = vld [vmem:[%s2008 + $0x111] sm:$0xff]
        %v2904 = vld [vmem:[%s2008 + $0x121] sm:$0xff]
        %v2905 = vld [vmem:[%s2008 + $0x129] sm:$0xff]
        %v2906 = vld [vmem:[%s2008 + $0x139] sm:$0xff]
        %v2907 = vld [vmem:[%s2008 + $0x141] sm:$0xff]
        %v2908 = vld [vmem:[%s2008 + $0x151] sm:$0xff]
        %v2909 = vld [vmem:[%s2008 + $0x159] sm:$0xff]
        %v2910 = vld [vmem:[%s2008 + $0x169] sm:$0xff]
        %v2911 = vld [vmem:[%s2008 + $0x171] sm:$0xff]
        %v2912 = vlaneseq
        %v2913 = vshrl.u32 %v2912, 7
        %v2914 = vsub.s32 0, %v2913
        %v2915 = vrot.slane %v2879, %v2914
        %v2916 = vmul.f32 %v2880, %v2915
        %v2917 = vmul.f32 %v2881, %v2915
        %v2918 = vmul.f32 %v2882, %v2915
        %v2919 = vmul.f32 %v2883, %v2915
        %v2920 = vmul.f32 %v2884, %v2915
        %v2921 = vmul.f32 %v2885, %v2915
        %v2922 = vmul.f32 %v2886, %v2915
        %v2923 = vmul.f32 %v2887, %v2915
        %v2924 = vmul.f32 %v2888, %v2915
        %v2925 = vmul.f32 %v2889, %v2915
        %v2926 = vmul.f32 %v2890, %v2915
        %v2927 = vmul.f32 %v2891, %v2915
        %v2928 = vmul.f32 %v2892, %v2915
        %v2929 = vmul.f32 %v2893, %v2915
        %v2930 = vmul.f32 %v2894, %v2915
        %v2931 = vmul.f32 %v2895, %v2915
        %v2932 = vmul.f32 %v2896, %v2915
        %v2933 = vmul.f32 %v2897, %v2915
        %v2934 = vmul.f32 %v2898, %v2915
        %v2935 = vmul.f32 %v2899, %v2915
        %v2936 = vmul.f32 %v2900, %v2915
        %v2937 = vmul.f32 %v2901, %v2915
        %v2938 = vmul.f32 %v2902, %v2915
        %v2939 = vmul.f32 %v2903, %v2915
        %v2940 = vmul.f32 %v2904, %v2915
        %v2941 = vmul.f32 %v2905, %v2915
        %v2942 = vmul.f32 %v2906, %v2915
        %v2943 = vmul.f32 %v2907, %v2915
        %v2944 = vmul.f32 %v2908, %v2915
        %v2945 = vmul.f32 %v2909, %v2915
        %v2946 = vmul.f32 %v2910, %v2915
        %v2947 = vmul.f32 %v2911, %v2915
        %v2948 = vadd.f32 %v2847, %v2916
        %v2949 = vadd.f32 %v2848, %v2917
        %v2950 = vadd.f32 %v2849, %v2918
        %v2951 = vadd.f32 %v2850, %v2919
        %v2952 = vadd.f32 %v2851, %v2920
        %v2953 = vadd.f32 %v2852, %v2921
        %v2954 = vadd.f32 %v2853, %v2922
        %v2955 = vadd.f32 %v2854, %v2923
        %v2956 = vadd.f32 %v2855, %v2924
        %v2957 = vadd.f32 %v2856, %v2925
        %v2958 = vadd.f32 %v2857, %v2926
        %v2959 = vadd.f32 %v2858, %v2927
        %v2960 = vadd.f32 %v2859, %v2928
        %v2961 = vadd.f32 %v2860, %v2929
        %v2962 = vadd.f32 %v2861, %v2930
        %v2963 = vadd.f32 %v2862, %v2931
        %v2964 = vadd.f32 %v2863, %v2932
        %v2965 = vadd.f32 %v2864, %v2933
        %v2966 = vadd.f32 %v2865, %v2934
        %v2967 = vadd.f32 %v2866, %v2935
        %v2968 = vadd.f32 %v2867, %v2936
        %v2969 = vadd.f32 %v2868, %v2937
        %v2970 = vadd.f32 %v2869, %v2938
        %v2971 = vadd.f32 %v2870, %v2939
        %v2972 = vadd.f32 %v2871, %v2940
        %v2973 = vadd.f32 %v2872, %v2941
        %v2974 = vadd.f32 %v2873, %v2942
        %v2975 = vadd.f32 %v2874, %v2943
        %v2976 = vadd.f32 %v2875, %v2944
        %v2977 = vadd.f32 %v2876, %v2945
        %v2978 = vadd.f32 %v2877, %v2946
        %v2979 = vadd.f32 %v2878, %v2947
        %v2980 = vld [vmem:[%s3 + $0x8] sm:$0x1]
        %v2981 = vld [vmem:[%s2137 + $0x1] sm:$0xff]
        %v2982 = vld [vmem:[%s2137 + $0x9] sm:$0xff]
        %v2983 = vld [vmem:[%s2137 + $0x19] sm:$0xff]
        %v2984 = vld [vmem:[%s2137 + $0x21] sm:$0xff]
        %v2985 = vld [vmem:[%s2137 + $0x31] sm:$0xff]
        %v2986 = vld [vmem:[%s2137 + $0x39] sm:$0xff]
        %v2987 = vld [vmem:[%s2137 + $0x49] sm:$0xff]
        %v2988 = vld [vmem:[%s2137 + $0x51] sm:$0xff]
        %v2989 = vld [vmem:[%s2137 + $0x61] sm:$0xff]
        %v2990 = vld [vmem:[%s2137 + $0x69] sm:$0xff]
        %v2991 = vld [vmem:[%s2137 + $0x79] sm:$0xff]
        %v2992 = vld [vmem:[%s2137 + $0x81] sm:$0xff]
        %v2993 = vld [vmem:[%s2137 + $0x91] sm:$0xff]
        %v2994 = vld [vmem:[%s2137 + $0x99] sm:$0xff]
        %v2995 = vld [vmem:[%s2137 + $0xa9] sm:$0xff]
        %v2996 = vld [vmem:[%s2137 + $0xb1] sm:$0xff]
        %v2997 = vld [vmem:[%s2137 + $0xc1] sm:$0xff]
        %v2998 = vld [vmem:[%s2137 + $0xc9] sm:$0xff]
        %v2999 = vld [vmem:[%s2137 + $0xd9] sm:$0xff]
        %v3000 = vld [vmem:[%s2137 + $0xe1] sm:$0xff]
        %v3001 = vld [vmem:[%s2137 + $0xf1] sm:$0xff]
        %v3002 = vld [vmem:[%s2137 + $0xf9] sm:$0xff]
        %v3003 = vld [vmem:[%s2137 + $0x109] sm:$0xff]
        %v3004 = vld [vmem:[%s2137 + $0x111] sm:$0xff]
        %v3005 = vld [vmem:[%s2137 + $0x121] sm:$0xff]
        %v3006 = vld [vmem:[%s2137 + $0x129] sm:$0xff]
        %v3007 = vld [vmem:[%s2137 + $0x139] sm:$0xff]
        %v3008 = vld [vmem:[%s2137 + $0x141] sm:$0xff]
        %v3009 = vld [vmem:[%s2137 + $0x151] sm:$0xff]
        %v3010 = vld [vmem:[%s2137 + $0x159] sm:$0xff]
        %v3011 = vld [vmem:[%s2137 + $0x169] sm:$0xff]
        %v3012 = vld [vmem:[%s2137 + $0x171] sm:$0xff]
        %v3013 = vlaneseq
        %v3014 = vshrl.u32 %v3013, 7
        %v3015 = vsub.s32 0, %v3014
        %v3016 = vrot.slane %v2980, %v3015
        %v3017 = vmul.f32 %v2981, %v3016
        %v3018 = vmul.f32 %v2982, %v3016
        %v3019 = vmul.f32 %v2983, %v3016
        %v3020 = vmul.f32 %v2984, %v3016
        %v3021 = vmul.f32 %v2985, %v3016
        %v3022 = vmul.f32 %v2986, %v3016
        %v3023 = vmul.f32 %v2987, %v3016
        %v3024 = vmul.f32 %v2988, %v3016
        %v3025 = vmul.f32 %v2989, %v3016
        %v3026 = vmul.f32 %v2990, %v3016
        %v3027 = vmul.f32 %v2991, %v3016
        %v3028 = vmul.f32 %v2992, %v3016
        %v3029 = vmul.f32 %v2993, %v3016
        %v3030 = vmul.f32 %v2994, %v3016
        %v3031 = vmul.f32 %v2995, %v3016
        %v3032 = vmul.f32 %v2996, %v3016
        %v3033 = vmul.f32 %v2997, %v3016
        %v3034 = vmul.f32 %v2998, %v3016
        %v3035 = vmul.f32 %v2999, %v3016
        %v3036 = vmul.f32 %v3000, %v3016
        %v3037 = vmul.f32 %v3001, %v3016
        %v3038 = vmul.f32 %v3002, %v3016
        %v3039 = vmul.f32 %v3003, %v3016
        %v3040 = vmul.f32 %v3004, %v3016
        %v3041 = vmul.f32 %v3005, %v3016
        %v3042 = vmul.f32 %v3006, %v3016
        %v3043 = vmul.f32 %v3007, %v3016
        %v3044 = vmul.f32 %v3008, %v3016
        %v3045 = vmul.f32 %v3009, %v3016
        %v3046 = vmul.f32 %v3010, %v3016
        %v3047 = vmul.f32 %v3011, %v3016
        %v3048 = vmul.f32 %v3012, %v3016
        %v3049 = vadd.f32 %v2948, %v3017
        %v3050 = vadd.f32 %v2949, %v3018
        %v3051 = vadd.f32 %v2950, %v3019
        %v3052 = vadd.f32 %v2951, %v3020
        %v3053 = vadd.f32 %v2952, %v3021
        %v3054 = vadd.f32 %v2953, %v3022
        %v3055 = vadd.f32 %v2954, %v3023
        %v3056 = vadd.f32 %v2955, %v3024
        %v3057 = vadd.f32 %v2956, %v3025
        %v3058 = vadd.f32 %v2957, %v3026
        %v3059 = vadd.f32 %v2958, %v3027
        %v3060 = vadd.f32 %v2959, %v3028
        %v3061 = vadd.f32 %v2960, %v3029
        %v3062 = vadd.f32 %v2961, %v3030
        %v3063 = vadd.f32 %v2962, %v3031
        %v3064 = vadd.f32 %v2963, %v3032
        %v3065 = vadd.f32 %v2964, %v3033
        %v3066 = vadd.f32 %v2965, %v3034
        %v3067 = vadd.f32 %v2966, %v3035
        %v3068 = vadd.f32 %v2967, %v3036
        %v3069 = vadd.f32 %v2968, %v3037
        %v3070 = vadd.f32 %v2969, %v3038
        %v3071 = vadd.f32 %v2970, %v3039
        %v3072 = vadd.f32 %v2971, %v3040
        %v3073 = vadd.f32 %v2972, %v3041
        %v3074 = vadd.f32 %v2973, %v3042
        %v3075 = vadd.f32 %v2974, %v3043
        %v3076 = vadd.f32 %v2975, %v3044
        %v3077 = vadd.f32 %v2976, %v3045
        %v3078 = vadd.f32 %v2977, %v3046
        %v3079 = vadd.f32 %v2978, %v3047
        %v3080 = vadd.f32 %v2979, %v3048
        %v3081 = vsel %vm272, %v3049, 0.0
        %3082 = vadd.xlane.f32.xlu0 %v3081
        %v3083 = vpop.xlane.xlu0 %3082
        %v3084 = vsel %vm272, %v3050, 0.0
        %3085 = vadd.xlane.f32.xlu0 %v3084
        %v3086 = vpop.xlane.xlu0 %3085
        %v3087 = vsel %vm272, %v3051, 0.0
        %3088 = vadd.xlane.f32.xlu0 %v3087
        %v3089 = vpop.xlane.xlu0 %3088
        %v3090 = vsel %vm272, %v3052, 0.0
        %3091 = vadd.xlane.f32.xlu0 %v3090
        %v3092 = vpop.xlane.xlu0 %3091
        %v3093 = vsel %vm272, %v3053, 0.0
        %3094 = vadd.xlane.f32.xlu0 %v3093
        %v3095 = vpop.xlane.xlu0 %3094
        %v3096 = vsel %vm272, %v3054, 0.0
        %3097 = vadd.xlane.f32.xlu0 %v3096
        %v3098 = vpop.xlane.xlu0 %3097
        %v3099 = vsel %vm272, %v3055, 0.0
        %3100 = vadd.xlane.f32.xlu0 %v3099
        %v3101 = vpop.xlane.xlu0 %3100
        %v3102 = vsel %vm272, %v3056, 0.0
        %3103 = vadd.xlane.f32.xlu0 %v3102
        %v3104 = vpop.xlane.xlu0 %3103
        %v3105 = vsel %vm272, %v3057, 0.0
        %3106 = vadd.xlane.f32.xlu0 %v3105
        %v3107 = vpop.xlane.xlu0 %3106
        %v3108 = vsel %vm272, %v3058, 0.0
        %3109 = vadd.xlane.f32.xlu0 %v3108
        %v3110 = vpop.xlane.xlu0 %3109
        %v3111 = vsel %vm272, %v3059, 0.0
        %3112 = vadd.xlane.f32.xlu0 %v3111
        %v3113 = vpop.xlane.xlu0 %3112
        %v3114 = vsel %vm272, %v3060, 0.0
        %3115 = vadd.xlane.f32.xlu0 %v3114
        %v3116 = vpop.xlane.xlu0 %3115
        %v3117 = vsel %vm272, %v3061, 0.0
        %3118 = vadd.xlane.f32.xlu0 %v3117
        %v3119 = vpop.xlane.xlu0 %3118
        %v3120 = vsel %vm272, %v3062, 0.0
        %3121 = vadd.xlane.f32.xlu0 %v3120
        %v3122 = vpop.xlane.xlu0 %3121
        %v3123 = vsel %vm272, %v3063, 0.0
        %3124 = vadd.xlane.f32.xlu0 %v3123
        %v3125 = vpop.xlane.xlu0 %3124
        %v3126 = vsel %vm272, %v3064, 0.0
        %3127 = vadd.xlane.f32.xlu0 %v3126
        %v3128 = vpop.xlane.xlu0 %3127
        %v3129 = vsel %vm272, %v3065, 0.0
        %3130 = vadd.xlane.f32.xlu0 %v3129
        %v3131 = vpop.xlane.xlu0 %3130
        %v3132 = vsel %vm272, %v3066, 0.0
        %3133 = vadd.xlane.f32.xlu0 %v3132
        %v3134 = vpop.xlane.xlu0 %3133
        %v3135 = vsel %vm272, %v3067, 0.0
        %3136 = vadd.xlane.f32.xlu0 %v3135
        %v3137 = vpop.xlane.xlu0 %3136
        %v3138 = vsel %vm272, %v3068, 0.0
        %3139 = vadd.xlane.f32.xlu0 %v3138
        %v3140 = vpop.xlane.xlu0 %3139
        %v3141 = vsel %vm272, %v3069, 0.0
        %3142 = vadd.xlane.f32.xlu0 %v3141
        %v3143 = vpop.xlane.xlu0 %3142
        %v3144 = vsel %vm272, %v3070, 0.0
        %3145 = vadd.xlane.f32.xlu0 %v3144
        %v3146 = vpop.xlane.xlu0 %3145
        %v3147 = vsel %vm272, %v3071, 0.0
        %3148 = vadd.xlane.f32.xlu0 %v3147
        %v3149 = vpop.xlane.xlu0 %3148
        %v3150 = vsel %vm272, %v3072, 0.0
        %3151 = vadd.xlane.f32.xlu0 %v3150
        %v3152 = vpop.xlane.xlu0 %3151
        %v3153 = vsel %vm272, %v3073, 0.0
        %3154 = vadd.xlane.f32.xlu0 %v3153
        %v3155 = vpop.xlane.xlu0 %3154
        %v3156 = vsel %vm272, %v3074, 0.0
        %3157 = vadd.xlane.f32.xlu0 %v3156
        %v3158 = vpop.xlane.xlu0 %3157
        %v3159 = vsel %vm272, %v3075, 0.0
        %3160 = vadd.xlane.f32.xlu0 %v3159
        %v3161 = vpop.xlane.xlu0 %3160
        %v3162 = vsel %vm272, %v3076, 0.0
        %3163 = vadd.xlane.f32.xlu0 %v3162
        %v3164 = vpop.xlane.xlu0 %3163
        %v3165 = vsel %vm272, %v3077, 0.0
        %3166 = vadd.xlane.f32.xlu0 %v3165
        %v3167 = vpop.xlane.xlu0 %3166
        %v3168 = vsel %vm272, %v3078, 0.0
        %3169 = vadd.xlane.f32.xlu0 %v3168
        %v3170 = vpop.xlane.xlu0 %3169
        %v3171 = vsel %vm272, %v3079, 0.0
        %3172 = vadd.xlane.f32.xlu0 %v3171
        %v3173 = vpop.xlane.xlu0 %3172
        %v3174 = vsel %vm272, %v3080, 0.0
        %3175 = vadd.xlane.f32.xlu0 %v3174
        %v3176 = vpop.xlane.xlu0 %3175
        %v3177 = vrcp.pop 32.0
        %v3178 = vmul.f32 %v3083, %v3177
        %v3179 = vmul.f32 %v3086, %v3177
        %v3180 = vmul.f32 %v3089, %v3177
        %v3181 = vmul.f32 %v3092, %v3177
        %v3182 = vmul.f32 %v3095, %v3177
        %v3183 = vmul.f32 %v3098, %v3177
        %v3184 = vmul.f32 %v3101, %v3177
        %v3185 = vmul.f32 %v3104, %v3177
        %v3186 = vmul.f32 %v3107, %v3177
        %v3187 = vmul.f32 %v3110, %v3177
        %v3188 = vmul.f32 %v3113, %v3177
        %v3189 = vmul.f32 %v3116, %v3177
        %v3190 = vmul.f32 %v3119, %v3177
        %v3191 = vmul.f32 %v3122, %v3177
        %v3192 = vmul.f32 %v3125, %v3177
        %v3193 = vmul.f32 %v3128, %v3177
        %v3194 = vmul.f32 %v3131, %v3177
        %v3195 = vmul.f32 %v3134, %v3177
        %v3196 = vmul.f32 %v3137, %v3177
        %v3197 = vmul.f32 %v3140, %v3177
        %v3198 = vmul.f32 %v3143, %v3177
        %v3199 = vmul.f32 %v3146, %v3177
        %v3200 = vmul.f32 %v3149, %v3177
        %v3201 = vmul.f32 %v3152, %v3177
        %v3202 = vmul.f32 %v3155, %v3177
        %v3203 = vmul.f32 %v3158, %v3177
        %v3204 = vmul.f32 %v3161, %v3177
        %v3205 = vmul.f32 %v3164, %v3177
        %v3206 = vmul.f32 %v3167, %v3177
        %v3207 = vmul.f32 %v3170, %v3177
        %v3208 = vmul.f32 %v3173, %v3177
        %v3209 = vmul.f32 %v3176, %v3177
        %v3210 = vsub.f32 %v3049, %v3178
        %v3211 = vsub.f32 %v3050, %v3179
        %v3212 = vsub.f32 %v3051, %v3180
        %v3213 = vsub.f32 %v3052, %v3181
        %v3214 = vsub.f32 %v3053, %v3182
        %v3215 = vsub.f32 %v3054, %v3183
        %v3216 = vsub.f32 %v3055, %v3184
        %v3217 = vsub.f32 %v3056, %v3185
        %v3218 = vsub.f32 %v3057, %v3186
        %v3219 = vsub.f32 %v3058, %v3187
        %v3220 = vsub.f32 %v3059, %v3188
        %v3221 = vsub.f32 %v3060, %v3189
        %v3222 = vsub.f32 %v3061, %v3190
        %v3223 = vsub.f32 %v3062, %v3191
        %v3224 = vsub.f32 %v3063, %v3192
        %v3225 = vsub.f32 %v3064, %v3193
        %v3226 = vsub.f32 %v3065, %v3194
        %v3227 = vsub.f32 %v3066, %v3195
        %v3228 = vsub.f32 %v3067, %v3196
        %v3229 = vsub.f32 %v3068, %v3197
        %v3230 = vsub.f32 %v3069, %v3198
        %v3231 = vsub.f32 %v3070, %v3199
        %v3232 = vsub.f32 %v3071, %v3200
        %v3233 = vsub.f32 %v3072, %v3201
        %v3234 = vsub.f32 %v3073, %v3202
        %v3235 = vsub.f32 %v3074, %v3203
        %v3236 = vsub.f32 %v3075, %v3204
        %v3237 = vsub.f32 %v3076, %v3205
        %v3238 = vsub.f32 %v3077, %v3206
        %v3239 = vsub.f32 %v3078, %v3207
        %v3240 = vsub.f32 %v3079, %v3208
        %v3241 = vsub.f32 %v3080, %v3209
        %v3242 = vmul.f32 %v3210, %v3210
        %v3243 = vmul.f32 %v3211, %v3211
        %v3244 = vmul.f32 %v3212, %v3212
        %v3245 = vmul.f32 %v3213, %v3213
        %v3246 = vmul.f32 %v3214, %v3214
        %v3247 = vmul.f32 %v3215, %v3215
        %v3248 = vmul.f32 %v3216, %v3216
        %v3249 = vmul.f32 %v3217, %v3217
        %v3250 = vmul.f32 %v3218, %v3218
        %v3251 = vmul.f32 %v3219, %v3219
        %v3252 = vmul.f32 %v3220, %v3220
        %v3253 = vmul.f32 %v3221, %v3221
        %v3254 = vmul.f32 %v3222, %v3222
        %v3255 = vmul.f32 %v3223, %v3223
        %v3256 = vmul.f32 %v3224, %v3224
        %v3257 = vmul.f32 %v3225, %v3225
        %v3258 = vmul.f32 %v3226, %v3226
        %v3259 = vmul.f32 %v3227, %v3227
        %v3260 = vmul.f32 %v3228, %v3228
        %v3261 = vmul.f32 %v3229, %v3229
        %v3262 = vmul.f32 %v3230, %v3230
        %v3263 = vmul.f32 %v3231, %v3231
        %v3264 = vmul.f32 %v3232, %v3232
        %v3265 = vmul.f32 %v3233, %v3233
        %v3266 = vmul.f32 %v3234, %v3234
        %v3267 = vmul.f32 %v3235, %v3235
        %v3268 = vmul.f32 %v3236, %v3236
        %v3269 = vmul.f32 %v3237, %v3237
        %v3270 = vmul.f32 %v3238, %v3238
        %v3271 = vmul.f32 %v3239, %v3239
        %v3272 = vmul.f32 %v3240, %v3240
        %v3273 = vmul.f32 %v3241, %v3241
        %v3274 = vsel %vm272, %v3242, 0.0
        %3275 = vadd.xlane.f32.xlu0 %v3274
        %v3276 = vpop.xlane.xlu0 %3275
        %v3277 = vsel %vm272, %v3243, 0.0
        %3278 = vadd.xlane.f32.xlu0 %v3277
        %v3279 = vpop.xlane.xlu0 %3278
        %v3280 = vsel %vm272, %v3244, 0.0
        %3281 = vadd.xlane.f32.xlu0 %v3280
        %v3282 = vpop.xlane.xlu0 %3281
        %v3283 = vsel %vm272, %v3245, 0.0
        %3284 = vadd.xlane.f32.xlu0 %v3283
        %v3285 = vpop.xlane.xlu0 %3284
        %v3286 = vsel %vm272, %v3246, 0.0
        %3287 = vadd.xlane.f32.xlu0 %v3286
        %v3288 = vpop.xlane.xlu0 %3287
        %v3289 = vsel %vm272, %v3247, 0.0
        %3290 = vadd.xlane.f32.xlu0 %v3289
        %v3291 = vpop.xlane.xlu0 %3290
        %v3292 = vsel %vm272, %v3248, 0.0
        %3293 = vadd.xlane.f32.xlu0 %v3292
        %v3294 = vpop.xlane.xlu0 %3293
        %v3295 = vsel %vm272, %v3249, 0.0
        %3296 = vadd.xlane.f32.xlu0 %v3295
        %v3297 = vpop.xlane.xlu0 %3296
        %v3298 = vsel %vm272, %v3250, 0.0
        %3299 = vadd.xlane.f32.xlu0 %v3298
        %v3300 = vpop.xlane.xlu0 %3299
        %v3301 = vsel %vm272, %v3251, 0.0
        %3302 = vadd.xlane.f32.xlu0 %v3301
        %v3303 = vpop.xlane.xlu0 %3302
        %v3304 = vsel %vm272, %v3252, 0.0
        %3305 = vadd.xlane.f32.xlu0 %v3304
        %v3306 = vpop.xlane.xlu0 %3305
        %v3307 = vsel %vm272, %v3253, 0.0
        %3308 = vadd.xlane.f32.xlu0 %v3307
        %v3309 = vpop.xlane.xlu0 %3308
        %v3310 = vsel %vm272, %v3254, 0.0
        %3311 = vadd.xlane.f32.xlu0 %v3310
        %v3312 = vpop.xlane.xlu0 %3311
        %v3313 = vsel %vm272, %v3255, 0.0
        %3314 = vadd.xlane.f32.xlu0 %v3313
        %v3315 = vpop.xlane.xlu0 %3314
        %v3316 = vsel %vm272, %v3256, 0.0
        %3317 = vadd.xlane.f32.xlu0 %v3316
        %v3318 = vpop.xlane.xlu0 %3317
        %v3319 = vsel %vm272, %v3257, 0.0
        %3320 = vadd.xlane.f32.xlu0 %v3319
        %v3321 = vpop.xlane.xlu0 %3320
        %v3322 = vsel %vm272, %v3258, 0.0
        %3323 = vadd.xlane.f32.xlu0 %v3322
        %v3324 = vpop.xlane.xlu0 %3323
        %v3325 = vsel %vm272, %v3259, 0.0
        %3326 = vadd.xlane.f32.xlu0 %v3325
        %v3327 = vpop.xlane.xlu0 %3326
        %v3328 = vsel %vm272, %v3260, 0.0
        %3329 = vadd.xlane.f32.xlu0 %v3328
        %v3330 = vpop.xlane.xlu0 %3329
        %v3331 = vsel %vm272, %v3261, 0.0
        %3332 = vadd.xlane.f32.xlu0 %v3331
        %v3333 = vpop.xlane.xlu0 %3332
        %v3334 = vsel %vm272, %v3262, 0.0
        %3335 = vadd.xlane.f32.xlu0 %v3334
        %v3336 = vpop.xlane.xlu0 %3335
        %v3337 = vsel %vm272, %v3263, 0.0
        %3338 = vadd.xlane.f32.xlu0 %v3337
        %v3339 = vpop.xlane.xlu0 %3338
        %v3340 = vsel %vm272, %v3264, 0.0
        %3341 = vadd.xlane.f32.xlu0 %v3340
        %v3342 = vpop.xlane.xlu0 %3341
        %v3343 = vsel %vm272, %v3265, 0.0
        %3344 = vadd.xlane.f32.xlu0 %v3343
        %v3345 = vpop.xlane.xlu0 %3344
        %v3346 = vsel %vm272, %v3266, 0.0
        %3347 = vadd.xlane.f32.xlu0 %v3346
        %v3348 = vpop.xlane.xlu0 %3347
        %v3349 = vsel %vm272, %v3267, 0.0
        %3350 = vadd.xlane.f32.xlu0 %v3349
        %v3351 = vpop.xlane.xlu0 %3350
        %v3352 = vsel %vm272, %v3268, 0.0
        %3353 = vadd.xlane.f32.xlu0 %v3352
        %v3354 = vpop.xlane.xlu0 %3353
        %v3355 = vsel %vm272, %v3269, 0.0
        %3356 = vadd.xlane.f32.xlu0 %v3355
        %v3357 = vpop.xlane.xlu0 %3356
        %v3358 = vsel %vm272, %v3270, 0.0
        %3359 = vadd.xlane.f32.xlu0 %v3358
        %v3360 = vpop.xlane.xlu0 %3359
        %v3361 = vsel %vm272, %v3271, 0.0
        %3362 = vadd.xlane.f32.xlu0 %v3361
        %v3363 = vpop.xlane.xlu0 %3362
        %v3364 = vsel %vm272, %v3272, 0.0
        %3365 = vadd.xlane.f32.xlu0 %v3364
        %v3366 = vpop.xlane.xlu0 %3365
        %v3367 = vsel %vm272, %v3273, 0.0
        %3368 = vadd.xlane.f32.xlu0 %v3367
        %v3369 = vpop.xlane.xlu0 %3368
        %v3370 = vmul.f32 %v3276, %v3177
        %v3371 = vmul.f32 %v3279, %v3177
        %v3372 = vmul.f32 %v3282, %v3177
        %v3373 = vmul.f32 %v3285, %v3177
        %v3374 = vmul.f32 %v3288, %v3177
        %v3375 = vmul.f32 %v3291, %v3177
        %v3376 = vmul.f32 %v3294, %v3177
        %v3377 = vmul.f32 %v3297, %v3177
        %v3378 = vmul.f32 %v3300, %v3177
        %v3379 = vmul.f32 %v3303, %v3177
        %v3380 = vmul.f32 %v3306, %v3177
        %v3381 = vmul.f32 %v3309, %v3177
        %v3382 = vmul.f32 %v3312, %v3177
        %v3383 = vmul.f32 %v3315, %v3177
        %v3384 = vmul.f32 %v3318, %v3177
        %v3385 = vmul.f32 %v3321, %v3177
        %v3386 = vmul.f32 %v3324, %v3177
        %v3387 = vmul.f32 %v3327, %v3177
        %v3388 = vmul.f32 %v3330, %v3177
        %v3389 = vmul.f32 %v3333, %v3177
        %v3390 = vmul.f32 %v3336, %v3177
        %v3391 = vmul.f32 %v3339, %v3177
        %v3392 = vmul.f32 %v3342, %v3177
        %v3393 = vmul.f32 %v3345, %v3177
        %v3394 = vmul.f32 %v3348, %v3177
        %v3395 = vmul.f32 %v3351, %v3177
        %v3396 = vmul.f32 %v3354, %v3177
        %v3397 = vmul.f32 %v3357, %v3177
        %v3398 = vmul.f32 %v3360, %v3177
        %v3399 = vmul.f32 %v3363, %v3177
        %v3400 = vmul.f32 %v3366, %v3177
        %v3401 = vmul.f32 %v3369, %v3177
        %v3402 = vadd.f32 %v3370, 1e-06
        %v3403 = vadd.f32 %v3371, 1e-06
        %v3404 = vadd.f32 %v3372, 1e-06
        %v3405 = vadd.f32 %v3373, 1e-06
        %v3406 = vadd.f32 %v3374, 1e-06
        %v3407 = vadd.f32 %v3375, 1e-06
        %v3408 = vadd.f32 %v3376, 1e-06
        %v3409 = vadd.f32 %v3377, 1e-06
        %v3410 = vadd.f32 %v3378, 1e-06
        %v3411 = vadd.f32 %v3379, 1e-06
        %v3412 = vadd.f32 %v3380, 1e-06
        %v3413 = vadd.f32 %v3381, 1e-06
        %v3414 = vadd.f32 %v3382, 1e-06
        %v3415 = vadd.f32 %v3383, 1e-06
        %v3416 = vadd.f32 %v3384, 1e-06
        %v3417 = vadd.f32 %v3385, 1e-06
        %v3418 = vadd.f32 %v3386, 1e-06
        %v3419 = vadd.f32 %v3387, 1e-06
        %v3420 = vadd.f32 %v3388, 1e-06
        %v3421 = vadd.f32 %v3389, 1e-06
        %v3422 = vadd.f32 %v3390, 1e-06
        %v3423 = vadd.f32 %v3391, 1e-06
        %v3424 = vadd.f32 %v3392, 1e-06
        %v3425 = vadd.f32 %v3393, 1e-06
        %v3426 = vadd.f32 %v3394, 1e-06
        %v3427 = vadd.f32 %v3395, 1e-06
        %v3428 = vadd.f32 %v3396, 1e-06
        %v3429 = vadd.f32 %v3397, 1e-06
        %v3430 = vadd.f32 %v3398, 1e-06
        %v3431 = vadd.f32 %v3399, 1e-06
        %v3432 = vadd.f32 %v3400, 1e-06
        %v3433 = vadd.f32 %v3401, 1e-06
        %v3434 = vrsqrt.pop %v3402
        %v3435 = vrsqrt.pop %v3403
        %v3436 = vrsqrt.pop %v3404
        %v3437 = vrsqrt.pop %v3405
        %v3438 = vrsqrt.pop %v3406
        %v3439 = vrsqrt.pop %v3407
        %v3440 = vrsqrt.pop %v3408
        %v3441 = vrsqrt.pop %v3409
        %v3442 = vrsqrt.pop %v3410
        %v3443 = vrsqrt.pop %v3411
        %v3444 = vrsqrt.pop %v3412
        %v3445 = vrsqrt.pop %v3413
        %v3446 = vrsqrt.pop %v3414
        %v3447 = vrsqrt.pop %v3415
        %v3448 = vrsqrt.pop %v3416
        %v3449 = vrsqrt.pop %v3417
        %v3450 = vrsqrt.pop %v3418
        %v3451 = vrsqrt.pop %v3419
        %v3452 = vrsqrt.pop %v3420
        %v3453 = vrsqrt.pop %v3421
        %v3454 = vrsqrt.pop %v3422
        %v3455 = vrsqrt.pop %v3423
        %v3456 = vrsqrt.pop %v3424
        %v3457 = vrsqrt.pop %v3425
        %v3458 = vrsqrt.pop %v3426
        %v3459 = vrsqrt.pop %v3427
        %v3460 = vrsqrt.pop %v3428
        %v3461 = vrsqrt.pop %v3429
        %v3462 = vrsqrt.pop %v3430
        %v3463 = vrsqrt.pop %v3431
        %v3464 = vrsqrt.pop %v3432
        %v3465 = vrsqrt.pop %v3433
        %v3466 = vmul.f32 %v3210, %v3434
        %v3467 = vmul.f32 %v3211, %v3435
        %v3468 = vmul.f32 %v3212, %v3436
        %v3469 = vmul.f32 %v3213, %v3437
        %v3470 = vmul.f32 %v3214, %v3438
        %v3471 = vmul.f32 %v3215, %v3439
        %v3472 = vmul.f32 %v3216, %v3440
        %v3473 = vmul.f32 %v3217, %v3441
        %v3474 = vmul.f32 %v3218, %v3442
        %v3475 = vmul.f32 %v3219, %v3443
        %v3476 = vmul.f32 %v3220, %v3444
        %v3477 = vmul.f32 %v3221, %v3445
        %v3478 = vmul.f32 %v3222, %v3446
        %v3479 = vmul.f32 %v3223, %v3447
        %v3480 = vmul.f32 %v3224, %v3448
        %v3481 = vmul.f32 %v3225, %v3449
        %v3482 = vmul.f32 %v3226, %v3450
        %v3483 = vmul.f32 %v3227, %v3451
        %v3484 = vmul.f32 %v3228, %v3452
        %v3485 = vmul.f32 %v3229, %v3453
        %v3486 = vmul.f32 %v3230, %v3454
        %v3487 = vmul.f32 %v3231, %v3455
        %v3488 = vmul.f32 %v3232, %v3456
        %v3489 = vmul.f32 %v3233, %v3457
        %v3490 = vmul.f32 %v3234, %v3458
        %v3491 = vmul.f32 %v3235, %v3459
        %v3492 = vmul.f32 %v3236, %v3460
        %v3493 = vmul.f32 %v3237, %v3461
        %v3494 = vmul.f32 %v3238, %v3462
        %v3495 = vmul.f32 %v3239, %v3463
        %v3496 = vmul.f32 %v3240, %v3464
        %v3497 = vmul.f32 %v3241, %v3465
        %v3499 = vlaneseq
        %v3500 = vshrl.u32 %v3499, 7
        %v3501 = vsub.s32 0, %v3500
        %v3502 = vrot.slane %v2170, %v3501
        %v3504 = vmul.f32 %v3466, %v3502
        %v3505 = vmul.f32 %v3467, %v3502
        %v3506 = vmul.f32 %v3468, %v3502
        %v3507 = vmul.f32 %v3469, %v3502
        %v3508 = vmul.f32 %v3470, %v3502
        %v3509 = vmul.f32 %v3471, %v3502
        %v3510 = vmul.f32 %v3472, %v3502
        %v3511 = vmul.f32 %v3473, %v3502
        %v3512 = vmul.f32 %v3474, %v3502
        %v3513 = vmul.f32 %v3475, %v3502
        %v3514 = vmul.f32 %v3476, %v3502
        %v3515 = vmul.f32 %v3477, %v3502
        %v3516 = vmul.f32 %v3478, %v3502
        %v3517 = vmul.f32 %v3479, %v3502
        %v3518 = vmul.f32 %v3480, %v3502
        %v3519 = vmul.f32 %v3481, %v3502
        %v3520 = vmul.f32 %v3482, %v3502
        %v3521 = vmul.f32 %v3483, %v3502
        %v3522 = vmul.f32 %v3484, %v3502
        %v3523 = vmul.f32 %v3485, %v3502
        %v3524 = vmul.f32 %v3486, %v3502
        %v3525 = vmul.f32 %v3487, %v3502
        %v3526 = vmul.f32 %v3488, %v3502
        %v3527 = vmul.f32 %v3489, %v3502
        %v3528 = vmul.f32 %v3490, %v3502
        %v3529 = vmul.f32 %v3491, %v3502
        %v3530 = vmul.f32 %v3492, %v3502
        %v3531 = vmul.f32 %v3493, %v3502
        %v3532 = vmul.f32 %v3494, %v3502
        %v3533 = vmul.f32 %v3495, %v3502
        %v3534 = vmul.f32 %v3496, %v3502
        %v3535 = vmul.f32 %v3497, %v3502
        %v3537 = vlaneseq
        %v3538 = vshrl.u32 %v3537, 7
        %v3539 = vsub.s32 0, %v3538
        %v3540 = vrot.slane %v2171, %v3539
        %v3542 = vadd.f32 %v3504, %v3540
        %v3543 = vadd.f32 %v3505, %v3540
        %v3544 = vadd.f32 %v3506, %v3540
        %v3545 = vadd.f32 %v3507, %v3540
        %v3546 = vadd.f32 %v3508, %v3540
        %v3547 = vadd.f32 %v3509, %v3540
        %v3548 = vadd.f32 %v3510, %v3540
        %v3549 = vadd.f32 %v3511, %v3540
        %v3550 = vadd.f32 %v3512, %v3540
        %v3551 = vadd.f32 %v3513, %v3540
        %v3552 = vadd.f32 %v3514, %v3540
        %v3553 = vadd.f32 %v3515, %v3540
        %v3554 = vadd.f32 %v3516, %v3540
        %v3555 = vadd.f32 %v3517, %v3540
        %v3556 = vadd.f32 %v3518, %v3540
        %v3557 = vadd.f32 %v3519, %v3540
        %v3558 = vadd.f32 %v3520, %v3540
        %v3559 = vadd.f32 %v3521, %v3540
        %v3560 = vadd.f32 %v3522, %v3540
        %v3561 = vadd.f32 %v3523, %v3540
        %v3562 = vadd.f32 %v3524, %v3540
        %v3563 = vadd.f32 %v3525, %v3540
        %v3564 = vadd.f32 %v3526, %v3540
        %v3565 = vadd.f32 %v3527, %v3540
        %v3566 = vadd.f32 %v3528, %v3540
        %v3567 = vadd.f32 %v3529, %v3540
        %v3568 = vadd.f32 %v3530, %v3540
        %v3569 = vadd.f32 %v3531, %v3540
        %v3570 = vadd.f32 %v3532, %v3540
        %v3571 = vadd.f32 %v3533, %v3540
        %v3572 = vadd.f32 %v3534, %v3540
        %v3573 = vadd.f32 %v3535, %v3540
        %3574 = vst.msk [vmem:[%s271] sm:$0xff] %vm272, %v3542
        %3575 = vst.msk [vmem:[%s271 + $0x8] sm:$0xff] %vm272, %v3543
        %3576 = vst.msk [vmem:[%s271 + $0x10] sm:$0xff] %vm272, %v3544
        %3577 = vst.msk [vmem:[%s271 + $0x18] sm:$0xff] %vm272, %v3545
        %3578 = vst.msk [vmem:[%s271 + $0x20] sm:$0xff] %vm272, %v3546
        %3579 = vst.msk [vmem:[%s271 + $0x28] sm:$0xff] %vm272, %v3547
        %3580 = vst.msk [vmem:[%s271 + $0x30] sm:$0xff] %vm272, %v3548
        %3581 = vst.msk [vmem:[%s271 + $0x38] sm:$0xff] %vm272, %v3549
        %3582 = vst.msk [vmem:[%s271 + $0x40] sm:$0xff] %vm272, %v3550
        %3583 = vst.msk [vmem:[%s271 + $0x48] sm:$0xff] %vm272, %v3551
        %3584 = vst.msk [vmem:[%s271 + $0x50] sm:$0xff] %vm272, %v3552
        %3585 = vst.msk [vmem:[%s271 + $0x58] sm:$0xff] %vm272, %v3553
        %3586 = vst.msk [vmem:[%s271 + $0x60] sm:$0xff] %vm272, %v3554
        %3587 = vst.msk [vmem:[%s271 + $0x68] sm:$0xff] %vm272, %v3555
        %3588 = vst.msk [vmem:[%s271 + $0x70] sm:$0xff] %vm272, %v3556
        %3589 = vst.msk [vmem:[%s271 + $0x78] sm:$0xff] %vm272, %v3557
        %3590 = vst.msk [vmem:[%s271 + $0x80] sm:$0xff] %vm272, %v3558
        %3591 = vst.msk [vmem:[%s271 + $0x88] sm:$0xff] %vm272, %v3559
        %3592 = vst.msk [vmem:[%s271 + $0x90] sm:$0xff] %vm272, %v3560
        %3593 = vst.msk [vmem:[%s271 + $0x98] sm:$0xff] %vm272, %v3561
        %3594 = vst.msk [vmem:[%s271 + $0xa0] sm:$0xff] %vm272, %v3562
        %3595 = vst.msk [vmem:[%s271 + $0xa8] sm:$0xff] %vm272, %v3563
        %3596 = vst.msk [vmem:[%s271 + $0xb0] sm:$0xff] %vm272, %v3564
        %3597 = vst.msk [vmem:[%s271 + $0xb8] sm:$0xff] %vm272, %v3565
        %3598 = vst.msk [vmem:[%s271 + $0xc0] sm:$0xff] %vm272, %v3566
        %3599 = vst.msk [vmem:[%s271 + $0xc8] sm:$0xff] %vm272, %v3567
        %3600 = vst.msk [vmem:[%s271 + $0xd0] sm:$0xff] %vm272, %v3568
        %3601 = vst.msk [vmem:[%s271 + $0xd8] sm:$0xff] %vm272, %v3569
        %3602 = vst.msk [vmem:[%s271 + $0xe0] sm:$0xff] %vm272, %v3570
        %3603 = vst.msk [vmem:[%s271 + $0xe8] sm:$0xff] %vm272, %v3571
        %3604 = vst.msk [vmem:[%s271 + $0xf0] sm:$0xff] %vm272, %v3572
        %3605 = vst.msk [vmem:[%s271 + $0xf8] sm:$0xff] %vm272, %v3573
        %v3606 = vld [vmem:[%s3] sm:$0x1]
        %v3607 = vld [vmem:[#allocation4 + $0x1] sm:$0xff]
        %v3608 = vld [vmem:[#allocation4 + $0x9] sm:$0xff]
        %v3609 = vld [vmem:[#allocation4 + $0x19] sm:$0xff]
        %v3610 = vld [vmem:[#allocation4 + $0x21] sm:$0xff]
        %v3611 = vld [vmem:[#allocation4 + $0x31] sm:$0xff]
        %v3612 = vld [vmem:[#allocation4 + $0x39] sm:$0xff]
        %v3613 = vld [vmem:[#allocation4 + $0x49] sm:$0xff]
        %v3614 = vld [vmem:[#allocation4 + $0x51] sm:$0xff]
        %v3615 = vld [vmem:[#allocation4 + $0x61] sm:$0xff]
        %v3616 = vld [vmem:[#allocation4 + $0x69] sm:$0xff]
        %v3617 = vld [vmem:[#allocation4 + $0x79] sm:$0xff]
        %v3618 = vld [vmem:[#allocation4 + $0x81] sm:$0xff]
        %v3619 = vld [vmem:[#allocation4 + $0x91] sm:$0xff]
        %v3620 = vld [vmem:[#allocation4 + $0x99] sm:$0xff]
        %v3621 = vld [vmem:[#allocation4 + $0xa9] sm:$0xff]
        %v3622 = vld [vmem:[#allocation4 + $0xb1] sm:$0xff]
        %v3623 = vld [vmem:[#allocation4 + $0xc1] sm:$0xff]
        %v3624 = vld [vmem:[#allocation4 + $0xc9] sm:$0xff]
        %v3625 = vld [vmem:[#allocation4 + $0xd9] sm:$0xff]
        %v3626 = vld [vmem:[#allocation4 + $0xe1] sm:$0xff]
        %v3627 = vld [vmem:[#allocation4 + $0xf1] sm:$0xff]
        %v3628 = vld [vmem:[#allocation4 + $0xf9] sm:$0xff]
        %v3629 = vld [vmem:[#allocation4 + $0x109] sm:$0xff]
        %v3630 = vld [vmem:[#allocation4 + $0x111] sm:$0xff]
        %v3631 = vld [vmem:[#allocation4 + $0x121] sm:$0xff]
        %v3632 = vld [vmem:[#allocation4 + $0x129] sm:$0xff]
        %v3633 = vld [vmem:[#allocation4 + $0x139] sm:$0xff]
        %v3634 = vld [vmem:[#allocation4 + $0x141] sm:$0xff]
        %v3635 = vld [vmem:[#allocation4 + $0x151] sm:$0xff]
        %v3636 = vld [vmem:[#allocation4 + $0x159] sm:$0xff]
        %v3637 = vld [vmem:[#allocation4 + $0x169] sm:$0xff]
        %v3638 = vld [vmem:[#allocation4 + $0x171] sm:$0xff]
        %v3639 = vlaneseq
        %v3640 = vshrl.u32 %v3639, 7
        %v3641 = vsub.s32 0, %v3640
        %v3642 = vrot.slane %v3606, %v3641
        %v3643 = vmul.f32 %v3607, %v3642
        %v3644 = vmul.f32 %v3608, %v3642
        %v3645 = vmul.f32 %v3609, %v3642
        %v3646 = vmul.f32 %v3610, %v3642
        %v3647 = vmul.f32 %v3611, %v3642
        %v3648 = vmul.f32 %v3612, %v3642
        %v3649 = vmul.f32 %v3613, %v3642
        %v3650 = vmul.f32 %v3614, %v3642
        %v3651 = vmul.f32 %v3615, %v3642
        %v3652 = vmul.f32 %v3616, %v3642
        %v3653 = vmul.f32 %v3617, %v3642
        %v3654 = vmul.f32 %v3618, %v3642
        %v3655 = vmul.f32 %v3619, %v3642
        %v3656 = vmul.f32 %v3620, %v3642
        %v3657 = vmul.f32 %v3621, %v3642
        %v3658 = vmul.f32 %v3622, %v3642
        %v3659 = vmul.f32 %v3623, %v3642
        %v3660 = vmul.f32 %v3624, %v3642
        %v3661 = vmul.f32 %v3625, %v3642
        %v3662 = vmul.f32 %v3626, %v3642
        %v3663 = vmul.f32 %v3627, %v3642
        %v3664 = vmul.f32 %v3628, %v3642
        %v3665 = vmul.f32 %v3629, %v3642
        %v3666 = vmul.f32 %v3630, %v3642
        %v3667 = vmul.f32 %v3631, %v3642
        %v3668 = vmul.f32 %v3632, %v3642
        %v3669 = vmul.f32 %v3633, %v3642
        %v3670 = vmul.f32 %v3634, %v3642
        %v3671 = vmul.f32 %v3635, %v3642
        %v3672 = vmul.f32 %v3636, %v3642
        %v3673 = vmul.f32 %v3637, %v3642
        %v3674 = vmul.f32 %v3638, %v3642
        %v3675 = vadd.f32 %v3643, 0.0
        %v3676 = vadd.f32 %v3644, 0.0
        %v3677 = vadd.f32 %v3645, 0.0
        %v3678 = vadd.f32 %v3646, 0.0
        %v3679 = vadd.f32 %v3647, 0.0
        %v3680 = vadd.f32 %v3648, 0.0
        %v3681 = vadd.f32 %v3649, 0.0
        %v3682 = vadd.f32 %v3650, 0.0
        %v3683 = vadd.f32 %v3651, 0.0
        %v3684 = vadd.f32 %v3652, 0.0
        %v3685 = vadd.f32 %v3653, 0.0
        %v3686 = vadd.f32 %v3654, 0.0
        %v3687 = vadd.f32 %v3655, 0.0
        %v3688 = vadd.f32 %v3656, 0.0
        %v3689 = vadd.f32 %v3657, 0.0
        %v3690 = vadd.f32 %v3658, 0.0
        %v3691 = vadd.f32 %v3659, 0.0
        %v3692 = vadd.f32 %v3660, 0.0
        %v3693 = vadd.f32 %v3661, 0.0
        %v3694 = vadd.f32 %v3662, 0.0
        %v3695 = vadd.f32 %v3663, 0.0
        %v3696 = vadd.f32 %v3664, 0.0
        %v3697 = vadd.f32 %v3665, 0.0
        %v3698 = vadd.f32 %v3666, 0.0
        %v3699 = vadd.f32 %v3667, 0.0
        %v3700 = vadd.f32 %v3668, 0.0
        %v3701 = vadd.f32 %v3669, 0.0
        %v3702 = vadd.f32 %v3670, 0.0
        %v3703 = vadd.f32 %v3671, 0.0
        %v3704 = vadd.f32 %v3672, 0.0
        %v3705 = vadd.f32 %v3673, 0.0
        %v3706 = vadd.f32 %v3674, 0.0
        %v3707 = vld [vmem:[%s3 + $0x1] sm:$0x1]
        %v3708 = vld [vmem:[#allocation5 + $0x1] sm:$0xff]
        %v3709 = vld [vmem:[#allocation5 + $0x9] sm:$0xff]
        %v3710 = vld [vmem:[#allocation5 + $0x19] sm:$0xff]
        %v3711 = vld [vmem:[#allocation5 + $0x21] sm:$0xff]
        %v3712 = vld [vmem:[#allocation5 + $0x31] sm:$0xff]
        %v3713 = vld [vmem:[#allocation5 + $0x39] sm:$0xff]
        %v3714 = vld [vmem:[#allocation5 + $0x49] sm:$0xff]
        %v3715 = vld [vmem:[#allocation5 + $0x51] sm:$0xff]
        %v3716 = vld [vmem:[#allocation5 + $0x61] sm:$0xff]
        %v3717 = vld [vmem:[#allocation5 + $0x69] sm:$0xff]
        %v3718 = vld [vmem:[#allocation5 + $0x79] sm:$0xff]
        %v3719 = vld [vmem:[#allocation5 + $0x81] sm:$0xff]
        %v3720 = vld [vmem:[#allocation5 + $0x91] sm:$0xff]
        %v3721 = vld [vmem:[#allocation5 + $0x99] sm:$0xff]
        %v3722 = vld [vmem:[#allocation5 + $0xa9] sm:$0xff]
        %v3723 = vld [vmem:[#allocation5 + $0xb1] sm:$0xff]
        %v3724 = vld [vmem:[#allocation5 + $0xc1] sm:$0xff]
        %v3725 = vld [vmem:[#allocation5 + $0xc9] sm:$0xff]
        %v3726 = vld [vmem:[#allocation5 + $0xd9] sm:$0xff]
        %v3727 = vld [vmem:[#allocation5 + $0xe1] sm:$0xff]
        %v3728 = vld [vmem:[#allocation5 + $0xf1] sm:$0xff]
        %v3729 = vld [vmem:[#allocation5 + $0xf9] sm:$0xff]
        %v3730 = vld [vmem:[#allocation5 + $0x109] sm:$0xff]
        %v3731 = vld [vmem:[#allocation5 + $0x111] sm:$0xff]
        %v3732 = vld [vmem:[#allocation5 + $0x121] sm:$0xff]
        %v3733 = vld [vmem:[#allocation5 + $0x129] sm:$0xff]
        %v3734 = vld [vmem:[#allocation5 + $0x139] sm:$0xff]
        %v3735 = vld [vmem:[#allocation5 + $0x141] sm:$0xff]
        %v3736 = vld [vmem:[#allocation5 + $0x151] sm:$0xff]
        %v3737 = vld [vmem:[#allocation5 + $0x159] sm:$0xff]
        %v3738 = vld [vmem:[#allocation5 + $0x169] sm:$0xff]
        %v3739 = vld [vmem:[#allocation5 + $0x171] sm:$0xff]
        %v3740 = vlaneseq
        %v3741 = vshrl.u32 %v3740, 7
        %v3742 = vsub.s32 0, %v3741
        %v3743 = vrot.slane %v3707, %v3742
        %v3744 = vmul.f32 %v3708, %v3743
        %v3745 = vmul.f32 %v3709, %v3743
        %v3746 = vmul.f32 %v3710, %v3743
        %v3747 = vmul.f32 %v3711, %v3743
        %v3748 = vmul.f32 %v3712, %v3743
        %v3749 = vmul.f32 %v3713, %v3743
        %v3750 = vmul.f32 %v3714, %v3743
        %v3751 = vmul.f32 %v3715, %v3743
        %v3752 = vmul.f32 %v3716, %v3743
        %v3753 = vmul.f32 %v3717, %v3743
        %v3754 = vmul.f32 %v3718, %v3743
        %v3755 = vmul.f32 %v3719, %v3743
        %v3756 = vmul.f32 %v3720, %v3743
        %v3757 = vmul.f32 %v3721, %v3743
        %v3758 = vmul.f32 %v3722, %v3743
        %v3759 = vmul.f32 %v3723, %v3743
        %v3760 = vmul.f32 %v3724, %v3743
        %v3761 = vmul.f32 %v3725, %v3743
        %v3762 = vmul.f32 %v3726, %v3743
        %v3763 = vmul.f32 %v3727, %v3743
        %v3764 = vmul.f32 %v3728, %v3743
        %v3765 = vmul.f32 %v3729, %v3743
        %v3766 = vmul.f32 %v3730, %v3743
        %v3767 = vmul.f32 %v3731, %v3743
        %v3768 = vmul.f32 %v3732, %v3743
        %v3769 = vmul.f32 %v3733, %v3743
        %v3770 = vmul.f32 %v3734, %v3743
        %v3771 = vmul.f32 %v3735, %v3743
        %v3772 = vmul.f32 %v3736, %v3743
        %v3773 = vmul.f32 %v3737, %v3743
        %v3774 = vmul.f32 %v3738, %v3743
        %v3775 = vmul.f32 %v3739, %v3743
        %v3776 = vadd.f32 %v3675, %v3744
        %v3777 = vadd.f32 %v3676, %v3745
        %v3778 = vadd.f32 %v3677, %v3746
        %v3779 = vadd.f32 %v3678, %v3747
        %v3780 = vadd.f32 %v3679, %v3748
        %v3781 = vadd.f32 %v3680, %v3749
        %v3782 = vadd.f32 %v3681, %v3750
        %v3783 = vadd.f32 %v3682, %v3751
        %v3784 = vadd.f32 %v3683, %v3752
        %v3785 = vadd.f32 %v3684, %v3753
        %v3786 = vadd.f32 %v3685, %v3754
        %v3787 = vadd.f32 %v3686, %v3755
        %v3788 = vadd.f32 %v3687, %v3756
        %v3789 = vadd.f32 %v3688, %v3757
        %v3790 = vadd.f32 %v3689, %v3758
        %v3791 = vadd.f32 %v3690, %v3759
        %v3792 = vadd.f32 %v3691, %v3760
        %v3793 = vadd.f32 %v3692, %v3761
        %v3794 = vadd.f32 %v3693, %v3762
        %v3795 = vadd.f32 %v3694, %v3763
        %v3796 = vadd.f32 %v3695, %v3764
        %v3797 = vadd.f32 %v3696, %v3765
        %v3798 = vadd.f32 %v3697, %v3766
        %v3799 = vadd.f32 %v3698, %v3767
        %v3800 = vadd.f32 %v3699, %v3768
        %v3801 = vadd.f32 %v3700, %v3769
        %v3802 = vadd.f32 %v3701, %v3770
        %v3803 = vadd.f32 %v3702, %v3771
        %v3804 = vadd.f32 %v3703, %v3772
        %v3805 = vadd.f32 %v3704, %v3773
        %v3806 = vadd.f32 %v3705, %v3774
        %v3807 = vadd.f32 %v3706, %v3775
        %v3808 = vld [vmem:[%s3 + $0x2] sm:$0x1]
        %v3809 = vld [vmem:[#allocation4 + $0x2] sm:$0xff]
        %v3810 = vld [vmem:[#allocation4 + $0xa] sm:$0xff]
        %v3811 = vld [vmem:[#allocation4 + $0x1a] sm:$0xff]
        %v3812 = vld [vmem:[#allocation4 + $0x22] sm:$0xff]
        %v3813 = vld [vmem:[#allocation4 + $0x32] sm:$0xff]
        %v3814 = vld [vmem:[#allocation4 + $0x3a] sm:$0xff]
        %v3815 = vld [vmem:[#allocation4 + $0x4a] sm:$0xff]
        %v3816 = vld [vmem:[#allocation4 + $0x52] sm:$0xff]
        %v3817 = vld [vmem:[#allocation4 + $0x62] sm:$0xff]
        %v3818 = vld [vmem:[#allocation4 + $0x6a] sm:$0xff]
        %v3819 = vld [vmem:[#allocation4 + $0x7a] sm:$0xff]
        %v3820 = vld [vmem:[#allocation4 + $0x82] sm:$0xff]
        %v3821 = vld [vmem:[#allocation4 + $0x92] sm:$0xff]
        %v3822 = vld [vmem:[#allocation4 + $0x9a] sm:$0xff]
        %v3823 = vld [vmem:[#allocation4 + $0xaa] sm:$0xff]
        %v3824 = vld [vmem:[#allocation4 + $0xb2] sm:$0xff]
        %v3825 = vld [vmem:[#allocation4 + $0xc2] sm:$0xff]
        %v3826 = vld [vmem:[#allocation4 + $0xca] sm:$0xff]
        %v3827 = vld [vmem:[#allocation4 + $0xda] sm:$0xff]
        %v3828 = vld [vmem:[#allocation4 + $0xe2] sm:$0xff]
        %v3829 = vld [vmem:[#allocation4 + $0xf2] sm:$0xff]
        %v3830 = vld [vmem:[#allocation4 + $0xfa] sm:$0xff]
        %v3831 = vld [vmem:[#allocation4 + $0x10a] sm:$0xff]
        %v3832 = vld [vmem:[#allocation4 + $0x112] sm:$0xff]
        %v3833 = vld [vmem:[#allocation4 + $0x122] sm:$0xff]
        %v3834 = vld [vmem:[#allocation4 + $0x12a] sm:$0xff]
        %v3835 = vld [vmem:[#allocation4 + $0x13a] sm:$0xff]
        %v3836 = vld [vmem:[#allocation4 + $0x142] sm:$0xff]
        %v3837 = vld [vmem:[#allocation4 + $0x152] sm:$0xff]
        %v3838 = vld [vmem:[#allocation4 + $0x15a] sm:$0xff]
        %v3839 = vld [vmem:[#allocation4 + $0x16a] sm:$0xff]
        %v3840 = vld [vmem:[#allocation4 + $0x172] sm:$0xff]
        %v3841 = vlaneseq
        %v3842 = vshrl.u32 %v3841, 7
        %v3843 = vsub.s32 0, %v3842
        %v3844 = vrot.slane %v3808, %v3843
        %v3845 = vmul.f32 %v3809, %v3844
        %v3846 = vmul.f32 %v3810, %v3844
        %v3847 = vmul.f32 %v3811, %v3844
        %v3848 = vmul.f32 %v3812, %v3844
        %v3849 = vmul.f32 %v3813, %v3844
        %v3850 = vmul.f32 %v3814, %v3844
        %v3851 = vmul.f32 %v3815, %v3844
        %v3852 = vmul.f32 %v3816, %v3844
        %v3853 = vmul.f32 %v3817, %v3844
        %v3854 = vmul.f32 %v3818, %v3844
        %v3855 = vmul.f32 %v3819, %v3844
        %v3856 = vmul.f32 %v3820, %v3844
        %v3857 = vmul.f32 %v3821, %v3844
        %v3858 = vmul.f32 %v3822, %v3844
        %v3859 = vmul.f32 %v3823, %v3844
        %v3860 = vmul.f32 %v3824, %v3844
        %v3861 = vmul.f32 %v3825, %v3844
        %v3862 = vmul.f32 %v3826, %v3844
        %v3863 = vmul.f32 %v3827, %v3844
        %v3864 = vmul.f32 %v3828, %v3844
        %v3865 = vmul.f32 %v3829, %v3844
        %v3866 = vmul.f32 %v3830, %v3844
        %v3867 = vmul.f32 %v3831, %v3844
        %v3868 = vmul.f32 %v3832, %v3844
        %v3869 = vmul.f32 %v3833, %v3844
        %v3870 = vmul.f32 %v3834, %v3844
        %v3871 = vmul.f32 %v3835, %v3844
        %v3872 = vmul.f32 %v3836, %v3844
        %v3873 = vmul.f32 %v3837, %v3844
        %v3874 = vmul.f32 %v3838, %v3844
        %v3875 = vmul.f32 %v3839, %v3844
        %v3876 = vmul.f32 %v3840, %v3844
        %v3877 = vadd.f32 %v3776, %v3845
        %v3878 = vadd.f32 %v3777, %v3846
        %v3879 = vadd.f32 %v3778, %v3847
        %v3880 = vadd.f32 %v3779, %v3848
        %v3881 = vadd.f32 %v3780, %v3849
        %v3882 = vadd.f32 %v3781, %v3850
        %v3883 = vadd.f32 %v3782, %v3851
        %v3884 = vadd.f32 %v3783, %v3852
        %v3885 = vadd.f32 %v3784, %v3853
        %v3886 = vadd.f32 %v3785, %v3854
        %v3887 = vadd.f32 %v3786, %v3855
        %v3888 = vadd.f32 %v3787, %v3856
        %v3889 = vadd.f32 %v3788, %v3857
        %v3890 = vadd.f32 %v3789, %v3858
        %v3891 = vadd.f32 %v3790, %v3859
        %v3892 = vadd.f32 %v3791, %v3860
        %v3893 = vadd.f32 %v3792, %v3861
        %v3894 = vadd.f32 %v3793, %v3862
        %v3895 = vadd.f32 %v3794, %v3863
        %v3896 = vadd.f32 %v3795, %v3864
        %v3897 = vadd.f32 %v3796, %v3865
        %v3898 = vadd.f32 %v3797, %v3866
        %v3899 = vadd.f32 %v3798, %v3867
        %v3900 = vadd.f32 %v3799, %v3868
        %v3901 = vadd.f32 %v3800, %v3869
        %v3902 = vadd.f32 %v3801, %v3870
        %v3903 = vadd.f32 %v3802, %v3871
        %v3904 = vadd.f32 %v3803, %v3872
        %v3905 = vadd.f32 %v3804, %v3873
        %v3906 = vadd.f32 %v3805, %v3874
        %v3907 = vadd.f32 %v3806, %v3875
        %v3908 = vadd.f32 %v3807, %v3876
        %v3909 = vld [vmem:[%s3 + $0x3] sm:$0x1]
        %v3910 = vld [vmem:[%s1718 + $0x1] sm:$0xff]
        %v3911 = vld [vmem:[%s1718 + $0x9] sm:$0xff]
        %v3912 = vld [vmem:[%s1718 + $0x19] sm:$0xff]
        %v3913 = vld [vmem:[%s1718 + $0x21] sm:$0xff]
        %v3914 = vld [vmem:[%s1718 + $0x31] sm:$0xff]
        %v3915 = vld [vmem:[%s1718 + $0x39] sm:$0xff]
        %v3916 = vld [vmem:[%s1718 + $0x49] sm:$0xff]
        %v3917 = vld [vmem:[%s1718 + $0x51] sm:$0xff]
        %v3918 = vld [vmem:[%s1718 + $0x61] sm:$0xff]
        %v3919 = vld [vmem:[%s1718 + $0x69] sm:$0xff]
        %v3920 = vld [vmem:[%s1718 + $0x79] sm:$0xff]
        %v3921 = vld [vmem:[%s1718 + $0x81] sm:$0xff]
        %v3922 = vld [vmem:[%s1718 + $0x91] sm:$0xff]
        %v3923 = vld [vmem:[%s1718 + $0x99] sm:$0xff]
        %v3924 = vld [vmem:[%s1718 + $0xa9] sm:$0xff]
        %v3925 = vld [vmem:[%s1718 + $0xb1] sm:$0xff]
        %v3926 = vld [vmem:[%s1718 + $0xc1] sm:$0xff]
        %v3927 = vld [vmem:[%s1718 + $0xc9] sm:$0xff]
        %v3928 = vld [vmem:[%s1718 + $0xd9] sm:$0xff]
        %v3929 = vld [vmem:[%s1718 + $0xe1] sm:$0xff]
        %v3930 = vld [vmem:[%s1718 + $0xf1] sm:$0xff]
        %v3931 = vld [vmem:[%s1718 + $0xf9] sm:$0xff]
        %v3932 = vld [vmem:[%s1718 + $0x109] sm:$0xff]
        %v3933 = vld [vmem:[%s1718 + $0x111] sm:$0xff]
        %v3934 = vld [vmem:[%s1718 + $0x121] sm:$0xff]
        %v3935 = vld [vmem:[%s1718 + $0x129] sm:$0xff]
        %v3936 = vld [vmem:[%s1718 + $0x139] sm:$0xff]
        %v3937 = vld [vmem:[%s1718 + $0x141] sm:$0xff]
        %v3938 = vld [vmem:[%s1718 + $0x151] sm:$0xff]
        %v3939 = vld [vmem:[%s1718 + $0x159] sm:$0xff]
        %v3940 = vld [vmem:[%s1718 + $0x169] sm:$0xff]
        %v3941 = vld [vmem:[%s1718 + $0x171] sm:$0xff]
        %v3942 = vlaneseq
        %v3943 = vshrl.u32 %v3942, 7
        %v3944 = vsub.s32 0, %v3943
        %v3945 = vrot.slane %v3909, %v3944
        %v3946 = vmul.f32 %v3910, %v3945
        %v3947 = vmul.f32 %v3911, %v3945
        %v3948 = vmul.f32 %v3912, %v3945
        %v3949 = vmul.f32 %v3913, %v3945
        %v3950 = vmul.f32 %v3914, %v3945
        %v3951 = vmul.f32 %v3915, %v3945
        %v3952 = vmul.f32 %v3916, %v3945
        %v3953 = vmul.f32 %v3917, %v3945
        %v3954 = vmul.f32 %v3918, %v3945
        %v3955 = vmul.f32 %v3919, %v3945
        %v3956 = vmul.f32 %v3920, %v3945
        %v3957 = vmul.f32 %v3921, %v3945
        %v3958 = vmul.f32 %v3922, %v3945
        %v3959 = vmul.f32 %v3923, %v3945
        %v3960 = vmul.f32 %v3924, %v3945
        %v3961 = vmul.f32 %v3925, %v3945
        %v3962 = vmul.f32 %v3926, %v3945
        %v3963 = vmul.f32 %v3927, %v3945
        %v3964 = vmul.f32 %v3928, %v3945
        %v3965 = vmul.f32 %v3929, %v3945
        %v3966 = vmul.f32 %v3930, %v3945
        %v3967 = vmul.f32 %v3931, %v3945
        %v3968 = vmul.f32 %v3932, %v3945
        %v3969 = vmul.f32 %v3933, %v3945
        %v3970 = vmul.f32 %v3934, %v3945
        %v3971 = vmul.f32 %v3935, %v3945
        %v3972 = vmul.f32 %v3936, %v3945
        %v3973 = vmul.f32 %v3937, %v3945
        %v3974 = vmul.f32 %v3938, %v3945
        %v3975 = vmul.f32 %v3939, %v3945
        %v3976 = vmul.f32 %v3940, %v3945
        %v3977 = vmul.f32 %v3941, %v3945
        %v3978 = vadd.f32 %v3877, %v3946
        %v3979 = vadd.f32 %v3878, %v3947
        %v3980 = vadd.f32 %v3879, %v3948
        %v3981 = vadd.f32 %v3880, %v3949
        %v3982 = vadd.f32 %v3881, %v3950
        %v3983 = vadd.f32 %v3882, %v3951
        %v3984 = vadd.f32 %v3883, %v3952
        %v3985 = vadd.f32 %v3884, %v3953
        %v3986 = vadd.f32 %v3885, %v3954
        %v3987 = vadd.f32 %v3886, %v3955
        %v3988 = vadd.f32 %v3887, %v3956
        %v3989 = vadd.f32 %v3888, %v3957
        %v3990 = vadd.f32 %v3889, %v3958
        %v3991 = vadd.f32 %v3890, %v3959
        %v3992 = vadd.f32 %v3891, %v3960
        %v3993 = vadd.f32 %v3892, %v3961
        %v3994 = vadd.f32 %v3893, %v3962
        %v3995 = vadd.f32 %v3894, %v3963
        %v3996 = vadd.f32 %v3895, %v3964
        %v3997 = vadd.f32 %v3896, %v3965
        %v3998 = vadd.f32 %v3897, %v3966
        %v3999 = vadd.f32 %v3898, %v3967
        %v4000 = vadd.f32 %v3899, %v3968
        %v4001 = vadd.f32 %v3900, %v3969
        %v4002 = vadd.f32 %v3901, %v3970
        %v4003 = vadd.f32 %v3902, %v3971
        %v4004 = vadd.f32 %v3903, %v3972
        %v4005 = vadd.f32 %v3904, %v3973
        %v4006 = vadd.f32 %v3905, %v3974
        %v4007 = vadd.f32 %v3906, %v3975
        %v4008 = vadd.f32 %v3907, %v3976
        %v4009 = vadd.f32 %v3908, %v3977
        %v4010 = vld [vmem:[%s3 + $0x4] sm:$0x1]
        %v4011 = vld [vmem:[%s1879 + $0x1] sm:$0xff]
        %v4012 = vld [vmem:[%s1879 + $0x9] sm:$0xff]
        %v4013 = vld [vmem:[%s1879 + $0x19] sm:$0xff]
        %v4014 = vld [vmem:[%s1879 + $0x21] sm:$0xff]
        %v4015 = vld [vmem:[%s1879 + $0x31] sm:$0xff]
        %v4016 = vld [vmem:[%s1879 + $0x39] sm:$0xff]
        %v4017 = vld [vmem:[%s1879 + $0x49] sm:$0xff]
        %v4018 = vld [vmem:[%s1879 + $0x51] sm:$0xff]
        %v4019 = vld [vmem:[%s1879 + $0x61] sm:$0xff]
        %v4020 = vld [vmem:[%s1879 + $0x69] sm:$0xff]
        %v4021 = vld [vmem:[%s1879 + $0x79] sm:$0xff]
        %v4022 = vld [vmem:[%s1879 + $0x81] sm:$0xff]
        %v4023 = vld [vmem:[%s1879 + $0x91] sm:$0xff]
        %v4024 = vld [vmem:[%s1879 + $0x99] sm:$0xff]
        %v4025 = vld [vmem:[%s1879 + $0xa9] sm:$0xff]
        %v4026 = vld [vmem:[%s1879 + $0xb1] sm:$0xff]
        %v4027 = vld [vmem:[%s1879 + $0xc1] sm:$0xff]
        %v4028 = vld [vmem:[%s1879 + $0xc9] sm:$0xff]
        %v4029 = vld [vmem:[%s1879 + $0xd9] sm:$0xff]
        %v4030 = vld [vmem:[%s1879 + $0xe1] sm:$0xff]
        %v4031 = vld [vmem:[%s1879 + $0xf1] sm:$0xff]
        %v4032 = vld [vmem:[%s1879 + $0xf9] sm:$0xff]
        %v4033 = vld [vmem:[%s1879 + $0x109] sm:$0xff]
        %v4034 = vld [vmem:[%s1879 + $0x111] sm:$0xff]
        %v4035 = vld [vmem:[%s1879 + $0x121] sm:$0xff]
        %v4036 = vld [vmem:[%s1879 + $0x129] sm:$0xff]
        %v4037 = vld [vmem:[%s1879 + $0x139] sm:$0xff]
        %v4038 = vld [vmem:[%s1879 + $0x141] sm:$0xff]
        %v4039 = vld [vmem:[%s1879 + $0x151] sm:$0xff]
        %v4040 = vld [vmem:[%s1879 + $0x159] sm:$0xff]
        %v4041 = vld [vmem:[%s1879 + $0x169] sm:$0xff]
        %v4042 = vld [vmem:[%s1879 + $0x171] sm:$0xff]
        %v4043 = vlaneseq
        %v4044 = vshrl.u32 %v4043, 7
        %v4045 = vsub.s32 0, %v4044
        %v4046 = vrot.slane %v4010, %v4045
        %v4047 = vmul.f32 %v4011, %v4046
        %v4048 = vmul.f32 %v4012, %v4046
        %v4049 = vmul.f32 %v4013, %v4046
        %v4050 = vmul.f32 %v4014, %v4046
        %v4051 = vmul.f32 %v4015, %v4046
        %v4052 = vmul.f32 %v4016, %v4046
        %v4053 = vmul.f32 %v4017, %v4046
        %v4054 = vmul.f32 %v4018, %v4046
        %v4055 = vmul.f32 %v4019, %v4046
        %v4056 = vmul.f32 %v4020, %v4046
        %v4057 = vmul.f32 %v4021, %v4046
        %v4058 = vmul.f32 %v4022, %v4046
        %v4059 = vmul.f32 %v4023, %v4046
        %v4060 = vmul.f32 %v4024, %v4046
        %v4061 = vmul.f32 %v4025, %v4046
        %v4062 = vmul.f32 %v4026, %v4046
        %v4063 = vmul.f32 %v4027, %v4046
        %v4064 = vmul.f32 %v4028, %v4046
        %v4065 = vmul.f32 %v4029, %v4046
        %v4066 = vmul.f32 %v4030, %v4046
        %v4067 = vmul.f32 %v4031, %v4046
        %v4068 = vmul.f32 %v4032, %v4046
        %v4069 = vmul.f32 %v4033, %v4046
        %v4070 = vmul.f32 %v4034, %v4046
        %v4071 = vmul.f32 %v4035, %v4046
        %v4072 = vmul.f32 %v4036, %v4046
        %v4073 = vmul.f32 %v4037, %v4046
        %v4074 = vmul.f32 %v4038, %v4046
        %v4075 = vmul.f32 %v4039, %v4046
        %v4076 = vmul.f32 %v4040, %v4046
        %v4077 = vmul.f32 %v4041, %v4046
        %v4078 = vmul.f32 %v4042, %v4046
        %v4079 = vadd.f32 %v3978, %v4047
        %v4080 = vadd.f32 %v3979, %v4048
        %v4081 = vadd.f32 %v3980, %v4049
        %v4082 = vadd.f32 %v3981, %v4050
        %v4083 = vadd.f32 %v3982, %v4051
        %v4084 = vadd.f32 %v3983, %v4052
        %v4085 = vadd.f32 %v3984, %v4053
        %v4086 = vadd.f32 %v3985, %v4054
        %v4087 = vadd.f32 %v3986, %v4055
        %v4088 = vadd.f32 %v3987, %v4056
        %v4089 = vadd.f32 %v3988, %v4057
        %v4090 = vadd.f32 %v3989, %v4058
        %v4091 = vadd.f32 %v3990, %v4059
        %v4092 = vadd.f32 %v3991, %v4060
        %v4093 = vadd.f32 %v3992, %v4061
        %v4094 = vadd.f32 %v3993, %v4062
        %v4095 = vadd.f32 %v3994, %v4063
        %v4096 = vadd.f32 %v3995, %v4064
        %v4097 = vadd.f32 %v3996, %v4065
        %v4098 = vadd.f32 %v3997, %v4066
        %v4099 = vadd.f32 %v3998, %v4067
        %v4100 = vadd.f32 %v3999, %v4068
        %v4101 = vadd.f32 %v4000, %v4069
        %v4102 = vadd.f32 %v4001, %v4070
        %v4103 = vadd.f32 %v4002, %v4071
        %v4104 = vadd.f32 %v4003, %v4072
        %v4105 = vadd.f32 %v4004, %v4073
        %v4106 = vadd.f32 %v4005, %v4074
        %v4107 = vadd.f32 %v4006, %v4075
        %v4108 = vadd.f32 %v4007, %v4076
        %v4109 = vadd.f32 %v4008, %v4077
        %v4110 = vadd.f32 %v4009, %v4078
        %v4111 = vld [vmem:[%s3 + $0x5] sm:$0x1]
        %v4112 = vld [vmem:[%s1718 + $0x2] sm:$0xff]
        %v4113 = vld [vmem:[%s1718 + $0xa] sm:$0xff]
        %v4114 = vld [vmem:[%s1718 + $0x1a] sm:$0xff]
        %v4115 = vld [vmem:[%s1718 + $0x22] sm:$0xff]
        %v4116 = vld [vmem:[%s1718 + $0x32] sm:$0xff]
        %v4117 = vld [vmem:[%s1718 + $0x3a] sm:$0xff]
        %v4118 = vld [vmem:[%s1718 + $0x4a] sm:$0xff]
        %v4119 = vld [vmem:[%s1718 + $0x52] sm:$0xff]
        %v4120 = vld [vmem:[%s1718 + $0x62] sm:$0xff]
        %v4121 = vld [vmem:[%s1718 + $0x6a] sm:$0xff]
        %v4122 = vld [vmem:[%s1718 + $0x7a] sm:$0xff]
        %v4123 = vld [vmem:[%s1718 + $0x82] sm:$0xff]
        %v4124 = vld [vmem:[%s1718 + $0x92] sm:$0xff]
        %v4125 = vld [vmem:[%s1718 + $0x9a] sm:$0xff]
        %v4126 = vld [vmem:[%s1718 + $0xaa] sm:$0xff]
        %v4127 = vld [vmem:[%s1718 + $0xb2] sm:$0xff]
        %v4128 = vld [vmem:[%s1718 + $0xc2] sm:$0xff]
        %v4129 = vld [vmem:[%s1718 + $0xca] sm:$0xff]
        %v4130 = vld [vmem:[%s1718 + $0xda] sm:$0xff]
        %v4131 = vld [vmem:[%s1718 + $0xe2] sm:$0xff]
        %v4132 = vld [vmem:[%s1718 + $0xf2] sm:$0xff]
        %v4133 = vld [vmem:[%s1718 + $0xfa] sm:$0xff]
        %v4134 = vld [vmem:[%s1718 + $0x10a] sm:$0xff]
        %v4135 = vld [vmem:[%s1718 + $0x112] sm:$0xff]
        %v4136 = vld [vmem:[%s1718 + $0x122] sm:$0xff]
        %v4137 = vld [vmem:[%s1718 + $0x12a] sm:$0xff]
        %v4138 = vld [vmem:[%s1718 + $0x13a] sm:$0xff]
        %v4139 = vld [vmem:[%s1718 + $0x142] sm:$0xff]
        %v4140 = vld [vmem:[%s1718 + $0x152] sm:$0xff]
        %v4141 = vld [vmem:[%s1718 + $0x15a] sm:$0xff]
        %v4142 = vld [vmem:[%s1718 + $0x16a] sm:$0xff]
        %v4143 = vld [vmem:[%s1718 + $0x172] sm:$0xff]
        %v4144 = vlaneseq
        %v4145 = vshrl.u32 %v4144, 7
        %v4146 = vsub.s32 0, %v4145
        %v4147 = vrot.slane %v4111, %v4146
        %v4148 = vmul.f32 %v4112, %v4147
        %v4149 = vmul.f32 %v4113, %v4147
        %v4150 = vmul.f32 %v4114, %v4147
        %v4151 = vmul.f32 %v4115, %v4147
        %v4152 = vmul.f32 %v4116, %v4147
        %v4153 = vmul.f32 %v4117, %v4147
        %v4154 = vmul.f32 %v4118, %v4147
        %v4155 = vmul.f32 %v4119, %v4147
        %v4156 = vmul.f32 %v4120, %v4147
        %v4157 = vmul.f32 %v4121, %v4147
        %v4158 = vmul.f32 %v4122, %v4147
        %v4159 = vmul.f32 %v4123, %v4147
        %v4160 = vmul.f32 %v4124, %v4147
        %v4161 = vmul.f32 %v4125, %v4147
        %v4162 = vmul.f32 %v4126, %v4147
        %v4163 = vmul.f32 %v4127, %v4147
        %v4164 = vmul.f32 %v4128, %v4147
        %v4165 = vmul.f32 %v4129, %v4147
        %v4166 = vmul.f32 %v4130, %v4147
        %v4167 = vmul.f32 %v4131, %v4147
        %v4168 = vmul.f32 %v4132, %v4147
        %v4169 = vmul.f32 %v4133, %v4147
        %v4170 = vmul.f32 %v4134, %v4147
        %v4171 = vmul.f32 %v4135, %v4147
        %v4172 = vmul.f32 %v4136, %v4147
        %v4173 = vmul.f32 %v4137, %v4147
        %v4174 = vmul.f32 %v4138, %v4147
        %v4175 = vmul.f32 %v4139, %v4147
        %v4176 = vmul.f32 %v4140, %v4147
        %v4177 = vmul.f32 %v4141, %v4147
        %v4178 = vmul.f32 %v4142, %v4147
        %v4179 = vmul.f32 %v4143, %v4147
        %v4180 = vadd.f32 %v4079, %v4148
        %v4181 = vadd.f32 %v4080, %v4149
        %v4182 = vadd.f32 %v4081, %v4150
        %v4183 = vadd.f32 %v4082, %v4151
        %v4184 = vadd.f32 %v4083, %v4152
        %v4185 = vadd.f32 %v4084, %v4153
        %v4186 = vadd.f32 %v4085, %v4154
        %v4187 = vadd.f32 %v4086, %v4155
        %v4188 = vadd.f32 %v4087, %v4156
        %v4189 = vadd.f32 %v4088, %v4157
        %v4190 = vadd.f32 %v4089, %v4158
        %v4191 = vadd.f32 %v4090, %v4159
        %v4192 = vadd.f32 %v4091, %v4160
        %v4193 = vadd.f32 %v4092, %v4161
        %v4194 = vadd.f32 %v4093, %v4162
        %v4195 = vadd.f32 %v4094, %v4163
        %v4196 = vadd.f32 %v4095, %v4164
        %v4197 = vadd.f32 %v4096, %v4165
        %v4198 = vadd.f32 %v4097, %v4166
        %v4199 = vadd.f32 %v4098, %v4167
        %v4200 = vadd.f32 %v4099, %v4168
        %v4201 = vadd.f32 %v4100, %v4169
        %v4202 = vadd.f32 %v4101, %v4170
        %v4203 = vadd.f32 %v4102, %v4171
        %v4204 = vadd.f32 %v4103, %v4172
        %v4205 = vadd.f32 %v4104, %v4173
        %v4206 = vadd.f32 %v4105, %v4174
        %v4207 = vadd.f32 %v4106, %v4175
        %v4208 = vadd.f32 %v4107, %v4176
        %v4209 = vadd.f32 %v4108, %v4177
        %v4210 = vadd.f32 %v4109, %v4178
        %v4211 = vadd.f32 %v4110, %v4179
        %v4212 = vld [vmem:[%s3 + $0x6] sm:$0x1]
        %v4213 = vld [vmem:[%s2008 + $0x1] sm:$0xff]
        %v4214 = vld [vmem:[%s2008 + $0x9] sm:$0xff]
        %v4215 = vld [vmem:[%s2008 + $0x19] sm:$0xff]
        %v4216 = vld [vmem:[%s2008 + $0x21] sm:$0xff]
        %v4217 = vld [vmem:[%s2008 + $0x31] sm:$0xff]
        %v4218 = vld [vmem:[%s2008 + $0x39] sm:$0xff]
        %v4219 = vld [vmem:[%s2008 + $0x49] sm:$0xff]
        %v4220 = vld [vmem:[%s2008 + $0x51] sm:$0xff]
        %v4221 = vld [vmem:[%s2008 + $0x61] sm:$0xff]
        %v4222 = vld [vmem:[%s2008 + $0x69] sm:$0xff]
        %v4223 = vld [vmem:[%s2008 + $0x79] sm:$0xff]
        %v4224 = vld [vmem:[%s2008 + $0x81] sm:$0xff]
        %v4225 = vld [vmem:[%s2008 + $0x91] sm:$0xff]
        %v4226 = vld [vmem:[%s2008 + $0x99] sm:$0xff]
        %v4227 = vld [vmem:[%s2008 + $0xa9] sm:$0xff]
        %v4228 = vld [vmem:[%s2008 + $0xb1] sm:$0xff]
        %v4229 = vld [vmem:[%s2008 + $0xc1] sm:$0xff]
        %v4230 = vld [vmem:[%s2008 + $0xc9] sm:$0xff]
        %v4231 = vld [vmem:[%s2008 + $0xd9] sm:$0xff]
        %v4232 = vld [vmem:[%s2008 + $0xe1] sm:$0xff]
        %v4233 = vld [vmem:[%s2008 + $0xf1] sm:$0xff]
        %v4234 = vld [vmem:[%s2008 + $0xf9] sm:$0xff]
        %v4235 = vld [vmem:[%s2008 + $0x109] sm:$0xff]
        %v4236 = vld [vmem:[%s2008 + $0x111] sm:$0xff]
        %v4237 = vld [vmem:[%s2008 + $0x121] sm:$0xff]
        %v4238 = vld [vmem:[%s2008 + $0x129] sm:$0xff]
        %v4239 = vld [vmem:[%s2008 + $0x139] sm:$0xff]
        %v4240 = vld [vmem:[%s2008 + $0x141] sm:$0xff]
        %v4241 = vld [vmem:[%s2008 + $0x151] sm:$0xff]
        %v4242 = vld [vmem:[%s2008 + $0x159] sm:$0xff]
        %v4243 = vld [vmem:[%s2008 + $0x169] sm:$0xff]
        %v4244 = vld [vmem:[%s2008 + $0x171] sm:$0xff]
        %v4245 = vlaneseq
        %v4246 = vshrl.u32 %v4245, 7
        %v4247 = vsub.s32 0, %v4246
        %v4248 = vrot.slane %v4212, %v4247
        %v4249 = vmul.f32 %v4213, %v4248
        %v4250 = vmul.f32 %v4214, %v4248
        %v4251 = vmul.f32 %v4215, %v4248
        %v4252 = vmul.f32 %v4216, %v4248
        %v4253 = vmul.f32 %v4217, %v4248
        %v4254 = vmul.f32 %v4218, %v4248
        %v4255 = vmul.f32 %v4219, %v4248
        %v4256 = vmul.f32 %v4220, %v4248
        %v4257 = vmul.f32 %v4221, %v4248
        %v4258 = vmul.f32 %v4222, %v4248
        %v4259 = vmul.f32 %v4223, %v4248
        %v4260 = vmul.f32 %v4224, %v4248
        %v4261 = vmul.f32 %v4225, %v4248
        %v4262 = vmul.f32 %v4226, %v4248
        %v4263 = vmul.f32 %v4227, %v4248
        %v4264 = vmul.f32 %v4228, %v4248
        %v4265 = vmul.f32 %v4229, %v4248
        %v4266 = vmul.f32 %v4230, %v4248
        %v4267 = vmul.f32 %v4231, %v4248
        %v4268 = vmul.f32 %v4232, %v4248
        %v4269 = vmul.f32 %v4233, %v4248
        %v4270 = vmul.f32 %v4234, %v4248
        %v4271 = vmul.f32 %v4235, %v4248
        %v4272 = vmul.f32 %v4236, %v4248
        %v4273 = vmul.f32 %v4237, %v4248
        %v4274 = vmul.f32 %v4238, %v4248
        %v4275 = vmul.f32 %v4239, %v4248
        %v4276 = vmul.f32 %v4240, %v4248
        %v4277 = vmul.f32 %v4241, %v4248
        %v4278 = vmul.f32 %v4242, %v4248
        %v4279 = vmul.f32 %v4243, %v4248
        %v4280 = vmul.f32 %v4244, %v4248
        %v4281 = vadd.f32 %v4180, %v4249
        %v4282 = vadd.f32 %v4181, %v4250
        %v4283 = vadd.f32 %v4182, %v4251
        %v4284 = vadd.f32 %v4183, %v4252
        %v4285 = vadd.f32 %v4184, %v4253
        %v4286 = vadd.f32 %v4185, %v4254
        %v4287 = vadd.f32 %v4186, %v4255
        %v4288 = vadd.f32 %v4187, %v4256
        %v4289 = vadd.f32 %v4188, %v4257
        %v4290 = vadd.f32 %v4189, %v4258
        %v4291 = vadd.f32 %v4190, %v4259
        %v4292 = vadd.f32 %v4191, %v4260
        %v4293 = vadd.f32 %v4192, %v4261
        %v4294 = vadd.f32 %v4193, %v4262
        %v4295 = vadd.f32 %v4194, %v4263
        %v4296 = vadd.f32 %v4195, %v4264
        %v4297 = vadd.f32 %v4196, %v4265
        %v4298 = vadd.f32 %v4197, %v4266
        %v4299 = vadd.f32 %v4198, %v4267
        %v4300 = vadd.f32 %v4199, %v4268
        %v4301 = vadd.f32 %v4200, %v4269
        %v4302 = vadd.f32 %v4201, %v4270
        %v4303 = vadd.f32 %v4202, %v4271
        %v4304 = vadd.f32 %v4203, %v4272
        %v4305 = vadd.f32 %v4204, %v4273
        %v4306 = vadd.f32 %v4205, %v4274
        %v4307 = vadd.f32 %v4206, %v4275
        %v4308 = vadd.f32 %v4207, %v4276
        %v4309 = vadd.f32 %v4208, %v4277
        %v4310 = vadd.f32 %v4209, %v4278
        %v4311 = vadd.f32 %v4210, %v4279
        %v4312 = vadd.f32 %v4211, %v4280
        %v4313 = vld [vmem:[%s3 + $0x7] sm:$0x1]
        %v4314 = vld [vmem:[%s2137 + $0x1] sm:$0xff]
        %v4315 = vld [vmem:[%s2137 + $0x9] sm:$0xff]
        %v4316 = vld [vmem:[%s2137 + $0x19] sm:$0xff]
        %v4317 = vld [vmem:[%s2137 + $0x21] sm:$0xff]
        %v4318 = vld [vmem:[%s2137 + $0x31] sm:$0xff]
        %v4319 = vld [vmem:[%s2137 + $0x39] sm:$0xff]
        %v4320 = vld [vmem:[%s2137 + $0x49] sm:$0xff]
        %v4321 = vld [vmem:[%s2137 + $0x51] sm:$0xff]
        %v4322 = vld [vmem:[%s2137 + $0x61] sm:$0xff]
        %v4323 = vld [vmem:[%s2137 + $0x69] sm:$0xff]
        %v4324 = vld [vmem:[%s2137 + $0x79] sm:$0xff]
        %v4325 = vld [vmem:[%s2137 + $0x81] sm:$0xff]
        %v4326 = vld [vmem:[%s2137 + $0x91] sm:$0xff]
        %v4327 = vld [vmem:[%s2137 + $0x99] sm:$0xff]
        %v4328 = vld [vmem:[%s2137 + $0xa9] sm:$0xff]
        %v4329 = vld [vmem:[%s2137 + $0xb1] sm:$0xff]
        %v4330 = vld [vmem:[%s2137 + $0xc1] sm:$0xff]
        %v4331 = vld [vmem:[%s2137 + $0xc9] sm:$0xff]
        %v4332 = vld [vmem:[%s2137 + $0xd9] sm:$0xff]
        %v4333 = vld [vmem:[%s2137 + $0xe1] sm:$0xff]
        %v4334 = vld [vmem:[%s2137 + $0xf1] sm:$0xff]
        %v4335 = vld [vmem:[%s2137 + $0xf9] sm:$0xff]
        %v4336 = vld [vmem:[%s2137 + $0x109] sm:$0xff]
        %v4337 = vld [vmem:[%s2137 + $0x111] sm:$0xff]
        %v4338 = vld [vmem:[%s2137 + $0x121] sm:$0xff]
        %v4339 = vld [vmem:[%s2137 + $0x129] sm:$0xff]
        %v4340 = vld [vmem:[%s2137 + $0x139] sm:$0xff]
        %v4341 = vld [vmem:[%s2137 + $0x141] sm:$0xff]
        %v4342 = vld [vmem:[%s2137 + $0x151] sm:$0xff]
        %v4343 = vld [vmem:[%s2137 + $0x159] sm:$0xff]
        %v4344 = vld [vmem:[%s2137 + $0x169] sm:$0xff]
        %v4345 = vld [vmem:[%s2137 + $0x171] sm:$0xff]
        %v4346 = vlaneseq
        %v4347 = vshrl.u32 %v4346, 7
        %v4348 = vsub.s32 0, %v4347
        %v4349 = vrot.slane %v4313, %v4348
        %v4350 = vmul.f32 %v4314, %v4349
        %v4351 = vmul.f32 %v4315, %v4349
        %v4352 = vmul.f32 %v4316, %v4349
        %v4353 = vmul.f32 %v4317, %v4349
        %v4354 = vmul.f32 %v4318, %v4349
        %v4355 = vmul.f32 %v4319, %v4349
        %v4356 = vmul.f32 %v4320, %v4349
        %v4357 = vmul.f32 %v4321, %v4349
        %v4358 = vmul.f32 %v4322, %v4349
        %v4359 = vmul.f32 %v4323, %v4349
        %v4360 = vmul.f32 %v4324, %v4349
        %v4361 = vmul.f32 %v4325, %v4349
        %v4362 = vmul.f32 %v4326, %v4349
        %v4363 = vmul.f32 %v4327, %v4349
        %v4364 = vmul.f32 %v4328, %v4349
        %v4365 = vmul.f32 %v4329, %v4349
        %v4366 = vmul.f32 %v4330, %v4349
        %v4367 = vmul.f32 %v4331, %v4349
        %v4368 = vmul.f32 %v4332, %v4349
        %v4369 = vmul.f32 %v4333, %v4349
        %v4370 = vmul.f32 %v4334, %v4349
        %v4371 = vmul.f32 %v4335, %v4349
        %v4372 = vmul.f32 %v4336, %v4349
        %v4373 = vmul.f32 %v4337, %v4349
        %v4374 = vmul.f32 %v4338, %v4349
        %v4375 = vmul.f32 %v4339, %v4349
        %v4376 = vmul.f32 %v4340, %v4349
        %v4377 = vmul.f32 %v4341, %v4349
        %v4378 = vmul.f32 %v4342, %v4349
        %v4379 = vmul.f32 %v4343, %v4349
        %v4380 = vmul.f32 %v4344, %v4349
        %v4381 = vmul.f32 %v4345, %v4349
        %v4382 = vadd.f32 %v4281, %v4350
        %v4383 = vadd.f32 %v4282, %v4351
        %v4384 = vadd.f32 %v4283, %v4352
        %v4385 = vadd.f32 %v4284, %v4353
        %v4386 = vadd.f32 %v4285, %v4354
        %v4387 = vadd.f32 %v4286, %v4355
        %v4388 = vadd.f32 %v4287, %v4356
        %v4389 = vadd.f32 %v4288, %v4357
        %v4390 = vadd.f32 %v4289, %v4358
        %v4391 = vadd.f32 %v4290, %v4359
        %v4392 = vadd.f32 %v4291, %v4360
        %v4393 = vadd.f32 %v4292, %v4361
        %v4394 = vadd.f32 %v4293, %v4362
        %v4395 = vadd.f32 %v4294, %v4363
        %v4396 = vadd.f32 %v4295, %v4364
        %v4397 = vadd.f32 %v4296, %v4365
        %v4398 = vadd.f32 %v4297, %v4366
        %v4399 = vadd.f32 %v4298, %v4367
        %v4400 = vadd.f32 %v4299, %v4368
        %v4401 = vadd.f32 %v4300, %v4369
        %v4402 = vadd.f32 %v4301, %v4370
        %v4403 = vadd.f32 %v4302, %v4371
        %v4404 = vadd.f32 %v4303, %v4372
        %v4405 = vadd.f32 %v4304, %v4373
        %v4406 = vadd.f32 %v4305, %v4374
        %v4407 = vadd.f32 %v4306, %v4375
        %v4408 = vadd.f32 %v4307, %v4376
        %v4409 = vadd.f32 %v4308, %v4377
        %v4410 = vadd.f32 %v4309, %v4378
        %v4411 = vadd.f32 %v4310, %v4379
        %v4412 = vadd.f32 %v4311, %v4380
        %v4413 = vadd.f32 %v4312, %v4381
        %v4414 = vld [vmem:[%s3 + $0x8] sm:$0x1]
        %v4415 = vld [vmem:[%s2008 + $0x2] sm:$0xff]
        %v4416 = vld [vmem:[%s2008 + $0xa] sm:$0xff]
        %v4417 = vld [vmem:[%s2008 + $0x1a] sm:$0xff]
        %v4418 = vld [vmem:[%s2008 + $0x22] sm:$0xff]
        %v4419 = vld [vmem:[%s2008 + $0x32] sm:$0xff]
        %v4420 = vld [vmem:[%s2008 + $0x3a] sm:$0xff]
        %v4421 = vld [vmem:[%s2008 + $0x4a] sm:$0xff]
        %v4422 = vld [vmem:[%s2008 + $0x52] sm:$0xff]
        %v4423 = vld [vmem:[%s2008 + $0x62] sm:$0xff]
        %v4424 = vld [vmem:[%s2008 + $0x6a] sm:$0xff]
        %v4425 = vld [vmem:[%s2008 + $0x7a] sm:$0xff]
        %v4426 = vld [vmem:[%s2008 + $0x82] sm:$0xff]
        %v4427 = vld [vmem:[%s2008 + $0x92] sm:$0xff]
        %v4428 = vld [vmem:[%s2008 + $0x9a] sm:$0xff]
        %v4429 = vld [vmem:[%s2008 + $0xaa] sm:$0xff]
        %v4430 = vld [vmem:[%s2008 + $0xb2] sm:$0xff]
        %v4431 = vld [vmem:[%s2008 + $0xc2] sm:$0xff]
        %v4432 = vld [vmem:[%s2008 + $0xca] sm:$0xff]
        %v4433 = vld [vmem:[%s2008 + $0xda] sm:$0xff]
        %v4434 = vld [vmem:[%s2008 + $0xe2] sm:$0xff]
        %v4435 = vld [vmem:[%s2008 + $0xf2] sm:$0xff]
        %v4436 = vld [vmem:[%s2008 + $0xfa] sm:$0xff]
        %v4437 = vld [vmem:[%s2008 + $0x10a] sm:$0xff]
        %v4438 = vld [vmem:[%s2008 + $0x112] sm:$0xff]
        %v4439 = vld [vmem:[%s2008 + $0x122] sm:$0xff]
        %v4440 = vld [vmem:[%s2008 + $0x12a] sm:$0xff]
        %v4441 = vld [vmem:[%s2008 + $0x13a] sm:$0xff]
        %v4442 = vld [vmem:[%s2008 + $0x142] sm:$0xff]
        %v4443 = vld [vmem:[%s2008 + $0x152] sm:$0xff]
        %v4444 = vld [vmem:[%s2008 + $0x15a] sm:$0xff]
        %v4445 = vld [vmem:[%s2008 + $0x16a] sm:$0xff]
        %v4446 = vld [vmem:[%s2008 + $0x172] sm:$0xff]
        %v4447 = vlaneseq
        %v4448 = vshrl.u32 %v4447, 7
        %v4449 = vsub.s32 0, %v4448
        %v4450 = vrot.slane %v4414, %v4449
        %v4451 = vmul.f32 %v4415, %v4450
        %v4452 = vmul.f32 %v4416, %v4450
        %v4453 = vmul.f32 %v4417, %v4450
        %v4454 = vmul.f32 %v4418, %v4450
        %v4455 = vmul.f32 %v4419, %v4450
        %v4456 = vmul.f32 %v4420, %v4450
        %v4457 = vmul.f32 %v4421, %v4450
        %v4458 = vmul.f32 %v4422, %v4450
        %v4459 = vmul.f32 %v4423, %v4450
        %v4460 = vmul.f32 %v4424, %v4450
        %v4461 = vmul.f32 %v4425, %v4450
        %v4462 = vmul.f32 %v4426, %v4450
        %v4463 = vmul.f32 %v4427, %v4450
        %v4464 = vmul.f32 %v4428, %v4450
        %v4465 = vmul.f32 %v4429, %v4450
        %v4466 = vmul.f32 %v4430, %v4450
        %v4467 = vmul.f32 %v4431, %v4450
        %v4468 = vmul.f32 %v4432, %v4450
        %v4469 = vmul.f32 %v4433, %v4450
        %v4470 = vmul.f32 %v4434, %v4450
        %v4471 = vmul.f32 %v4435, %v4450
        %v4472 = vmul.f32 %v4436, %v4450
        %v4473 = vmul.f32 %v4437, %v4450
        %v4474 = vmul.f32 %v4438, %v4450
        %v4475 = vmul.f32 %v4439, %v4450
        %v4476 = vmul.f32 %v4440, %v4450
        %v4477 = vmul.f32 %v4441, %v4450
        %v4478 = vmul.f32 %v4442, %v4450
        %v4479 = vmul.f32 %v4443, %v4450
        %v4480 = vmul.f32 %v4444, %v4450
        %v4481 = vmul.f32 %v4445, %v4450
        %v4482 = vmul.f32 %v4446, %v4450
        %v4483 = vadd.f32 %v4382, %v4451
        %v4484 = vadd.f32 %v4383, %v4452
        %v4485 = vadd.f32 %v4384, %v4453
        %v4486 = vadd.f32 %v4385, %v4454
        %v4487 = vadd.f32 %v4386, %v4455
        %v4488 = vadd.f32 %v4387, %v4456
        %v4489 = vadd.f32 %v4388, %v4457
        %v4490 = vadd.f32 %v4389, %v4458
        %v4491 = vadd.f32 %v4390, %v4459
        %v4492 = vadd.f32 %v4391, %v4460
        %v4493 = vadd.f32 %v4392, %v4461
        %v4494 = vadd.f32 %v4393, %v4462
        %v4495 = vadd.f32 %v4394, %v4463
        %v4496 = vadd.f32 %v4395, %v4464
        %v4497 = vadd.f32 %v4396, %v4465
        %v4498 = vadd.f32 %v4397, %v4466
        %v4499 = vadd.f32 %v4398, %v4467
        %v4500 = vadd.f32 %v4399, %v4468
        %v4501 = vadd.f32 %v4400, %v4469
        %v4502 = vadd.f32 %v4401, %v4470
        %v4503 = vadd.f32 %v4402, %v4471
        %v4504 = vadd.f32 %v4403, %v4472
        %v4505 = vadd.f32 %v4404, %v4473
        %v4506 = vadd.f32 %v4405, %v4474
        %v4507 = vadd.f32 %v4406, %v4475
        %v4508 = vadd.f32 %v4407, %v4476
        %v4509 = vadd.f32 %v4408, %v4477
        %v4510 = vadd.f32 %v4409, %v4478
        %v4511 = vadd.f32 %v4410, %v4479
        %v4512 = vadd.f32 %v4411, %v4480
        %v4513 = vadd.f32 %v4412, %v4481
        %v4514 = vadd.f32 %v4413, %v4482
        %v4515 = vsel %vm272, %v4483, 0.0
        %4516 = vadd.xlane.f32.xlu0 %v4515
        %v4517 = vpop.xlane.xlu0 %4516
        %v4518 = vsel %vm272, %v4484, 0.0
        %4519 = vadd.xlane.f32.xlu0 %v4518
        %v4520 = vpop.xlane.xlu0 %4519
        %v4521 = vsel %vm272, %v4485, 0.0
        %4522 = vadd.xlane.f32.xlu0 %v4521
        %v4523 = vpop.xlane.xlu0 %4522
        %v4524 = vsel %vm272, %v4486, 0.0
        %4525 = vadd.xlane.f32.xlu0 %v4524
        %v4526 = vpop.xlane.xlu0 %4525
        %v4527 = vsel %vm272, %v4487, 0.0
        %4528 = vadd.xlane.f32.xlu0 %v4527
        %v4529 = vpop.xlane.xlu0 %4528
        %v4530 = vsel %vm272, %v4488, 0.0
        %4531 = vadd.xlane.f32.xlu0 %v4530
        %v4532 = vpop.xlane.xlu0 %4531
        %v4533 = vsel %vm272, %v4489, 0.0
        %4534 = vadd.xlane.f32.xlu0 %v4533
        %v4535 = vpop.xlane.xlu0 %4534
        %v4536 = vsel %vm272, %v4490, 0.0
        %4537 = vadd.xlane.f32.xlu0 %v4536
        %v4538 = vpop.xlane.xlu0 %4537
        %v4539 = vsel %vm272, %v4491, 0.0
        %4540 = vadd.xlane.f32.xlu0 %v4539
        %v4541 = vpop.xlane.xlu0 %4540
        %v4542 = vsel %vm272, %v4492, 0.0
        %4543 = vadd.xlane.f32.xlu0 %v4542
        %v4544 = vpop.xlane.xlu0 %4543
        %v4545 = vsel %vm272, %v4493, 0.0
        %4546 = vadd.xlane.f32.xlu0 %v4545
        %v4547 = vpop.xlane.xlu0 %4546
        %v4548 = vsel %vm272, %v4494, 0.0
        %4549 = vadd.xlane.f32.xlu0 %v4548
        %v4550 = vpop.xlane.xlu0 %4549
        %v4551 = vsel %vm272, %v4495, 0.0
        %4552 = vadd.xlane.f32.xlu0 %v4551
        %v4553 = vpop.xlane.xlu0 %4552
        %v4554 = vsel %vm272, %v4496, 0.0
        %4555 = vadd.xlane.f32.xlu0 %v4554
        %v4556 = vpop.xlane.xlu0 %4555
        %v4557 = vsel %vm272, %v4497, 0.0
        %4558 = vadd.xlane.f32.xlu0 %v4557
        %v4559 = vpop.xlane.xlu0 %4558
        %v4560 = vsel %vm272, %v4498, 0.0
        %4561 = vadd.xlane.f32.xlu0 %v4560
        %v4562 = vpop.xlane.xlu0 %4561
        %v4563 = vsel %vm272, %v4499, 0.0
        %4564 = vadd.xlane.f32.xlu0 %v4563
        %v4565 = vpop.xlane.xlu0 %4564
        %v4566 = vsel %vm272, %v4500, 0.0
        %4567 = vadd.xlane.f32.xlu0 %v4566
        %v4568 = vpop.xlane.xlu0 %4567
        %v4569 = vsel %vm272, %v4501, 0.0
        %4570 = vadd.xlane.f32.xlu0 %v4569
        %v4571 = vpop.xlane.xlu0 %4570
        %v4572 = vsel %vm272, %v4502, 0.0
        %4573 = vadd.xlane.f32.xlu0 %v4572
        %v4574 = vpop.xlane.xlu0 %4573
        %v4575 = vsel %vm272, %v4503, 0.0
        %4576 = vadd.xlane.f32.xlu0 %v4575
        %v4577 = vpop.xlane.xlu0 %4576
        %v4578 = vsel %vm272, %v4504, 0.0
        %4579 = vadd.xlane.f32.xlu0 %v4578
        %v4580 = vpop.xlane.xlu0 %4579
        %v4581 = vsel %vm272, %v4505, 0.0
        %4582 = vadd.xlane.f32.xlu0 %v4581
        %v4583 = vpop.xlane.xlu0 %4582
        %v4584 = vsel %vm272, %v4506, 0.0
        %4585 = vadd.xlane.f32.xlu0 %v4584
        %v4586 = vpop.xlane.xlu0 %4585
        %v4587 = vsel %vm272, %v4507, 0.0
        %4588 = vadd.xlane.f32.xlu0 %v4587
        %v4589 = vpop.xlane.xlu0 %4588
        %v4590 = vsel %vm272, %v4508, 0.0
        %4591 = vadd.xlane.f32.xlu0 %v4590
        %v4592 = vpop.xlane.xlu0 %4591
        %v4593 = vsel %vm272, %v4509, 0.0
        %4594 = vadd.xlane.f32.xlu0 %v4593
        %v4595 = vpop.xlane.xlu0 %4594
        %v4596 = vsel %vm272, %v4510, 0.0
        %4597 = vadd.xlane.f32.xlu0 %v4596
        %v4598 = vpop.xlane.xlu0 %4597
        %v4599 = vsel %vm272, %v4511, 0.0
        %4600 = vadd.xlane.f32.xlu0 %v4599
        %v4601 = vpop.xlane.xlu0 %4600
        %v4602 = vsel %vm272, %v4512, 0.0
        %4603 = vadd.xlane.f32.xlu0 %v4602
        %v4604 = vpop.xlane.xlu0 %4603
        %v4605 = vsel %vm272, %v4513, 0.0
        %4606 = vadd.xlane.f32.xlu0 %v4605
        %v4607 = vpop.xlane.xlu0 %4606
        %v4608 = vsel %vm272, %v4514, 0.0
        %4609 = vadd.xlane.f32.xlu0 %v4608
        %v4610 = vpop.xlane.xlu0 %4609
        %v4611 = vmul.f32 %v4517, %v3177
        %v4612 = vmul.f32 %v4520, %v3177
        %v4613 = vmul.f32 %v4523, %v3177
        %v4614 = vmul.f32 %v4526, %v3177
        %v4615 = vmul.f32 %v4529, %v3177
        %v4616 = vmul.f32 %v4532, %v3177
        %v4617 = vmul.f32 %v4535, %v3177
        %v4618 = vmul.f32 %v4538, %v3177
        %v4619 = vmul.f32 %v4541, %v3177
        %v4620 = vmul.f32 %v4544, %v3177
        %v4621 = vmul.f32 %v4547, %v3177
        %v4622 = vmul.f32 %v4550, %v3177
        %v4623 = vmul.f32 %v4553, %v3177
        %v4624 = vmul.f32 %v4556, %v3177
        %v4625 = vmul.f32 %v4559, %v3177
        %v4626 = vmul.f32 %v4562, %v3177
        %v4627 = vmul.f32 %v4565, %v3177
        %v4628 = vmul.f32 %v4568, %v3177
        %v4629 = vmul.f32 %v4571, %v3177
        %v4630 = vmul.f32 %v4574, %v3177
        %v4631 = vmul.f32 %v4577, %v3177
        %v4632 = vmul.f32 %v4580, %v3177
        %v4633 = vmul.f32 %v4583, %v3177
        %v4634 = vmul.f32 %v4586, %v3177
        %v4635 = vmul.f32 %v4589, %v3177
        %v4636 = vmul.f32 %v4592, %v3177
        %v4637 = vmul.f32 %v4595, %v3177
        %v4638 = vmul.f32 %v4598, %v3177
        %v4639 = vmul.f32 %v4601, %v3177
        %v4640 = vmul.f32 %v4604, %v3177
        %v4641 = vmul.f32 %v4607, %v3177
        %v4642 = vmul.f32 %v4610, %v3177
        %v4643 = vsub.f32 %v4483, %v4611
        %v4644 = vsub.f32 %v4484, %v4612
        %v4645 = vsub.f32 %v4485, %v4613
        %v4646 = vsub.f32 %v4486, %v4614
        %v4647 = vsub.f32 %v4487, %v4615
        %v4648 = vsub.f32 %v4488, %v4616
        %v4649 = vsub.f32 %v4489, %v4617
        %v4650 = vsub.f32 %v4490, %v4618
        %v4651 = vsub.f32 %v4491, %v4619
        %v4652 = vsub.f32 %v4492, %v4620
        %v4653 = vsub.f32 %v4493, %v4621
        %v4654 = vsub.f32 %v4494, %v4622
        %v4655 = vsub.f32 %v4495, %v4623
        %v4656 = vsub.f32 %v4496, %v4624
        %v4657 = vsub.f32 %v4497, %v4625
        %v4658 = vsub.f32 %v4498, %v4626
        %v4659 = vsub.f32 %v4499, %v4627
        %v4660 = vsub.f32 %v4500, %v4628
        %v4661 = vsub.f32 %v4501, %v4629
        %v4662 = vsub.f32 %v4502, %v4630
        %v4663 = vsub.f32 %v4503, %v4631
        %v4664 = vsub.f32 %v4504, %v4632
        %v4665 = vsub.f32 %v4505, %v4633
        %v4666 = vsub.f32 %v4506, %v4634
        %v4667 = vsub.f32 %v4507, %v4635
        %v4668 = vsub.f32 %v4508, %v4636
        %v4669 = vsub.f32 %v4509, %v4637
        %v4670 = vsub.f32 %v4510, %v4638
        %v4671 = vsub.f32 %v4511, %v4639
        %v4672 = vsub.f32 %v4512, %v4640
        %v4673 = vsub.f32 %v4513, %v4641
        %v4674 = vsub.f32 %v4514, %v4642
        %v4675 = vmul.f32 %v4643, %v4643
        %v4676 = vmul.f32 %v4644, %v4644
        %v4677 = vmul.f32 %v4645, %v4645
        %v4678 = vmul.f32 %v4646, %v4646
        %v4679 = vmul.f32 %v4647, %v4647
        %v4680 = vmul.f32 %v4648, %v4648
        %v4681 = vmul.f32 %v4649, %v4649
        %v4682 = vmul.f32 %v4650, %v4650
        %v4683 = vmul.f32 %v4651, %v4651
        %v4684 = vmul.f32 %v4652, %v4652
        %v4685 = vmul.f32 %v4653, %v4653
        %v4686 = vmul.f32 %v4654, %v4654
        %v4687 = vmul.f32 %v4655, %v4655
        %v4688 = vmul.f32 %v4656, %v4656
        %v4689 = vmul.f32 %v4657, %v4657
        %v4690 = vmul.f32 %v4658, %v4658
        %v4691 = vmul.f32 %v4659, %v4659
        %v4692 = vmul.f32 %v4660, %v4660
        %v4693 = vmul.f32 %v4661, %v4661
        %v4694 = vmul.f32 %v4662, %v4662
        %v4695 = vmul.f32 %v4663, %v4663
        %v4696 = vmul.f32 %v4664, %v4664
        %v4697 = vmul.f32 %v4665, %v4665
        %v4698 = vmul.f32 %v4666, %v4666
        %v4699 = vmul.f32 %v4667, %v4667
        %v4700 = vmul.f32 %v4668, %v4668
        %v4701 = vmul.f32 %v4669, %v4669
        %v4702 = vmul.f32 %v4670, %v4670
        %v4703 = vmul.f32 %v4671, %v4671
        %v4704 = vmul.f32 %v4672, %v4672
        %v4705 = vmul.f32 %v4673, %v4673
        %v4706 = vmul.f32 %v4674, %v4674
        %v4707 = vsel %vm272, %v4675, 0.0
        %4708 = vadd.xlane.f32.xlu0 %v4707
        %v4709 = vpop.xlane.xlu0 %4708
        %v4710 = vsel %vm272, %v4676, 0.0
        %4711 = vadd.xlane.f32.xlu0 %v4710
        %v4712 = vpop.xlane.xlu0 %4711
        %v4713 = vsel %vm272, %v4677, 0.0
        %4714 = vadd.xlane.f32.xlu0 %v4713
        %v4715 = vpop.xlane.xlu0 %4714
        %v4716 = vsel %vm272, %v4678, 0.0
        %4717 = vadd.xlane.f32.xlu0 %v4716
        %v4718 = vpop.xlane.xlu0 %4717
        %v4719 = vsel %vm272, %v4679, 0.0
        %4720 = vadd.xlane.f32.xlu0 %v4719
        %v4721 = vpop.xlane.xlu0 %4720
        %v4722 = vsel %vm272, %v4680, 0.0
        %4723 = vadd.xlane.f32.xlu0 %v4722
        %v4724 = vpop.xlane.xlu0 %4723
        %v4725 = vsel %vm272, %v4681, 0.0
        %4726 = vadd.xlane.f32.xlu0 %v4725
        %v4727 = vpop.xlane.xlu0 %4726
        %v4728 = vsel %vm272, %v4682, 0.0
        %4729 = vadd.xlane.f32.xlu0 %v4728
        %v4730 = vpop.xlane.xlu0 %4729
        %v4731 = vsel %vm272, %v4683, 0.0
        %4732 = vadd.xlane.f32.xlu0 %v4731
        %v4733 = vpop.xlane.xlu0 %4732
        %v4734 = vsel %vm272, %v4684, 0.0
        %4735 = vadd.xlane.f32.xlu0 %v4734
        %v4736 = vpop.xlane.xlu0 %4735
        %v4737 = vsel %vm272, %v4685, 0.0
        %4738 = vadd.xlane.f32.xlu0 %v4737
        %v4739 = vpop.xlane.xlu0 %4738
        %v4740 = vsel %vm272, %v4686, 0.0
        %4741 = vadd.xlane.f32.xlu0 %v4740
        %v4742 = vpop.xlane.xlu0 %4741
        %v4743 = vsel %vm272, %v4687, 0.0
        %4744 = vadd.xlane.f32.xlu0 %v4743
        %v4745 = vpop.xlane.xlu0 %4744
        %v4746 = vsel %vm272, %v4688, 0.0
        %4747 = vadd.xlane.f32.xlu0 %v4746
        %v4748 = vpop.xlane.xlu0 %4747
        %v4749 = vsel %vm272, %v4689, 0.0
        %4750 = vadd.xlane.f32.xlu0 %v4749
        %v4751 = vpop.xlane.xlu0 %4750
        %v4752 = vsel %vm272, %v4690, 0.0
        %4753 = vadd.xlane.f32.xlu0 %v4752
        %v4754 = vpop.xlane.xlu0 %4753
        %v4755 = vsel %vm272, %v4691, 0.0
        %4756 = vadd.xlane.f32.xlu0 %v4755
        %v4757 = vpop.xlane.xlu0 %4756
        %v4758 = vsel %vm272, %v4692, 0.0
        %4759 = vadd.xlane.f32.xlu0 %v4758
        %v4760 = vpop.xlane.xlu0 %4759
        %v4761 = vsel %vm272, %v4693, 0.0
        %4762 = vadd.xlane.f32.xlu0 %v4761
        %v4763 = vpop.xlane.xlu0 %4762
        %v4764 = vsel %vm272, %v4694, 0.0
        %4765 = vadd.xlane.f32.xlu0 %v4764
        %v4766 = vpop.xlane.xlu0 %4765
        %v4767 = vsel %vm272, %v4695, 0.0
        %4768 = vadd.xlane.f32.xlu0 %v4767
        %v4769 = vpop.xlane.xlu0 %4768
        %v4770 = vsel %vm272, %v4696, 0.0
        %4771 = vadd.xlane.f32.xlu0 %v4770
        %v4772 = vpop.xlane.xlu0 %4771
        %v4773 = vsel %vm272, %v4697, 0.0
        %4774 = vadd.xlane.f32.xlu0 %v4773
        %v4775 = vpop.xlane.xlu0 %4774
        %v4776 = vsel %vm272, %v4698, 0.0
        %4777 = vadd.xlane.f32.xlu0 %v4776
        %v4778 = vpop.xlane.xlu0 %4777
        %v4779 = vsel %vm272, %v4699, 0.0
        %4780 = vadd.xlane.f32.xlu0 %v4779
        %v4781 = vpop.xlane.xlu0 %4780
        %v4782 = vsel %vm272, %v4700, 0.0
        %4783 = vadd.xlane.f32.xlu0 %v4782
        %v4784 = vpop.xlane.xlu0 %4783
        %v4785 = vsel %vm272, %v4701, 0.0
        %4786 = vadd.xlane.f32.xlu0 %v4785
        %v4787 = vpop.xlane.xlu0 %4786
        %v4788 = vsel %vm272, %v4702, 0.0
        %4789 = vadd.xlane.f32.xlu0 %v4788
        %v4790 = vpop.xlane.xlu0 %4789
        %v4791 = vsel %vm272, %v4703, 0.0
        %4792 = vadd.xlane.f32.xlu0 %v4791
        %v4793 = vpop.xlane.xlu0 %4792
        %v4794 = vsel %vm272, %v4704, 0.0
        %4795 = vadd.xlane.f32.xlu0 %v4794
        %v4796 = vpop.xlane.xlu0 %4795
        %v4797 = vsel %vm272, %v4705, 0.0
        %4798 = vadd.xlane.f32.xlu0 %v4797
        %v4799 = vpop.xlane.xlu0 %4798
        %v4800 = vsel %vm272, %v4706, 0.0
        %4801 = vadd.xlane.f32.xlu0 %v4800
        %v4802 = vpop.xlane.xlu0 %4801
        %v4803 = vmul.f32 %v4709, %v3177
        %v4804 = vmul.f32 %v4712, %v3177
        %v4805 = vmul.f32 %v4715, %v3177
        %v4806 = vmul.f32 %v4718, %v3177
        %v4807 = vmul.f32 %v4721, %v3177
        %v4808 = vmul.f32 %v4724, %v3177
        %v4809 = vmul.f32 %v4727, %v3177
        %v4810 = vmul.f32 %v4730, %v3177
        %v4811 = vmul.f32 %v4733, %v3177
        %v4812 = vmul.f32 %v4736, %v3177
        %v4813 = vmul.f32 %v4739, %v3177
        %v4814 = vmul.f32 %v4742, %v3177
        %v4815 = vmul.f32 %v4745, %v3177
        %v4816 = vmul.f32 %v4748, %v3177
        %v4817 = vmul.f32 %v4751, %v3177
        %v4818 = vmul.f32 %v4754, %v3177
        %v4819 = vmul.f32 %v4757, %v3177
        %v4820 = vmul.f32 %v4760, %v3177
        %v4821 = vmul.f32 %v4763, %v3177
        %v4822 = vmul.f32 %v4766, %v3177
        %v4823 = vmul.f32 %v4769, %v3177
        %v4824 = vmul.f32 %v4772, %v3177
        %v4825 = vmul.f32 %v4775, %v3177
        %v4826 = vmul.f32 %v4778, %v3177
        %v4827 = vmul.f32 %v4781, %v3177
        %v4828 = vmul.f32 %v4784, %v3177
        %v4829 = vmul.f32 %v4787, %v3177
        %v4830 = vmul.f32 %v4790, %v3177
        %v4831 = vmul.f32 %v4793, %v3177
        %v4832 = vmul.f32 %v4796, %v3177
        %v4833 = vmul.f32 %v4799, %v3177
        %v4834 = vmul.f32 %v4802, %v3177
        %v4835 = vadd.f32 %v4803, 1e-06
        %v4836 = vadd.f32 %v4804, 1e-06
        %v4837 = vadd.f32 %v4805, 1e-06
        %v4838 = vadd.f32 %v4806, 1e-06
        %v4839 = vadd.f32 %v4807, 1e-06
        %v4840 = vadd.f32 %v4808, 1e-06
        %v4841 = vadd.f32 %v4809, 1e-06
        %v4842 = vadd.f32 %v4810, 1e-06
        %v4843 = vadd.f32 %v4811, 1e-06
        %v4844 = vadd.f32 %v4812, 1e-06
        %v4845 = vadd.f32 %v4813, 1e-06
        %v4846 = vadd.f32 %v4814, 1e-06
        %v4847 = vadd.f32 %v4815, 1e-06
        %v4848 = vadd.f32 %v4816, 1e-06
        %v4849 = vadd.f32 %v4817, 1e-06
        %v4850 = vadd.f32 %v4818, 1e-06
        %v4851 = vadd.f32 %v4819, 1e-06
        %v4852 = vadd.f32 %v4820, 1e-06
        %v4853 = vadd.f32 %v4821, 1e-06
        %v4854 = vadd.f32 %v4822, 1e-06
        %v4855 = vadd.f32 %v4823, 1e-06
        %v4856 = vadd.f32 %v4824, 1e-06
        %v4857 = vadd.f32 %v4825, 1e-06
        %v4858 = vadd.f32 %v4826, 1e-06
        %v4859 = vadd.f32 %v4827, 1e-06
        %v4860 = vadd.f32 %v4828, 1e-06
        %v4861 = vadd.f32 %v4829, 1e-06
        %v4862 = vadd.f32 %v4830, 1e-06
        %v4863 = vadd.f32 %v4831, 1e-06
        %v4864 = vadd.f32 %v4832, 1e-06
        %v4865 = vadd.f32 %v4833, 1e-06
        %v4866 = vadd.f32 %v4834, 1e-06
        %v4867 = vrsqrt.pop %v4835
        %v4868 = vrsqrt.pop %v4836
        %v4869 = vrsqrt.pop %v4837
        %v4870 = vrsqrt.pop %v4838
        %v4871 = vrsqrt.pop %v4839
        %v4872 = vrsqrt.pop %v4840
        %v4873 = vrsqrt.pop %v4841
        %v4874 = vrsqrt.pop %v4842
        %v4875 = vrsqrt.pop %v4843
        %v4876 = vrsqrt.pop %v4844
        %v4877 = vrsqrt.pop %v4845
        %v4878 = vrsqrt.pop %v4846
        %v4879 = vrsqrt.pop %v4847
        %v4880 = vrsqrt.pop %v4848
        %v4881 = vrsqrt.pop %v4849
        %v4882 = vrsqrt.pop %v4850
        %v4883 = vrsqrt.pop %v4851
        %v4884 = vrsqrt.pop %v4852
        %v4885 = vrsqrt.pop %v4853
        %v4886 = vrsqrt.pop %v4854
        %v4887 = vrsqrt.pop %v4855
        %v4888 = vrsqrt.pop %v4856
        %v4889 = vrsqrt.pop %v4857
        %v4890 = vrsqrt.pop %v4858
        %v4891 = vrsqrt.pop %v4859
        %v4892 = vrsqrt.pop %v4860
        %v4893 = vrsqrt.pop %v4861
        %v4894 = vrsqrt.pop %v4862
        %v4895 = vrsqrt.pop %v4863
        %v4896 = vrsqrt.pop %v4864
        %v4897 = vrsqrt.pop %v4865
        %v4898 = vrsqrt.pop %v4866
        %v4899 = vmul.f32 %v4643, %v4867
        %v4900 = vmul.f32 %v4644, %v4868
        %v4901 = vmul.f32 %v4645, %v4869
        %v4902 = vmul.f32 %v4646, %v4870
        %v4903 = vmul.f32 %v4647, %v4871
        %v4904 = vmul.f32 %v4648, %v4872
        %v4905 = vmul.f32 %v4649, %v4873
        %v4906 = vmul.f32 %v4650, %v4874
        %v4907 = vmul.f32 %v4651, %v4875
        %v4908 = vmul.f32 %v4652, %v4876
        %v4909 = vmul.f32 %v4653, %v4877
        %v4910 = vmul.f32 %v4654, %v4878
        %v4911 = vmul.f32 %v4655, %v4879
        %v4912 = vmul.f32 %v4656, %v4880
        %v4913 = vmul.f32 %v4657, %v4881
        %v4914 = vmul.f32 %v4658, %v4882
        %v4915 = vmul.f32 %v4659, %v4883
        %v4916 = vmul.f32 %v4660, %v4884
        %v4917 = vmul.f32 %v4661, %v4885
        %v4918 = vmul.f32 %v4662, %v4886
        %v4919 = vmul.f32 %v4663, %v4887
        %v4920 = vmul.f32 %v4664, %v4888
        %v4921 = vmul.f32 %v4665, %v4889
        %v4922 = vmul.f32 %v4666, %v4890
        %v4923 = vmul.f32 %v4667, %v4891
        %v4924 = vmul.f32 %v4668, %v4892
        %v4925 = vmul.f32 %v4669, %v4893
        %v4926 = vmul.f32 %v4670, %v4894
        %v4927 = vmul.f32 %v4671, %v4895
        %v4928 = vmul.f32 %v4672, %v4896
        %v4929 = vmul.f32 %v4673, %v4897
        %v4930 = vmul.f32 %v4674, %v4898
        %v4931 = vmul.f32 %v4899, %v3502
        %v4932 = vmul.f32 %v4900, %v3502
        %v4933 = vmul.f32 %v4901, %v3502
        %v4934 = vmul.f32 %v4902, %v3502
        %v4935 = vmul.f32 %v4903, %v3502
        %v4936 = vmul.f32 %v4904, %v3502
        %v4937 = vmul.f32 %v4905, %v3502
        %v4938 = vmul.f32 %v4906, %v3502
        %v4939 = vmul.f32 %v4907, %v3502
        %v4940 = vmul.f32 %v4908, %v3502
        %v4941 = vmul.f32 %v4909, %v3502
        %v4942 = vmul.f32 %v4910, %v3502
        %v4943 = vmul.f32 %v4911, %v3502
        %v4944 = vmul.f32 %v4912, %v3502
        %v4945 = vmul.f32 %v4913, %v3502
        %v4946 = vmul.f32 %v4914, %v3502
        %v4947 = vmul.f32 %v4915, %v3502
        %v4948 = vmul.f32 %v4916, %v3502
        %v4949 = vmul.f32 %v4917, %v3502
        %v4950 = vmul.f32 %v4918, %v3502
        %v4951 = vmul.f32 %v4919, %v3502
        %v4952 = vmul.f32 %v4920, %v3502
        %v4953 = vmul.f32 %v4921, %v3502
        %v4954 = vmul.f32 %v4922, %v3502
        %v4955 = vmul.f32 %v4923, %v3502
        %v4956 = vmul.f32 %v4924, %v3502
        %v4957 = vmul.f32 %v4925, %v3502
        %v4958 = vmul.f32 %v4926, %v3502
        %v4959 = vmul.f32 %v4927, %v3502
        %v4960 = vmul.f32 %v4928, %v3502
        %v4961 = vmul.f32 %v4929, %v3502
        %v4962 = vmul.f32 %v4930, %v3502
        %v4963 = vadd.f32 %v4931, %v3540
        %v4964 = vadd.f32 %v4932, %v3540
        %v4965 = vadd.f32 %v4933, %v3540
        %v4966 = vadd.f32 %v4934, %v3540
        %v4967 = vadd.f32 %v4935, %v3540
        %v4968 = vadd.f32 %v4936, %v3540
        %v4969 = vadd.f32 %v4937, %v3540
        %v4970 = vadd.f32 %v4938, %v3540
        %v4971 = vadd.f32 %v4939, %v3540
        %v4972 = vadd.f32 %v4940, %v3540
        %v4973 = vadd.f32 %v4941, %v3540
        %v4974 = vadd.f32 %v4942, %v3540
        %v4975 = vadd.f32 %v4943, %v3540
        %v4976 = vadd.f32 %v4944, %v3540
        %v4977 = vadd.f32 %v4945, %v3540
        %v4978 = vadd.f32 %v4946, %v3540
        %v4979 = vadd.f32 %v4947, %v3540
        %v4980 = vadd.f32 %v4948, %v3540
        %v4981 = vadd.f32 %v4949, %v3540
        %v4982 = vadd.f32 %v4950, %v3540
        %v4983 = vadd.f32 %v4951, %v3540
        %v4984 = vadd.f32 %v4952, %v3540
        %v4985 = vadd.f32 %v4953, %v3540
        %v4986 = vadd.f32 %v4954, %v3540
        %v4987 = vadd.f32 %v4955, %v3540
        %v4988 = vadd.f32 %v4956, %v3540
        %v4989 = vadd.f32 %v4957, %v3540
        %v4990 = vadd.f32 %v4958, %v3540
        %v4991 = vadd.f32 %v4959, %v3540
        %v4992 = vadd.f32 %v4960, %v3540
        %v4993 = vadd.f32 %v4961, %v3540
        %v4994 = vadd.f32 %v4962, %v3540
        %s4995 = scalar_lea.vmem %s271, 256
        %4996 = vst.msk [vmem:[%s4995] sm:$0xff] %vm272, %v4963
        %4997 = vst.msk [vmem:[%s4995 + $0x8] sm:$0xff] %vm272, %v4964
        %4998 = vst.msk [vmem:[%s4995 + $0x10] sm:$0xff] %vm272, %v4965
        %4999 = vst.msk [vmem:[%s4995 + $0x18] sm:$0xff] %vm272, %v4966
        %5000 = vst.msk [vmem:[%s4995 + $0x20] sm:$0xff] %vm272, %v4967
        %5001 = vst.msk [vmem:[%s4995 + $0x28] sm:$0xff] %vm272, %v4968
        %5002 = vst.msk [vmem:[%s4995 + $0x30] sm:$0xff] %vm272, %v4969
        %5003 = vst.msk [vmem:[%s4995 + $0x38] sm:$0xff] %vm272, %v4970
        %5004 = vst.msk [vmem:[%s4995 + $0x40] sm:$0xff] %vm272, %v4971
        %5005 = vst.msk [vmem:[%s4995 + $0x48] sm:$0xff] %vm272, %v4972
        %5006 = vst.msk [vmem:[%s4995 + $0x50] sm:$0xff] %vm272, %v4973
        %5007 = vst.msk [vmem:[%s4995 + $0x58] sm:$0xff] %vm272, %v4974
        %5008 = vst.msk [vmem:[%s4995 + $0x60] sm:$0xff] %vm272, %v4975
        %5009 = vst.msk [vmem:[%s4995 + $0x68] sm:$0xff] %vm272, %v4976
        %5010 = vst.msk [vmem:[%s4995 + $0x70] sm:$0xff] %vm272, %v4977
        %5011 = vst.msk [vmem:[%s4995 + $0x78] sm:$0xff] %vm272, %v4978
        %5012 = vst.msk [vmem:[%s4995 + $0x80] sm:$0xff] %vm272, %v4979
        %5013 = vst.msk [vmem:[%s4995 + $0x88] sm:$0xff] %vm272, %v4980
        %5014 = vst.msk [vmem:[%s4995 + $0x90] sm:$0xff] %vm272, %v4981
        %5015 = vst.msk [vmem:[%s4995 + $0x98] sm:$0xff] %vm272, %v4982
        %5016 = vst.msk [vmem:[%s4995 + $0xa0] sm:$0xff] %vm272, %v4983
        %5017 = vst.msk [vmem:[%s4995 + $0xa8] sm:$0xff] %vm272, %v4984
        %5018 = vst.msk [vmem:[%s4995 + $0xb0] sm:$0xff] %vm272, %v4985
        %5019 = vst.msk [vmem:[%s4995 + $0xb8] sm:$0xff] %vm272, %v4986
        %5020 = vst.msk [vmem:[%s4995 + $0xc0] sm:$0xff] %vm272, %v4987
        %5021 = vst.msk [vmem:[%s4995 + $0xc8] sm:$0xff] %vm272, %v4988
        %5022 = vst.msk [vmem:[%s4995 + $0xd0] sm:$0xff] %vm272, %v4989
        %5023 = vst.msk [vmem:[%s4995 + $0xd8] sm:$0xff] %vm272, %v4990
        %5024 = vst.msk [vmem:[%s4995 + $0xe0] sm:$0xff] %vm272, %v4991
        %5025 = vst.msk [vmem:[%s4995 + $0xe8] sm:$0xff] %vm272, %v4992
        %5026 = vst.msk [vmem:[%s4995 + $0xf0] sm:$0xff] %vm272, %v4993
        %5027 = vst.msk [vmem:[%s4995 + $0xf8] sm:$0xff] %vm272, %v4994
        %v5028 = vld [vmem:[%s3] sm:$0x1]
        %v5029 = vld [vmem:[%s1879] sm:$0xff]
        %v5030 = vld [vmem:[%s1879 + $0x8] sm:$0xff]
        %v5031 = vld [vmem:[%s1879 + $0x18] sm:$0xff]
        %v5032 = vld [vmem:[%s1879 + $0x20] sm:$0xff]
        %v5033 = vld [vmem:[%s1879 + $0x30] sm:$0xff]
        %v5034 = vld [vmem:[%s1879 + $0x38] sm:$0xff]
        %v5035 = vld [vmem:[%s1879 + $0x48] sm:$0xff]
        %v5036 = vld [vmem:[%s1879 + $0x50] sm:$0xff]
        %v5037 = vld [vmem:[%s1879 + $0x60] sm:$0xff]
        %v5038 = vld [vmem:[%s1879 + $0x68] sm:$0xff]
        %v5039 = vld [vmem:[%s1879 + $0x78] sm:$0xff]
        %v5040 = vld [vmem:[%s1879 + $0x80] sm:$0xff]
        %v5041 = vld [vmem:[%s1879 + $0x90] sm:$0xff]
        %v5042 = vld [vmem:[%s1879 + $0x98] sm:$0xff]
        %v5043 = vld [vmem:[%s1879 + $0xa8] sm:$0xff]
        %v5044 = vld [vmem:[%s1879 + $0xb0] sm:$0xff]
        %v5045 = vld [vmem:[%s1879 + $0xc0] sm:$0xff]
        %v5046 = vld [vmem:[%s1879 + $0xc8] sm:$0xff]
        %v5047 = vld [vmem:[%s1879 + $0xd8] sm:$0xff]
        %v5048 = vld [vmem:[%s1879 + $0xe0] sm:$0xff]
        %v5049 = vld [vmem:[%s1879 + $0xf0] sm:$0xff]
        %v5050 = vld [vmem:[%s1879 + $0xf8] sm:$0xff]
        %v5051 = vld [vmem:[%s1879 + $0x108] sm:$0xff]
        %v5052 = vld [vmem:[%s1879 + $0x110] sm:$0xff]
        %v5053 = vld [vmem:[%s1879 + $0x120] sm:$0xff]
        %v5054 = vld [vmem:[%s1879 + $0x128] sm:$0xff]
        %v5055 = vld [vmem:[%s1879 + $0x138] sm:$0xff]
        %v5056 = vld [vmem:[%s1879 + $0x140] sm:$0xff]
        %v5057 = vld [vmem:[%s1879 + $0x150] sm:$0xff]
        %v5058 = vld [vmem:[%s1879 + $0x158] sm:$0xff]
        %v5059 = vld [vmem:[%s1879 + $0x168] sm:$0xff]
        %v5060 = vld [vmem:[%s1879 + $0x170] sm:$0xff]
        %v5061 = vlaneseq
        %v5062 = vshrl.u32 %v5061, 7
        %v5063 = vsub.s32 0, %v5062
        %v5064 = vrot.slane %v5028, %v5063
        %v5065 = vmul.f32 %v5029, %v5064
        %v5066 = vmul.f32 %v5030, %v5064
        %v5067 = vmul.f32 %v5031, %v5064
        %v5068 = vmul.f32 %v5032, %v5064
        %v5069 = vmul.f32 %v5033, %v5064
        %v5070 = vmul.f32 %v5034, %v5064
        %v5071 = vmul.f32 %v5035, %v5064
        %v5072 = vmul.f32 %v5036, %v5064
        %v5073 = vmul.f32 %v5037, %v5064
        %v5074 = vmul.f32 %v5038, %v5064
        %v5075 = vmul.f32 %v5039, %v5064
        %v5076 = vmul.f32 %v5040, %v5064
        %v5077 = vmul.f32 %v5041, %v5064
        %v5078 = vmul.f32 %v5042, %v5064
        %v5079 = vmul.f32 %v5043, %v5064
        %v5080 = vmul.f32 %v5044, %v5064
        %v5081 = vmul.f32 %v5045, %v5064
        %v5082 = vmul.f32 %v5046, %v5064
        %v5083 = vmul.f32 %v5047, %v5064
        %v5084 = vmul.f32 %v5048, %v5064
        %v5085 = vmul.f32 %v5049, %v5064
        %v5086 = vmul.f32 %v5050, %v5064
        %v5087 = vmul.f32 %v5051, %v5064
        %v5088 = vmul.f32 %v5052, %v5064
        %v5089 = vmul.f32 %v5053, %v5064
        %v5090 = vmul.f32 %v5054, %v5064
        %v5091 = vmul.f32 %v5055, %v5064
        %v5092 = vmul.f32 %v5056, %v5064
        %v5093 = vmul.f32 %v5057, %v5064
        %v5094 = vmul.f32 %v5058, %v5064
        %v5095 = vmul.f32 %v5059, %v5064
        %v5096 = vmul.f32 %v5060, %v5064
        %v5097 = vadd.f32 %v5065, 0.0
        %v5098 = vadd.f32 %v5066, 0.0
        %v5099 = vadd.f32 %v5067, 0.0
        %v5100 = vadd.f32 %v5068, 0.0
        %v5101 = vadd.f32 %v5069, 0.0
        %v5102 = vadd.f32 %v5070, 0.0
        %v5103 = vadd.f32 %v5071, 0.0
        %v5104 = vadd.f32 %v5072, 0.0
        %v5105 = vadd.f32 %v5073, 0.0
        %v5106 = vadd.f32 %v5074, 0.0
        %v5107 = vadd.f32 %v5075, 0.0
        %v5108 = vadd.f32 %v5076, 0.0
        %v5109 = vadd.f32 %v5077, 0.0
        %v5110 = vadd.f32 %v5078, 0.0
        %v5111 = vadd.f32 %v5079, 0.0
        %v5112 = vadd.f32 %v5080, 0.0
        %v5113 = vadd.f32 %v5081, 0.0
        %v5114 = vadd.f32 %v5082, 0.0
        %v5115 = vadd.f32 %v5083, 0.0
        %v5116 = vadd.f32 %v5084, 0.0
        %v5117 = vadd.f32 %v5085, 0.0
        %v5118 = vadd.f32 %v5086, 0.0
        %v5119 = vadd.f32 %v5087, 0.0
        %v5120 = vadd.f32 %v5088, 0.0
        %v5121 = vadd.f32 %v5089, 0.0
        %v5122 = vadd.f32 %v5090, 0.0
        %v5123 = vadd.f32 %v5091, 0.0
        %v5124 = vadd.f32 %v5092, 0.0
        %v5125 = vadd.f32 %v5093, 0.0
        %v5126 = vadd.f32 %v5094, 0.0
        %v5127 = vadd.f32 %v5095, 0.0
        %v5128 = vadd.f32 %v5096, 0.0
        %v5129 = vld [vmem:[%s3 + $0x1] sm:$0x1]
        %v5130 = vld [vmem:[%s1718 + $0x1] sm:$0xff]
        %v5131 = vld [vmem:[%s1718 + $0x9] sm:$0xff]
        %v5132 = vld [vmem:[%s1718 + $0x19] sm:$0xff]
        %v5133 = vld [vmem:[%s1718 + $0x21] sm:$0xff]
        %v5134 = vld [vmem:[%s1718 + $0x31] sm:$0xff]
        %v5135 = vld [vmem:[%s1718 + $0x39] sm:$0xff]
        %v5136 = vld [vmem:[%s1718 + $0x49] sm:$0xff]
        %v5137 = vld [vmem:[%s1718 + $0x51] sm:$0xff]
        %v5138 = vld [vmem:[%s1718 + $0x61] sm:$0xff]
        %v5139 = vld [vmem:[%s1718 + $0x69] sm:$0xff]
        %v5140 = vld [vmem:[%s1718 + $0x79] sm:$0xff]
        %v5141 = vld [vmem:[%s1718 + $0x81] sm:$0xff]
        %v5142 = vld [vmem:[%s1718 + $0x91] sm:$0xff]
        %v5143 = vld [vmem:[%s1718 + $0x99] sm:$0xff]
        %v5144 = vld [vmem:[%s1718 + $0xa9] sm:$0xff]
        %v5145 = vld [vmem:[%s1718 + $0xb1] sm:$0xff]
        %v5146 = vld [vmem:[%s1718 + $0xc1] sm:$0xff]
        %v5147 = vld [vmem:[%s1718 + $0xc9] sm:$0xff]
        %v5148 = vld [vmem:[%s1718 + $0xd9] sm:$0xff]
        %v5149 = vld [vmem:[%s1718 + $0xe1] sm:$0xff]
        %v5150 = vld [vmem:[%s1718 + $0xf1] sm:$0xff]
        %v5151 = vld [vmem:[%s1718 + $0xf9] sm:$0xff]
        %v5152 = vld [vmem:[%s1718 + $0x109] sm:$0xff]
        %v5153 = vld [vmem:[%s1718 + $0x111] sm:$0xff]
        %v5154 = vld [vmem:[%s1718 + $0x121] sm:$0xff]
        %v5155 = vld [vmem:[%s1718 + $0x129] sm:$0xff]
        %v5156 = vld [vmem:[%s1718 + $0x139] sm:$0xff]
        %v5157 = vld [vmem:[%s1718 + $0x141] sm:$0xff]
        %v5158 = vld [vmem:[%s1718 + $0x151] sm:$0xff]
        %v5159 = vld [vmem:[%s1718 + $0x159] sm:$0xff]
        %v5160 = vld [vmem:[%s1718 + $0x169] sm:$0xff]
        %v5161 = vld [vmem:[%s1718 + $0x171] sm:$0xff]
        %v5162 = vlaneseq
        %v5163 = vshrl.u32 %v5162, 7
        %v5164 = vsub.s32 0, %v5163
        %v5165 = vrot.slane %v5129, %v5164
        %v5166 = vmul.f32 %v5130, %v5165
        %v5167 = vmul.f32 %v5131, %v5165
        %v5168 = vmul.f32 %v5132, %v5165
        %v5169 = vmul.f32 %v5133, %v5165
        %v5170 = vmul.f32 %v5134, %v5165
        %v5171 = vmul.f32 %v5135, %v5165
        %v5172 = vmul.f32 %v5136, %v5165
        %v5173 = vmul.f32 %v5137, %v5165
        %v5174 = vmul.f32 %v5138, %v5165
        %v5175 = vmul.f32 %v5139, %v5165
        %v5176 = vmul.f32 %v5140, %v5165
        %v5177 = vmul.f32 %v5141, %v5165
        %v5178 = vmul.f32 %v5142, %v5165
        %v5179 = vmul.f32 %v5143, %v5165
        %v5180 = vmul.f32 %v5144, %v5165
        %v5181 = vmul.f32 %v5145, %v5165
        %v5182 = vmul.f32 %v5146, %v5165
        %v5183 = vmul.f32 %v5147, %v5165
        %v5184 = vmul.f32 %v5148, %v5165
        %v5185 = vmul.f32 %v5149, %v5165
        %v5186 = vmul.f32 %v5150, %v5165
        %v5187 = vmul.f32 %v5151, %v5165
        %v5188 = vmul.f32 %v5152, %v5165
        %v5189 = vmul.f32 %v5153, %v5165
        %v5190 = vmul.f32 %v5154, %v5165
        %v5191 = vmul.f32 %v5155, %v5165
        %v5192 = vmul.f32 %v5156, %v5165
        %v5193 = vmul.f32 %v5157, %v5165
        %v5194 = vmul.f32 %v5158, %v5165
        %v5195 = vmul.f32 %v5159, %v5165
        %v5196 = vmul.f32 %v5160, %v5165
        %v5197 = vmul.f32 %v5161, %v5165
        %v5198 = vadd.f32 %v5097, %v5166
        %v5199 = vadd.f32 %v5098, %v5167
        %v5200 = vadd.f32 %v5099, %v5168
        %v5201 = vadd.f32 %v5100, %v5169
        %v5202 = vadd.f32 %v5101, %v5170
        %v5203 = vadd.f32 %v5102, %v5171
        %v5204 = vadd.f32 %v5103, %v5172
        %v5205 = vadd.f32 %v5104, %v5173
        %v5206 = vadd.f32 %v5105, %v5174
        %v5207 = vadd.f32 %v5106, %v5175
        %v5208 = vadd.f32 %v5107, %v5176
        %v5209 = vadd.f32 %v5108, %v5177
        %v5210 = vadd.f32 %v5109, %v5178
        %v5211 = vadd.f32 %v5110, %v5179
        %v5212 = vadd.f32 %v5111, %v5180
        %v5213 = vadd.f32 %v5112, %v5181
        %v5214 = vadd.f32 %v5113, %v5182
        %v5215 = vadd.f32 %v5114, %v5183
        %v5216 = vadd.f32 %v5115, %v5184
        %v5217 = vadd.f32 %v5116, %v5185
        %v5218 = vadd.f32 %v5117, %v5186
        %v5219 = vadd.f32 %v5118, %v5187
        %v5220 = vadd.f32 %v5119, %v5188
        %v5221 = vadd.f32 %v5120, %v5189
        %v5222 = vadd.f32 %v5121, %v5190
        %v5223 = vadd.f32 %v5122, %v5191
        %v5224 = vadd.f32 %v5123, %v5192
        %v5225 = vadd.f32 %v5124, %v5193
        %v5226 = vadd.f32 %v5125, %v5194
        %v5227 = vadd.f32 %v5126, %v5195
        %v5228 = vadd.f32 %v5127, %v5196
        %v5229 = vadd.f32 %v5128, %v5197
        %v5230 = vld [vmem:[%s3 + $0x2] sm:$0x1]
        %v5231 = vld [vmem:[%s1879 + $0x1] sm:$0xff]
        %v5232 = vld [vmem:[%s1879 + $0x9] sm:$0xff]
        %v5233 = vld [vmem:[%s1879 + $0x19] sm:$0xff]
        %v5234 = vld [vmem:[%s1879 + $0x21] sm:$0xff]
        %v5235 = vld [vmem:[%s1879 + $0x31] sm:$0xff]
        %v5236 = vld [vmem:[%s1879 + $0x39] sm:$0xff]
        %v5237 = vld [vmem:[%s1879 + $0x49] sm:$0xff]
        %v5238 = vld [vmem:[%s1879 + $0x51] sm:$0xff]
        %v5239 = vld [vmem:[%s1879 + $0x61] sm:$0xff]
        %v5240 = vld [vmem:[%s1879 + $0x69] sm:$0xff]
        %v5241 = vld [vmem:[%s1879 + $0x79] sm:$0xff]
        %v5242 = vld [vmem:[%s1879 + $0x81] sm:$0xff]
        %v5243 = vld [vmem:[%s1879 + $0x91] sm:$0xff]
        %v5244 = vld [vmem:[%s1879 + $0x99] sm:$0xff]
        %v5245 = vld [vmem:[%s1879 + $0xa9] sm:$0xff]
        %v5246 = vld [vmem:[%s1879 + $0xb1] sm:$0xff]
        %v5247 = vld [vmem:[%s1879 + $0xc1] sm:$0xff]
        %v5248 = vld [vmem:[%s1879 + $0xc9] sm:$0xff]
        %v5249 = vld [vmem:[%s1879 + $0xd9] sm:$0xff]
        %v5250 = vld [vmem:[%s1879 + $0xe1] sm:$0xff]
        %v5251 = vld [vmem:[%s1879 + $0xf1] sm:$0xff]
        %v5252 = vld [vmem:[%s1879 + $0xf9] sm:$0xff]
        %v5253 = vld [vmem:[%s1879 + $0x109] sm:$0xff]
        %v5254 = vld [vmem:[%s1879 + $0x111] sm:$0xff]
        %v5255 = vld [vmem:[%s1879 + $0x121] sm:$0xff]
        %v5256 = vld [vmem:[%s1879 + $0x129] sm:$0xff]
        %v5257 = vld [vmem:[%s1879 + $0x139] sm:$0xff]
        %v5258 = vld [vmem:[%s1879 + $0x141] sm:$0xff]
        %v5259 = vld [vmem:[%s1879 + $0x151] sm:$0xff]
        %v5260 = vld [vmem:[%s1879 + $0x159] sm:$0xff]
        %v5261 = vld [vmem:[%s1879 + $0x169] sm:$0xff]
        %v5262 = vld [vmem:[%s1879 + $0x171] sm:$0xff]
        %v5263 = vlaneseq
        %v5264 = vshrl.u32 %v5263, 7
        %v5265 = vsub.s32 0, %v5264
        %v5266 = vrot.slane %v5230, %v5265
        %v5267 = vmul.f32 %v5231, %v5266
        %v5268 = vmul.f32 %v5232, %v5266
        %v5269 = vmul.f32 %v5233, %v5266
        %v5270 = vmul.f32 %v5234, %v5266
        %v5271 = vmul.f32 %v5235, %v5266
        %v5272 = vmul.f32 %v5236, %v5266
        %v5273 = vmul.f32 %v5237, %v5266
        %v5274 = vmul.f32 %v5238, %v5266
        %v5275 = vmul.f32 %v5239, %v5266
        %v5276 = vmul.f32 %v5240, %v5266
        %v5277 = vmul.f32 %v5241, %v5266
        %v5278 = vmul.f32 %v5242, %v5266
        %v5279 = vmul.f32 %v5243, %v5266
        %v5280 = vmul.f32 %v5244, %v5266
        %v5281 = vmul.f32 %v5245, %v5266
        %v5282 = vmul.f32 %v5246, %v5266
        %v5283 = vmul.f32 %v5247, %v5266
        %v5284 = vmul.f32 %v5248, %v5266
        %v5285 = vmul.f32 %v5249, %v5266
        %v5286 = vmul.f32 %v5250, %v5266
        %v5287 = vmul.f32 %v5251, %v5266
        %v5288 = vmul.f32 %v5252, %v5266
        %v5289 = vmul.f32 %v5253, %v5266
        %v5290 = vmul.f32 %v5254, %v5266
        %v5291 = vmul.f32 %v5255, %v5266
        %v5292 = vmul.f32 %v5256, %v5266
        %v5293 = vmul.f32 %v5257, %v5266
        %v5294 = vmul.f32 %v5258, %v5266
        %v5295 = vmul.f32 %v5259, %v5266
        %v5296 = vmul.f32 %v5260, %v5266
        %v5297 = vmul.f32 %v5261, %v5266
        %v5298 = vmul.f32 %v5262, %v5266
        %v5299 = vadd.f32 %v5198, %v5267
        %v5300 = vadd.f32 %v5199, %v5268
        %v5301 = vadd.f32 %v5200, %v5269
        %v5302 = vadd.f32 %v5201, %v5270
        %v5303 = vadd.f32 %v5202, %v5271
        %v5304 = vadd.f32 %v5203, %v5272
        %v5305 = vadd.f32 %v5204, %v5273
        %v5306 = vadd.f32 %v5205, %v5274
        %v5307 = vadd.f32 %v5206, %v5275
        %v5308 = vadd.f32 %v5207, %v5276
        %v5309 = vadd.f32 %v5208, %v5277
        %v5310 = vadd.f32 %v5209, %v5278
        %v5311 = vadd.f32 %v5210, %v5279
        %v5312 = vadd.f32 %v5211, %v5280
        %v5313 = vadd.f32 %v5212, %v5281
        %v5314 = vadd.f32 %v5213, %v5282
        %v5315 = vadd.f32 %v5214, %v5283
        %v5316 = vadd.f32 %v5215, %v5284
        %v5317 = vadd.f32 %v5216, %v5285
        %v5318 = vadd.f32 %v5217, %v5286
        %v5319 = vadd.f32 %v5218, %v5287
        %v5320 = vadd.f32 %v5219, %v5288
        %v5321 = vadd.f32 %v5220, %v5289
        %v5322 = vadd.f32 %v5221, %v5290
        %v5323 = vadd.f32 %v5222, %v5291
        %v5324 = vadd.f32 %v5223, %v5292
        %v5325 = vadd.f32 %v5224, %v5293
        %v5326 = vadd.f32 %v5225, %v5294
        %v5327 = vadd.f32 %v5226, %v5295
        %v5328 = vadd.f32 %v5227, %v5296
        %v5329 = vadd.f32 %v5228, %v5297
        %v5330 = vadd.f32 %v5229, %v5298
        %v5331 = vld [vmem:[%s3 + $0x3] sm:$0x1]
        %v5332 = vld [vmem:[%s2137] sm:$0xff]
        %v5333 = vld [vmem:[%s2137 + $0x8] sm:$0xff]
        %v5334 = vld [vmem:[%s2137 + $0x18] sm:$0xff]
        %v5335 = vld [vmem:[%s2137 + $0x20] sm:$0xff]
        %v5336 = vld [vmem:[%s2137 + $0x30] sm:$0xff]
        %v5337 = vld [vmem:[%s2137 + $0x38] sm:$0xff]
        %v5338 = vld [vmem:[%s2137 + $0x48] sm:$0xff]
        %v5339 = vld [vmem:[%s2137 + $0x50] sm:$0xff]
        %v5340 = vld [vmem:[%s2137 + $0x60] sm:$0xff]
        %v5341 = vld [vmem:[%s2137 + $0x68] sm:$0xff]
        %v5342 = vld [vmem:[%s2137 + $0x78] sm:$0xff]
        %v5343 = vld [vmem:[%s2137 + $0x80] sm:$0xff]
        %v5344 = vld [vmem:[%s2137 + $0x90] sm:$0xff]
        %v5345 = vld [vmem:[%s2137 + $0x98] sm:$0xff]
        %v5346 = vld [vmem:[%s2137 + $0xa8] sm:$0xff]
        %v5347 = vld [vmem:[%s2137 + $0xb0] sm:$0xff]
        %v5348 = vld [vmem:[%s2137 + $0xc0] sm:$0xff]
        %v5349 = vld [vmem:[%s2137 + $0xc8] sm:$0xff]
        %v5350 = vld [vmem:[%s2137 + $0xd8] sm:$0xff]
        %v5351 = vld [vmem:[%s2137 + $0xe0] sm:$0xff]
        %v5352 = vld [vmem:[%s2137 + $0xf0] sm:$0xff]
        %v5353 = vld [vmem:[%s2137 + $0xf8] sm:$0xff]
        %v5354 = vld [vmem:[%s2137 + $0x108] sm:$0xff]
        %v5355 = vld [vmem:[%s2137 + $0x110] sm:$0xff]
        %v5356 = vld [vmem:[%s2137 + $0x120] sm:$0xff]
        %v5357 = vld [vmem:[%s2137 + $0x128] sm:$0xff]
        %v5358 = vld [vmem:[%s2137 + $0x138] sm:$0xff]
        %v5359 = vld [vmem:[%s2137 + $0x140] sm:$0xff]
        %v5360 = vld [vmem:[%s2137 + $0x150] sm:$0xff]
        %v5361 = vld [vmem:[%s2137 + $0x158] sm:$0xff]
        %v5362 = vld [vmem:[%s2137 + $0x168] sm:$0xff]
        %v5363 = vld [vmem:[%s2137 + $0x170] sm:$0xff]
        %v5364 = vlaneseq
        %v5365 = vshrl.u32 %v5364, 7
        %v5366 = vsub.s32 0, %v5365
        %v5367 = vrot.slane %v5331, %v5366
        %v5368 = vmul.f32 %v5332, %v5367
        %v5369 = vmul.f32 %v5333, %v5367
        %v5370 = vmul.f32 %v5334, %v5367
        %v5371 = vmul.f32 %v5335, %v5367
        %v5372 = vmul.f32 %v5336, %v5367
        %v5373 = vmul.f32 %v5337, %v5367
        %v5374 = vmul.f32 %v5338, %v5367
        %v5375 = vmul.f32 %v5339, %v5367
        %v5376 = vmul.f32 %v5340, %v5367
        %v5377 = vmul.f32 %v5341, %v5367
        %v5378 = vmul.f32 %v5342, %v5367
        %v5379 = vmul.f32 %v5343, %v5367
        %v5380 = vmul.f32 %v5344, %v5367
        %v5381 = vmul.f32 %v5345, %v5367
        %v5382 = vmul.f32 %v5346, %v5367
        %v5383 = vmul.f32 %v5347, %v5367
        %v5384 = vmul.f32 %v5348, %v5367
        %v5385 = vmul.f32 %v5349, %v5367
        %v5386 = vmul.f32 %v5350, %v5367
        %v5387 = vmul.f32 %v5351, %v5367
        %v5388 = vmul.f32 %v5352, %v5367
        %v5389 = vmul.f32 %v5353, %v5367
        %v5390 = vmul.f32 %v5354, %v5367
        %v5391 = vmul.f32 %v5355, %v5367
        %v5392 = vmul.f32 %v5356, %v5367
        %v5393 = vmul.f32 %v5357, %v5367
        %v5394 = vmul.f32 %v5358, %v5367
        %v5395 = vmul.f32 %v5359, %v5367
        %v5396 = vmul.f32 %v5360, %v5367
        %v5397 = vmul.f32 %v5361, %v5367
        %v5398 = vmul.f32 %v5362, %v5367
        %v5399 = vmul.f32 %v5363, %v5367
        %v5400 = vadd.f32 %v5299, %v5368
        %v5401 = vadd.f32 %v5300, %v5369
        %v5402 = vadd.f32 %v5301, %v5370
        %v5403 = vadd.f32 %v5302, %v5371
        %v5404 = vadd.f32 %v5303, %v5372
        %v5405 = vadd.f32 %v5304, %v5373
        %v5406 = vadd.f32 %v5305, %v5374
        %v5407 = vadd.f32 %v5306, %v5375
        %v5408 = vadd.f32 %v5307, %v5376
        %v5409 = vadd.f32 %v5308, %v5377
        %v5410 = vadd.f32 %v5309, %v5378
        %v5411 = vadd.f32 %v5310, %v5379
        %v5412 = vadd.f32 %v5311, %v5380
        %v5413 = vadd.f32 %v5312, %v5381
        %v5414 = vadd.f32 %v5313, %v5382
        %v5415 = vadd.f32 %v5314, %v5383
        %v5416 = vadd.f32 %v5315, %v5384
        %v5417 = vadd.f32 %v5316, %v5385
        %v5418 = vadd.f32 %v5317, %v5386
        %v5419 = vadd.f32 %v5318, %v5387
        %v5420 = vadd.f32 %v5319, %v5388
        %v5421 = vadd.f32 %v5320, %v5389
        %v5422 = vadd.f32 %v5321, %v5390
        %v5423 = vadd.f32 %v5322, %v5391
        %v5424 = vadd.f32 %v5323, %v5392
        %v5425 = vadd.f32 %v5324, %v5393
        %v5426 = vadd.f32 %v5325, %v5394
        %v5427 = vadd.f32 %v5326, %v5395
        %v5428 = vadd.f32 %v5327, %v5396
        %v5429 = vadd.f32 %v5328, %v5397
        %v5430 = vadd.f32 %v5329, %v5398
        %v5431 = vadd.f32 %v5330, %v5399
        %v5432 = vld [vmem:[%s3 + $0x4] sm:$0x1]
        %v5433 = vld [vmem:[%s2008 + $0x1] sm:$0xff]
        %v5434 = vld [vmem:[%s2008 + $0x9] sm:$0xff]
        %v5435 = vld [vmem:[%s2008 + $0x19] sm:$0xff]
        %v5436 = vld [vmem:[%s2008 + $0x21] sm:$0xff]
        %v5437 = vld [vmem:[%s2008 + $0x31] sm:$0xff]
        %v5438 = vld [vmem:[%s2008 + $0x39] sm:$0xff]
        %v5439 = vld [vmem:[%s2008 + $0x49] sm:$0xff]
        %v5440 = vld [vmem:[%s2008 + $0x51] sm:$0xff]
        %v5441 = vld [vmem:[%s2008 + $0x61] sm:$0xff]
        %v5442 = vld [vmem:[%s2008 + $0x69] sm:$0xff]
        %v5443 = vld [vmem:[%s2008 + $0x79] sm:$0xff]
        %v5444 = vld [vmem:[%s2008 + $0x81] sm:$0xff]
        %v5445 = vld [vmem:[%s2008 + $0x91] sm:$0xff]
        %v5446 = vld [vmem:[%s2008 + $0x99] sm:$0xff]
        %v5447 = vld [vmem:[%s2008 + $0xa9] sm:$0xff]
        %v5448 = vld [vmem:[%s2008 + $0xb1] sm:$0xff]
        %v5449 = vld [vmem:[%s2008 + $0xc1] sm:$0xff]
        %v5450 = vld [vmem:[%s2008 + $0xc9] sm:$0xff]
        %v5451 = vld [vmem:[%s2008 + $0xd9] sm:$0xff]
        %v5452 = vld [vmem:[%s2008 + $0xe1] sm:$0xff]
        %v5453 = vld [vmem:[%s2008 + $0xf1] sm:$0xff]
        %v5454 = vld [vmem:[%s2008 + $0xf9] sm:$0xff]
        %v5455 = vld [vmem:[%s2008 + $0x109] sm:$0xff]
        %v5456 = vld [vmem:[%s2008 + $0x111] sm:$0xff]
        %v5457 = vld [vmem:[%s2008 + $0x121] sm:$0xff]
        %v5458 = vld [vmem:[%s2008 + $0x129] sm:$0xff]
        %v5459 = vld [vmem:[%s2008 + $0x139] sm:$0xff]
        %v5460 = vld [vmem:[%s2008 + $0x141] sm:$0xff]
        %v5461 = vld [vmem:[%s2008 + $0x151] sm:$0xff]
        %v5462 = vld [vmem:[%s2008 + $0x159] sm:$0xff]
        %v5463 = vld [vmem:[%s2008 + $0x169] sm:$0xff]
        %v5464 = vld [vmem:[%s2008 + $0x171] sm:$0xff]
        %v5465 = vlaneseq
        %v5466 = vshrl.u32 %v5465, 7
        %v5467 = vsub.s32 0, %v5466
        %v5468 = vrot.slane %v5432, %v5467
        %v5469 = vmul.f32 %v5433, %v5468
        %v5470 = vmul.f32 %v5434, %v5468
        %v5471 = vmul.f32 %v5435, %v5468
        %v5472 = vmul.f32 %v5436, %v5468
        %v5473 = vmul.f32 %v5437, %v5468
        %v5474 = vmul.f32 %v5438, %v5468
        %v5475 = vmul.f32 %v5439, %v5468
        %v5476 = vmul.f32 %v5440, %v5468
        %v5477 = vmul.f32 %v5441, %v5468
        %v5478 = vmul.f32 %v5442, %v5468
        %v5479 = vmul.f32 %v5443, %v5468
        %v5480 = vmul.f32 %v5444, %v5468
        %v5481 = vmul.f32 %v5445, %v5468
        %v5482 = vmul.f32 %v5446, %v5468
        %v5483 = vmul.f32 %v5447, %v5468
        %v5484 = vmul.f32 %v5448, %v5468
        %v5485 = vmul.f32 %v5449, %v5468
        %v5486 = vmul.f32 %v5450, %v5468
        %v5487 = vmul.f32 %v5451, %v5468
        %v5488 = vmul.f32 %v5452, %v5468
        %v5489 = vmul.f32 %v5453, %v5468
        %v5490 = vmul.f32 %v5454, %v5468
        %v5491 = vmul.f32 %v5455, %v5468
        %v5492 = vmul.f32 %v5456, %v5468
        %v5493 = vmul.f32 %v5457, %v5468
        %v5494 = vmul.f32 %v5458, %v5468
        %v5495 = vmul.f32 %v5459, %v5468
        %v5496 = vmul.f32 %v5460, %v5468
        %v5497 = vmul.f32 %v5461, %v5468
        %v5498 = vmul.f32 %v5462, %v5468
        %v5499 = vmul.f32 %v5463, %v5468
        %v5500 = vmul.f32 %v5464, %v5468
        %v5501 = vadd.f32 %v5400, %v5469
        %v5502 = vadd.f32 %v5401, %v5470
        %v5503 = vadd.f32 %v5402, %v5471
        %v5504 = vadd.f32 %v5403, %v5472
        %v5505 = vadd.f32 %v5404, %v5473
        %v5506 = vadd.f32 %v5405, %v5474
        %v5507 = vadd.f32 %v5406, %v5475
        %v5508 = vadd.f32 %v5407, %v5476
        %v5509 = vadd.f32 %v5408, %v5477
        %v5510 = vadd.f32 %v5409, %v5478
        %v5511 = vadd.f32 %v5410, %v5479
        %v5512 = vadd.f32 %v5411, %v5480
        %v5513 = vadd.f32 %v5412, %v5481
        %v5514 = vadd.f32 %v5413, %v5482
        %v5515 = vadd.f32 %v5414, %v5483
        %v5516 = vadd.f32 %v5415, %v5484
        %v5517 = vadd.f32 %v5416, %v5485
        %v5518 = vadd.f32 %v5417, %v5486
        %v5519 = vadd.f32 %v5418, %v5487
        %v5520 = vadd.f32 %v5419, %v5488
        %v5521 = vadd.f32 %v5420, %v5489
        %v5522 = vadd.f32 %v5421, %v5490
        %v5523 = vadd.f32 %v5422, %v5491
        %v5524 = vadd.f32 %v5423, %v5492
        %v5525 = vadd.f32 %v5424, %v5493
        %v5526 = vadd.f32 %v5425, %v5494
        %v5527 = vadd.f32 %v5426, %v5495
        %v5528 = vadd.f32 %v5427, %v5496
        %v5529 = vadd.f32 %v5428, %v5497
        %v5530 = vadd.f32 %v5429, %v5498
        %v5531 = vadd.f32 %v5430, %v5499
        %v5532 = vadd.f32 %v5431, %v5500
        %v5533 = vld [vmem:[%s3 + $0x5] sm:$0x1]
        %v5534 = vld [vmem:[%s2137 + $0x1] sm:$0xff]
        %v5535 = vld [vmem:[%s2137 + $0x9] sm:$0xff]
        %v5536 = vld [vmem:[%s2137 + $0x19] sm:$0xff]
        %v5537 = vld [vmem:[%s2137 + $0x21] sm:$0xff]
        %v5538 = vld [vmem:[%s2137 + $0x31] sm:$0xff]
        %v5539 = vld [vmem:[%s2137 + $0x39] sm:$0xff]
        %v5540 = vld [vmem:[%s2137 + $0x49] sm:$0xff]
        %v5541 = vld [vmem:[%s2137 + $0x51] sm:$0xff]
        %v5542 = vld [vmem:[%s2137 + $0x61] sm:$0xff]
        %v5543 = vld [vmem:[%s2137 + $0x69] sm:$0xff]
        %v5544 = vld [vmem:[%s2137 + $0x79] sm:$0xff]
        %v5545 = vld [vmem:[%s2137 + $0x81] sm:$0xff]
        %v5546 = vld [vmem:[%s2137 + $0x91] sm:$0xff]
        %v5547 = vld [vmem:[%s2137 + $0x99] sm:$0xff]
        %v5548 = vld [vmem:[%s2137 + $0xa9] sm:$0xff]
        %v5549 = vld [vmem:[%s2137 + $0xb1] sm:$0xff]
        %v5550 = vld [vmem:[%s2137 + $0xc1] sm:$0xff]
        %v5551 = vld [vmem:[%s2137 + $0xc9] sm:$0xff]
        %v5552 = vld [vmem:[%s2137 + $0xd9] sm:$0xff]
        %v5553 = vld [vmem:[%s2137 + $0xe1] sm:$0xff]
        %v5554 = vld [vmem:[%s2137 + $0xf1] sm:$0xff]
        %v5555 = vld [vmem:[%s2137 + $0xf9] sm:$0xff]
        %v5556 = vld [vmem:[%s2137 + $0x109] sm:$0xff]
        %v5557 = vld [vmem:[%s2137 + $0x111] sm:$0xff]
        %v5558 = vld [vmem:[%s2137 + $0x121] sm:$0xff]
        %v5559 = vld [vmem:[%s2137 + $0x129] sm:$0xff]
        %v5560 = vld [vmem:[%s2137 + $0x139] sm:$0xff]
        %v5561 = vld [vmem:[%s2137 + $0x141] sm:$0xff]
        %v5562 = vld [vmem:[%s2137 + $0x151] sm:$0xff]
        %v5563 = vld [vmem:[%s2137 + $0x159] sm:$0xff]
        %v5564 = vld [vmem:[%s2137 + $0x169] sm:$0xff]
        %v5565 = vld [vmem:[%s2137 + $0x171] sm:$0xff]
        %v5566 = vlaneseq
        %v5567 = vshrl.u32 %v5566, 7
        %v5568 = vsub.s32 0, %v5567
        %v5569 = vrot.slane %v5533, %v5568
        %v5570 = vmul.f32 %v5534, %v5569
        %v5571 = vmul.f32 %v5535, %v5569
        %v5572 = vmul.f32 %v5536, %v5569
        %v5573 = vmul.f32 %v5537, %v5569
        %v5574 = vmul.f32 %v5538, %v5569
        %v5575 = vmul.f32 %v5539, %v5569
        %v5576 = vmul.f32 %v5540, %v5569
        %v5577 = vmul.f32 %v5541, %v5569
        %v5578 = vmul.f32 %v5542, %v5569
        %v5579 = vmul.f32 %v5543, %v5569
        %v5580 = vmul.f32 %v5544, %v5569
        %v5581 = vmul.f32 %v5545, %v5569
        %v5582 = vmul.f32 %v5546, %v5569
        %v5583 = vmul.f32 %v5547, %v5569
        %v5584 = vmul.f32 %v5548, %v5569
        %v5585 = vmul.f32 %v5549, %v5569
        %v5586 = vmul.f32 %v5550, %v5569
        %v5587 = vmul.f32 %v5551, %v5569
        %v5588 = vmul.f32 %v5552, %v5569
        %v5589 = vmul.f32 %v5553, %v5569
        %v5590 = vmul.f32 %v5554, %v5569
        %v5591 = vmul.f32 %v5555, %v5569
        %v5592 = vmul.f32 %v5556, %v5569
        %v5593 = vmul.f32 %v5557, %v5569
        %v5594 = vmul.f32 %v5558, %v5569
        %v5595 = vmul.f32 %v5559, %v5569
        %v5596 = vmul.f32 %v5560, %v5569
        %v5597 = vmul.f32 %v5561, %v5569
        %v5598 = vmul.f32 %v5562, %v5569
        %v5599 = vmul.f32 %v5563, %v5569
        %v5600 = vmul.f32 %v5564, %v5569
        %v5601 = vmul.f32 %v5565, %v5569
        %v5602 = vadd.f32 %v5501, %v5570
        %v5603 = vadd.f32 %v5502, %v5571
        %v5604 = vadd.f32 %v5503, %v5572
        %v5605 = vadd.f32 %v5504, %v5573
        %v5606 = vadd.f32 %v5505, %v5574
        %v5607 = vadd.f32 %v5506, %v5575
        %v5608 = vadd.f32 %v5507, %v5576
        %v5609 = vadd.f32 %v5508, %v5577
        %v5610 = vadd.f32 %v5509, %v5578
        %v5611 = vadd.f32 %v5510, %v5579
        %v5612 = vadd.f32 %v5511, %v5580
        %v5613 = vadd.f32 %v5512, %v5581
        %v5614 = vadd.f32 %v5513, %v5582
        %v5615 = vadd.f32 %v5514, %v5583
        %v5616 = vadd.f32 %v5515, %v5584
        %v5617 = vadd.f32 %v5516, %v5585
        %v5618 = vadd.f32 %v5517, %v5586
        %v5619 = vadd.f32 %v5518, %v5587
        %v5620 = vadd.f32 %v5519, %v5588
        %v5621 = vadd.f32 %v5520, %v5589
        %v5622 = vadd.f32 %v5521, %v5590
        %v5623 = vadd.f32 %v5522, %v5591
        %v5624 = vadd.f32 %v5523, %v5592
        %v5625 = vadd.f32 %v5524, %v5593
        %v5626 = vadd.f32 %v5525, %v5594
        %v5627 = vadd.f32 %v5526, %v5595
        %v5628 = vadd.f32 %v5527, %v5596
        %v5629 = vadd.f32 %v5528, %v5597
        %v5630 = vadd.f32 %v5529, %v5598
        %v5631 = vadd.f32 %v5530, %v5599
        %v5632 = vadd.f32 %v5531, %v5600
        %v5633 = vadd.f32 %v5532, %v5601
        %v5634 = vld [vmem:[%s3 + $0x6] sm:$0x1]
        %s5635 = scalar_lea.vmem [#allocation3], 48
        %v5636 = vld [vmem:[%s5635] sm:$0xff]
        %v5637 = vld [vmem:[%s5635 + $0x8] sm:$0xff]
        %v5638 = vld [vmem:[%s5635 + $0x18] sm:$0xff]
        %v5639 = vld [vmem:[%s5635 + $0x20] sm:$0xff]
        %v5640 = vld [vmem:[%s5635 + $0x30] sm:$0xff]
        %v5641 = vld [vmem:[%s5635 + $0x38] sm:$0xff]
        %v5642 = vld [vmem:[%s5635 + $0x48] sm:$0xff]
        %v5643 = vld [vmem:[%s5635 + $0x50] sm:$0xff]
        %v5644 = vld [vmem:[%s5635 + $0x60] sm:$0xff]
        %v5645 = vld [vmem:[%s5635 + $0x68] sm:$0xff]
        %v5646 = vld [vmem:[%s5635 + $0x78] sm:$0xff]
        %v5647 = vld [vmem:[%s5635 + $0x80] sm:$0xff]
        %v5648 = vld [vmem:[%s5635 + $0x90] sm:$0xff]
        %v5649 = vld [vmem:[%s5635 + $0x98] sm:$0xff]
        %v5650 = vld [vmem:[%s5635 + $0xa8] sm:$0xff]
        %v5651 = vld [vmem:[%s5635 + $0xb0] sm:$0xff]
        %v5652 = vld [vmem:[%s5635 + $0xc0] sm:$0xff]
        %v5653 = vld [vmem:[%s5635 + $0xc8] sm:$0xff]
        %v5654 = vld [vmem:[%s5635 + $0xd8] sm:$0xff]
        %v5655 = vld [vmem:[%s5635 + $0xe0] sm:$0xff]
        %v5656 = vld [vmem:[%s5635 + $0xf0] sm:$0xff]
        %v5657 = vld [vmem:[%s5635 + $0xf8] sm:$0xff]
        %v5658 = vld [vmem:[%s5635 + $0x108] sm:$0xff]
        %v5659 = vld [vmem:[%s5635 + $0x110] sm:$0xff]
        %v5660 = vld [vmem:[%s5635 + $0x120] sm:$0xff]
        %v5661 = vld [vmem:[%s5635 + $0x128] sm:$0xff]
        %v5662 = vld [vmem:[%s5635 + $0x138] sm:$0xff]
        %v5663 = vld [vmem:[%s5635 + $0x140] sm:$0xff]
        %v5664 = vld [vmem:[%s5635 + $0x150] sm:$0xff]
        %v5665 = vld [vmem:[%s5635 + $0x158] sm:$0xff]
        %v5666 = vld [vmem:[%s5635 + $0x168] sm:$0xff]
        %v5667 = vld [vmem:[%s5635 + $0x170] sm:$0xff]
        %v5668 = vlaneseq
        %v5669 = vshrl.u32 %v5668, 7
        %v5670 = vsub.s32 0, %v5669
        %v5671 = vrot.slane %v5634, %v5670
        %v5672 = vmul.f32 %v5636, %v5671
        %v5673 = vmul.f32 %v5637, %v5671
        %v5674 = vmul.f32 %v5638, %v5671
        %v5675 = vmul.f32 %v5639, %v5671
        %v5676 = vmul.f32 %v5640, %v5671
        %v5677 = vmul.f32 %v5641, %v5671
        %v5678 = vmul.f32 %v5642, %v5671
        %v5679 = vmul.f32 %v5643, %v5671
        %v5680 = vmul.f32 %v5644, %v5671
        %v5681 = vmul.f32 %v5645, %v5671
        %v5682 = vmul.f32 %v5646, %v5671
        %v5683 = vmul.f32 %v5647, %v5671
        %v5684 = vmul.f32 %v5648, %v5671
        %v5685 = vmul.f32 %v5649, %v5671
        %v5686 = vmul.f32 %v5650, %v5671
        %v5687 = vmul.f32 %v5651, %v5671
        %v5688 = vmul.f32 %v5652, %v5671
        %v5689 = vmul.f32 %v5653, %v5671
        %v5690 = vmul.f32 %v5654, %v5671
        %v5691 = vmul.f32 %v5655, %v5671
        %v5692 = vmul.f32 %v5656, %v5671
        %v5693 = vmul.f32 %v5657, %v5671
        %v5694 = vmul.f32 %v5658, %v5671
        %v5695 = vmul.f32 %v5659, %v5671
        %v5696 = vmul.f32 %v5660, %v5671
        %v5697 = vmul.f32 %v5661, %v5671
        %v5698 = vmul.f32 %v5662, %v5671
        %v5699 = vmul.f32 %v5663, %v5671
        %v5700 = vmul.f32 %v5664, %v5671
        %v5701 = vmul.f32 %v5665, %v5671
        %v5702 = vmul.f32 %v5666, %v5671
        %v5703 = vmul.f32 %v5667, %v5671
        %v5704 = vadd.f32 %v5602, %v5672
        %v5705 = vadd.f32 %v5603, %v5673
        %v5706 = vadd.f32 %v5604, %v5674
        %v5707 = vadd.f32 %v5605, %v5675
        %v5708 = vadd.f32 %v5606, %v5676
        %v5709 = vadd.f32 %v5607, %v5677
        %v5710 = vadd.f32 %v5608, %v5678
        %v5711 = vadd.f32 %v5609, %v5679
        %v5712 = vadd.f32 %v5610, %v5680
        %v5713 = vadd.f32 %v5611, %v5681
        %v5714 = vadd.f32 %v5612, %v5682
        %v5715 = vadd.f32 %v5613, %v5683
        %v5716 = vadd.f32 %v5614, %v5684
        %v5717 = vadd.f32 %v5615, %v5685
        %v5718 = vadd.f32 %v5616, %v5686
        %v5719 = vadd.f32 %v5617, %v5687
        %v5720 = vadd.f32 %v5618, %v5688
        %v5721 = vadd.f32 %v5619, %v5689
        %v5722 = vadd.f32 %v5620, %v5690
        %v5723 = vadd.f32 %v5621, %v5691
        %v5724 = vadd.f32 %v5622, %v5692
        %v5725 = vadd.f32 %v5623, %v5693
        %v5726 = vadd.f32 %v5624, %v5694
        %v5727 = vadd.f32 %v5625, %v5695
        %v5728 = vadd.f32 %v5626, %v5696
        %v5729 = vadd.f32 %v5627, %v5697
        %v5730 = vadd.f32 %v5628, %v5698
        %v5731 = vadd.f32 %v5629, %v5699
        %v5732 = vadd.f32 %v5630, %v5700
        %v5733 = vadd.f32 %v5631, %v5701
        %v5734 = vadd.f32 %v5632, %v5702
        %v5735 = vadd.f32 %v5633, %v5703
        %v5736 = vld [vmem:[%s3 + $0x7] sm:$0x1]
        %s5737 = scalar_lea.vmem [#allocation2], 48
        %v5738 = vld [vmem:[%s5737 + $0x1] sm:$0xff]
        %v5739 = vld [vmem:[%s5737 + $0x9] sm:$0xff]
        %v5740 = vld [vmem:[%s5737 + $0x19] sm:$0xff]
        %v5741 = vld [vmem:[%s5737 + $0x21] sm:$0xff]
        %v5742 = vld [vmem:[%s5737 + $0x31] sm:$0xff]
        %v5743 = vld [vmem:[%s5737 + $0x39] sm:$0xff]
        %v5744 = vld [vmem:[%s5737 + $0x49] sm:$0xff]
        %v5745 = vld [vmem:[%s5737 + $0x51] sm:$0xff]
        %v5746 = vld [vmem:[%s5737 + $0x61] sm:$0xff]
        %v5747 = vld [vmem:[%s5737 + $0x69] sm:$0xff]
        %v5748 = vld [vmem:[%s5737 + $0x79] sm:$0xff]
        %v5749 = vld [vmem:[%s5737 + $0x81] sm:$0xff]
        %v5750 = vld [vmem:[%s5737 + $0x91] sm:$0xff]
        %v5751 = vld [vmem:[%s5737 + $0x99] sm:$0xff]
        %v5752 = vld [vmem:[%s5737 + $0xa9] sm:$0xff]
        %v5753 = vld [vmem:[%s5737 + $0xb1] sm:$0xff]
        %v5754 = vld [vmem:[%s5737 + $0xc1] sm:$0xff]
        %v5755 = vld [vmem:[%s5737 + $0xc9] sm:$0xff]
        %v5756 = vld [vmem:[%s5737 + $0xd9] sm:$0xff]
        %v5757 = vld [vmem:[%s5737 + $0xe1] sm:$0xff]
        %v5758 = vld [vmem:[%s5737 + $0xf1] sm:$0xff]
        %v5759 = vld [vmem:[%s5737 + $0xf9] sm:$0xff]
        %v5760 = vld [vmem:[%s5737 + $0x109] sm:$0xff]
        %v5761 = vld [vmem:[%s5737 + $0x111] sm:$0xff]
        %v5762 = vld [vmem:[%s5737 + $0x121] sm:$0xff]
        %v5763 = vld [vmem:[%s5737 + $0x129] sm:$0xff]
        %v5764 = vld [vmem:[%s5737 + $0x139] sm:$0xff]
        %v5765 = vld [vmem:[%s5737 + $0x141] sm:$0xff]
        %v5766 = vld [vmem:[%s5737 + $0x151] sm:$0xff]
        %v5767 = vld [vmem:[%s5737 + $0x159] sm:$0xff]
        %v5768 = vld [vmem:[%s5737 + $0x169] sm:$0xff]
        %v5769 = vld [vmem:[%s5737 + $0x171] sm:$0xff]
        %v5770 = vlaneseq
        %v5771 = vshrl.u32 %v5770, 7
        %v5772 = vsub.s32 0, %v5771
        %v5773 = vrot.slane %v5736, %v5772
        %v5774 = vmul.f32 %v5738, %v5773
        %v5775 = vmul.f32 %v5739, %v5773
        %v5776 = vmul.f32 %v5740, %v5773
        %v5777 = vmul.f32 %v5741, %v5773
        %v5778 = vmul.f32 %v5742, %v5773
        %v5779 = vmul.f32 %v5743, %v5773
        %v5780 = vmul.f32 %v5744, %v5773
        %v5781 = vmul.f32 %v5745, %v5773
        %v5782 = vmul.f32 %v5746, %v5773
        %v5783 = vmul.f32 %v5747, %v5773
        %v5784 = vmul.f32 %v5748, %v5773
        %v5785 = vmul.f32 %v5749, %v5773
        %v5786 = vmul.f32 %v5750, %v5773
        %v5787 = vmul.f32 %v5751, %v5773
        %v5788 = vmul.f32 %v5752, %v5773
        %v5789 = vmul.f32 %v5753, %v5773
        %v5790 = vmul.f32 %v5754, %v5773
        %v5791 = vmul.f32 %v5755, %v5773
        %v5792 = vmul.f32 %v5756, %v5773
        %v5793 = vmul.f32 %v5757, %v5773
        %v5794 = vmul.f32 %v5758, %v5773
        %v5795 = vmul.f32 %v5759, %v5773
        %v5796 = vmul.f32 %v5760, %v5773
        %v5797 = vmul.f32 %v5761, %v5773
        %v5798 = vmul.f32 %v5762, %v5773
        %v5799 = vmul.f32 %v5763, %v5773
        %v5800 = vmul.f32 %v5764, %v5773
        %v5801 = vmul.f32 %v5765, %v5773
        %v5802 = vmul.f32 %v5766, %v5773
        %v5803 = vmul.f32 %v5767, %v5773
        %v5804 = vmul.f32 %v5768, %v5773
        %v5805 = vmul.f32 %v5769, %v5773
        %v5806 = vadd.f32 %v5704, %v5774
        %v5807 = vadd.f32 %v5705, %v5775
        %v5808 = vadd.f32 %v5706, %v5776
        %v5809 = vadd.f32 %v5707, %v5777
        %v5810 = vadd.f32 %v5708, %v5778
        %v5811 = vadd.f32 %v5709, %v5779
        %v5812 = vadd.f32 %v5710, %v5780
        %v5813 = vadd.f32 %v5711, %v5781
        %v5814 = vadd.f32 %v5712, %v5782
        %v5815 = vadd.f32 %v5713, %v5783
        %v5816 = vadd.f32 %v5714, %v5784
        %v5817 = vadd.f32 %v5715, %v5785
        %v5818 = vadd.f32 %v5716, %v5786
        %v5819 = vadd.f32 %v5717, %v5787
        %v5820 = vadd.f32 %v5718, %v5788
        %v5821 = vadd.f32 %v5719, %v5789
        %v5822 = vadd.f32 %v5720, %v5790
        %v5823 = vadd.f32 %v5721, %v5791
        %v5824 = vadd.f32 %v5722, %v5792
        %v5825 = vadd.f32 %v5723, %v5793
        %v5826 = vadd.f32 %v5724, %v5794
        %v5827 = vadd.f32 %v5725, %v5795
        %v5828 = vadd.f32 %v5726, %v5796
        %v5829 = vadd.f32 %v5727, %v5797
        %v5830 = vadd.f32 %v5728, %v5798
        %v5831 = vadd.f32 %v5729, %v5799
        %v5832 = vadd.f32 %v5730, %v5800
        %v5833 = vadd.f32 %v5731, %v5801
        %v5834 = vadd.f32 %v5732, %v5802
        %v5835 = vadd.f32 %v5733, %v5803
        %v5836 = vadd.f32 %v5734, %v5804
        %v5837 = vadd.f32 %v5735, %v5805
        %v5838 = vld [vmem:[%s3 + $0x8] sm:$0x1]
        %v5839 = vld [vmem:[%s5635 + $0x1] sm:$0xff]
        %v5840 = vld [vmem:[%s5635 + $0x9] sm:$0xff]
        %v5841 = vld [vmem:[%s5635 + $0x19] sm:$0xff]
        %v5842 = vld [vmem:[%s5635 + $0x21] sm:$0xff]
        %v5843 = vld [vmem:[%s5635 + $0x31] sm:$0xff]
        %v5844 = vld [vmem:[%s5635 + $0x39] sm:$0xff]
        %v5845 = vld [vmem:[%s5635 + $0x49] sm:$0xff]
        %v5846 = vld [vmem:[%s5635 + $0x51] sm:$0xff]
        %v5847 = vld [vmem:[%s5635 + $0x61] sm:$0xff]
        %v5848 = vld [vmem:[%s5635 + $0x69] sm:$0xff]
        %v5849 = vld [vmem:[%s5635 + $0x79] sm:$0xff]
        %v5850 = vld [vmem:[%s5635 + $0x81] sm:$0xff]
        %v5851 = vld [vmem:[%s5635 + $0x91] sm:$0xff]
        %v5852 = vld [vmem:[%s5635 + $0x99] sm:$0xff]
        %v5853 = vld [vmem:[%s5635 + $0xa9] sm:$0xff]
        %v5854 = vld [vmem:[%s5635 + $0xb1] sm:$0xff]
        %v5855 = vld [vmem:[%s5635 + $0xc1] sm:$0xff]
        %v5856 = vld [vmem:[%s5635 + $0xc9] sm:$0xff]
        %v5857 = vld [vmem:[%s5635 + $0xd9] sm:$0xff]
        %v5858 = vld [vmem:[%s5635 + $0xe1] sm:$0xff]
        %v5859 = vld [vmem:[%s5635 + $0xf1] sm:$0xff]
        %v5860 = vld [vmem:[%s5635 + $0xf9] sm:$0xff]
        %v5861 = vld [vmem:[%s5635 + $0x109] sm:$0xff]
        %v5862 = vld [vmem:[%s5635 + $0x111] sm:$0xff]
        %v5863 = vld [vmem:[%s5635 + $0x121] sm:$0xff]
        %v5864 = vld [vmem:[%s5635 + $0x129] sm:$0xff]
        %v5865 = vld [vmem:[%s5635 + $0x139] sm:$0xff]
        %v5866 = vld [vmem:[%s5635 + $0x141] sm:$0xff]
        %v5867 = vld [vmem:[%s5635 + $0x151] sm:$0xff]
        %v5868 = vld [vmem:[%s5635 + $0x159] sm:$0xff]
        %v5869 = vld [vmem:[%s5635 + $0x169] sm:$0xff]
        %v5870 = vld [vmem:[%s5635 + $0x171] sm:$0xff]
        %v5871 = vlaneseq
        %v5872 = vshrl.u32 %v5871, 7
        %v5873 = vsub.s32 0, %v5872
        %v5874 = vrot.slane %v5838, %v5873
        %v5875 = vmul.f32 %v5839, %v5874
        %v5876 = vmul.f32 %v5840, %v5874
        %v5877 = vmul.f32 %v5841, %v5874
        %v5878 = vmul.f32 %v5842, %v5874
        %v5879 = vmul.f32 %v5843, %v5874
        %v5880 = vmul.f32 %v5844, %v5874
        %v5881 = vmul.f32 %v5845, %v5874
        %v5882 = vmul.f32 %v5846, %v5874
        %v5883 = vmul.f32 %v5847, %v5874
        %v5884 = vmul.f32 %v5848, %v5874
        %v5885 = vmul.f32 %v5849, %v5874
        %v5886 = vmul.f32 %v5850, %v5874
        %v5887 = vmul.f32 %v5851, %v5874
        %v5888 = vmul.f32 %v5852, %v5874
        %v5889 = vmul.f32 %v5853, %v5874
        %v5890 = vmul.f32 %v5854, %v5874
        %v5891 = vmul.f32 %v5855, %v5874
        %v5892 = vmul.f32 %v5856, %v5874
        %v5893 = vmul.f32 %v5857, %v5874
        %v5894 = vmul.f32 %v5858, %v5874
        %v5895 = vmul.f32 %v5859, %v5874
        %v5896 = vmul.f32 %v5860, %v5874
        %v5897 = vmul.f32 %v5861, %v5874
        %v5898 = vmul.f32 %v5862, %v5874
        %v5899 = vmul.f32 %v5863, %v5874
        %v5900 = vmul.f32 %v5864, %v5874
        %v5901 = vmul.f32 %v5865, %v5874
        %v5902 = vmul.f32 %v5866, %v5874
        %v5903 = vmul.f32 %v5867, %v5874
        %v5904 = vmul.f32 %v5868, %v5874
        %v5905 = vmul.f32 %v5869, %v5874
        %v5906 = vmul.f32 %v5870, %v5874
        %v5907 = vadd.f32 %v5806, %v5875
        %v5908 = vadd.f32 %v5807, %v5876
        %v5909 = vadd.f32 %v5808, %v5877
        %v5910 = vadd.f32 %v5809, %v5878
        %v5911 = vadd.f32 %v5810, %v5879
        %v5912 = vadd.f32 %v5811, %v5880
        %v5913 = vadd.f32 %v5812, %v5881
        %v5914 = vadd.f32 %v5813, %v5882
        %v5915 = vadd.f32 %v5814, %v5883
        %v5916 = vadd.f32 %v5815, %v5884
        %v5917 = vadd.f32 %v5816, %v5885
        %v5918 = vadd.f32 %v5817, %v5886
        %v5919 = vadd.f32 %v5818, %v5887
        %v5920 = vadd.f32 %v5819, %v5888
        %v5921 = vadd.f32 %v5820, %v5889
        %v5922 = vadd.f32 %v5821, %v5890
        %v5923 = vadd.f32 %v5822, %v5891
        %v5924 = vadd.f32 %v5823, %v5892
        %v5925 = vadd.f32 %v5824, %v5893
        %v5926 = vadd.f32 %v5825, %v5894
        %v5927 = vadd.f32 %v5826, %v5895
        %v5928 = vadd.f32 %v5827, %v5896
        %v5929 = vadd.f32 %v5828, %v5897
        %v5930 = vadd.f32 %v5829, %v5898
        %v5931 = vadd.f32 %v5830, %v5899
        %v5932 = vadd.f32 %v5831, %v5900
        %v5933 = vadd.f32 %v5832, %v5901
        %v5934 = vadd.f32 %v5833, %v5902
        %v5935 = vadd.f32 %v5834, %v5903
        %v5936 = vadd.f32 %v5835, %v5904
        %v5937 = vadd.f32 %v5836, %v5905
        %v5938 = vadd.f32 %v5837, %v5906
        %v5939 = vsel %vm272, %v5907, 0.0
        %5940 = vadd.xlane.f32.xlu0 %v5939
        %v5941 = vpop.xlane.xlu0 %5940
        %v5942 = vsel %vm272, %v5908, 0.0
        %5943 = vadd.xlane.f32.xlu0 %v5942
        %v5944 = vpop.xlane.xlu0 %5943
        %v5945 = vsel %vm272, %v5909, 0.0
        %5946 = vadd.xlane.f32.xlu0 %v5945
        %v5947 = vpop.xlane.xlu0 %5946
        %v5948 = vsel %vm272, %v5910, 0.0
        %5949 = vadd.xlane.f32.xlu0 %v5948
        %v5950 = vpop.xlane.xlu0 %5949
        %v5951 = vsel %vm272, %v5911, 0.0
        %5952 = vadd.xlane.f32.xlu0 %v5951
        %v5953 = vpop.xlane.xlu0 %5952
        %v5954 = vsel %vm272, %v5912, 0.0
        %5955 = vadd.xlane.f32.xlu0 %v5954
        %v5956 = vpop.xlane.xlu0 %5955
        %v5957 = vsel %vm272, %v5913, 0.0
        %5958 = vadd.xlane.f32.xlu0 %v5957
        %v5959 = vpop.xlane.xlu0 %5958
        %v5960 = vsel %vm272, %v5914, 0.0
        %5961 = vadd.xlane.f32.xlu0 %v5960
        %v5962 = vpop.xlane.xlu0 %5961
        %v5963 = vsel %vm272, %v5915, 0.0
        %5964 = vadd.xlane.f32.xlu0 %v5963
        %v5965 = vpop.xlane.xlu0 %5964
        %v5966 = vsel %vm272, %v5916, 0.0
        %5967 = vadd.xlane.f32.xlu0 %v5966
        %v5968 = vpop.xlane.xlu0 %5967
        %v5969 = vsel %vm272, %v5917, 0.0
        %5970 = vadd.xlane.f32.xlu0 %v5969
        %v5971 = vpop.xlane.xlu0 %5970
        %v5972 = vsel %vm272, %v5918, 0.0
        %5973 = vadd.xlane.f32.xlu0 %v5972
        %v5974 = vpop.xlane.xlu0 %5973
        %v5975 = vsel %vm272, %v5919, 0.0
        %5976 = vadd.xlane.f32.xlu0 %v5975
        %v5977 = vpop.xlane.xlu0 %5976
        %v5978 = vsel %vm272, %v5920, 0.0
        %5979 = vadd.xlane.f32.xlu0 %v5978
        %v5980 = vpop.xlane.xlu0 %5979
        %v5981 = vsel %vm272, %v5921, 0.0
        %5982 = vadd.xlane.f32.xlu0 %v5981
        %v5983 = vpop.xlane.xlu0 %5982
        %v5984 = vsel %vm272, %v5922, 0.0
        %5985 = vadd.xlane.f32.xlu0 %v5984
        %v5986 = vpop.xlane.xlu0 %5985
        %v5987 = vsel %vm272, %v5923, 0.0
        %5988 = vadd.xlane.f32.xlu0 %v5987
        %v5989 = vpop.xlane.xlu0 %5988
        %v5990 = vsel %vm272, %v5924, 0.0
        %5991 = vadd.xlane.f32.xlu0 %v5990
        %v5992 = vpop.xlane.xlu0 %5991
        %v5993 = vsel %vm272, %v5925, 0.0
        %5994 = vadd.xlane.f32.xlu0 %v5993
        %v5995 = vpop.xlane.xlu0 %5994
        %v5996 = vsel %vm272, %v5926, 0.0
        %5997 = vadd.xlane.f32.xlu0 %v5996
        %v5998 = vpop.xlane.xlu0 %5997
        %v5999 = vsel %vm272, %v5927, 0.0
        %6000 = vadd.xlane.f32.xlu0 %v5999
        %v6001 = vpop.xlane.xlu0 %6000
        %v6002 = vsel %vm272, %v5928, 0.0
        %6003 = vadd.xlane.f32.xlu0 %v6002
        %v6004 = vpop.xlane.xlu0 %6003
        %v6005 = vsel %vm272, %v5929, 0.0
        %6006 = vadd.xlane.f32.xlu0 %v6005
        %v6007 = vpop.xlane.xlu0 %6006
        %v6008 = vsel %vm272, %v5930, 0.0
        %6009 = vadd.xlane.f32.xlu0 %v6008
        %v6010 = vpop.xlane.xlu0 %6009
        %v6011 = vsel %vm272, %v5931, 0.0
        %6012 = vadd.xlane.f32.xlu0 %v6011
        %v6013 = vpop.xlane.xlu0 %6012
        %v6014 = vsel %vm272, %v5932, 0.0
        %6015 = vadd.xlane.f32.xlu0 %v6014
        %v6016 = vpop.xlane.xlu0 %6015
        %v6017 = vsel %vm272, %v5933, 0.0
        %6018 = vadd.xlane.f32.xlu0 %v6017
        %v6019 = vpop.xlane.xlu0 %6018
        %v6020 = vsel %vm272, %v5934, 0.0
        %6021 = vadd.xlane.f32.xlu0 %v6020
        %v6022 = vpop.xlane.xlu0 %6021
        %v6023 = vsel %vm272, %v5935, 0.0
        %6024 = vadd.xlane.f32.xlu0 %v6023
        %v6025 = vpop.xlane.xlu0 %6024
        %v6026 = vsel %vm272, %v5936, 0.0
        %6027 = vadd.xlane.f32.xlu0 %v6026
        %v6028 = vpop.xlane.xlu0 %6027
        %v6029 = vsel %vm272, %v5937, 0.0
        %6030 = vadd.xlane.f32.xlu0 %v6029
        %v6031 = vpop.xlane.xlu0 %6030
        %v6032 = vsel %vm272, %v5938, 0.0
        %6033 = vadd.xlane.f32.xlu0 %v6032
        %v6034 = vpop.xlane.xlu0 %6033
        %v6035 = vmul.f32 %v5941, %v3177
        %v6036 = vmul.f32 %v5944, %v3177
        %v6037 = vmul.f32 %v5947, %v3177
        %v6038 = vmul.f32 %v5950, %v3177
        %v6039 = vmul.f32 %v5953, %v3177
        %v6040 = vmul.f32 %v5956, %v3177
        %v6041 = vmul.f32 %v5959, %v3177
        %v6042 = vmul.f32 %v5962, %v3177
        %v6043 = vmul.f32 %v5965, %v3177
        %v6044 = vmul.f32 %v5968, %v3177
        %v6045 = vmul.f32 %v5971, %v3177
        %v6046 = vmul.f32 %v5974, %v3177
        %v6047 = vmul.f32 %v5977, %v3177
        %v6048 = vmul.f32 %v5980, %v3177
        %v6049 = vmul.f32 %v5983, %v3177
        %v6050 = vmul.f32 %v5986, %v3177
        %v6051 = vmul.f32 %v5989, %v3177
        %v6052 = vmul.f32 %v5992, %v3177
        %v6053 = vmul.f32 %v5995, %v3177
        %v6054 = vmul.f32 %v5998, %v3177
        %v6055 = vmul.f32 %v6001, %v3177
        %v6056 = vmul.f32 %v6004, %v3177
        %v6057 = vmul.f32 %v6007, %v3177
        %v6058 = vmul.f32 %v6010, %v3177
        %v6059 = vmul.f32 %v6013, %v3177
        %v6060 = vmul.f32 %v6016, %v3177
        %v6061 = vmul.f32 %v6019, %v3177
        %v6062 = vmul.f32 %v6022, %v3177
        %v6063 = vmul.f32 %v6025, %v3177
        %v6064 = vmul.f32 %v6028, %v3177
        %v6065 = vmul.f32 %v6031, %v3177
        %v6066 = vmul.f32 %v6034, %v3177
        %v6067 = vsub.f32 %v5907, %v6035
        %v6068 = vsub.f32 %v5908, %v6036
        %v6069 = vsub.f32 %v5909, %v6037
        %v6070 = vsub.f32 %v5910, %v6038
        %v6071 = vsub.f32 %v5911, %v6039
        %v6072 = vsub.f32 %v5912, %v6040
        %v6073 = vsub.f32 %v5913, %v6041
        %v6074 = vsub.f32 %v5914, %v6042
        %v6075 = vsub.f32 %v5915, %v6043
        %v6076 = vsub.f32 %v5916, %v6044
        %v6077 = vsub.f32 %v5917, %v6045
        %v6078 = vsub.f32 %v5918, %v6046
        %v6079 = vsub.f32 %v5919, %v6047
        %v6080 = vsub.f32 %v5920, %v6048
        %v6081 = vsub.f32 %v5921, %v6049
        %v6082 = vsub.f32 %v5922, %v6050
        %v6083 = vsub.f32 %v5923, %v6051
        %v6084 = vsub.f32 %v5924, %v6052
        %v6085 = vsub.f32 %v5925, %v6053
        %v6086 = vsub.f32 %v5926, %v6054
        %v6087 = vsub.f32 %v5927, %v6055
        %v6088 = vsub.f32 %v5928, %v6056
        %v6089 = vsub.f32 %v5929, %v6057
        %v6090 = vsub.f32 %v5930, %v6058
        %v6091 = vsub.f32 %v5931, %v6059
        %v6092 = vsub.f32 %v5932, %v6060
        %v6093 = vsub.f32 %v5933, %v6061
        %v6094 = vsub.f32 %v5934, %v6062
        %v6095 = vsub.f32 %v5935, %v6063
        %v6096 = vsub.f32 %v5936, %v6064
        %v6097 = vsub.f32 %v5937, %v6065
        %v6098 = vsub.f32 %v5938, %v6066
        %v6099 = vmul.f32 %v6067, %v6067
        %v6100 = vmul.f32 %v6068, %v6068
        %v6101 = vmul.f32 %v6069, %v6069
        %v6102 = vmul.f32 %v6070, %v6070
        %v6103 = vmul.f32 %v6071, %v6071
        %v6104 = vmul.f32 %v6072, %v6072
        %v6105 = vmul.f32 %v6073, %v6073
        %v6106 = vmul.f32 %v6074, %v6074
        %v6107 = vmul.f32 %v6075, %v6075
        %v6108 = vmul.f32 %v6076, %v6076
        %v6109 = vmul.f32 %v6077, %v6077
        %v6110 = vmul.f32 %v6078, %v6078
        %v6111 = vmul.f32 %v6079, %v6079
        %v6112 = vmul.f32 %v6080, %v6080
        %v6113 = vmul.f32 %v6081, %v6081
        %v6114 = vmul.f32 %v6082, %v6082
        %v6115 = vmul.f32 %v6083, %v6083
        %v6116 = vmul.f32 %v6084, %v6084
        %v6117 = vmul.f32 %v6085, %v6085
        %v6118 = vmul.f32 %v6086, %v6086
        %v6119 = vmul.f32 %v6087, %v6087
        %v6120 = vmul.f32 %v6088, %v6088
        %v6121 = vmul.f32 %v6089, %v6089
        %v6122 = vmul.f32 %v6090, %v6090
        %v6123 = vmul.f32 %v6091, %v6091
        %v6124 = vmul.f32 %v6092, %v6092
        %v6125 = vmul.f32 %v6093, %v6093
        %v6126 = vmul.f32 %v6094, %v6094
        %v6127 = vmul.f32 %v6095, %v6095
        %v6128 = vmul.f32 %v6096, %v6096
        %v6129 = vmul.f32 %v6097, %v6097
        %v6130 = vmul.f32 %v6098, %v6098
        %v6131 = vsel %vm272, %v6099, 0.0
        %6132 = vadd.xlane.f32.xlu0 %v6131
        %v6133 = vpop.xlane.xlu0 %6132
        %v6134 = vsel %vm272, %v6100, 0.0
        %6135 = vadd.xlane.f32.xlu0 %v6134
        %v6136 = vpop.xlane.xlu0 %6135
        %v6137 = vsel %vm272, %v6101, 0.0
        %6138 = vadd.xlane.f32.xlu0 %v6137
        %v6139 = vpop.xlane.xlu0 %6138
        %v6140 = vsel %vm272, %v6102, 0.0
        %6141 = vadd.xlane.f32.xlu0 %v6140
        %v6142 = vpop.xlane.xlu0 %6141
        %v6143 = vsel %vm272, %v6103, 0.0
        %6144 = vadd.xlane.f32.xlu0 %v6143
        %v6145 = vpop.xlane.xlu0 %6144
        %v6146 = vsel %vm272, %v6104, 0.0
        %6147 = vadd.xlane.f32.xlu0 %v6146
        %v6148 = vpop.xlane.xlu0 %6147
        %v6149 = vsel %vm272, %v6105, 0.0
        %6150 = vadd.xlane.f32.xlu0 %v6149
        %v6151 = vpop.xlane.xlu0 %6150
        %v6152 = vsel %vm272, %v6106, 0.0
        %6153 = vadd.xlane.f32.xlu0 %v6152
        %v6154 = vpop.xlane.xlu0 %6153
        %v6155 = vsel %vm272, %v6107, 0.0
        %6156 = vadd.xlane.f32.xlu0 %v6155
        %v6157 = vpop.xlane.xlu0 %6156
        %v6158 = vsel %vm272, %v6108, 0.0
        %6159 = vadd.xlane.f32.xlu0 %v6158
        %v6160 = vpop.xlane.xlu0 %6159
        %v6161 = vsel %vm272, %v6109, 0.0
        %6162 = vadd.xlane.f32.xlu0 %v6161
        %v6163 = vpop.xlane.xlu0 %6162
        %v6164 = vsel %vm272, %v6110, 0.0
        %6165 = vadd.xlane.f32.xlu0 %v6164
        %v6166 = vpop.xlane.xlu0 %6165
        %v6167 = vsel %vm272, %v6111, 0.0
        %6168 = vadd.xlane.f32.xlu0 %v6167
        %v6169 = vpop.xlane.xlu0 %6168
        %v6170 = vsel %vm272, %v6112, 0.0
        %6171 = vadd.xlane.f32.xlu0 %v6170
        %v6172 = vpop.xlane.xlu0 %6171
        %v6173 = vsel %vm272, %v6113, 0.0
        %6174 = vadd.xlane.f32.xlu0 %v6173
        %v6175 = vpop.xlane.xlu0 %6174
        %v6176 = vsel %vm272, %v6114, 0.0
        %6177 = vadd.xlane.f32.xlu0 %v6176
        %v6178 = vpop.xlane.xlu0 %6177
        %v6179 = vsel %vm272, %v6115, 0.0
        %6180 = vadd.xlane.f32.xlu0 %v6179
        %v6181 = vpop.xlane.xlu0 %6180
        %v6182 = vsel %vm272, %v6116, 0.0
        %6183 = vadd.xlane.f32.xlu0 %v6182
        %v6184 = vpop.xlane.xlu0 %6183
        %v6185 = vsel %vm272, %v6117, 0.0
        %6186 = vadd.xlane.f32.xlu0 %v6185
        %v6187 = vpop.xlane.xlu0 %6186
        %v6188 = vsel %vm272, %v6118, 0.0
        %6189 = vadd.xlane.f32.xlu0 %v6188
        %v6190 = vpop.xlane.xlu0 %6189
        %v6191 = vsel %vm272, %v6119, 0.0
        %6192 = vadd.xlane.f32.xlu0 %v6191
        %v6193 = vpop.xlane.xlu0 %6192
        %v6194 = vsel %vm272, %v6120, 0.0
        %6195 = vadd.xlane.f32.xlu0 %v6194
        %v6196 = vpop.xlane.xlu0 %6195
        %v6197 = vsel %vm272, %v6121, 0.0
        %6198 = vadd.xlane.f32.xlu0 %v6197
        %v6199 = vpop.xlane.xlu0 %6198
        %v6200 = vsel %vm272, %v6122, 0.0
        %6201 = vadd.xlane.f32.xlu0 %v6200
        %v6202 = vpop.xlane.xlu0 %6201
        %v6203 = vsel %vm272, %v6123, 0.0
        %6204 = vadd.xlane.f32.xlu0 %v6203
        %v6205 = vpop.xlane.xlu0 %6204
        %v6206 = vsel %vm272, %v6124, 0.0
        %6207 = vadd.xlane.f32.xlu0 %v6206
        %v6208 = vpop.xlane.xlu0 %6207
        %v6209 = vsel %vm272, %v6125, 0.0
        %6210 = vadd.xlane.f32.xlu0 %v6209
        %v6211 = vpop.xlane.xlu0 %6210
        %v6212 = vsel %vm272, %v6126, 0.0
        %6213 = vadd.xlane.f32.xlu0 %v6212
        %v6214 = vpop.xlane.xlu0 %6213
        %v6215 = vsel %vm272, %v6127, 0.0
        %6216 = vadd.xlane.f32.xlu0 %v6215
        %v6217 = vpop.xlane.xlu0 %6216
        %v6218 = vsel %vm272, %v6128, 0.0
        %6219 = vadd.xlane.f32.xlu0 %v6218
        %v6220 = vpop.xlane.xlu0 %6219
        %v6221 = vsel %vm272, %v6129, 0.0
        %6222 = vadd.xlane.f32.xlu0 %v6221
        %v6223 = vpop.xlane.xlu0 %6222
        %v6224 = vsel %vm272, %v6130, 0.0
        %6225 = vadd.xlane.f32.xlu0 %v6224
        %v6226 = vpop.xlane.xlu0 %6225
        %v6227 = vmul.f32 %v6133, %v3177
        %v6228 = vmul.f32 %v6136, %v3177
        %v6229 = vmul.f32 %v6139, %v3177
        %v6230 = vmul.f32 %v6142, %v3177
        %v6231 = vmul.f32 %v6145, %v3177
        %v6232 = vmul.f32 %v6148, %v3177
        %v6233 = vmul.f32 %v6151, %v3177
        %v6234 = vmul.f32 %v6154, %v3177
        %v6235 = vmul.f32 %v6157, %v3177
        %v6236 = vmul.f32 %v6160, %v3177
        %v6237 = vmul.f32 %v6163, %v3177
        %v6238 = vmul.f32 %v6166, %v3177
        %v6239 = vmul.f32 %v6169, %v3177
        %v6240 = vmul.f32 %v6172, %v3177
        %v6241 = vmul.f32 %v6175, %v3177
        %v6242 = vmul.f32 %v6178, %v3177
        %v6243 = vmul.f32 %v6181, %v3177
        %v6244 = vmul.f32 %v6184, %v3177
        %v6245 = vmul.f32 %v6187, %v3177
        %v6246 = vmul.f32 %v6190, %v3177
        %v6247 = vmul.f32 %v6193, %v3177
        %v6248 = vmul.f32 %v6196, %v3177
        %v6249 = vmul.f32 %v6199, %v3177
        %v6250 = vmul.f32 %v6202, %v3177
        %v6251 = vmul.f32 %v6205, %v3177
        %v6252 = vmul.f32 %v6208, %v3177
        %v6253 = vmul.f32 %v6211, %v3177
        %v6254 = vmul.f32 %v6214, %v3177
        %v6255 = vmul.f32 %v6217, %v3177
        %v6256 = vmul.f32 %v6220, %v3177
        %v6257 = vmul.f32 %v6223, %v3177
        %v6258 = vmul.f32 %v6226, %v3177
        %v6259 = vadd.f32 %v6227, 1e-06
        %v6260 = vadd.f32 %v6228, 1e-06
        %v6261 = vadd.f32 %v6229, 1e-06
        %v6262 = vadd.f32 %v6230, 1e-06
        %v6263 = vadd.f32 %v6231, 1e-06
        %v6264 = vadd.f32 %v6232, 1e-06
        %v6265 = vadd.f32 %v6233, 1e-06
        %v6266 = vadd.f32 %v6234, 1e-06
        %v6267 = vadd.f32 %v6235, 1e-06
        %v6268 = vadd.f32 %v6236, 1e-06
        %v6269 = vadd.f32 %v6237, 1e-06
        %v6270 = vadd.f32 %v6238, 1e-06
        %v6271 = vadd.f32 %v6239, 1e-06
        %v6272 = vadd.f32 %v6240, 1e-06
        %v6273 = vadd.f32 %v6241, 1e-06
        %v6274 = vadd.f32 %v6242, 1e-06
        %v6275 = vadd.f32 %v6243, 1e-06
        %v6276 = vadd.f32 %v6244, 1e-06
        %v6277 = vadd.f32 %v6245, 1e-06
        %v6278 = vadd.f32 %v6246, 1e-06
        %v6279 = vadd.f32 %v6247, 1e-06
        %v6280 = vadd.f32 %v6248, 1e-06
        %v6281 = vadd.f32 %v6249, 1e-06
        %v6282 = vadd.f32 %v6250, 1e-06
        %v6283 = vadd.f32 %v6251, 1e-06
        %v6284 = vadd.f32 %v6252, 1e-06
        %v6285 = vadd.f32 %v6253, 1e-06
        %v6286 = vadd.f32 %v6254, 1e-06
        %v6287 = vadd.f32 %v6255, 1e-06
        %v6288 = vadd.f32 %v6256, 1e-06
        %v6289 = vadd.f32 %v6257, 1e-06
        %v6290 = vadd.f32 %v6258, 1e-06
        %v6291 = vrsqrt.pop %v6259
        %v6292 = vrsqrt.pop %v6260
        %v6293 = vrsqrt.pop %v6261
        %v6294 = vrsqrt.pop %v6262
        %v6295 = vrsqrt.pop %v6263
        %v6296 = vrsqrt.pop %v6264
        %v6297 = vrsqrt.pop %v6265
        %v6298 = vrsqrt.pop %v6266
        %v6299 = vrsqrt.pop %v6267
        %v6300 = vrsqrt.pop %v6268
        %v6301 = vrsqrt.pop %v6269
        %v6302 = vrsqrt.pop %v6270
        %v6303 = vrsqrt.pop %v6271
        %v6304 = vrsqrt.pop %v6272
        %v6305 = vrsqrt.pop %v6273
        %v6306 = vrsqrt.pop %v6274
        %v6307 = vrsqrt.pop %v6275
        %v6308 = vrsqrt.pop %v6276
        %v6309 = vrsqrt.pop %v6277
        %v6310 = vrsqrt.pop %v6278
        %v6311 = vrsqrt.pop %v6279
        %v6312 = vrsqrt.pop %v6280
        %v6313 = vrsqrt.pop %v6281
        %v6314 = vrsqrt.pop %v6282
        %v6315 = vrsqrt.pop %v6283
        %v6316 = vrsqrt.pop %v6284
        %v6317 = vrsqrt.pop %v6285
        %v6318 = vrsqrt.pop %v6286
        %v6319 = vrsqrt.pop %v6287
        %v6320 = vrsqrt.pop %v6288
        %v6321 = vrsqrt.pop %v6289
        %v6322 = vrsqrt.pop %v6290
        %v6323 = vmul.f32 %v6067, %v6291
        %v6324 = vmul.f32 %v6068, %v6292
        %v6325 = vmul.f32 %v6069, %v6293
        %v6326 = vmul.f32 %v6070, %v6294
        %v6327 = vmul.f32 %v6071, %v6295
        %v6328 = vmul.f32 %v6072, %v6296
        %v6329 = vmul.f32 %v6073, %v6297
        %v6330 = vmul.f32 %v6074, %v6298
        %v6331 = vmul.f32 %v6075, %v6299
        %v6332 = vmul.f32 %v6076, %v6300
        %v6333 = vmul.f32 %v6077, %v6301
        %v6334 = vmul.f32 %v6078, %v6302
        %v6335 = vmul.f32 %v6079, %v6303
        %v6336 = vmul.f32 %v6080, %v6304
        %v6337 = vmul.f32 %v6081, %v6305
        %v6338 = vmul.f32 %v6082, %v6306
        %v6339 = vmul.f32 %v6083, %v6307
        %v6340 = vmul.f32 %v6084, %v6308
        %v6341 = vmul.f32 %v6085, %v6309
        %v6342 = vmul.f32 %v6086, %v6310
        %v6343 = vmul.f32 %v6087, %v6311
        %v6344 = vmul.f32 %v6088, %v6312
        %v6345 = vmul.f32 %v6089, %v6313
        %v6346 = vmul.f32 %v6090, %v6314
        %v6347 = vmul.f32 %v6091, %v6315
        %v6348 = vmul.f32 %v6092, %v6316
        %v6349 = vmul.f32 %v6093, %v6317
        %v6350 = vmul.f32 %v6094, %v6318
        %v6351 = vmul.f32 %v6095, %v6319
        %v6352 = vmul.f32 %v6096, %v6320
        %v6353 = vmul.f32 %v6097, %v6321
        %v6354 = vmul.f32 %v6098, %v6322
        %v6355 = vmul.f32 %v6323, %v3502
        %v6356 = vmul.f32 %v6324, %v3502
        %v6357 = vmul.f32 %v6325, %v3502
        %v6358 = vmul.f32 %v6326, %v3502
        %v6359 = vmul.f32 %v6327, %v3502
        %v6360 = vmul.f32 %v6328, %v3502
        %v6361 = vmul.f32 %v6329, %v3502
        %v6362 = vmul.f32 %v6330, %v3502
        %v6363 = vmul.f32 %v6331, %v3502
        %v6364 = vmul.f32 %v6332, %v3502
        %v6365 = vmul.f32 %v6333, %v3502
        %v6366 = vmul.f32 %v6334, %v3502
        %v6367 = vmul.f32 %v6335, %v3502
        %v6368 = vmul.f32 %v6336, %v3502
        %v6369 = vmul.f32 %v6337, %v3502
        %v6370 = vmul.f32 %v6338, %v3502
        %v6371 = vmul.f32 %v6339, %v3502
        %v6372 = vmul.f32 %v6340, %v3502
        %v6373 = vmul.f32 %v6341, %v3502
        %v6374 = vmul.f32 %v6342, %v3502
        %v6375 = vmul.f32 %v6343, %v3502
        %v6376 = vmul.f32 %v6344, %v3502
        %v6377 = vmul.f32 %v6345, %v3502
        %v6378 = vmul.f32 %v6346, %v3502
        %v6379 = vmul.f32 %v6347, %v3502
        %v6380 = vmul.f32 %v6348, %v3502
        %v6381 = vmul.f32 %v6349, %v3502
        %v6382 = vmul.f32 %v6350, %v3502
        %v6383 = vmul.f32 %v6351, %v3502
        %v6384 = vmul.f32 %v6352, %v3502
        %v6385 = vmul.f32 %v6353, %v3502
        %v6386 = vmul.f32 %v6354, %v3502
        %v6387 = vadd.f32 %v6355, %v3540
        %v6388 = vadd.f32 %v6356, %v3540
        %v6389 = vadd.f32 %v6357, %v3540
        %v6390 = vadd.f32 %v6358, %v3540
        %v6391 = vadd.f32 %v6359, %v3540
        %v6392 = vadd.f32 %v6360, %v3540
        %v6393 = vadd.f32 %v6361, %v3540
        %v6394 = vadd.f32 %v6362, %v3540
        %v6395 = vadd.f32 %v6363, %v3540
        %v6396 = vadd.f32 %v6364, %v3540
        %v6397 = vadd.f32 %v6365, %v3540
        %v6398 = vadd.f32 %v6366, %v3540
        %v6399 = vadd.f32 %v6367, %v3540
        %v6400 = vadd.f32 %v6368, %v3540
        %v6401 = vadd.f32 %v6369, %v3540
        %v6402 = vadd.f32 %v6370, %v3540
        %v6403 = vadd.f32 %v6371, %v3540
        %v6404 = vadd.f32 %v6372, %v3540
        %v6405 = vadd.f32 %v6373, %v3540
        %v6406 = vadd.f32 %v6374, %v3540
        %v6407 = vadd.f32 %v6375, %v3540
        %v6408 = vadd.f32 %v6376, %v3540
        %v6409 = vadd.f32 %v6377, %v3540
        %v6410 = vadd.f32 %v6378, %v3540
        %v6411 = vadd.f32 %v6379, %v3540
        %v6412 = vadd.f32 %v6380, %v3540
        %v6413 = vadd.f32 %v6381, %v3540
        %v6414 = vadd.f32 %v6382, %v3540
        %v6415 = vadd.f32 %v6383, %v3540
        %v6416 = vadd.f32 %v6384, %v3540
        %v6417 = vadd.f32 %v6385, %v3540
        %v6418 = vadd.f32 %v6386, %v3540
        %s6419 = scalar_lea.vmem %s271, 512
        %6420 = vst.msk [vmem:[%s6419] sm:$0xff] %vm272, %v6387
        %6421 = vst.msk [vmem:[%s6419 + $0x8] sm:$0xff] %vm272, %v6388
        %6422 = vst.msk [vmem:[%s6419 + $0x10] sm:$0xff] %vm272, %v6389
        %6423 = vst.msk [vmem:[%s6419 + $0x18] sm:$0xff] %vm272, %v6390
        %6424 = vst.msk [vmem:[%s6419 + $0x20] sm:$0xff] %vm272, %v6391
        %6425 = vst.msk [vmem:[%s6419 + $0x28] sm:$0xff] %vm272, %v6392
        %6426 = vst.msk [vmem:[%s6419 + $0x30] sm:$0xff] %vm272, %v6393
        %6427 = vst.msk [vmem:[%s6419 + $0x38] sm:$0xff] %vm272, %v6394
        %6428 = vst.msk [vmem:[%s6419 + $0x40] sm:$0xff] %vm272, %v6395
        %6429 = vst.msk [vmem:[%s6419 + $0x48] sm:$0xff] %vm272, %v6396
        %6430 = vst.msk [vmem:[%s6419 + $0x50] sm:$0xff] %vm272, %v6397
        %6431 = vst.msk [vmem:[%s6419 + $0x58] sm:$0xff] %vm272, %v6398
        %6432 = vst.msk [vmem:[%s6419 + $0x60] sm:$0xff] %vm272, %v6399
        %6433 = vst.msk [vmem:[%s6419 + $0x68] sm:$0xff] %vm272, %v6400
        %6434 = vst.msk [vmem:[%s6419 + $0x70] sm:$0xff] %vm272, %v6401
        %6435 = vst.msk [vmem:[%s6419 + $0x78] sm:$0xff] %vm272, %v6402
        %6436 = vst.msk [vmem:[%s6419 + $0x80] sm:$0xff] %vm272, %v6403
        %6437 = vst.msk [vmem:[%s6419 + $0x88] sm:$0xff] %vm272, %v6404
        %6438 = vst.msk [vmem:[%s6419 + $0x90] sm:$0xff] %vm272, %v6405
        %6439 = vst.msk [vmem:[%s6419 + $0x98] sm:$0xff] %vm272, %v6406
        %6440 = vst.msk [vmem:[%s6419 + $0xa0] sm:$0xff] %vm272, %v6407
        %6441 = vst.msk [vmem:[%s6419 + $0xa8] sm:$0xff] %vm272, %v6408
        %6442 = vst.msk [vmem:[%s6419 + $0xb0] sm:$0xff] %vm272, %v6409
        %6443 = vst.msk [vmem:[%s6419 + $0xb8] sm:$0xff] %vm272, %v6410
        %6444 = vst.msk [vmem:[%s6419 + $0xc0] sm:$0xff] %vm272, %v6411
        %6445 = vst.msk [vmem:[%s6419 + $0xc8] sm:$0xff] %vm272, %v6412
        %6446 = vst.msk [vmem:[%s6419 + $0xd0] sm:$0xff] %vm272, %v6413
        %6447 = vst.msk [vmem:[%s6419 + $0xd8] sm:$0xff] %vm272, %v6414
        %6448 = vst.msk [vmem:[%s6419 + $0xe0] sm:$0xff] %vm272, %v6415
        %6449 = vst.msk [vmem:[%s6419 + $0xe8] sm:$0xff] %vm272, %v6416
        %6450 = vst.msk [vmem:[%s6419 + $0xf0] sm:$0xff] %vm272, %v6417
        %6451 = vst.msk [vmem:[%s6419 + $0xf8] sm:$0xff] %vm272, %v6418
        %v6452 = vld [vmem:[%s3] sm:$0x1]
        %v6453 = vld [vmem:[%s1718 + $0x1] sm:$0xff]
        %v6454 = vld [vmem:[%s1718 + $0x9] sm:$0xff]
        %v6455 = vld [vmem:[%s1718 + $0x19] sm:$0xff]
        %v6456 = vld [vmem:[%s1718 + $0x21] sm:$0xff]
        %v6457 = vld [vmem:[%s1718 + $0x31] sm:$0xff]
        %v6458 = vld [vmem:[%s1718 + $0x39] sm:$0xff]
        %v6459 = vld [vmem:[%s1718 + $0x49] sm:$0xff]
        %v6460 = vld [vmem:[%s1718 + $0x51] sm:$0xff]
        %v6461 = vld [vmem:[%s1718 + $0x61] sm:$0xff]
        %v6462 = vld [vmem:[%s1718 + $0x69] sm:$0xff]
        %v6463 = vld [vmem:[%s1718 + $0x79] sm:$0xff]
        %v6464 = vld [vmem:[%s1718 + $0x81] sm:$0xff]
        %v6465 = vld [vmem:[%s1718 + $0x91] sm:$0xff]
        %v6466 = vld [vmem:[%s1718 + $0x99] sm:$0xff]
        %v6467 = vld [vmem:[%s1718 + $0xa9] sm:$0xff]
        %v6468 = vld [vmem:[%s1718 + $0xb1] sm:$0xff]
        %v6469 = vld [vmem:[%s1718 + $0xc1] sm:$0xff]
        %v6470 = vld [vmem:[%s1718 + $0xc9] sm:$0xff]
        %v6471 = vld [vmem:[%s1718 + $0xd9] sm:$0xff]
        %v6472 = vld [vmem:[%s1718 + $0xe1] sm:$0xff]
        %v6473 = vld [vmem:[%s1718 + $0xf1] sm:$0xff]
        %v6474 = vld [vmem:[%s1718 + $0xf9] sm:$0xff]
        %v6475 = vld [vmem:[%s1718 + $0x109] sm:$0xff]
        %v6476 = vld [vmem:[%s1718 + $0x111] sm:$0xff]
        %v6477 = vld [vmem:[%s1718 + $0x121] sm:$0xff]
        %v6478 = vld [vmem:[%s1718 + $0x129] sm:$0xff]
        %v6479 = vld [vmem:[%s1718 + $0x139] sm:$0xff]
        %v6480 = vld [vmem:[%s1718 + $0x141] sm:$0xff]
        %v6481 = vld [vmem:[%s1718 + $0x151] sm:$0xff]
        %v6482 = vld [vmem:[%s1718 + $0x159] sm:$0xff]
        %v6483 = vld [vmem:[%s1718 + $0x169] sm:$0xff]
        %v6484 = vld [vmem:[%s1718 + $0x171] sm:$0xff]
        %v6485 = vlaneseq
        %v6486 = vshrl.u32 %v6485, 7
        %v6487 = vsub.s32 0, %v6486
        %v6488 = vrot.slane %v6452, %v6487
        %v6489 = vmul.f32 %v6453, %v6488
        %v6490 = vmul.f32 %v6454, %v6488
        %v6491 = vmul.f32 %v6455, %v6488
        %v6492 = vmul.f32 %v6456, %v6488
        %v6493 = vmul.f32 %v6457, %v6488
        %v6494 = vmul.f32 %v6458, %v6488
        %v6495 = vmul.f32 %v6459, %v6488
        %v6496 = vmul.f32 %v6460, %v6488
        %v6497 = vmul.f32 %v6461, %v6488
        %v6498 = vmul.f32 %v6462, %v6488
        %v6499 = vmul.f32 %v6463, %v6488
        %v6500 = vmul.f32 %v6464, %v6488
        %v6501 = vmul.f32 %v6465, %v6488
        %v6502 = vmul.f32 %v6466, %v6488
        %v6503 = vmul.f32 %v6467, %v6488
        %v6504 = vmul.f32 %v6468, %v6488
        %v6505 = vmul.f32 %v6469, %v6488
        %v6506 = vmul.f32 %v6470, %v6488
        %v6507 = vmul.f32 %v6471, %v6488
        %v6508 = vmul.f32 %v6472, %v6488
        %v6509 = vmul.f32 %v6473, %v6488
        %v6510 = vmul.f32 %v6474, %v6488
        %v6511 = vmul.f32 %v6475, %v6488
        %v6512 = vmul.f32 %v6476, %v6488
        %v6513 = vmul.f32 %v6477, %v6488
        %v6514 = vmul.f32 %v6478, %v6488
        %v6515 = vmul.f32 %v6479, %v6488
        %v6516 = vmul.f32 %v6480, %v6488
        %v6517 = vmul.f32 %v6481, %v6488
        %v6518 = vmul.f32 %v6482, %v6488
        %v6519 = vmul.f32 %v6483, %v6488
        %v6520 = vmul.f32 %v6484, %v6488
        %v6521 = vadd.f32 %v6489, 0.0
        %v6522 = vadd.f32 %v6490, 0.0
        %v6523 = vadd.f32 %v6491, 0.0
        %v6524 = vadd.f32 %v6492, 0.0
        %v6525 = vadd.f32 %v6493, 0.0
        %v6526 = vadd.f32 %v6494, 0.0
        %v6527 = vadd.f32 %v6495, 0.0
        %v6528 = vadd.f32 %v6496, 0.0
        %v6529 = vadd.f32 %v6497, 0.0
        %v6530 = vadd.f32 %v6498, 0.0
        %v6531 = vadd.f32 %v6499, 0.0
        %v6532 = vadd.f32 %v6500, 0.0
        %v6533 = vadd.f32 %v6501, 0.0
        %v6534 = vadd.f32 %v6502, 0.0
        %v6535 = vadd.f32 %v6503, 0.0
        %v6536 = vadd.f32 %v6504, 0.0
        %v6537 = vadd.f32 %v6505, 0.0
        %v6538 = vadd.f32 %v6506, 0.0
        %v6539 = vadd.f32 %v6507, 0.0
        %v6540 = vadd.f32 %v6508, 0.0
        %v6541 = vadd.f32 %v6509, 0.0
        %v6542 = vadd.f32 %v6510, 0.0
        %v6543 = vadd.f32 %v6511, 0.0
        %v6544 = vadd.f32 %v6512, 0.0
        %v6545 = vadd.f32 %v6513, 0.0
        %v6546 = vadd.f32 %v6514, 0.0
        %v6547 = vadd.f32 %v6515, 0.0
        %v6548 = vadd.f32 %v6516, 0.0
        %v6549 = vadd.f32 %v6517, 0.0
        %v6550 = vadd.f32 %v6518, 0.0
        %v6551 = vadd.f32 %v6519, 0.0
        %v6552 = vadd.f32 %v6520, 0.0
        %v6553 = vld [vmem:[%s3 + $0x1] sm:$0x1]
        %v6554 = vld [vmem:[%s1879 + $0x1] sm:$0xff]
        %v6555 = vld [vmem:[%s1879 + $0x9] sm:$0xff]
        %v6556 = vld [vmem:[%s1879 + $0x19] sm:$0xff]
        %v6557 = vld [vmem:[%s1879 + $0x21] sm:$0xff]
        %v6558 = vld [vmem:[%s1879 + $0x31] sm:$0xff]
        %v6559 = vld [vmem:[%s1879 + $0x39] sm:$0xff]
        %v6560 = vld [vmem:[%s1879 + $0x49] sm:$0xff]
        %v6561 = vld [vmem:[%s1879 + $0x51] sm:$0xff]
        %v6562 = vld [vmem:[%s1879 + $0x61] sm:$0xff]
        %v6563 = vld [vmem:[%s1879 + $0x69] sm:$0xff]
        %v6564 = vld [vmem:[%s1879 + $0x79] sm:$0xff]
        %v6565 = vld [vmem:[%s1879 + $0x81] sm:$0xff]
        %v6566 = vld [vmem:[%s1879 + $0x91] sm:$0xff]
        %v6567 = vld [vmem:[%s1879 + $0x99] sm:$0xff]
        %v6568 = vld [vmem:[%s1879 + $0xa9] sm:$0xff]
        %v6569 = vld [vmem:[%s1879 + $0xb1] sm:$0xff]
        %v6570 = vld [vmem:[%s1879 + $0xc1] sm:$0xff]
        %v6571 = vld [vmem:[%s1879 + $0xc9] sm:$0xff]
        %v6572 = vld [vmem:[%s1879 + $0xd9] sm:$0xff]
        %v6573 = vld [vmem:[%s1879 + $0xe1] sm:$0xff]
        %v6574 = vld [vmem:[%s1879 + $0xf1] sm:$0xff]
        %v6575 = vld [vmem:[%s1879 + $0xf9] sm:$0xff]
        %v6576 = vld [vmem:[%s1879 + $0x109] sm:$0xff]
        %v6577 = vld [vmem:[%s1879 + $0x111] sm:$0xff]
        %v6578 = vld [vmem:[%s1879 + $0x121] sm:$0xff]
        %v6579 = vld [vmem:[%s1879 + $0x129] sm:$0xff]
        %v6580 = vld [vmem:[%s1879 + $0x139] sm:$0xff]
        %v6581 = vld [vmem:[%s1879 + $0x141] sm:$0xff]
        %v6582 = vld [vmem:[%s1879 + $0x151] sm:$0xff]
        %v6583 = vld [vmem:[%s1879 + $0x159] sm:$0xff]
        %v6584 = vld [vmem:[%s1879 + $0x169] sm:$0xff]
        %v6585 = vld [vmem:[%s1879 + $0x171] sm:$0xff]
        %v6586 = vlaneseq
        %v6587 = vshrl.u32 %v6586, 7
        %v6588 = vsub.s32 0, %v6587
        %v6589 = vrot.slane %v6553, %v6588
        %v6590 = vmul.f32 %v6554, %v6589
        %v6591 = vmul.f32 %v6555, %v6589
        %v6592 = vmul.f32 %v6556, %v6589
        %v6593 = vmul.f32 %v6557, %v6589
        %v6594 = vmul.f32 %v6558, %v6589
        %v6595 = vmul.f32 %v6559, %v6589
        %v6596 = vmul.f32 %v6560, %v6589
        %v6597 = vmul.f32 %v6561, %v6589
        %v6598 = vmul.f32 %v6562, %v6589
        %v6599 = vmul.f32 %v6563, %v6589
        %v6600 = vmul.f32 %v6564, %v6589
        %v6601 = vmul.f32 %v6565, %v6589
        %v6602 = vmul.f32 %v6566, %v6589
        %v6603 = vmul.f32 %v6567, %v6589
        %v6604 = vmul.f32 %v6568, %v6589
        %v6605 = vmul.f32 %v6569, %v6589
        %v6606 = vmul.f32 %v6570, %v6589
        %v6607 = vmul.f32 %v6571, %v6589
        %v6608 = vmul.f32 %v6572, %v6589
        %v6609 = vmul.f32 %v6573, %v6589
        %v6610 = vmul.f32 %v6574, %v6589
        %v6611 = vmul.f32 %v6575, %v6589
        %v6612 = vmul.f32 %v6576, %v6589
        %v6613 = vmul.f32 %v6577, %v6589
        %v6614 = vmul.f32 %v6578, %v6589
        %v6615 = vmul.f32 %v6579, %v6589
        %v6616 = vmul.f32 %v6580, %v6589
        %v6617 = vmul.f32 %v6581, %v6589
        %v6618 = vmul.f32 %v6582, %v6589
        %v6619 = vmul.f32 %v6583, %v6589
        %v6620 = vmul.f32 %v6584, %v6589
        %v6621 = vmul.f32 %v6585, %v6589
        %v6622 = vadd.f32 %v6521, %v6590
        %v6623 = vadd.f32 %v6522, %v6591
        %v6624 = vadd.f32 %v6523, %v6592
        %v6625 = vadd.f32 %v6524, %v6593
        %v6626 = vadd.f32 %v6525, %v6594
        %v6627 = vadd.f32 %v6526, %v6595
        %v6628 = vadd.f32 %v6527, %v6596
        %v6629 = vadd.f32 %v6528, %v6597
        %v6630 = vadd.f32 %v6529, %v6598
        %v6631 = vadd.f32 %v6530, %v6599
        %v6632 = vadd.f32 %v6531, %v6600
        %v6633 = vadd.f32 %v6532, %v6601
        %v6634 = vadd.f32 %v6533, %v6602
        %v6635 = vadd.f32 %v6534, %v6603
        %v6636 = vadd.f32 %v6535, %v6604
        %v6637 = vadd.f32 %v6536, %v6605
        %v6638 = vadd.f32 %v6537, %v6606
        %v6639 = vadd.f32 %v6538, %v6607
        %v6640 = vadd.f32 %v6539, %v6608
        %v6641 = vadd.f32 %v6540, %v6609
        %v6642 = vadd.f32 %v6541, %v6610
        %v6643 = vadd.f32 %v6542, %v6611
        %v6644 = vadd.f32 %v6543, %v6612
        %v6645 = vadd.f32 %v6544, %v6613
        %v6646 = vadd.f32 %v6545, %v6614
        %v6647 = vadd.f32 %v6546, %v6615
        %v6648 = vadd.f32 %v6547, %v6616
        %v6649 = vadd.f32 %v6548, %v6617
        %v6650 = vadd.f32 %v6549, %v6618
        %v6651 = vadd.f32 %v6550, %v6619
        %v6652 = vadd.f32 %v6551, %v6620
        %v6653 = vadd.f32 %v6552, %v6621
        %v6654 = vld [vmem:[%s3 + $0x2] sm:$0x1]
        %v6655 = vld [vmem:[%s1718 + $0x2] sm:$0xff]
        %v6656 = vld [vmem:[%s1718 + $0xa] sm:$0xff]
        %v6657 = vld [vmem:[%s1718 + $0x1a] sm:$0xff]
        %v6658 = vld [vmem:[%s1718 + $0x22] sm:$0xff]
        %v6659 = vld [vmem:[%s1718 + $0x32] sm:$0xff]
        %v6660 = vld [vmem:[%s1718 + $0x3a] sm:$0xff]
        %v6661 = vld [vmem:[%s1718 + $0x4a] sm:$0xff]
        %v6662 = vld [vmem:[%s1718 + $0x52] sm:$0xff]
        %v6663 = vld [vmem:[%s1718 + $0x62] sm:$0xff]
        %v6664 = vld [vmem:[%s1718 + $0x6a] sm:$0xff]
        %v6665 = vld [vmem:[%s1718 + $0x7a] sm:$0xff]
        %v6666 = vld [vmem:[%s1718 + $0x82] sm:$0xff]
        %v6667 = vld [vmem:[%s1718 + $0x92] sm:$0xff]
        %v6668 = vld [vmem:[%s1718 + $0x9a] sm:$0xff]
        %v6669 = vld [vmem:[%s1718 + $0xaa] sm:$0xff]
        %v6670 = vld [vmem:[%s1718 + $0xb2] sm:$0xff]
        %v6671 = vld [vmem:[%s1718 + $0xc2] sm:$0xff]
        %v6672 = vld [vmem:[%s1718 + $0xca] sm:$0xff]
        %v6673 = vld [vmem:[%s1718 + $0xda] sm:$0xff]
        %v6674 = vld [vmem:[%s1718 + $0xe2] sm:$0xff]
        %v6675 = vld [vmem:[%s1718 + $0xf2] sm:$0xff]
        %v6676 = vld [vmem:[%s1718 + $0xfa] sm:$0xff]
        %v6677 = vld [vmem:[%s1718 + $0x10a] sm:$0xff]
        %v6678 = vld [vmem:[%s1718 + $0x112] sm:$0xff]
        %v6679 = vld [vmem:[%s1718 + $0x122] sm:$0xff]
        %v6680 = vld [vmem:[%s1718 + $0x12a] sm:$0xff]
        %v6681 = vld [vmem:[%s1718 + $0x13a] sm:$0xff]
        %v6682 = vld [vmem:[%s1718 + $0x142] sm:$0xff]
        %v6683 = vld [vmem:[%s1718 + $0x152] sm:$0xff]
        %v6684 = vld [vmem:[%s1718 + $0x15a] sm:$0xff]
        %v6685 = vld [vmem:[%s1718 + $0x16a] sm:$0xff]
        %v6686 = vld [vmem:[%s1718 + $0x172] sm:$0xff]
        %v6687 = vlaneseq
        %v6688 = vshrl.u32 %v6687, 7
        %v6689 = vsub.s32 0, %v6688
        %v6690 = vrot.slane %v6654, %v6689
        %v6691 = vmul.f32 %v6655, %v6690
        %v6692 = vmul.f32 %v6656, %v6690
        %v6693 = vmul.f32 %v6657, %v6690
        %v6694 = vmul.f32 %v6658, %v6690
        %v6695 = vmul.f32 %v6659, %v6690
        %v6696 = vmul.f32 %v6660, %v6690
        %v6697 = vmul.f32 %v6661, %v6690
        %v6698 = vmul.f32 %v6662, %v6690
        %v6699 = vmul.f32 %v6663, %v6690
        %v6700 = vmul.f32 %v6664, %v6690
        %v6701 = vmul.f32 %v6665, %v6690
        %v6702 = vmul.f32 %v6666, %v6690
        %v6703 = vmul.f32 %v6667, %v6690
        %v6704 = vmul.f32 %v6668, %v6690
        %v6705 = vmul.f32 %v6669, %v6690
        %v6706 = vmul.f32 %v6670, %v6690
        %v6707 = vmul.f32 %v6671, %v6690
        %v6708 = vmul.f32 %v6672, %v6690
        %v6709 = vmul.f32 %v6673, %v6690
        %v6710 = vmul.f32 %v6674, %v6690
        %v6711 = vmul.f32 %v6675, %v6690
        %v6712 = vmul.f32 %v6676, %v6690
        %v6713 = vmul.f32 %v6677, %v6690
        %v6714 = vmul.f32 %v6678, %v6690
        %v6715 = vmul.f32 %v6679, %v6690
        %v6716 = vmul.f32 %v6680, %v6690
        %v6717 = vmul.f32 %v6681, %v6690
        %v6718 = vmul.f32 %v6682, %v6690
        %v6719 = vmul.f32 %v6683, %v6690
        %v6720 = vmul.f32 %v6684, %v6690
        %v6721 = vmul.f32 %v6685, %v6690
        %v6722 = vmul.f32 %v6686, %v6690
        %v6723 = vadd.f32 %v6622, %v6691
        %v6724 = vadd.f32 %v6623, %v6692
        %v6725 = vadd.f32 %v6624, %v6693
        %v6726 = vadd.f32 %v6625, %v6694
        %v6727 = vadd.f32 %v6626, %v6695
        %v6728 = vadd.f32 %v6627, %v6696
        %v6729 = vadd.f32 %v6628, %v6697
        %v6730 = vadd.f32 %v6629, %v6698
        %v6731 = vadd.f32 %v6630, %v6699
        %v6732 = vadd.f32 %v6631, %v6700
        %v6733 = vadd.f32 %v6632, %v6701
        %v6734 = vadd.f32 %v6633, %v6702
        %v6735 = vadd.f32 %v6634, %v6703
        %v6736 = vadd.f32 %v6635, %v6704
        %v6737 = vadd.f32 %v6636, %v6705
        %v6738 = vadd.f32 %v6637, %v6706
        %v6739 = vadd.f32 %v6638, %v6707
        %v6740 = vadd.f32 %v6639, %v6708
        %v6741 = vadd.f32 %v6640, %v6709
        %v6742 = vadd.f32 %v6641, %v6710
        %v6743 = vadd.f32 %v6642, %v6711
        %v6744 = vadd.f32 %v6643, %v6712
        %v6745 = vadd.f32 %v6644, %v6713
        %v6746 = vadd.f32 %v6645, %v6714
        %v6747 = vadd.f32 %v6646, %v6715
        %v6748 = vadd.f32 %v6647, %v6716
        %v6749 = vadd.f32 %v6648, %v6717
        %v6750 = vadd.f32 %v6649, %v6718
        %v6751 = vadd.f32 %v6650, %v6719
        %v6752 = vadd.f32 %v6651, %v6720
        %v6753 = vadd.f32 %v6652, %v6721
        %v6754 = vadd.f32 %v6653, %v6722
        %v6755 = vld [vmem:[%s3 + $0x3] sm:$0x1]
        %v6756 = vld [vmem:[%s2008 + $0x1] sm:$0xff]
        %v6757 = vld [vmem:[%s2008 + $0x9] sm:$0xff]
        %v6758 = vld [vmem:[%s2008 + $0x19] sm:$0xff]
        %v6759 = vld [vmem:[%s2008 + $0x21] sm:$0xff]
        %v6760 = vld [vmem:[%s2008 + $0x31] sm:$0xff]
        %v6761 = vld [vmem:[%s2008 + $0x39] sm:$0xff]
        %v6762 = vld [vmem:[%s2008 + $0x49] sm:$0xff]
        %v6763 = vld [vmem:[%s2008 + $0x51] sm:$0xff]
        %v6764 = vld [vmem:[%s2008 + $0x61] sm:$0xff]
        %v6765 = vld [vmem:[%s2008 + $0x69] sm:$0xff]
        %v6766 = vld [vmem:[%s2008 + $0x79] sm:$0xff]
        %v6767 = vld [vmem:[%s2008 + $0x81] sm:$0xff]
        %v6768 = vld [vmem:[%s2008 + $0x91] sm:$0xff]
        %v6769 = vld [vmem:[%s2008 + $0x99] sm:$0xff]
        %v6770 = vld [vmem:[%s2008 + $0xa9] sm:$0xff]
        %v6771 = vld [vmem:[%s2008 + $0xb1] sm:$0xff]
        %v6772 = vld [vmem:[%s2008 + $0xc1] sm:$0xff]
        %v6773 = vld [vmem:[%s2008 + $0xc9] sm:$0xff]
        %v6774 = vld [vmem:[%s2008 + $0xd9] sm:$0xff]
        %v6775 = vld [vmem:[%s2008 + $0xe1] sm:$0xff]
        %v6776 = vld [vmem:[%s2008 + $0xf1] sm:$0xff]
        %v6777 = vld [vmem:[%s2008 + $0xf9] sm:$0xff]
        %v6778 = vld [vmem:[%s2008 + $0x109] sm:$0xff]
        %v6779 = vld [vmem:[%s2008 + $0x111] sm:$0xff]
        %v6780 = vld [vmem:[%s2008 + $0x121] sm:$0xff]
        %v6781 = vld [vmem:[%s2008 + $0x129] sm:$0xff]
        %v6782 = vld [vmem:[%s2008 + $0x139] sm:$0xff]
        %v6783 = vld [vmem:[%s2008 + $0x141] sm:$0xff]
        %v6784 = vld [vmem:[%s2008 + $0x151] sm:$0xff]
        %v6785 = vld [vmem:[%s2008 + $0x159] sm:$0xff]
        %v6786 = vld [vmem:[%s2008 + $0x169] sm:$0xff]
        %v6787 = vld [vmem:[%s2008 + $0x171] sm:$0xff]
        %v6788 = vlaneseq
        %v6789 = vshrl.u32 %v6788, 7
        %v6790 = vsub.s32 0, %v6789
        %v6791 = vrot.slane %v6755, %v6790
        %v6792 = vmul.f32 %v6756, %v6791
        %v6793 = vmul.f32 %v6757, %v6791
        %v6794 = vmul.f32 %v6758, %v6791
        %v6795 = vmul.f32 %v6759, %v6791
        %v6796 = vmul.f32 %v6760, %v6791
        %v6797 = vmul.f32 %v6761, %v6791
        %v6798 = vmul.f32 %v6762, %v6791
        %v6799 = vmul.f32 %v6763, %v6791
        %v6800 = vmul.f32 %v6764, %v6791
        %v6801 = vmul.f32 %v6765, %v6791
        %v6802 = vmul.f32 %v6766, %v6791
        %v6803 = vmul.f32 %v6767, %v6791
        %v6804 = vmul.f32 %v6768, %v6791
        %v6805 = vmul.f32 %v6769, %v6791
        %v6806 = vmul.f32 %v6770, %v6791
        %v6807 = vmul.f32 %v6771, %v6791
        %v6808 = vmul.f32 %v6772, %v6791
        %v6809 = vmul.f32 %v6773, %v6791
        %v6810 = vmul.f32 %v6774, %v6791
        %v6811 = vmul.f32 %v6775, %v6791
        %v6812 = vmul.f32 %v6776, %v6791
        %v6813 = vmul.f32 %v6777, %v6791
        %v6814 = vmul.f32 %v6778, %v6791
        %v6815 = vmul.f32 %v6779, %v6791
        %v6816 = vmul.f32 %v6780, %v6791
        %v6817 = vmul.f32 %v6781, %v6791
        %v6818 = vmul.f32 %v6782, %v6791
        %v6819 = vmul.f32 %v6783, %v6791
        %v6820 = vmul.f32 %v6784, %v6791
        %v6821 = vmul.f32 %v6785, %v6791
        %v6822 = vmul.f32 %v6786, %v6791
        %v6823 = vmul.f32 %v6787, %v6791
        %v6824 = vadd.f32 %v6723, %v6792
        %v6825 = vadd.f32 %v6724, %v6793
        %v6826 = vadd.f32 %v6725, %v6794
        %v6827 = vadd.f32 %v6726, %v6795
        %v6828 = vadd.f32 %v6727, %v6796
        %v6829 = vadd.f32 %v6728, %v6797
        %v6830 = vadd.f32 %v6729, %v6798
        %v6831 = vadd.f32 %v6730, %v6799
        %v6832 = vadd.f32 %v6731, %v6800
        %v6833 = vadd.f32 %v6732, %v6801
        %v6834 = vadd.f32 %v6733, %v6802
        %v6835 = vadd.f32 %v6734, %v6803
        %v6836 = vadd.f32 %v6735, %v6804
        %v6837 = vadd.f32 %v6736, %v6805
        %v6838 = vadd.f32 %v6737, %v6806
        %v6839 = vadd.f32 %v6738, %v6807
        %v6840 = vadd.f32 %v6739, %v6808
        %v6841 = vadd.f32 %v6740, %v6809
        %v6842 = vadd.f32 %v6741, %v6810
        %v6843 = vadd.f32 %v6742, %v6811
        %v6844 = vadd.f32 %v6743, %v6812
        %v6845 = vadd.f32 %v6744, %v6813
        %v6846 = vadd.f32 %v6745, %v6814
        %v6847 = vadd.f32 %v6746, %v6815
        %v6848 = vadd.f32 %v6747, %v6816
        %v6849 = vadd.f32 %v6748, %v6817
        %v6850 = vadd.f32 %v6749, %v6818
        %v6851 = vadd.f32 %v6750, %v6819
        %v6852 = vadd.f32 %v6751, %v6820
        %v6853 = vadd.f32 %v6752, %v6821
        %v6854 = vadd.f32 %v6753, %v6822
        %v6855 = vadd.f32 %v6754, %v6823
        %v6856 = vld [vmem:[%s3 + $0x4] sm:$0x1]
        %v6857 = vld [vmem:[%s2137 + $0x1] sm:$0xff]
        %v6858 = vld [vmem:[%s2137 + $0x9] sm:$0xff]
        %v6859 = vld [vmem:[%s2137 + $0x19] sm:$0xff]
        %v6860 = vld [vmem:[%s2137 + $0x21] sm:$0xff]
        %v6861 = vld [vmem:[%s2137 + $0x31] sm:$0xff]
        %v6862 = vld [vmem:[%s2137 + $0x39] sm:$0xff]
        %v6863 = vld [vmem:[%s2137 + $0x49] sm:$0xff]
        %v6864 = vld [vmem:[%s2137 + $0x51] sm:$0xff]
        %v6865 = vld [vmem:[%s2137 + $0x61] sm:$0xff]
        %v6866 = vld [vmem:[%s2137 + $0x69] sm:$0xff]
        %v6867 = vld [vmem:[%s2137 + $0x79] sm:$0xff]
        %v6868 = vld [vmem:[%s2137 + $0x81] sm:$0xff]
        %v6869 = vld [vmem:[%s2137 + $0x91] sm:$0xff]
        %v6870 = vld [vmem:[%s2137 + $0x99] sm:$0xff]
        %v6871 = vld [vmem:[%s2137 + $0xa9] sm:$0xff]
        %v6872 = vld [vmem:[%s2137 + $0xb1] sm:$0xff]
        %v6873 = vld [vmem:[%s2137 + $0xc1] sm:$0xff]
        %v6874 = vld [vmem:[%s2137 + $0xc9] sm:$0xff]
        %v6875 = vld [vmem:[%s2137 + $0xd9] sm:$0xff]
        %v6876 = vld [vmem:[%s2137 + $0xe1] sm:$0xff]
        %v6877 = vld [vmem:[%s2137 + $0xf1] sm:$0xff]
        %v6878 = vld [vmem:[%s2137 + $0xf9] sm:$0xff]
        %v6879 = vld [vmem:[%s2137 + $0x109] sm:$0xff]
        %v6880 = vld [vmem:[%s2137 + $0x111] sm:$0xff]
        %v6881 = vld [vmem:[%s2137 + $0x121] sm:$0xff]
        %v6882 = vld [vmem:[%s2137 + $0x129] sm:$0xff]
        %v6883 = vld [vmem:[%s2137 + $0x139] sm:$0xff]
        %v6884 = vld [vmem:[%s2137 + $0x141] sm:$0xff]
        %v6885 = vld [vmem:[%s2137 + $0x151] sm:$0xff]
        %v6886 = vld [vmem:[%s2137 + $0x159] sm:$0xff]
        %v6887 = vld [vmem:[%s2137 + $0x169] sm:$0xff]
        %v6888 = vld [vmem:[%s2137 + $0x171] sm:$0xff]
        %v6889 = vlaneseq
        %v6890 = vshrl.u32 %v6889, 7
        %v6891 = vsub.s32 0, %v6890
        %v6892 = vrot.slane %v6856, %v6891
        %v6893 = vmul.f32 %v6857, %v6892
        %v6894 = vmul.f32 %v6858, %v6892
        %v6895 = vmul.f32 %v6859, %v6892
        %v6896 = vmul.f32 %v6860, %v6892
        %v6897 = vmul.f32 %v6861, %v6892
        %v6898 = vmul.f32 %v6862, %v6892
        %v6899 = vmul.f32 %v6863, %v6892
        %v6900 = vmul.f32 %v6864, %v6892
        %v6901 = vmul.f32 %v6865, %v6892
        %v6902 = vmul.f32 %v6866, %v6892
        %v6903 = vmul.f32 %v6867, %v6892
        %v6904 = vmul.f32 %v6868, %v6892
        %v6905 = vmul.f32 %v6869, %v6892
        %v6906 = vmul.f32 %v6870, %v6892
        %v6907 = vmul.f32 %v6871, %v6892
        %v6908 = vmul.f32 %v6872, %v6892
        %v6909 = vmul.f32 %v6873, %v6892
        %v6910 = vmul.f32 %v6874, %v6892
        %v6911 = vmul.f32 %v6875, %v6892
        %v6912 = vmul.f32 %v6876, %v6892
        %v6913 = vmul.f32 %v6877, %v6892
        %v6914 = vmul.f32 %v6878, %v6892
        %v6915 = vmul.f32 %v6879, %v6892
        %v6916 = vmul.f32 %v6880, %v6892
        %v6917 = vmul.f32 %v6881, %v6892
        %v6918 = vmul.f32 %v6882, %v6892
        %v6919 = vmul.f32 %v6883, %v6892
        %v6920 = vmul.f32 %v6884, %v6892
        %v6921 = vmul.f32 %v6885, %v6892
        %v6922 = vmul.f32 %v6886, %v6892
        %v6923 = vmul.f32 %v6887, %v6892
        %v6924 = vmul.f32 %v6888, %v6892
        %v6925 = vadd.f32 %v6824, %v6893
        %v6926 = vadd.f32 %v6825, %v6894
        %v6927 = vadd.f32 %v6826, %v6895
        %v6928 = vadd.f32 %v6827, %v6896
        %v6929 = vadd.f32 %v6828, %v6897
        %v6930 = vadd.f32 %v6829, %v6898
        %v6931 = vadd.f32 %v6830, %v6899
        %v6932 = vadd.f32 %v6831, %v6900
        %v6933 = vadd.f32 %v6832, %v6901
        %v6934 = vadd.f32 %v6833, %v6902
        %v6935 = vadd.f32 %v6834, %v6903
        %v6936 = vadd.f32 %v6835, %v6904
        %v6937 = vadd.f32 %v6836, %v6905
        %v6938 = vadd.f32 %v6837, %v6906
        %v6939 = vadd.f32 %v6838, %v6907
        %v6940 = vadd.f32 %v6839, %v6908
        %v6941 = vadd.f32 %v6840, %v6909
        %v6942 = vadd.f32 %v6841, %v6910
        %v6943 = vadd.f32 %v6842, %v6911
        %v6944 = vadd.f32 %v6843, %v6912
        %v6945 = vadd.f32 %v6844, %v6913
        %v6946 = vadd.f32 %v6845, %v6914
        %v6947 = vadd.f32 %v6846, %v6915
        %v6948 = vadd.f32 %v6847, %v6916
        %v6949 = vadd.f32 %v6848, %v6917
        %v6950 = vadd.f32 %v6849, %v6918
        %v6951 = vadd.f32 %v6850, %v6919
        %v6952 = vadd.f32 %v6851, %v6920
        %v6953 = vadd.f32 %v6852, %v6921
        %v6954 = vadd.f32 %v6853, %v6922
        %v6955 = vadd.f32 %v6854, %v6923
        %v6956 = vadd.f32 %v6855, %v6924
        %v6957 = vld [vmem:[%s3 + $0x5] sm:$0x1]
        %v6958 = vld [vmem:[%s2008 + $0x2] sm:$0xff]
        %v6959 = vld [vmem:[%s2008 + $0xa] sm:$0xff]
        %v6960 = vld [vmem:[%s2008 + $0x1a] sm:$0xff]
        %v6961 = vld [vmem:[%s2008 + $0x22] sm:$0xff]
        %v6962 = vld [vmem:[%s2008 + $0x32] sm:$0xff]
        %v6963 = vld [vmem:[%s2008 + $0x3a] sm:$0xff]
        %v6964 = vld [vmem:[%s2008 + $0x4a] sm:$0xff]
        %v6965 = vld [vmem:[%s2008 + $0x52] sm:$0xff]
        %v6966 = vld [vmem:[%s2008 + $0x62] sm:$0xff]
        %v6967 = vld [vmem:[%s2008 + $0x6a] sm:$0xff]
        %v6968 = vld [vmem:[%s2008 + $0x7a] sm:$0xff]
        %v6969 = vld [vmem:[%s2008 + $0x82] sm:$0xff]
        %v6970 = vld [vmem:[%s2008 + $0x92] sm:$0xff]
        %v6971 = vld [vmem:[%s2008 + $0x9a] sm:$0xff]
        %v6972 = vld [vmem:[%s2008 + $0xaa] sm:$0xff]
        %v6973 = vld [vmem:[%s2008 + $0xb2] sm:$0xff]
        %v6974 = vld [vmem:[%s2008 + $0xc2] sm:$0xff]
        %v6975 = vld [vmem:[%s2008 + $0xca] sm:$0xff]
        %v6976 = vld [vmem:[%s2008 + $0xda] sm:$0xff]
        %v6977 = vld [vmem:[%s2008 + $0xe2] sm:$0xff]
        %v6978 = vld [vmem:[%s2008 + $0xf2] sm:$0xff]
        %v6979 = vld [vmem:[%s2008 + $0xfa] sm:$0xff]
        %v6980 = vld [vmem:[%s2008 + $0x10a] sm:$0xff]
        %v6981 = vld [vmem:[%s2008 + $0x112] sm:$0xff]
        %v6982 = vld [vmem:[%s2008 + $0x122] sm:$0xff]
        %v6983 = vld [vmem:[%s2008 + $0x12a] sm:$0xff]
        %v6984 = vld [vmem:[%s2008 + $0x13a] sm:$0xff]
        %v6985 = vld [vmem:[%s2008 + $0x142] sm:$0xff]
        %v6986 = vld [vmem:[%s2008 + $0x152] sm:$0xff]
        %v6987 = vld [vmem:[%s2008 + $0x15a] sm:$0xff]
        %v6988 = vld [vmem:[%s2008 + $0x16a] sm:$0xff]
        %v6989 = vld [vmem:[%s2008 + $0x172] sm:$0xff]
        %v6990 = vlaneseq
        %v6991 = vshrl.u32 %v6990, 7
        %v6992 = vsub.s32 0, %v6991
        %v6993 = vrot.slane %v6957, %v6992
        %v6994 = vmul.f32 %v6958, %v6993
        %v6995 = vmul.f32 %v6959, %v6993
        %v6996 = vmul.f32 %v6960, %v6993
        %v6997 = vmul.f32 %v6961, %v6993
        %v6998 = vmul.f32 %v6962, %v6993
        %v6999 = vmul.f32 %v6963, %v6993
        %v7000 = vmul.f32 %v6964, %v6993
        %v7001 = vmul.f32 %v6965, %v6993
        %v7002 = vmul.f32 %v6966, %v6993
        %v7003 = vmul.f32 %v6967, %v6993
        %v7004 = vmul.f32 %v6968, %v6993
        %v7005 = vmul.f32 %v6969, %v6993
        %v7006 = vmul.f32 %v6970, %v6993
        %v7007 = vmul.f32 %v6971, %v6993
        %v7008 = vmul.f32 %v6972, %v6993
        %v7009 = vmul.f32 %v6973, %v6993
        %v7010 = vmul.f32 %v6974, %v6993
        %v7011 = vmul.f32 %v6975, %v6993
        %v7012 = vmul.f32 %v6976, %v6993
        %v7013 = vmul.f32 %v6977, %v6993
        %v7014 = vmul.f32 %v6978, %v6993
        %v7015 = vmul.f32 %v6979, %v6993
        %v7016 = vmul.f32 %v6980, %v6993
        %v7017 = vmul.f32 %v6981, %v6993
        %v7018 = vmul.f32 %v6982, %v6993
        %v7019 = vmul.f32 %v6983, %v6993
        %v7020 = vmul.f32 %v6984, %v6993
        %v7021 = vmul.f32 %v6985, %v6993
        %v7022 = vmul.f32 %v6986, %v6993
        %v7023 = vmul.f32 %v6987, %v6993
        %v7024 = vmul.f32 %v6988, %v6993
        %v7025 = vmul.f32 %v6989, %v6993
        %v7026 = vadd.f32 %v6925, %v6994
        %v7027 = vadd.f32 %v6926, %v6995
        %v7028 = vadd.f32 %v6927, %v6996
        %v7029 = vadd.f32 %v6928, %v6997
        %v7030 = vadd.f32 %v6929, %v6998
        %v7031 = vadd.f32 %v6930, %v6999
        %v7032 = vadd.f32 %v6931, %v7000
        %v7033 = vadd.f32 %v6932, %v7001
        %v7034 = vadd.f32 %v6933, %v7002
        %v7035 = vadd.f32 %v6934, %v7003
        %v7036 = vadd.f32 %v6935, %v7004
        %v7037 = vadd.f32 %v6936, %v7005
        %v7038 = vadd.f32 %v6937, %v7006
        %v7039 = vadd.f32 %v6938, %v7007
        %v7040 = vadd.f32 %v6939, %v7008
        %v7041 = vadd.f32 %v6940, %v7009
        %v7042 = vadd.f32 %v6941, %v7010
        %v7043 = vadd.f32 %v6942, %v7011
        %v7044 = vadd.f32 %v6943, %v7012
        %v7045 = vadd.f32 %v6944, %v7013
        %v7046 = vadd.f32 %v6945, %v7014
        %v7047 = vadd.f32 %v6946, %v7015
        %v7048 = vadd.f32 %v6947, %v7016
        %v7049 = vadd.f32 %v6948, %v7017
        %v7050 = vadd.f32 %v6949, %v7018
        %v7051 = vadd.f32 %v6950, %v7019
        %v7052 = vadd.f32 %v6951, %v7020
        %v7053 = vadd.f32 %v6952, %v7021
        %v7054 = vadd.f32 %v6953, %v7022
        %v7055 = vadd.f32 %v6954, %v7023
        %v7056 = vadd.f32 %v6955, %v7024
        %v7057 = vadd.f32 %v6956, %v7025
        %v7058 = vld [vmem:[%s3 + $0x6] sm:$0x1]
        %v7059 = vld [vmem:[%s5737 + $0x1] sm:$0xff]
        %v7060 = vld [vmem:[%s5737 + $0x9] sm:$0xff]
        %v7061 = vld [vmem:[%s5737 + $0x19] sm:$0xff]
        %v7062 = vld [vmem:[%s5737 + $0x21] sm:$0xff]
        %v7063 = vld [vmem:[%s5737 + $0x31] sm:$0xff]
        %v7064 = vld [vmem:[%s5737 + $0x39] sm:$0xff]
        %v7065 = vld [vmem:[%s5737 + $0x49] sm:$0xff]
        %v7066 = vld [vmem:[%s5737 + $0x51] sm:$0xff]
        %v7067 = vld [vmem:[%s5737 + $0x61] sm:$0xff]
        %v7068 = vld [vmem:[%s5737 + $0x69] sm:$0xff]
        %v7069 = vld [vmem:[%s5737 + $0x79] sm:$0xff]
        %v7070 = vld [vmem:[%s5737 + $0x81] sm:$0xff]
        %v7071 = vld [vmem:[%s5737 + $0x91] sm:$0xff]
        %v7072 = vld [vmem:[%s5737 + $0x99] sm:$0xff]
        %v7073 = vld [vmem:[%s5737 + $0xa9] sm:$0xff]
        %v7074 = vld [vmem:[%s5737 + $0xb1] sm:$0xff]
        %v7075 = vld [vmem:[%s5737 + $0xc1] sm:$0xff]
        %v7076 = vld [vmem:[%s5737 + $0xc9] sm:$0xff]
        %v7077 = vld [vmem:[%s5737 + $0xd9] sm:$0xff]
        %v7078 = vld [vmem:[%s5737 + $0xe1] sm:$0xff]
        %v7079 = vld [vmem:[%s5737 + $0xf1] sm:$0xff]
        %v7080 = vld [vmem:[%s5737 + $0xf9] sm:$0xff]
        %v7081 = vld [vmem:[%s5737 + $0x109] sm:$0xff]
        %v7082 = vld [vmem:[%s5737 + $0x111] sm:$0xff]
        %v7083 = vld [vmem:[%s5737 + $0x121] sm:$0xff]
        %v7084 = vld [vmem:[%s5737 + $0x129] sm:$0xff]
        %v7085 = vld [vmem:[%s5737 + $0x139] sm:$0xff]
        %v7086 = vld [vmem:[%s5737 + $0x141] sm:$0xff]
        %v7087 = vld [vmem:[%s5737 + $0x151] sm:$0xff]
        %v7088 = vld [vmem:[%s5737 + $0x159] sm:$0xff]
        %v7089 = vld [vmem:[%s5737 + $0x169] sm:$0xff]
        %v7090 = vld [vmem:[%s5737 + $0x171] sm:$0xff]
        %v7091 = vlaneseq
        %v7092 = vshrl.u32 %v7091, 7
        %v7093 = vsub.s32 0, %v7092
        %v7094 = vrot.slane %v7058, %v7093
        %v7095 = vmul.f32 %v7059, %v7094
        %v7096 = vmul.f32 %v7060, %v7094
        %v7097 = vmul.f32 %v7061, %v7094
        %v7098 = vmul.f32 %v7062, %v7094
        %v7099 = vmul.f32 %v7063, %v7094
        %v7100 = vmul.f32 %v7064, %v7094
        %v7101 = vmul.f32 %v7065, %v7094
        %v7102 = vmul.f32 %v7066, %v7094
        %v7103 = vmul.f32 %v7067, %v7094
        %v7104 = vmul.f32 %v7068, %v7094
        %v7105 = vmul.f32 %v7069, %v7094
        %v7106 = vmul.f32 %v7070, %v7094
        %v7107 = vmul.f32 %v7071, %v7094
        %v7108 = vmul.f32 %v7072, %v7094
        %v7109 = vmul.f32 %v7073, %v7094
        %v7110 = vmul.f32 %v7074, %v7094
        %v7111 = vmul.f32 %v7075, %v7094
        %v7112 = vmul.f32 %v7076, %v7094
        %v7113 = vmul.f32 %v7077, %v7094
        %v7114 = vmul.f32 %v7078, %v7094
        %v7115 = vmul.f32 %v7079, %v7094
        %v7116 = vmul.f32 %v7080, %v7094
        %v7117 = vmul.f32 %v7081, %v7094
        %v7118 = vmul.f32 %v7082, %v7094
        %v7119 = vmul.f32 %v7083, %v7094
        %v7120 = vmul.f32 %v7084, %v7094
        %v7121 = vmul.f32 %v7085, %v7094
        %v7122 = vmul.f32 %v7086, %v7094
        %v7123 = vmul.f32 %v7087, %v7094
        %v7124 = vmul.f32 %v7088, %v7094
        %v7125 = vmul.f32 %v7089, %v7094
        %v7126 = vmul.f32 %v7090, %v7094
        %v7127 = vadd.f32 %v7026, %v7095
        %v7128 = vadd.f32 %v7027, %v7096
        %v7129 = vadd.f32 %v7028, %v7097
        %v7130 = vadd.f32 %v7029, %v7098
        %v7131 = vadd.f32 %v7030, %v7099
        %v7132 = vadd.f32 %v7031, %v7100
        %v7133 = vadd.f32 %v7032, %v7101
        %v7134 = vadd.f32 %v7033, %v7102
        %v7135 = vadd.f32 %v7034, %v7103
        %v7136 = vadd.f32 %v7035, %v7104
        %v7137 = vadd.f32 %v7036, %v7105
        %v7138 = vadd.f32 %v7037, %v7106
        %v7139 = vadd.f32 %v7038, %v7107
        %v7140 = vadd.f32 %v7039, %v7108
        %v7141 = vadd.f32 %v7040, %v7109
        %v7142 = vadd.f32 %v7041, %v7110
        %v7143 = vadd.f32 %v7042, %v7111
        %v7144 = vadd.f32 %v7043, %v7112
        %v7145 = vadd.f32 %v7044, %v7113
        %v7146 = vadd.f32 %v7045, %v7114
        %v7147 = vadd.f32 %v7046, %v7115
        %v7148 = vadd.f32 %v7047, %v7116
        %v7149 = vadd.f32 %v7048, %v7117
        %v7150 = vadd.f32 %v7049, %v7118
        %v7151 = vadd.f32 %v7050, %v7119
        %v7152 = vadd.f32 %v7051, %v7120
        %v7153 = vadd.f32 %v7052, %v7121
        %v7154 = vadd.f32 %v7053, %v7122
        %v7155 = vadd.f32 %v7054, %v7123
        %v7156 = vadd.f32 %v7055, %v7124
        %v7157 = vadd.f32 %v7056, %v7125
        %v7158 = vadd.f32 %v7057, %v7126
        %v7159 = vld [vmem:[%s3 + $0x7] sm:$0x1]
        %v7160 = vld [vmem:[%s5635 + $0x1] sm:$0xff]
        %v7161 = vld [vmem:[%s5635 + $0x9] sm:$0xff]
        %v7162 = vld [vmem:[%s5635 + $0x19] sm:$0xff]
        %v7163 = vld [vmem:[%s5635 + $0x21] sm:$0xff]
        %v7164 = vld [vmem:[%s5635 + $0x31] sm:$0xff]
        %v7165 = vld [vmem:[%s5635 + $0x39] sm:$0xff]
        %v7166 = vld [vmem:[%s5635 + $0x49] sm:$0xff]
        %v7167 = vld [vmem:[%s5635 + $0x51] sm:$0xff]
        %v7168 = vld [vmem:[%s5635 + $0x61] sm:$0xff]
        %v7169 = vld [vmem:[%s5635 + $0x69] sm:$0xff]
        %v7170 = vld [vmem:[%s5635 + $0x79] sm:$0xff]
        %v7171 = vld [vmem:[%s5635 + $0x81] sm:$0xff]
        %v7172 = vld [vmem:[%s5635 + $0x91] sm:$0xff]
        %v7173 = vld [vmem:[%s5635 + $0x99] sm:$0xff]
        %v7174 = vld [vmem:[%s5635 + $0xa9] sm:$0xff]
        %v7175 = vld [vmem:[%s5635 + $0xb1] sm:$0xff]
        %v7176 = vld [vmem:[%s5635 + $0xc1] sm:$0xff]
        %v7177 = vld [vmem:[%s5635 + $0xc9] sm:$0xff]
        %v7178 = vld [vmem:[%s5635 + $0xd9] sm:$0xff]
        %v7179 = vld [vmem:[%s5635 + $0xe1] sm:$0xff]
        %v7180 = vld [vmem:[%s5635 + $0xf1] sm:$0xff]
        %v7181 = vld [vmem:[%s5635 + $0xf9] sm:$0xff]
        %v7182 = vld [vmem:[%s5635 + $0x109] sm:$0xff]
        %v7183 = vld [vmem:[%s5635 + $0x111] sm:$0xff]
        %v7184 = vld [vmem:[%s5635 + $0x121] sm:$0xff]
        %v7185 = vld [vmem:[%s5635 + $0x129] sm:$0xff]
        %v7186 = vld [vmem:[%s5635 + $0x139] sm:$0xff]
        %v7187 = vld [vmem:[%s5635 + $0x141] sm:$0xff]
        %v7188 = vld [vmem:[%s5635 + $0x151] sm:$0xff]
        %v7189 = vld [vmem:[%s5635 + $0x159] sm:$0xff]
        %v7190 = vld [vmem:[%s5635 + $0x169] sm:$0xff]
        %v7191 = vld [vmem:[%s5635 + $0x171] sm:$0xff]
        %v7192 = vlaneseq
        %v7193 = vshrl.u32 %v7192, 7
        %v7194 = vsub.s32 0, %v7193
        %v7195 = vrot.slane %v7159, %v7194
        %v7196 = vmul.f32 %v7160, %v7195
        %v7197 = vmul.f32 %v7161, %v7195
        %v7198 = vmul.f32 %v7162, %v7195
        %v7199 = vmul.f32 %v7163, %v7195
        %v7200 = vmul.f32 %v7164, %v7195
        %v7201 = vmul.f32 %v7165, %v7195
        %v7202 = vmul.f32 %v7166, %v7195
        %v7203 = vmul.f32 %v7167, %v7195
        %v7204 = vmul.f32 %v7168, %v7195
        %v7205 = vmul.f32 %v7169, %v7195
        %v7206 = vmul.f32 %v7170, %v7195
        %v7207 = vmul.f32 %v7171, %v7195
        %v7208 = vmul.f32 %v7172, %v7195
        %v7209 = vmul.f32 %v7173, %v7195
        %v7210 = vmul.f32 %v7174, %v7195
        %v7211 = vmul.f32 %v7175, %v7195
        %v7212 = vmul.f32 %v7176, %v7195
        %v7213 = vmul.f32 %v7177, %v7195
        %v7214 = vmul.f32 %v7178, %v7195
        %v7215 = vmul.f32 %v7179, %v7195
        %v7216 = vmul.f32 %v7180, %v7195
        %v7217 = vmul.f32 %v7181, %v7195
        %v7218 = vmul.f32 %v7182, %v7195
        %v7219 = vmul.f32 %v7183, %v7195
        %v7220 = vmul.f32 %v7184, %v7195
        %v7221 = vmul.f32 %v7185, %v7195
        %v7222 = vmul.f32 %v7186, %v7195
        %v7223 = vmul.f32 %v7187, %v7195
        %v7224 = vmul.f32 %v7188, %v7195
        %v7225 = vmul.f32 %v7189, %v7195
        %v7226 = vmul.f32 %v7190, %v7195
        %v7227 = vmul.f32 %v7191, %v7195
        %v7228 = vadd.f32 %v7127, %v7196
        %v7229 = vadd.f32 %v7128, %v7197
        %v7230 = vadd.f32 %v7129, %v7198
        %v7231 = vadd.f32 %v7130, %v7199
        %v7232 = vadd.f32 %v7131, %v7200
        %v7233 = vadd.f32 %v7132, %v7201
        %v7234 = vadd.f32 %v7133, %v7202
        %v7235 = vadd.f32 %v7134, %v7203
        %v7236 = vadd.f32 %v7135, %v7204
        %v7237 = vadd.f32 %v7136, %v7205
        %v7238 = vadd.f32 %v7137, %v7206
        %v7239 = vadd.f32 %v7138, %v7207
        %v7240 = vadd.f32 %v7139, %v7208
        %v7241 = vadd.f32 %v7140, %v7209
        %v7242 = vadd.f32 %v7141, %v7210
        %v7243 = vadd.f32 %v7142, %v7211
        %v7244 = vadd.f32 %v7143, %v7212
        %v7245 = vadd.f32 %v7144, %v7213
        %v7246 = vadd.f32 %v7145, %v7214
        %v7247 = vadd.f32 %v7146, %v7215
        %v7248 = vadd.f32 %v7147, %v7216
        %v7249 = vadd.f32 %v7148, %v7217
        %v7250 = vadd.f32 %v7149, %v7218
        %v7251 = vadd.f32 %v7150, %v7219
        %v7252 = vadd.f32 %v7151, %v7220
        %v7253 = vadd.f32 %v7152, %v7221
        %v7254 = vadd.f32 %v7153, %v7222
        %v7255 = vadd.f32 %v7154, %v7223
        %v7256 = vadd.f32 %v7155, %v7224
        %v7257 = vadd.f32 %v7156, %v7225
        %v7258 = vadd.f32 %v7157, %v7226
        %v7259 = vadd.f32 %v7158, %v7227
        %v7260 = vld [vmem:[%s3 + $0x8] sm:$0x1]
        %v7261 = vld [vmem:[%s5737 + $0x2] sm:$0xff]
        %v7262 = vld [vmem:[%s5737 + $0xa] sm:$0xff]
        %v7263 = vld [vmem:[%s5737 + $0x1a] sm:$0xff]
        %v7264 = vld [vmem:[%s5737 + $0x22] sm:$0xff]
        %v7265 = vld [vmem:[%s5737 + $0x32] sm:$0xff]
        %v7266 = vld [vmem:[%s5737 + $0x3a] sm:$0xff]
        %v7267 = vld [vmem:[%s5737 + $0x4a] sm:$0xff]
        %v7268 = vld [vmem:[%s5737 + $0x52] sm:$0xff]
        %v7269 = vld [vmem:[%s5737 + $0x62] sm:$0xff]
        %v7270 = vld [vmem:[%s5737 + $0x6a] sm:$0xff]
        %v7271 = vld [vmem:[%s5737 + $0x7a] sm:$0xff]
        %v7272 = vld [vmem:[%s5737 + $0x82] sm:$0xff]
        %v7273 = vld [vmem:[%s5737 + $0x92] sm:$0xff]
        %v7274 = vld [vmem:[%s5737 + $0x9a] sm:$0xff]
        %v7275 = vld [vmem:[%s5737 + $0xaa] sm:$0xff]
        %v7276 = vld [vmem:[%s5737 + $0xb2] sm:$0xff]
        %v7277 = vld [vmem:[%s5737 + $0xc2] sm:$0xff]
        %v7278 = vld [vmem:[%s5737 + $0xca] sm:$0xff]
        %v7279 = vld [vmem:[%s5737 + $0xda] sm:$0xff]
        %v7280 = vld [vmem:[%s5737 + $0xe2] sm:$0xff]
        %v7281 = vld [vmem:[%s5737 + $0xf2] sm:$0xff]
        %v7282 = vld [vmem:[%s5737 + $0xfa] sm:$0xff]
        %v7283 = vld [vmem:[%s5737 + $0x10a] sm:$0xff]
        %v7284 = vld [vmem:[%s5737 + $0x112] sm:$0xff]
        %v7285 = vld [vmem:[%s5737 + $0x122] sm:$0xff]
        %v7286 = vld [vmem:[%s5737 + $0x12a] sm:$0xff]
        %v7287 = vld [vmem:[%s5737 + $0x13a] sm:$0xff]
        %v7288 = vld [vmem:[%s5737 + $0x142] sm:$0xff]
        %v7289 = vld [vmem:[%s5737 + $0x152] sm:$0xff]
        %v7290 = vld [vmem:[%s5737 + $0x15a] sm:$0xff]
        %v7291 = vld [vmem:[%s5737 + $0x16a] sm:$0xff]
        %v7292 = vld [vmem:[%s5737 + $0x172] sm:$0xff]
        %v7293 = vlaneseq
        %v7294 = vshrl.u32 %v7293, 7
        %v7295 = vsub.s32 0, %v7294
        %v7296 = vrot.slane %v7260, %v7295
        %v7297 = vmul.f32 %v7261, %v7296
        %v7298 = vmul.f32 %v7262, %v7296
        %v7299 = vmul.f32 %v7263, %v7296
        %v7300 = vmul.f32 %v7264, %v7296
        %v7301 = vmul.f32 %v7265, %v7296
        %v7302 = vmul.f32 %v7266, %v7296
        %v7303 = vmul.f32 %v7267, %v7296
        %v7304 = vmul.f32 %v7268, %v7296
        %v7305 = vmul.f32 %v7269, %v7296
        %v7306 = vmul.f32 %v7270, %v7296
        %v7307 = vmul.f32 %v7271, %v7296
        %v7308 = vmul.f32 %v7272, %v7296
        %v7309 = vmul.f32 %v7273, %v7296
        %v7310 = vmul.f32 %v7274, %v7296
        %v7311 = vmul.f32 %v7275, %v7296
        %v7312 = vmul.f32 %v7276, %v7296
        %v7313 = vmul.f32 %v7277, %v7296
        %v7314 = vmul.f32 %v7278, %v7296
        %v7315 = vmul.f32 %v7279, %v7296
        %v7316 = vmul.f32 %v7280, %v7296
        %v7317 = vmul.f32 %v7281, %v7296
        %v7318 = vmul.f32 %v7282, %v7296
        %v7319 = vmul.f32 %v7283, %v7296
        %v7320 = vmul.f32 %v7284, %v7296
        %v7321 = vmul.f32 %v7285, %v7296
        %v7322 = vmul.f32 %v7286, %v7296
        %v7323 = vmul.f32 %v7287, %v7296
        %v7324 = vmul.f32 %v7288, %v7296
        %v7325 = vmul.f32 %v7289, %v7296
        %v7326 = vmul.f32 %v7290, %v7296
        %v7327 = vmul.f32 %v7291, %v7296
        %v7328 = vmul.f32 %v7292, %v7296
        %v7329 = vadd.f32 %v7228, %v7297
        %v7330 = vadd.f32 %v7229, %v7298
        %v7331 = vadd.f32 %v7230, %v7299
        %v7332 = vadd.f32 %v7231, %v7300
        %v7333 = vadd.f32 %v7232, %v7301
        %v7334 = vadd.f32 %v7233, %v7302
        %v7335 = vadd.f32 %v7234, %v7303
        %v7336 = vadd.f32 %v7235, %v7304
        %v7337 = vadd.f32 %v7236, %v7305
        %v7338 = vadd.f32 %v7237, %v7306
        %v7339 = vadd.f32 %v7238, %v7307
        %v7340 = vadd.f32 %v7239, %v7308
        %v7341 = vadd.f32 %v7240, %v7309
        %v7342 = vadd.f32 %v7241, %v7310
        %v7343 = vadd.f32 %v7242, %v7311
        %v7344 = vadd.f32 %v7243, %v7312
        %v7345 = vadd.f32 %v7244, %v7313
        %v7346 = vadd.f32 %v7245, %v7314
        %v7347 = vadd.f32 %v7246, %v7315
        %v7348 = vadd.f32 %v7247, %v7316
        %v7349 = vadd.f32 %v7248, %v7317
        %v7350 = vadd.f32 %v7249, %v7318
        %v7351 = vadd.f32 %v7250, %v7319
        %v7352 = vadd.f32 %v7251, %v7320
        %v7353 = vadd.f32 %v7252, %v7321
        %v7354 = vadd.f32 %v7253, %v7322
        %v7355 = vadd.f32 %v7254, %v7323
        %v7356 = vadd.f32 %v7255, %v7324
        %v7357 = vadd.f32 %v7256, %v7325
        %v7358 = vadd.f32 %v7257, %v7326
        %v7359 = vadd.f32 %v7258, %v7327
        %v7360 = vadd.f32 %v7259, %v7328
        %v7361 = vsel %vm272, %v7329, 0.0
        %7362 = vadd.xlane.f32.xlu0 %v7361
        %v7363 = vpop.xlane.xlu0 %7362
        %v7364 = vsel %vm272, %v7330, 0.0
        %7365 = vadd.xlane.f32.xlu0 %v7364
        %v7366 = vpop.xlane.xlu0 %7365
        %v7367 = vsel %vm272, %v7331, 0.0
        %7368 = vadd.xlane.f32.xlu0 %v7367
        %v7369 = vpop.xlane.xlu0 %7368
        %v7370 = vsel %vm272, %v7332, 0.0
        %7371 = vadd.xlane.f32.xlu0 %v7370
        %v7372 = vpop.xlane.xlu0 %7371
        %v7373 = vsel %vm272, %v7333, 0.0
        %7374 = vadd.xlane.f32.xlu0 %v7373
        %v7375 = vpop.xlane.xlu0 %7374
        %v7376 = vsel %vm272, %v7334, 0.0
        %7377 = vadd.xlane.f32.xlu0 %v7376
        %v7378 = vpop.xlane.xlu0 %7377
        %v7379 = vsel %vm272, %v7335, 0.0
        %7380 = vadd.xlane.f32.xlu0 %v7379
        %v7381 = vpop.xlane.xlu0 %7380
        %v7382 = vsel %vm272, %v7336, 0.0
        %7383 = vadd.xlane.f32.xlu0 %v7382
        %v7384 = vpop.xlane.xlu0 %7383
        %v7385 = vsel %vm272, %v7337, 0.0
        %7386 = vadd.xlane.f32.xlu0 %v7385
        %v7387 = vpop.xlane.xlu0 %7386
        %v7388 = vsel %vm272, %v7338, 0.0
        %7389 = vadd.xlane.f32.xlu0 %v7388
        %v7390 = vpop.xlane.xlu0 %7389
        %v7391 = vsel %vm272, %v7339, 0.0
        %7392 = vadd.xlane.f32.xlu0 %v7391
        %v7393 = vpop.xlane.xlu0 %7392
        %v7394 = vsel %vm272, %v7340, 0.0
        %7395 = vadd.xlane.f32.xlu0 %v7394
        %v7396 = vpop.xlane.xlu0 %7395
        %v7397 = vsel %vm272, %v7341, 0.0
        %7398 = vadd.xlane.f32.xlu0 %v7397
        %v7399 = vpop.xlane.xlu0 %7398
        %v7400 = vsel %vm272, %v7342, 0.0
        %7401 = vadd.xlane.f32.xlu0 %v7400
        %v7402 = vpop.xlane.xlu0 %7401
        %v7403 = vsel %vm272, %v7343, 0.0
        %7404 = vadd.xlane.f32.xlu0 %v7403
        %v7405 = vpop.xlane.xlu0 %7404
        %v7406 = vsel %vm272, %v7344, 0.0
        %7407 = vadd.xlane.f32.xlu0 %v7406
        %v7408 = vpop.xlane.xlu0 %7407
        %v7409 = vsel %vm272, %v7345, 0.0
        %7410 = vadd.xlane.f32.xlu0 %v7409
        %v7411 = vpop.xlane.xlu0 %7410
        %v7412 = vsel %vm272, %v7346, 0.0
        %7413 = vadd.xlane.f32.xlu0 %v7412
        %v7414 = vpop.xlane.xlu0 %7413
        %v7415 = vsel %vm272, %v7347, 0.0
        %7416 = vadd.xlane.f32.xlu0 %v7415
        %v7417 = vpop.xlane.xlu0 %7416
        %v7418 = vsel %vm272, %v7348, 0.0
        %7419 = vadd.xlane.f32.xlu0 %v7418
        %v7420 = vpop.xlane.xlu0 %7419
        %v7421 = vsel %vm272, %v7349, 0.0
        %7422 = vadd.xlane.f32.xlu0 %v7421
        %v7423 = vpop.xlane.xlu0 %7422
        %v7424 = vsel %vm272, %v7350, 0.0
        %7425 = vadd.xlane.f32.xlu0 %v7424
        %v7426 = vpop.xlane.xlu0 %7425
        %v7427 = vsel %vm272, %v7351, 0.0
        %7428 = vadd.xlane.f32.xlu0 %v7427
        %v7429 = vpop.xlane.xlu0 %7428
        %v7430 = vsel %vm272, %v7352, 0.0
        %7431 = vadd.xlane.f32.xlu0 %v7430
        %v7432 = vpop.xlane.xlu0 %7431
        %v7433 = vsel %vm272, %v7353, 0.0
        %7434 = vadd.xlane.f32.xlu0 %v7433
        %v7435 = vpop.xlane.xlu0 %7434
        %v7436 = vsel %vm272, %v7354, 0.0
        %7437 = vadd.xlane.f32.xlu0 %v7436
        %v7438 = vpop.xlane.xlu0 %7437
        %v7439 = vsel %vm272, %v7355, 0.0
        %7440 = vadd.xlane.f32.xlu0 %v7439
        %v7441 = vpop.xlane.xlu0 %7440
        %v7442 = vsel %vm272, %v7356, 0.0
        %7443 = vadd.xlane.f32.xlu0 %v7442
        %v7444 = vpop.xlane.xlu0 %7443
        %v7445 = vsel %vm272, %v7357, 0.0
        %7446 = vadd.xlane.f32.xlu0 %v7445
        %v7447 = vpop.xlane.xlu0 %7446
        %v7448 = vsel %vm272, %v7358, 0.0
        %7449 = vadd.xlane.f32.xlu0 %v7448
        %v7450 = vpop.xlane.xlu0 %7449
        %v7451 = vsel %vm272, %v7359, 0.0
        %7452 = vadd.xlane.f32.xlu0 %v7451
        %v7453 = vpop.xlane.xlu0 %7452
        %v7454 = vsel %vm272, %v7360, 0.0
        %7455 = vadd.xlane.f32.xlu0 %v7454
        %v7456 = vpop.xlane.xlu0 %7455
        %v7457 = vmul.f32 %v7363, %v3177
        %v7458 = vmul.f32 %v7366, %v3177
        %v7459 = vmul.f32 %v7369, %v3177
        %v7460 = vmul.f32 %v7372, %v3177
        %v7461 = vmul.f32 %v7375, %v3177
        %v7462 = vmul.f32 %v7378, %v3177
        %v7463 = vmul.f32 %v7381, %v3177
        %v7464 = vmul.f32 %v7384, %v3177
        %v7465 = vmul.f32 %v7387, %v3177
        %v7466 = vmul.f32 %v7390, %v3177
        %v7467 = vmul.f32 %v7393, %v3177
        %v7468 = vmul.f32 %v7396, %v3177
        %v7469 = vmul.f32 %v7399, %v3177
        %v7470 = vmul.f32 %v7402, %v3177
        %v7471 = vmul.f32 %v7405, %v3177
        %v7472 = vmul.f32 %v7408, %v3177
        %v7473 = vmul.f32 %v7411, %v3177
        %v7474 = vmul.f32 %v7414, %v3177
        %v7475 = vmul.f32 %v7417, %v3177
        %v7476 = vmul.f32 %v7420, %v3177
        %v7477 = vmul.f32 %v7423, %v3177
        %v7478 = vmul.f32 %v7426, %v3177
        %v7479 = vmul.f32 %v7429, %v3177
        %v7480 = vmul.f32 %v7432, %v3177
        %v7481 = vmul.f32 %v7435, %v3177
        %v7482 = vmul.f32 %v7438, %v3177
        %v7483 = vmul.f32 %v7441, %v3177
        %v7484 = vmul.f32 %v7444, %v3177
        %v7485 = vmul.f32 %v7447, %v3177
        %v7486 = vmul.f32 %v7450, %v3177
        %v7487 = vmul.f32 %v7453, %v3177
        %v7488 = vmul.f32 %v7456, %v3177
        %v7489 = vsub.f32 %v7329, %v7457
        %v7490 = vsub.f32 %v7330, %v7458
        %v7491 = vsub.f32 %v7331, %v7459
        %v7492 = vsub.f32 %v7332, %v7460
        %v7493 = vsub.f32 %v7333, %v7461
        %v7494 = vsub.f32 %v7334, %v7462
        %v7495 = vsub.f32 %v7335, %v7463
        %v7496 = vsub.f32 %v7336, %v7464
        %v7497 = vsub.f32 %v7337, %v7465
        %v7498 = vsub.f32 %v7338, %v7466
        %v7499 = vsub.f32 %v7339, %v7467
        %v7500 = vsub.f32 %v7340, %v7468
        %v7501 = vsub.f32 %v7341, %v7469
        %v7502 = vsub.f32 %v7342, %v7470
        %v7503 = vsub.f32 %v7343, %v7471
        %v7504 = vsub.f32 %v7344, %v7472
        %v7505 = vsub.f32 %v7345, %v7473
        %v7506 = vsub.f32 %v7346, %v7474
        %v7507 = vsub.f32 %v7347, %v7475
        %v7508 = vsub.f32 %v7348, %v7476
        %v7509 = vsub.f32 %v7349, %v7477
        %v7510 = vsub.f32 %v7350, %v7478
        %v7511 = vsub.f32 %v7351, %v7479
        %v7512 = vsub.f32 %v7352, %v7480
        %v7513 = vsub.f32 %v7353, %v7481
        %v7514 = vsub.f32 %v7354, %v7482
        %v7515 = vsub.f32 %v7355, %v7483
        %v7516 = vsub.f32 %v7356, %v7484
        %v7517 = vsub.f32 %v7357, %v7485
        %v7518 = vsub.f32 %v7358, %v7486
        %v7519 = vsub.f32 %v7359, %v7487
        %v7520 = vsub.f32 %v7360, %v7488
        %v7521 = vmul.f32 %v7489, %v7489
        %v7522 = vmul.f32 %v7490, %v7490
        %v7523 = vmul.f32 %v7491, %v7491
        %v7524 = vmul.f32 %v7492, %v7492
        %v7525 = vmul.f32 %v7493, %v7493
        %v7526 = vmul.f32 %v7494, %v7494
        %v7527 = vmul.f32 %v7495, %v7495
        %v7528 = vmul.f32 %v7496, %v7496
        %v7529 = vmul.f32 %v7497, %v7497
        %v7530 = vmul.f32 %v7498, %v7498
        %v7531 = vmul.f32 %v7499, %v7499
        %v7532 = vmul.f32 %v7500, %v7500
        %v7533 = vmul.f32 %v7501, %v7501
        %v7534 = vmul.f32 %v7502, %v7502
        %v7535 = vmul.f32 %v7503, %v7503
        %v7536 = vmul.f32 %v7504, %v7504
        %v7537 = vmul.f32 %v7505, %v7505
        %v7538 = vmul.f32 %v7506, %v7506
        %v7539 = vmul.f32 %v7507, %v7507
        %v7540 = vmul.f32 %v7508, %v7508
        %v7541 = vmul.f32 %v7509, %v7509
        %v7542 = vmul.f32 %v7510, %v7510
        %v7543 = vmul.f32 %v7511, %v7511
        %v7544 = vmul.f32 %v7512, %v7512
        %v7545 = vmul.f32 %v7513, %v7513
        %v7546 = vmul.f32 %v7514, %v7514
        %v7547 = vmul.f32 %v7515, %v7515
        %v7548 = vmul.f32 %v7516, %v7516
        %v7549 = vmul.f32 %v7517, %v7517
        %v7550 = vmul.f32 %v7518, %v7518
        %v7551 = vmul.f32 %v7519, %v7519
        %v7552 = vmul.f32 %v7520, %v7520
        %v7553 = vsel %vm272, %v7521, 0.0
        %7554 = vadd.xlane.f32.xlu0 %v7553
        %v7555 = vpop.xlane.xlu0 %7554
        %v7556 = vsel %vm272, %v7522, 0.0
        %7557 = vadd.xlane.f32.xlu0 %v7556
        %v7558 = vpop.xlane.xlu0 %7557
        %v7559 = vsel %vm272, %v7523, 0.0
        %7560 = vadd.xlane.f32.xlu0 %v7559
        %v7561 = vpop.xlane.xlu0 %7560
        %v7562 = vsel %vm272, %v7524, 0.0
        %7563 = vadd.xlane.f32.xlu0 %v7562
        %v7564 = vpop.xlane.xlu0 %7563
        %v7565 = vsel %vm272, %v7525, 0.0
        %7566 = vadd.xlane.f32.xlu0 %v7565
        %v7567 = vpop.xlane.xlu0 %7566
        %v7568 = vsel %vm272, %v7526, 0.0
        %7569 = vadd.xlane.f32.xlu0 %v7568
        %v7570 = vpop.xlane.xlu0 %7569
        %v7571 = vsel %vm272, %v7527, 0.0
        %7572 = vadd.xlane.f32.xlu0 %v7571
        %v7573 = vpop.xlane.xlu0 %7572
        %v7574 = vsel %vm272, %v7528, 0.0
        %7575 = vadd.xlane.f32.xlu0 %v7574
        %v7576 = vpop.xlane.xlu0 %7575
        %v7577 = vsel %vm272, %v7529, 0.0
        %7578 = vadd.xlane.f32.xlu0 %v7577
        %v7579 = vpop.xlane.xlu0 %7578
        %v7580 = vsel %vm272, %v7530, 0.0
        %7581 = vadd.xlane.f32.xlu0 %v7580
        %v7582 = vpop.xlane.xlu0 %7581
        %v7583 = vsel %vm272, %v7531, 0.0
        %7584 = vadd.xlane.f32.xlu0 %v7583
        %v7585 = vpop.xlane.xlu0 %7584
        %v7586 = vsel %vm272, %v7532, 0.0
        %7587 = vadd.xlane.f32.xlu0 %v7586
        %v7588 = vpop.xlane.xlu0 %7587
        %v7589 = vsel %vm272, %v7533, 0.0
        %7590 = vadd.xlane.f32.xlu0 %v7589
        %v7591 = vpop.xlane.xlu0 %7590
        %v7592 = vsel %vm272, %v7534, 0.0
        %7593 = vadd.xlane.f32.xlu0 %v7592
        %v7594 = vpop.xlane.xlu0 %7593
        %v7595 = vsel %vm272, %v7535, 0.0
        %7596 = vadd.xlane.f32.xlu0 %v7595
        %v7597 = vpop.xlane.xlu0 %7596
        %v7598 = vsel %vm272, %v7536, 0.0
        %7599 = vadd.xlane.f32.xlu0 %v7598
        %v7600 = vpop.xlane.xlu0 %7599
        %v7601 = vsel %vm272, %v7537, 0.0
        %7602 = vadd.xlane.f32.xlu0 %v7601
        %v7603 = vpop.xlane.xlu0 %7602
        %v7604 = vsel %vm272, %v7538, 0.0
        %7605 = vadd.xlane.f32.xlu0 %v7604
        %v7606 = vpop.xlane.xlu0 %7605
        %v7607 = vsel %vm272, %v7539, 0.0
        %7608 = vadd.xlane.f32.xlu0 %v7607
        %v7609 = vpop.xlane.xlu0 %7608
        %v7610 = vsel %vm272, %v7540, 0.0
        %7611 = vadd.xlane.f32.xlu0 %v7610
        %v7612 = vpop.xlane.xlu0 %7611
        %v7613 = vsel %vm272, %v7541, 0.0
        %7614 = vadd.xlane.f32.xlu0 %v7613
        %v7615 = vpop.xlane.xlu0 %7614
        %v7616 = vsel %vm272, %v7542, 0.0
        %7617 = vadd.xlane.f32.xlu0 %v7616
        %v7618 = vpop.xlane.xlu0 %7617
        %v7619 = vsel %vm272, %v7543, 0.0
        %7620 = vadd.xlane.f32.xlu0 %v7619
        %v7621 = vpop.xlane.xlu0 %7620
        %v7622 = vsel %vm272, %v7544, 0.0
        %7623 = vadd.xlane.f32.xlu0 %v7622
        %v7624 = vpop.xlane.xlu0 %7623
        %v7625 = vsel %vm272, %v7545, 0.0
        %7626 = vadd.xlane.f32.xlu0 %v7625
        %v7627 = vpop.xlane.xlu0 %7626
        %v7628 = vsel %vm272, %v7546, 0.0
        %7629 = vadd.xlane.f32.xlu0 %v7628
        %v7630 = vpop.xlane.xlu0 %7629
        %v7631 = vsel %vm272, %v7547, 0.0
        %7632 = vadd.xlane.f32.xlu0 %v7631
        %v7633 = vpop.xlane.xlu0 %7632
        %v7634 = vsel %vm272, %v7548, 0.0
        %7635 = vadd.xlane.f32.xlu0 %v7634
        %v7636 = vpop.xlane.xlu0 %7635
        %v7637 = vsel %vm272, %v7549, 0.0
        %7638 = vadd.xlane.f32.xlu0 %v7637
        %v7639 = vpop.xlane.xlu0 %7638
        %v7640 = vsel %vm272, %v7550, 0.0
        %7641 = vadd.xlane.f32.xlu0 %v7640
        %v7642 = vpop.xlane.xlu0 %7641
        %v7643 = vsel %vm272, %v7551, 0.0
        %7644 = vadd.xlane.f32.xlu0 %v7643
        %v7645 = vpop.xlane.xlu0 %7644
        %v7646 = vsel %vm272, %v7552, 0.0
        %7647 = vadd.xlane.f32.xlu0 %v7646
        %v7648 = vpop.xlane.xlu0 %7647
        %v7649 = vmul.f32 %v7555, %v3177
        %v7650 = vmul.f32 %v7558, %v3177
        %v7651 = vmul.f32 %v7561, %v3177
        %v7652 = vmul.f32 %v7564, %v3177
        %v7653 = vmul.f32 %v7567, %v3177
        %v7654 = vmul.f32 %v7570, %v3177
        %v7655 = vmul.f32 %v7573, %v3177
        %v7656 = vmul.f32 %v7576, %v3177
        %v7657 = vmul.f32 %v7579, %v3177
        %v7658 = vmul.f32 %v7582, %v3177
        %v7659 = vmul.f32 %v7585, %v3177
        %v7660 = vmul.f32 %v7588, %v3177
        %v7661 = vmul.f32 %v7591, %v3177
        %v7662 = vmul.f32 %v7594, %v3177
        %v7663 = vmul.f32 %v7597, %v3177
        %v7664 = vmul.f32 %v7600, %v3177
        %v7665 = vmul.f32 %v7603, %v3177
        %v7666 = vmul.f32 %v7606, %v3177
        %v7667 = vmul.f32 %v7609, %v3177
        %v7668 = vmul.f32 %v7612, %v3177
        %v7669 = vmul.f32 %v7615, %v3177
        %v7670 = vmul.f32 %v7618, %v3177
        %v7671 = vmul.f32 %v7621, %v3177
        %v7672 = vmul.f32 %v7624, %v3177
        %v7673 = vmul.f32 %v7627, %v3177
        %v7674 = vmul.f32 %v7630, %v3177
        %v7675 = vmul.f32 %v7633, %v3177
        %v7676 = vmul.f32 %v7636, %v3177
        %v7677 = vmul.f32 %v7639, %v3177
        %v7678 = vmul.f32 %v7642, %v3177
        %v7679 = vmul.f32 %v7645, %v3177
        %v7680 = vmul.f32 %v7648, %v3177
        %v7681 = vadd.f32 %v7649, 1e-06
        %v7682 = vadd.f32 %v7650, 1e-06
        %v7683 = vadd.f32 %v7651, 1e-06
        %v7684 = vadd.f32 %v7652, 1e-06
        %v7685 = vadd.f32 %v7653, 1e-06
        %v7686 = vadd.f32 %v7654, 1e-06
        %v7687 = vadd.f32 %v7655, 1e-06
        %v7688 = vadd.f32 %v7656, 1e-06
        %v7689 = vadd.f32 %v7657, 1e-06
        %v7690 = vadd.f32 %v7658, 1e-06
        %v7691 = vadd.f32 %v7659, 1e-06
        %v7692 = vadd.f32 %v7660, 1e-06
        %v7693 = vadd.f32 %v7661, 1e-06
        %v7694 = vadd.f32 %v7662, 1e-06
        %v7695 = vadd.f32 %v7663, 1e-06
        %v7696 = vadd.f32 %v7664, 1e-06
        %v7697 = vadd.f32 %v7665, 1e-06
        %v7698 = vadd.f32 %v7666, 1e-06
        %v7699 = vadd.f32 %v7667, 1e-06
        %v7700 = vadd.f32 %v7668, 1e-06
        %v7701 = vadd.f32 %v7669, 1e-06
        %v7702 = vadd.f32 %v7670, 1e-06
        %v7703 = vadd.f32 %v7671, 1e-06
        %v7704 = vadd.f32 %v7672, 1e-06
        %v7705 = vadd.f32 %v7673, 1e-06
        %v7706 = vadd.f32 %v7674, 1e-06
        %v7707 = vadd.f32 %v7675, 1e-06
        %v7708 = vadd.f32 %v7676, 1e-06
        %v7709 = vadd.f32 %v7677, 1e-06
        %v7710 = vadd.f32 %v7678, 1e-06
        %v7711 = vadd.f32 %v7679, 1e-06
        %v7712 = vadd.f32 %v7680, 1e-06
        %v7713 = vrsqrt.pop %v7681
        %v7714 = vrsqrt.pop %v7682
        %v7715 = vrsqrt.pop %v7683
        %v7716 = vrsqrt.pop %v7684
        %v7717 = vrsqrt.pop %v7685
        %v7718 = vrsqrt.pop %v7686
        %v7719 = vrsqrt.pop %v7687
        %v7720 = vrsqrt.pop %v7688
        %v7721 = vrsqrt.pop %v7689
        %v7722 = vrsqrt.pop %v7690
        %v7723 = vrsqrt.pop %v7691
        %v7724 = vrsqrt.pop %v7692
        %v7725 = vrsqrt.pop %v7693
        %v7726 = vrsqrt.pop %v7694
        %v7727 = vrsqrt.pop %v7695
        %v7728 = vrsqrt.pop %v7696
        %v7729 = vrsqrt.pop %v7697
        %v7730 = vrsqrt.pop %v7698
        %v7731 = vrsqrt.pop %v7699
        %v7732 = vrsqrt.pop %v7700
        %v7733 = vrsqrt.pop %v7701
        %v7734 = vrsqrt.pop %v7702
        %v7735 = vrsqrt.pop %v7703
        %v7736 = vrsqrt.pop %v7704
        %v7737 = vrsqrt.pop %v7705
        %v7738 = vrsqrt.pop %v7706
        %v7739 = vrsqrt.pop %v7707
        %v7740 = vrsqrt.pop %v7708
        %v7741 = vrsqrt.pop %v7709
        %v7742 = vrsqrt.pop %v7710
        %v7743 = vrsqrt.pop %v7711
        %v7744 = vrsqrt.pop %v7712
        %v7745 = vmul.f32 %v7489, %v7713
        %v7746 = vmul.f32 %v7490, %v7714
        %v7747 = vmul.f32 %v7491, %v7715
        %v7748 = vmul.f32 %v7492, %v7716
        %v7749 = vmul.f32 %v7493, %v7717
        %v7750 = vmul.f32 %v7494, %v7718
        %v7751 = vmul.f32 %v7495, %v7719
        %v7752 = vmul.f32 %v7496, %v7720
        %v7753 = vmul.f32 %v7497, %v7721
        %v7754 = vmul.f32 %v7498, %v7722
        %v7755 = vmul.f32 %v7499, %v7723
        %v7756 = vmul.f32 %v7500, %v7724
        %v7757 = vmul.f32 %v7501, %v7725
        %v7758 = vmul.f32 %v7502, %v7726
        %v7759 = vmul.f32 %v7503, %v7727
        %v7760 = vmul.f32 %v7504, %v7728
        %v7761 = vmul.f32 %v7505, %v7729
        %v7762 = vmul.f32 %v7506, %v7730
        %v7763 = vmul.f32 %v7507, %v7731
        %v7764 = vmul.f32 %v7508, %v7732
        %v7765 = vmul.f32 %v7509, %v7733
        %v7766 = vmul.f32 %v7510, %v7734
        %v7767 = vmul.f32 %v7511, %v7735
        %v7768 = vmul.f32 %v7512, %v7736
        %v7769 = vmul.f32 %v7513, %v7737
        %v7770 = vmul.f32 %v7514, %v7738
        %v7771 = vmul.f32 %v7515, %v7739
        %v7772 = vmul.f32 %v7516, %v7740
        %v7773 = vmul.f32 %v7517, %v7741
        %v7774 = vmul.f32 %v7518, %v7742
        %v7775 = vmul.f32 %v7519, %v7743
        %v7776 = vmul.f32 %v7520, %v7744
        %v7777 = vmul.f32 %v7745, %v3502
        %v7778 = vmul.f32 %v7746, %v3502
        %v7779 = vmul.f32 %v7747, %v3502
        %v7780 = vmul.f32 %v7748, %v3502
        %v7781 = vmul.f32 %v7749, %v3502
        %v7782 = vmul.f32 %v7750, %v3502
        %v7783 = vmul.f32 %v7751, %v3502
        %v7784 = vmul.f32 %v7752, %v3502
        %v7785 = vmul.f32 %v7753, %v3502
        %v7786 = vmul.f32 %v7754, %v3502
        %v7787 = vmul.f32 %v7755, %v3502
        %v7788 = vmul.f32 %v7756, %v3502
        %v7789 = vmul.f32 %v7757, %v3502
        %v7790 = vmul.f32 %v7758, %v3502
        %v7791 = vmul.f32 %v7759, %v3502
        %v7792 = vmul.f32 %v7760, %v3502
        %v7793 = vmul.f32 %v7761, %v3502
        %v7794 = vmul.f32 %v7762, %v3502
        %v7795 = vmul.f32 %v7763, %v3502
        %v7796 = vmul.f32 %v7764, %v3502
        %v7797 = vmul.f32 %v7765, %v3502
        %v7798 = vmul.f32 %v7766, %v3502
        %v7799 = vmul.f32 %v7767, %v3502
        %v7800 = vmul.f32 %v7768, %v3502
        %v7801 = vmul.f32 %v7769, %v3502
        %v7802 = vmul.f32 %v7770, %v3502
        %v7803 = vmul.f32 %v7771, %v3502
        %v7804 = vmul.f32 %v7772, %v3502
        %v7805 = vmul.f32 %v7773, %v3502
        %v7806 = vmul.f32 %v7774, %v3502
        %v7807 = vmul.f32 %v7775, %v3502
        %v7808 = vmul.f32 %v7776, %v3502
        %v7809 = vadd.f32 %v7777, %v3540
        %v7810 = vadd.f32 %v7778, %v3540
        %v7811 = vadd.f32 %v7779, %v3540
        %v7812 = vadd.f32 %v7780, %v3540
        %v7813 = vadd.f32 %v7781, %v3540
        %v7814 = vadd.f32 %v7782, %v3540
        %v7815 = vadd.f32 %v7783, %v3540
        %v7816 = vadd.f32 %v7784, %v3540
        %v7817 = vadd.f32 %v7785, %v3540
        %v7818 = vadd.f32 %v7786, %v3540
        %v7819 = vadd.f32 %v7787, %v3540
        %v7820 = vadd.f32 %v7788, %v3540
        %v7821 = vadd.f32 %v7789, %v3540
        %v7822 = vadd.f32 %v7790, %v3540
        %v7823 = vadd.f32 %v7791, %v3540
        %v7824 = vadd.f32 %v7792, %v3540
        %v7825 = vadd.f32 %v7793, %v3540
        %v7826 = vadd.f32 %v7794, %v3540
        %v7827 = vadd.f32 %v7795, %v3540
        %v7828 = vadd.f32 %v7796, %v3540
        %v7829 = vadd.f32 %v7797, %v3540
        %v7830 = vadd.f32 %v7798, %v3540
        %v7831 = vadd.f32 %v7799, %v3540
        %v7832 = vadd.f32 %v7800, %v3540
        %v7833 = vadd.f32 %v7801, %v3540
        %v7834 = vadd.f32 %v7802, %v3540
        %v7835 = vadd.f32 %v7803, %v3540
        %v7836 = vadd.f32 %v7804, %v3540
        %v7837 = vadd.f32 %v7805, %v3540
        %v7838 = vadd.f32 %v7806, %v3540
        %v7839 = vadd.f32 %v7807, %v3540
        %v7840 = vadd.f32 %v7808, %v3540
        %s7841 = scalar_lea.vmem %s271, 768
        %7842 = vst.msk [vmem:[%s7841] sm:$0xff] %vm272, %v7809
        %7843 = vst.msk [vmem:[%s7841 + $0x8] sm:$0xff] %vm272, %v7810
        %7844 = vst.msk [vmem:[%s7841 + $0x10] sm:$0xff] %vm272, %v7811
        %7845 = vst.msk [vmem:[%s7841 + $0x18] sm:$0xff] %vm272, %v7812
        %7846 = vst.msk [vmem:[%s7841 + $0x20] sm:$0xff] %vm272, %v7813
        %7847 = vst.msk [vmem:[%s7841 + $0x28] sm:$0xff] %vm272, %v7814
        %7848 = vst.msk [vmem:[%s7841 + $0x30] sm:$0xff] %vm272, %v7815
        %7849 = vst.msk [vmem:[%s7841 + $0x38] sm:$0xff] %vm272, %v7816
        %7850 = vst.msk [vmem:[%s7841 + $0x40] sm:$0xff] %vm272, %v7817
        %7851 = vst.msk [vmem:[%s7841 + $0x48] sm:$0xff] %vm272, %v7818
        %7852 = vst.msk [vmem:[%s7841 + $0x50] sm:$0xff] %vm272, %v7819
        %7853 = vst.msk [vmem:[%s7841 + $0x58] sm:$0xff] %vm272, %v7820
        %7854 = vst.msk [vmem:[%s7841 + $0x60] sm:$0xff] %vm272, %v7821
        %7855 = vst.msk [vmem:[%s7841 + $0x68] sm:$0xff] %vm272, %v7822
        %7856 = vst.msk [vmem:[%s7841 + $0x70] sm:$0xff] %vm272, %v7823
        %7857 = vst.msk [vmem:[%s7841 + $0x78] sm:$0xff] %vm272, %v7824
        %7858 = vst.msk [vmem:[%s7841 + $0x80] sm:$0xff] %vm272, %v7825
        %7859 = vst.msk [vmem:[%s7841 + $0x88] sm:$0xff] %vm272, %v7826
        %7860 = vst.msk [vmem:[%s7841 + $0x90] sm:$0xff] %vm272, %v7827
        %7861 = vst.msk [vmem:[%s7841 + $0x98] sm:$0xff] %vm272, %v7828
        %7862 = vst.msk [vmem:[%s7841 + $0xa0] sm:$0xff] %vm272, %v7829
        %7863 = vst.msk [vmem:[%s7841 + $0xa8] sm:$0xff] %vm272, %v7830
        %7864 = vst.msk [vmem:[%s7841 + $0xb0] sm:$0xff] %vm272, %v7831
        %7865 = vst.msk [vmem:[%s7841 + $0xb8] sm:$0xff] %vm272, %v7832
        %7866 = vst.msk [vmem:[%s7841 + $0xc0] sm:$0xff] %vm272, %v7833
        %7867 = vst.msk [vmem:[%s7841 + $0xc8] sm:$0xff] %vm272, %v7834
        %7868 = vst.msk [vmem:[%s7841 + $0xd0] sm:$0xff] %vm272, %v7835
        %7869 = vst.msk [vmem:[%s7841 + $0xd8] sm:$0xff] %vm272, %v7836
        %7870 = vst.msk [vmem:[%s7841 + $0xe0] sm:$0xff] %vm272, %v7837
        %7871 = vst.msk [vmem:[%s7841 + $0xe8] sm:$0xff] %vm272, %v7838
        %7872 = vst.msk [vmem:[%s7841 + $0xf0] sm:$0xff] %vm272, %v7839
        %7873 = vst.msk [vmem:[%s7841 + $0xf8] sm:$0xff] %vm272, %v7840
        %p7874 = scmp.lt.s32.totalorder %s20, 1
        %s7875 = scalar_select %p7874, %s20, 1
        %s7876 = smul.addr %s7875, 128
        %s7877 = smul.addr %s7876, 8
        %s7878 = scalar_lea.vmem %s6, %s7877
        // Predicated region
        $region49: #{scale_block.1} parent=43 // pred_check
          %p7879 = pneg %p169
        $region50: #{scale_block.1} parent=43 // pred_check_branch
          %7881 = sbr.rel (%p7879) target = $region52
        $region51: #{scale_block.1} parent=43 // pred_region
          _
        $region52: #{scale_block.1} parent=43 // pred_fallthru
          _
      $region44: #{scale_block.1} parent=5 // pred_fallthru
        _
      %p7882 = scmp.le.s32.totalorder 2, %s15
      // Predicated region
      $region53: #{scale_block.1} parent=5 // pred_check
        %p7883 = pneg %p7882
      $region54: #{scale_block.1} parent=5 // pred_check_branch
        %7885 = sbr.rel (%p7883) target = $region56
      $region55: #{scale_block.1} parent=5 // pred_region
        %s7886 = ssub.s32 %s15, 2
        // Predicated region
        $region57: #{scale_block.1} parent=55 // pred_check
          %p7887 = pneg %p175
        $region58: #{scale_block.1} parent=55 // pred_check_branch
          %7889 = sbr.rel (%p7887) target = $region60
        $region59: #{scale_block.1} parent=55 // pred_region
          %p7890 = scmp.lt.s32.totalorder %s21, 1
          %s7891 = scalar_select %p7890, %s21, 1
          %s7892 = smul.addr %s7891, 128
          %s7893 = smul.addr %s7892, 8
          %s7894 = scalar_lea.vmem %s6, %s7893
        $region60: #{scale_block.1} parent=55 // pred_fallthru
          _
      $region56: #{scale_block.1} parent=5 // pred_fallthru
        _
    $region6: #{scale_block.1} parent=1 // loop_footer
      %s19 = sadd.s32 1, %s15
    $region7: #{scale_block.1} parent=1 // loop_footer_branch
      %14 = sbr.rel target = $region3
    $region8: #{scale_block.1} parent=1 // loop_exit
      _
    %7895 = vsyncpa [#allocation7], 1
    %s7896 = scalar_lea.sflag [#allocation7], 1
    %7897 = vsyncpa %s7896, 1

</llo_original>
